<compile_context>
chip_gen: v6e
topology: v6e:2x2x1
jax: 0.10.0
libtpu: 0.0.40
codegen_flags: <defaults>
</compile_context>

<pallas_src>
import functools
import math

import jax
import jax.numpy as jnp
from jax.experimental import pallas as pl
from jax.experimental.pallas import tpu as pltpu


def fused_self_attention_kernel(q_ref, k_ref, v_ref, bias_ref,
                                wq_ref, wk_ref, wv_ref, wo_ref, bo_ref,
                                o_ref, acc_ref, *, heads):
    """One batch element per grid step: projections + attention + fused fc_out.

    q_ref/k_ref/v_ref : (1, L, E) f32
    bias_ref          : (1, 1, Lq, Lk) bf16 additive mask (0 keep / -1e30 drop)
    wq/wk/wv_ref      : (E, E) bf16 block-diagonal per-head weights (wq pre-scaled)
    wo_ref            : (E, E) bf16 fc_out weight, pre-transposed
    bo_ref            : (1, E) f32 fc_out bias
    o_ref             : (1, Lq, E) f32 output
    acc_ref           : (Lq, E) f32 VMEM scratch (concatenated head outputs)
    """
    H = heads
    Lq, E = q_ref.shape[1], q_ref.shape[2]
    Dh = E // H

    q = q_ref[0].astype(jnp.bfloat16)          # (Lq, E)
    k = k_ref[0].astype(jnp.bfloat16)          # (Lk, E)
    v = v_ref[0].astype(jnp.bfloat16)          # (Lv, E)

    # Lane-dense per-head projections: nn.Linear(head_dim, head_dim, bias=False)
    # applied per head == x_flat @ kron(I_H, W.T). 1/sqrt(E) is folded into wq.
    qp = jnp.dot(q, wq_ref[...], preferred_element_type=jnp.float32)   # (Lq, E)
    kp = jnp.dot(k, wk_ref[...], preferred_element_type=jnp.float32)   # (Lk, E)
    vp = jnp.dot(v, wv_ref[...], preferred_element_type=jnp.float32)   # (Lv, E)

    bias = bias_ref[0, 0].astype(jnp.float32)                          # (Lq, Lk)

    qp_b = qp.astype(jnp.bfloat16)
    kp_b = kp.astype(jnp.bfloat16)

    for h in range(H):                          # static -> unrolled at trace time
        lo = h * Dh
        q_h = qp_b[:, lo:lo + Dh]               # (Lq, Dh)
        k_h = kp_b[:, lo:lo + Dh]               # (Lk, Dh)

        # scores = Q_h @ K_h^T: contract dim 1 of BOTH operands (no .T in-kernel).
        s = jax.lax.dot_general(q_h, k_h, (((1,), (1,)), ((), ())),
                                preferred_element_type=jnp.float32)    # (Lq, Lk)
        s = s + bias                            # additive mask, finite sentinel

        # softmax over keys (f32 statistics, EUP reciprocal).
        m = jnp.max(s, axis=-1, keepdims=True)
        e = jnp.exp(s - m)
        p = e * pl.reciprocal(jnp.sum(e, axis=-1, keepdims=True), approx=True)

        # Module's einsum 'nhqk,nlhd->nqhd' sums k and l independently:
        #   out[q, h, :] = (sum_k p[q, k]) * (sum_l vp[l, h*Dh:(h+1)*Dh])
        p_rowsum = jnp.sum(p, axis=-1, keepdims=True)                   # (Lq, 1)
        v_colsum = jnp.sum(vp[:, lo:lo + Dh], axis=0, keepdims=True)    # (1, Dh)
        acc_ref[:, lo:lo + Dh] = p_rowsum * v_colsum                    # (Lq, Dh)

    # Fused fc_out over the lane-dense head concat: y = concat @ W_out^T + b.
    concat = acc_ref[...].astype(jnp.bfloat16)                          # (Lq, E)
    o_ref[0] = (jnp.dot(concat, wo_ref[...], preferred_element_type=jnp.float32)
                + bo_ref[...])


def self_attention_forward(values, keys, queries, mask, params, heads):
    """values/keys/queries: (N, L, E) f32; mask broadcastable to (N,1,Lq,Lk), 0 = masked."""
    N, Lv, E = values.shape
    Lk = keys.shape[1]
    Lq = queries.shape[1]
    H = heads

    # Host-side prep (one-time, free relative to the kernel):
    #  - block-diagonal per-head projection weights -> lane-dense (L,E)@(E,E),
    #  - 1/sqrt(embed_size) folded into the q weights,
    #  - fc_out weight pre-transposed, MXU operands in bf16.
    eye = jnp.eye(H, dtype=jnp.float32)
    scale = 1.0 / math.sqrt(E)                  # module divides by embed_size**0.5
    wq_blk = jnp.kron(eye, params["wq"].T * scale).astype(jnp.bfloat16)   # (E, E)
    wk_blk = jnp.kron(eye, params["wk"].T).astype(jnp.bfloat16)           # (E, E)
    wv_blk = jnp.kron(eye, params["wv"].T).astype(jnp.bfloat16)           # (E, E)
    wo_t = params["w_out"].T.astype(jnp.bfloat16)                          # (E, E)
    b_out = params["b_out"].reshape(1, E).astype(jnp.float32)              # (1, E)

    # Additive mask bias (0 keep / -1e30 masked), bf16 to halve DMA bytes.
    mask_b = jnp.broadcast_to(mask, (N, 1, Lq, Lk))
    bias = jnp.where(mask_b == 0.0, -1e30, 0.0).astype(jnp.bfloat16)

    kernel = functools.partial(fused_self_attention_kernel, heads=H)

    return pl.pallas_call(
        kernel,
        out_shape=jax.ShapeDtypeStruct((N, Lq, E), jnp.float32),
        grid=(N,),
        in_specs=[
            pl.BlockSpec((1, Lq, E), lambda b: (b, 0, 0)),         # queries
            pl.BlockSpec((1, Lk, E), lambda b: (b, 0, 0)),         # keys
            pl.BlockSpec((1, Lv, E), lambda b: (b, 0, 0)),         # values
            pl.BlockSpec((1, 1, Lq, Lk), lambda b: (b, 0, 0, 0)),  # mask bias
            pl.BlockSpec((E, E), lambda b: (0, 0)),                # wq (block-diag, scaled)
            pl.BlockSpec((E, E), lambda b: (0, 0)),                # wk (block-diag)
            pl.BlockSpec((E, E), lambda b: (0, 0)),                # wv (block-diag)
            pl.BlockSpec((E, E), lambda b: (0, 0)),                # w_out^T
            pl.BlockSpec((1, E), lambda b: (0, 0)),                # b_out
        ],
        out_specs=pl.BlockSpec((1, Lq, E), lambda b: (b, 0, 0)),
        scratch_shapes=[pltpu.VMEM((Lq, E), jnp.float32)],
        compiler_params=pltpu.CompilerParams(
            dimension_semantics=("parallel",)),
    )(queries, keys, values, bias, wq_blk, wk_blk, wv_blk, wo_t, b_out)


def self_attention_reference(values, keys, queries, mask, params, heads):
    """Literal pure-JAX (f32) transliteration of the PyTorch module's forward."""
    N, Lv, E = values.shape
    Lk, Lq = keys.shape[1], queries.shape[1]
    H, Dh = heads, E // heads
    v = values.reshape(N, Lv, H, Dh) @ params["wv"].T
    k = keys.reshape(N, Lk, H, Dh) @ params["wk"].T
    q = queries.reshape(N, Lq, H, Dh) @ params["wq"].T
    att = jnp.einsum("nqhd,nkhd->nhqk", q, k)
    att = jnp.where(mask == 0.0, -jnp.inf, att)
    att = jax.nn.softmax(att / math.sqrt(E), axis=3)
    # Same index labels as the torch module: `k` and `l` are summed independently.
    out = jnp.einsum("nhqk,nlhd->nqhd", att, v).reshape(N, Lq, E)
    return out @ params["w_out"].T + params["b_out"]


if __name__ == "__main__":
    # Small shapes consistent with the module constants (embed_size=512, heads=8).
    batch, seq, embed_size, heads = 2, 128, 512, 8
    head_dim = embed_size // heads

    key = jax.random.PRNGKey(0)
    k_wq, k_wk, k_wv, k_wo, k_bo, k_v, k_k, k_q = jax.random.split(key, 8)

    params = {
        "wq": 0.1 * jax.random.normal(k_wq, (head_dim, head_dim), jnp.float32),
        "wk": 0.1 * jax.random.normal(k_wk, (head_dim, head_dim), jnp.float32),
        "wv": 0.1 * jax.random.normal(k_wv, (head_dim, head_dim), jnp.float32),
        "w_out": 0.1 * jax.random.normal(k_wo, (embed_size, embed_size), jnp.float32),
        "b_out": 0.1 * jax.random.normal(k_bo, (embed_size,), jnp.float32),
    }

    values = jax.random.normal(k_v, (batch, seq, embed_size), jnp.float32)
    keys_in = jax.random.normal(k_k, (batch, seq, embed_size), jnp.float32)
    queries = jax.random.normal(k_q, (batch, seq, embed_size), jnp.float32)

    # Causal mask (1 = keep, 0 = masked), broadcastable to (N, H, Lq, Lk).
    mask = jnp.tril(jnp.ones((seq, seq), jnp.float32))[None, None, :, :]
    mask = jnp.broadcast_to(mask, (batch, 1, seq, seq))

    fwd = jax.jit(self_attention_forward, static_argnums=(5,))
    out = jax.block_until_ready(fwd(values, keys_in, queries, mask, params, heads))

    ref = self_attention_reference(values, keys_in, queries, mask, params, heads)

    assert out.shape == (batch, seq, embed_size)
    # bf16 MXU inputs + approx reciprocal -> loosen the old 1e-5 tolerance (per review).
    max_err = jnp.max(jnp.abs(out - ref))
    ref_scale = jnp.max(jnp.abs(ref))
    assert bool(max_err <= 2e-2 * ref_scale), (float(max_err), float(ref_scale))

    print("KERNEL_OK")
</pallas_src>

<mosaic_0001>
module attributes {stable_mosaic.version = 11 : i64} {
  func.func @fused_self_attention_kernel(%arg0: i32, %arg1: memref<1x128x512xf32, #tpu.memory_space<vmem>>, %arg2: memref<1x128x512xf32, #tpu.memory_space<vmem>>, %arg3: memref<1x128x512xf32, #tpu.memory_space<vmem>>, %arg4: memref<1x1x128x128xbf16, #tpu.memory_space<vmem>>, %arg5: memref<512x512xbf16, #tpu.memory_space<vmem>>, %arg6: memref<512x512xbf16, #tpu.memory_space<vmem>>, %arg7: memref<512x512xbf16, #tpu.memory_space<vmem>>, %arg8: memref<512x512xbf16, #tpu.memory_space<vmem>>, %arg9: memref<1x512xf32, #tpu.memory_space<vmem>>, %arg10: memref<1x128x512xf32, #tpu.memory_space<vmem>>, %arg11: memref<128x512xf32, #tpu.memory_space<vmem>>) attributes {dimension_semantics = [#tpu.dimension_semantics<parallel>], iteration_bounds = array<i64: 2>, scalar_prefetch = 0 : i64, scratch_operands = 1 : i64, tpu.core_type = #tpu.core_type<tc>, window_params = [{transform_indices = @transform_0, window_bounds = array<i64: 1, 128, 512>}, {transform_indices = @transform_1, window_bounds = array<i64: 1, 128, 512>}, {transform_indices = @transform_2, window_bounds = array<i64: 1, 128, 512>}, {transform_indices = @transform_3, window_bounds = array<i64: 1, 1, 128, 128>}, {pipeline_mode = #tpu.pipeline_mode<synchronous>, transform_indices = @transform_4, window_bounds = array<i64: 512, 512>}, {pipeline_mode = #tpu.pipeline_mode<synchronous>, transform_indices = @transform_5, window_bounds = array<i64: 512, 512>}, {pipeline_mode = #tpu.pipeline_mode<synchronous>, transform_indices = @transform_6, window_bounds = array<i64: 512, 512>}, {pipeline_mode = #tpu.pipeline_mode<synchronous>, transform_indices = @transform_7, window_bounds = array<i64: 512, 512>}, {pipeline_mode = #tpu.pipeline_mode<synchronous>, transform_indices = @transform_8, window_bounds = array<i64: 1, 512>}, {transform_indices = @transform_9, window_bounds = array<i64: 1, 128, 512>}]} {
    %c0 = arith.constant 0 : index
    %c0_0 = arith.constant 0 : index
    %c0_1 = arith.constant 0 : index
    %0 = vector.load %arg1[%c0, %c0_0, %c0_1] : memref<1x128x512xf32, #tpu.memory_space<vmem>>, vector<1x128x512xf32>
    %1 = vector.shape_cast %0 : vector<1x128x512xf32> to vector<128x512xf32>
    %2 = arith.truncf %1 : vector<128x512xf32> to vector<128x512xbf16>
    %c0_2 = arith.constant 0 : index
    %c0_3 = arith.constant 0 : index
    %c0_4 = arith.constant 0 : index
    %3 = vector.load %arg2[%c0_2, %c0_3, %c0_4] : memref<1x128x512xf32, #tpu.memory_space<vmem>>, vector<1x128x512xf32>
    %4 = vector.shape_cast %3 : vector<1x128x512xf32> to vector<128x512xf32>
    %5 = arith.truncf %4 : vector<128x512xf32> to vector<128x512xbf16>
    %c0_5 = arith.constant 0 : index
    %c0_6 = arith.constant 0 : index
    %c0_7 = arith.constant 0 : index
    %6 = vector.load %arg3[%c0_5, %c0_6, %c0_7] : memref<1x128x512xf32, #tpu.memory_space<vmem>>, vector<1x128x512xf32>
    %7 = vector.shape_cast %6 : vector<1x128x512xf32> to vector<128x512xf32>
    %8 = arith.truncf %7 : vector<128x512xf32> to vector<128x512xbf16>
    %c0_8 = arith.constant 0 : index
    %c0_9 = arith.constant 0 : index
    %9 = vector.load %arg5[%c0_8, %c0_9] : memref<512x512xbf16, #tpu.memory_space<vmem>>, vector<512x512xbf16>
    %cst = arith.constant dense<0.000000e+00> : vector<128x512xf32>
    %10 = tpu.matmul %2, %9, %cst {dimension_numbers = #tpu.dot_dimension_numbers<[1], [0], [0], [1], [0, 0, 1, 1], [], []>} : vector<128x512xbf16>, vector<512x512xbf16>, vector<128x512xf32> -> vector<128x512xf32>
    %c0_10 = arith.constant 0 : index
    %c0_11 = arith.constant 0 : index
    %11 = vector.load %arg6[%c0_10, %c0_11] : memref<512x512xbf16, #tpu.memory_space<vmem>>, vector<512x512xbf16>
    %cst_12 = arith.constant dense<0.000000e+00> : vector<128x512xf32>
    %12 = tpu.matmul %5, %11, %cst_12 {dimension_numbers = #tpu.dot_dimension_numbers<[1], [0], [0], [1], [0, 0, 1, 1], [], []>} : vector<128x512xbf16>, vector<512x512xbf16>, vector<128x512xf32> -> vector<128x512xf32>
    %c0_13 = arith.constant 0 : index
    %c0_14 = arith.constant 0 : index
    %13 = vector.load %arg7[%c0_13, %c0_14] : memref<512x512xbf16, #tpu.memory_space<vmem>>, vector<512x512xbf16>
    %cst_15 = arith.constant dense<0.000000e+00> : vector<128x512xf32>
    %14 = tpu.matmul %8, %13, %cst_15 {dimension_numbers = #tpu.dot_dimension_numbers<[1], [0], [0], [1], [0, 0, 1, 1], [], []>} : vector<128x512xbf16>, vector<512x512xbf16>, vector<128x512xf32> -> vector<128x512xf32>
    %c0_16 = arith.constant 0 : index
    %c0_17 = arith.constant 0 : index
    %c0_18 = arith.constant 0 : index
    %c0_19 = arith.constant 0 : index
    %15 = vector.load %arg4[%c0_16, %c0_17, %c0_18, %c0_19] : memref<1x1x128x128xbf16, #tpu.memory_space<vmem>>, vector<1x1x128x128xbf16>
    %16 = vector.shape_cast %15 : vector<1x1x128x128xbf16> to vector<128x128xbf16>
    %17 = arith.extf %16 : vector<128x128xbf16> to vector<128x128xf32>
    %18 = arith.truncf %10 : vector<128x512xf32> to vector<128x512xbf16>
    %19 = arith.truncf %12 : vector<128x512xf32> to vector<128x512xbf16>
    %20 = vector.extract_strided_slice %18 {offsets = [0, 0], sizes = [128, 64], strides = [1, 1]} : vector<128x512xbf16> to vector<128x64xbf16>
    %21 = vector.extract_strided_slice %19 {offsets = [0, 0], sizes = [128, 64], strides = [1, 1]} : vector<128x512xbf16> to vector<128x64xbf16>
    %cst_20 = arith.constant dense<0.000000e+00> : vector<128x128xf32>
    %22 = tpu.matmul %20, %21, %cst_20 {dimension_numbers = #tpu.dot_dimension_numbers<[1], [1], [0], [0], [0, 0, 1, 0], [], []>} : vector<128x64xbf16>, vector<128x64xbf16>, vector<128x128xf32> -> vector<128x128xf32>
    %23 = arith.addf %22, %17 : vector<128x128xf32>
    %cst_21 = arith.constant dense<0xFF800000> : vector<128xf32>
    %24 = vector.multi_reduction <maximumf>, %23, %cst_21 [1] : vector<128x128xf32> to vector<128xf32>
    %25 = vector.shape_cast %24 : vector<128xf32> to vector<128x1xf32>
    %26 = vector.broadcast %25 : vector<128x1xf32> to vector<128x128xf32>
    %27 = arith.subf %23, %26 : vector<128x128xf32>
    %28 = math.exp %27 : vector<128x128xf32>
    %cst_22 = arith.constant dense<0.000000e+00> : vector<128xf32>
    %29 = vector.multi_reduction <add>, %28, %cst_22 [1] : vector<128x128xf32> to vector<128xf32>
    %30 = vector.shape_cast %29 : vector<128xf32> to vector<128x1xf32>
    %31 = tpu.reciprocal %30 {approx = true} : vector<128x1xf32> -> vector<128x1xf32>
    %32 = vector.broadcast %31 : vector<128x1xf32> to vector<128x128xf32>
    %33 = arith.mulf %28, %32 : vector<128x128xf32>
    %cst_23 = arith.constant dense<0.000000e+00> : vector<128xf32>
    %34 = vector.multi_reduction <add>, %33, %cst_23 [1] : vector<128x128xf32> to vector<128xf32>
    %35 = vector.shape_cast %34 : vector<128xf32> to vector<128x1xf32>
    %36 = vector.extract_strided_slice %14 {offsets = [0, 0], sizes = [128, 64], strides = [1, 1]} : vector<128x512xf32> to vector<128x64xf32>
    %cst_24 = arith.constant dense<0.000000e+00> : vector<64xf32>
    %37 = vector.multi_reduction <add>, %36, %cst_24 [0] : vector<128x64xf32> to vector<64xf32>
    %38 = vector.shape_cast %37 : vector<64xf32> to vector<1x64xf32>
    %39 = vector.broadcast %35 : vector<128x1xf32> to vector<128x64xf32>
    %40 = vector.broadcast %38 : vector<1x64xf32> to vector<128x64xf32>
    %41 = arith.mulf %39, %40 : vector<128x64xf32>
    %c0_25 = arith.constant 0 : index
    %c0_26 = arith.constant 0 : index
    %42 = vector.load %arg11[%c0_25, %c0_26] : memref<128x512xf32, #tpu.memory_space<vmem>>, vector<128x64xf32>
    tpu.vector_store %arg11[%c0_25, %c0_26], %41 {strides = array<i32>} : memref<128x512xf32, #tpu.memory_space<vmem>>, vector<128x64xf32>,
    %43 = vector.extract_strided_slice %18 {offsets = [0, 64], sizes = [128, 64], strides = [1, 1]} : vector<128x512xbf16> to vector<128x64xbf16>
    %44 = vector.extract_strided_slice %19 {offsets = [0, 64], sizes = [128, 64], strides = [1, 1]} : vector<128x512xbf16> to vector<128x64xbf16>
    %cst_27 = arith.constant dense<0.000000e+00> : vector<128x128xf32>
    %45 = tpu.matmul %43, %44, %cst_27 {dimension_numbers = #tpu.dot_dimension_numbers<[1], [1], [0], [0], [0, 0, 1, 0], [], []>} : vector<128x64xbf16>, vector<128x64xbf16>, vector<128x128xf32> -> vector<128x128xf32>
    %46 = arith.addf %45, %17 : vector<128x128xf32>
    %cst_28 = arith.constant dense<0xFF800000> : vector<128xf32>
    %47 = vector.multi_reduction <maximumf>, %46, %cst_28 [1] : vector<128x128xf32> to vector<128xf32>
    %48 = vector.shape_cast %47 : vector<128xf32> to vector<128x1xf32>
    %49 = vector.broadcast %48 : vector<128x1xf32> to vector<128x128xf32>
    %50 = arith.subf %46, %49 : vector<128x128xf32>
    %51 = math.exp %50 : vector<128x128xf32>
    %cst_29 = arith.constant dense<0.000000e+00> : vector<128xf32>
    %52 = vector.multi_reduction <add>, %51, %cst_29 [1] : vector<128x128xf32> to vector<128xf32>
    %53 = vector.shape_cast %52 : vector<128xf32> to vector<128x1xf32>
    %54 = tpu.reciprocal %53 {approx = true} : vector<128x1xf32> -> vector<128x1xf32>
    %55 = vector.broadcast %54 : vector<128x1xf32> to vector<128x128xf32>
    %56 = arith.mulf %51, %55 : vector<128x128xf32>
    %cst_30 = arith.constant dense<0.000000e+00> : vector<128xf32>
    %57 = vector.multi_reduction <add>, %56, %cst_30 [1] : vector<128x128xf32> to vector<128xf32>
    %58 = vector.shape_cast %57 : vector<128xf32> to vector<128x1xf32>
    %59 = vector.extract_strided_slice %14 {offsets = [0, 64], sizes = [128, 64], strides = [1, 1]} : vector<128x512xf32> to vector<128x64xf32>
    %cst_31 = arith.constant dense<0.000000e+00> : vector<64xf32>
    %60 = vector.multi_reduction <add>, %59, %cst_31 [0] : vector<128x64xf32> to vector<64xf32>
    %61 = vector.shape_cast %60 : vector<64xf32> to vector<1x64xf32>
    %62 = vector.broadcast %58 : vector<128x1xf32> to vector<128x64xf32>
    %63 = vector.broadcast %61 : vector<1x64xf32> to vector<128x64xf32>
    %64 = arith.mulf %62, %63 : vector<128x64xf32>
    %c0_32 = arith.constant 0 : index
    %c64 = arith.constant 64 : index
    %65 = vector.load %arg11[%c0_32, %c64] : memref<128x512xf32, #tpu.memory_space<vmem>>, vector<128x64xf32>
    tpu.vector_store %arg11[%c0_32, %c64], %64 {strides = array<i32>} : memref<128x512xf32, #tpu.memory_space<vmem>>, vector<128x64xf32>,
    %66 = vector.extract_strided_slice %18 {offsets = [0, 128], sizes = [128, 64], strides = [1, 1]} : vector<128x512xbf16> to vector<128x64xbf16>
    %67 = vector.extract_strided_slice %19 {offsets = [0, 128], sizes = [128, 64], strides = [1, 1]} : vector<128x512xbf16> to vector<128x64xbf16>
    %cst_33 = arith.constant dense<0.000000e+00> : vector<128x128xf32>
    %68 = tpu.matmul %66, %67, %cst_33 {dimension_numbers = #tpu.dot_dimension_numbers<[1], [1], [0], [0], [0, 0, 1, 0], [], []>} : vector<128x64xbf16>, vector<128x64xbf16>, vector<128x128xf32> -> vector<128x128xf32>
    %69 = arith.addf %68, %17 : vector<128x128xf32>
    %cst_34 = arith.constant dense<0xFF800000> : vector<128xf32>
    %70 = vector.multi_reduction <maximumf>, %69, %cst_34 [1] : vector<128x128xf32> to vector<128xf32>
    %71 = vector.shape_cast %70 : vector<128xf32> to vector<128x1xf32>
    %72 = vector.broadcast %71 : vector<128x1xf32> to vector<128x128xf32>
    %73 = arith.subf %69, %72 : vector<128x128xf32>
    %74 = math.exp %73 : vector<128x128xf32>
    %cst_35 = arith.constant dense<0.000000e+00> : vector<128xf32>
    %75 = vector.multi_reduction <add>, %74, %cst_35 [1] : vector<128x128xf32> to vector<128xf32>
    %76 = vector.shape_cast %75 : vector<128xf32> to vector<128x1xf32>
    %77 = tpu.reciprocal %76 {approx = true} : vector<128x1xf32> -> vector<128x1xf32>
    %78 = vector.broadcast %77 : vector<128x1xf32> to vector<128x128xf32>
    %79 = arith.mulf %74, %78 : vector<128x128xf32>
    %cst_36 = arith.constant dense<0.000000e+00> : vector<128xf32>
    %80 = vector.multi_reduction <add>, %79, %cst_36 [1] : vector<128x128xf32> to vector<128xf32>
    %81 = vector.shape_cast %80 : vector<128xf32> to vector<128x1xf32>
    %82 = vector.extract_strided_slice %14 {offsets = [0, 128], sizes = [128, 64], strides = [1, 1]} : vector<128x512xf32> to vector<128x64xf32>
    %cst_37 = arith.constant dense<0.000000e+00> : vector<64xf32>
    %83 = vector.multi_reduction <add>, %82, %cst_37 [0] : vector<128x64xf32> to vector<64xf32>
    %84 = vector.shape_cast %83 : vector<64xf32> to vector<1x64xf32>
    %85 = vector.broadcast %81 : vector<128x1xf32> to vector<128x64xf32>
    %86 = vector.broadcast %84 : vector<1x64xf32> to vector<128x64xf32>
    %87 = arith.mulf %85, %86 : vector<128x64xf32>
    %c0_38 = arith.constant 0 : index
    %c128 = arith.constant 128 : index
    %88 = vector.load %arg11[%c0_38, %c128] : memref<128x512xf32, #tpu.memory_space<vmem>>, vector<128x64xf32>
    tpu.vector_store %arg11[%c0_38, %c128], %87 {strides = array<i32>} : memref<128x512xf32, #tpu.memory_space<vmem>>, vector<128x64xf32>,
    %89 = vector.extract_strided_slice %18 {offsets = [0, 192], sizes = [128, 64], strides = [1, 1]} : vector<128x512xbf16> to vector<128x64xbf16>
    %90 = vector.extract_strided_slice %19 {offsets = [0, 192], sizes = [128, 64], strides = [1, 1]} : vector<128x512xbf16> to vector<128x64xbf16>
    %cst_39 = arith.constant dense<0.000000e+00> : vector<128x128xf32>
    %91 = tpu.matmul %89, %90, %cst_39 {dimension_numbers = #tpu.dot_dimension_numbers<[1], [1], [0], [0], [0, 0, 1, 0], [], []>} : vector<128x64xbf16>, vector<128x64xbf16>, vector<128x128xf32> -> vector<128x128xf32>
    %92 = arith.addf %91, %17 : vector<128x128xf32>
    %cst_40 = arith.constant dense<0xFF800000> : vector<128xf32>
    %93 = vector.multi_reduction <maximumf>, %92, %cst_40 [1] : vector<128x128xf32> to vector<128xf32>
    %94 = vector.shape_cast %93 : vector<128xf32> to vector<128x1xf32>
    %95 = vector.broadcast %94 : vector<128x1xf32> to vector<128x128xf32>
    %96 = arith.subf %92, %95 : vector<128x128xf32>
    %97 = math.exp %96 : vector<128x128xf32>
    %cst_41 = arith.constant dense<0.000000e+00> : vector<128xf32>
    %98 = vector.multi_reduction <add>, %97, %cst_41 [1] : vector<128x128xf32> to vector<128xf32>
    %99 = vector.shape_cast %98 : vector<128xf32> to vector<128x1xf32>
    %100 = tpu.reciprocal %99 {approx = true} : vector<128x1xf32> -> vector<128x1xf32>
    %101 = vector.broadcast %100 : vector<128x1xf32> to vector<128x128xf32>
    %102 = arith.mulf %97, %101 : vector<128x128xf32>
    %cst_42 = arith.constant dense<0.000000e+00> : vector<128xf32>
    %103 = vector.multi_reduction <add>, %102, %cst_42 [1] : vector<128x128xf32> to vector<128xf32>
    %104 = vector.shape_cast %103 : vector<128xf32> to vector<128x1xf32>
    %105 = vector.extract_strided_slice %14 {offsets = [0, 192], sizes = [128, 64], strides = [1, 1]} : vector<128x512xf32> to vector<128x64xf32>
    %cst_43 = arith.constant dense<0.000000e+00> : vector<64xf32>
    %106 = vector.multi_reduction <add>, %105, %cst_43 [0] : vector<128x64xf32> to vector<64xf32>
    %107 = vector.shape_cast %106 : vector<64xf32> to vector<1x64xf32>
    %108 = vector.broadcast %104 : vector<128x1xf32> to vector<128x64xf32>
    %109 = vector.broadcast %107 : vector<1x64xf32> to vector<128x64xf32>
    %110 = arith.mulf %108, %109 : vector<128x64xf32>
    %c0_44 = arith.constant 0 : index
    %c192 = arith.constant 192 : index
    %111 = vector.load %arg11[%c0_44, %c192] : memref<128x512xf32, #tpu.memory_space<vmem>>, vector<128x64xf32>
    tpu.vector_store %arg11[%c0_44, %c192], %110 {strides = array<i32>} : memref<128x512xf32, #tpu.memory_space<vmem>>, vector<128x64xf32>,
    %112 = vector.extract_strided_slice %18 {offsets = [0, 256], sizes = [128, 64], strides = [1, 1]} : vector<128x512xbf16> to vector<128x64xbf16>
    %113 = vector.extract_strided_slice %19 {offsets = [0, 256], sizes = [128, 64], strides = [1, 1]} : vector<128x512xbf16> to vector<128x64xbf16>
    %cst_45 = arith.constant dense<0.000000e+00> : vector<128x128xf32>
    %114 = tpu.matmul %112, %113, %cst_45 {dimension_numbers = #tpu.dot_dimension_numbers<[1], [1], [0], [0], [0, 0, 1, 0], [], []>} : vector<128x64xbf16>, vector<128x64xbf16>, vector<128x128xf32> -> vector<128x128xf32>
    %115 = arith.addf %114, %17 : vector<128x128xf32>
    %cst_46 = arith.constant dense<0xFF800000> : vector<128xf32>
    %116 = vector.multi_reduction <maximumf>, %115, %cst_46 [1] : vector<128x128xf32> to vector<128xf32>
    %117 = vector.shape_cast %116 : vector<128xf32> to vector<128x1xf32>
    %118 = vector.broadcast %117 : vector<128x1xf32> to vector<128x128xf32>
    %119 = arith.subf %115, %118 : vector<128x128xf32>
    %120 = math.exp %119 : vector<128x128xf32>
    %cst_47 = arith.constant dense<0.000000e+00> : vector<128xf32>
    %121 = vector.multi_reduction <add>, %120, %cst_47 [1] : vector<128x128xf32> to vector<128xf32>
    %122 = vector.shape_cast %121 : vector<128xf32> to vector<128x1xf32>
    %123 = tpu.reciprocal %122 {approx = true} : vector<128x1xf32> -> vector<128x1xf32>
    %124 = vector.broadcast %123 : vector<128x1xf32> to vector<128x128xf32>
    %125 = arith.mulf %120, %124 : vector<128x128xf32>
    %cst_48 = arith.constant dense<0.000000e+00> : vector<128xf32>
    %126 = vector.multi_reduction <add>, %125, %cst_48 [1] : vector<128x128xf32> to vector<128xf32>
    %127 = vector.shape_cast %126 : vector<128xf32> to vector<128x1xf32>
    %128 = vector.extract_strided_slice %14 {offsets = [0, 256], sizes = [128, 64], strides = [1, 1]} : vector<128x512xf32> to vector<128x64xf32>
    %cst_49 = arith.constant dense<0.000000e+00> : vector<64xf32>
    %129 = vector.multi_reduction <add>, %128, %cst_49 [0] : vector<128x64xf32> to vector<64xf32>
    %130 = vector.shape_cast %129 : vector<64xf32> to vector<1x64xf32>
    %131 = vector.broadcast %127 : vector<128x1xf32> to vector<128x64xf32>
    %132 = vector.broadcast %130 : vector<1x64xf32> to vector<128x64xf32>
    %133 = arith.mulf %131, %132 : vector<128x64xf32>
    %c0_50 = arith.constant 0 : index
    %c256 = arith.constant 256 : index
    %134 = vector.load %arg11[%c0_50, %c256] : memref<128x512xf32, #tpu.memory_space<vmem>>, vector<128x64xf32>
    tpu.vector_store %arg11[%c0_50, %c256], %133 {strides = array<i32>} : memref<128x512xf32, #tpu.memory_space<vmem>>, vector<128x64xf32>,
    %135 = vector.extract_strided_slice %18 {offsets = [0, 320], sizes = [128, 64], strides = [1, 1]} : vector<128x512xbf16> to vector<128x64xbf16>
    %136 = vector.extract_strided_slice %19 {offsets = [0, 320], sizes = [128, 64], strides = [1, 1]} : vector<128x512xbf16> to vector<128x64xbf16>
    %cst_51 = arith.constant dense<0.000000e+00> : vector<128x128xf32>
    %137 = tpu.matmul %135, %136, %cst_51 {dimension_numbers = #tpu.dot_dimension_numbers<[1], [1], [0], [0], [0, 0, 1, 0], [], []>} : vector<128x64xbf16>, vector<128x64xbf16>, vector<128x128xf32> -> vector<128x128xf32>
    %138 = arith.addf %137, %17 : vector<128x128xf32>
    %cst_52 = arith.constant dense<0xFF800000> : vector<128xf32>
    %139 = vector.multi_reduction <maximumf>, %138, %cst_52 [1] : vector<128x128xf32> to vector<128xf32>
    %140 = vector.shape_cast %139 : vector<128xf32> to vector<128x1xf32>
    %141 = vector.broadcast %140 : vector<128x1xf32> to vector<128x128xf32>
    %142 = arith.subf %138, %141 : vector<128x128xf32>
    %143 = math.exp %142 : vector<128x128xf32>
    %cst_53 = arith.constant dense<0.000000e+00> : vector<128xf32>
    %144 = vector.multi_reduction <add>, %143, %cst_53 [1] : vector<128x128xf32> to vector<128xf32>
    %145 = vector.shape_cast %144 : vector<128xf32> to vector<128x1xf32>
    %146 = tpu.reciprocal %145 {approx = true} : vector<128x1xf32> -> vector<128x1xf32>
    %147 = vector.broadcast %146 : vector<128x1xf32> to vector<128x128xf32>
    %148 = arith.mulf %143, %147 : vector<128x128xf32>
    %cst_54 = arith.constant dense<0.000000e+00> : vector<128xf32>
    %149 = vector.multi_reduction <add>, %148, %cst_54 [1] : vector<128x128xf32> to vector<128xf32>
    %150 = vector.shape_cast %149 : vector<128xf32> to vector<128x1xf32>
    %151 = vector.extract_strided_slice %14 {offsets = [0, 320], sizes = [128, 64], strides = [1, 1]} : vector<128x512xf32> to vector<128x64xf32>
    %cst_55 = arith.constant dense<0.000000e+00> : vector<64xf32>
    %152 = vector.multi_reduction <add>, %151, %cst_55 [0] : vector<128x64xf32> to vector<64xf32>
    %153 = vector.shape_cast %152 : vector<64xf32> to vector<1x64xf32>
    %154 = vector.broadcast %150 : vector<128x1xf32> to vector<128x64xf32>
    %155 = vector.broadcast %153 : vector<1x64xf32> to vector<128x64xf32>
    %156 = arith.mulf %154, %155 : vector<128x64xf32>
    %c0_56 = arith.constant 0 : index
    %c320 = arith.constant 320 : index
    %157 = vector.load %arg11[%c0_56, %c320] : memref<128x512xf32, #tpu.memory_space<vmem>>, vector<128x64xf32>
    tpu.vector_store %arg11[%c0_56, %c320], %156 {strides = array<i32>} : memref<128x512xf32, #tpu.memory_space<vmem>>, vector<128x64xf32>,
    %158 = vector.extract_strided_slice %18 {offsets = [0, 384], sizes = [128, 64], strides = [1, 1]} : vector<128x512xbf16> to vector<128x64xbf16>
    %159 = vector.extract_strided_slice %19 {offsets = [0, 384], sizes = [128, 64], strides = [1, 1]} : vector<128x512xbf16> to vector<128x64xbf16>
    %cst_57 = arith.constant dense<0.000000e+00> : vector<128x128xf32>
    %160 = tpu.matmul %158, %159, %cst_57 {dimension_numbers = #tpu.dot_dimension_numbers<[1], [1], [0], [0], [0, 0, 1, 0], [], []>} : vector<128x64xbf16>, vector<128x64xbf16>, vector<128x128xf32> -> vector<128x128xf32>
    %161 = arith.addf %160, %17 : vector<128x128xf32>
    %cst_58 = arith.constant dense<0xFF800000> : vector<128xf32>
    %162 = vector.multi_reduction <maximumf>, %161, %cst_58 [1] : vector<128x128xf32> to vector<128xf32>
    %163 = vector.shape_cast %162 : vector<128xf32> to vector<128x1xf32>
    %164 = vector.broadcast %163 : vector<128x1xf32> to vector<128x128xf32>
    %165 = arith.subf %161, %164 : vector<128x128xf32>
    %166 = math.exp %165 : vector<128x128xf32>
    %cst_59 = arith.constant dense<0.000000e+00> : vector<128xf32>
    %167 = vector.multi_reduction <add>, %166, %cst_59 [1] : vector<128x128xf32> to vector<128xf32>
    %168 = vector.shape_cast %167 : vector<128xf32> to vector<128x1xf32>
    %169 = tpu.reciprocal %168 {approx = true} : vector<128x1xf32> -> vector<128x1xf32>
    %170 = vector.broadcast %169 : vector<128x1xf32> to vector<128x128xf32>
    %171 = arith.mulf %166, %170 : vector<128x128xf32>
    %cst_60 = arith.constant dense<0.000000e+00> : vector<128xf32>
    %172 = vector.multi_reduction <add>, %171, %cst_60 [1] : vector<128x128xf32> to vector<128xf32>
    %173 = vector.shape_cast %172 : vector<128xf32> to vector<128x1xf32>
    %174 = vector.extract_strided_slice %14 {offsets = [0, 384], sizes = [128, 64], strides = [1, 1]} : vector<128x512xf32> to vector<128x64xf32>
    %cst_61 = arith.constant dense<0.000000e+00> : vector<64xf32>
    %175 = vector.multi_reduction <add>, %174, %cst_61 [0] : vector<128x64xf32> to vector<64xf32>
    %176 = vector.shape_cast %175 : vector<64xf32> to vector<1x64xf32>
    %177 = vector.broadcast %173 : vector<128x1xf32> to vector<128x64xf32>
    %178 = vector.broadcast %176 : vector<1x64xf32> to vector<128x64xf32>
    %179 = arith.mulf %177, %178 : vector<128x64xf32>
    %c0_62 = arith.constant 0 : index
    %c384 = arith.constant 384 : index
    %180 = vector.load %arg11[%c0_62, %c384] : memref<128x512xf32, #tpu.memory_space<vmem>>, vector<128x64xf32>
    tpu.vector_store %arg11[%c0_62, %c384], %179 {strides = array<i32>} : memref<128x512xf32, #tpu.memory_space<vmem>>, vector<128x64xf32>,
    %181 = vector.extract_strided_slice %18 {offsets = [0, 448], sizes = [128, 64], strides = [1, 1]} : vector<128x512xbf16> to vector<128x64xbf16>
    %182 = vector.extract_strided_slice %19 {offsets = [0, 448], sizes = [128, 64], strides = [1, 1]} : vector<128x512xbf16> to vector<128x64xbf16>
    %cst_63 = arith.constant dense<0.000000e+00> : vector<128x128xf32>
    %183 = tpu.matmul %181, %182, %cst_63 {dimension_numbers = #tpu.dot_dimension_numbers<[1], [1], [0], [0], [0, 0, 1, 0], [], []>} : vector<128x64xbf16>, vector<128x64xbf16>, vector<128x128xf32> -> vector<128x128xf32>
    %184 = arith.addf %183, %17 : vector<128x128xf32>
    %cst_64 = arith.constant dense<0xFF800000> : vector<128xf32>
    %185 = vector.multi_reduction <maximumf>, %184, %cst_64 [1] : vector<128x128xf32> to vector<128xf32>
    %186 = vector.shape_cast %185 : vector<128xf32> to vector<128x1xf32>
    %187 = vector.broadcast %186 : vector<128x1xf32> to vector<128x128xf32>
    %188 = arith.subf %184, %187 : vector<128x128xf32>
    %189 = math.exp %188 : vector<128x128xf32>
    %cst_65 = arith.constant dense<0.000000e+00> : vector<128xf32>
    %190 = vector.multi_reduction <add>, %189, %cst_65 [1] : vector<128x128xf32> to vector<128xf32>
    %191 = vector.shape_cast %190 : vector<128xf32> to vector<128x1xf32>
    %192 = tpu.reciprocal %191 {approx = true} : vector<128x1xf32> -> vector<128x1xf32>
    %193 = vector.broadcast %192 : vector<128x1xf32> to vector<128x128xf32>
    %194 = arith.mulf %189, %193 : vector<128x128xf32>
    %cst_66 = arith.constant dense<0.000000e+00> : vector<128xf32>
    %195 = vector.multi_reduction <add>, %194, %cst_66 [1] : vector<128x128xf32> to vector<128xf32>
    %196 = vector.shape_cast %195 : vector<128xf32> to vector<128x1xf32>
    %197 = vector.extract_strided_slice %14 {offsets = [0, 448], sizes = [128, 64], strides = [1, 1]} : vector<128x512xf32> to vector<128x64xf32>
    %cst_67 = arith.constant dense<0.000000e+00> : vector<64xf32>
    %198 = vector.multi_reduction <add>, %197, %cst_67 [0] : vector<128x64xf32> to vector<64xf32>
    %199 = vector.shape_cast %198 : vector<64xf32> to vector<1x64xf32>
    %200 = vector.broadcast %196 : vector<128x1xf32> to vector<128x64xf32>
    %201 = vector.broadcast %199 : vector<1x64xf32> to vector<128x64xf32>
    %202 = arith.mulf %200, %201 : vector<128x64xf32>
    %c0_68 = arith.constant 0 : index
    %c448 = arith.constant 448 : index
    %203 = vector.load %arg11[%c0_68, %c448] : memref<128x512xf32, #tpu.memory_space<vmem>>, vector<128x64xf32>
    tpu.vector_store %arg11[%c0_68, %c448], %202 {strides = array<i32>} : memref<128x512xf32, #tpu.memory_space<vmem>>, vector<128x64xf32>,
    %c0_69 = arith.constant 0 : index
    %c0_70 = arith.constant 0 : index
    %204 = vector.load %arg11[%c0_69, %c0_70] : memref<128x512xf32, #tpu.memory_space<vmem>>, vector<128x512xf32>
    %205 = arith.truncf %204 : vector<128x512xf32> to vector<128x512xbf16>
    %c0_71 = arith.constant 0 : index
    %c0_72 = arith.constant 0 : index
    %206 = vector.load %arg8[%c0_71, %c0_72] : memref<512x512xbf16, #tpu.memory_space<vmem>>, vector<512x512xbf16>
    %cst_73 = arith.constant dense<0.000000e+00> : vector<128x512xf32>
    %207 = tpu.matmul %205, %206, %cst_73 {dimension_numbers = #tpu.dot_dimension_numbers<[1], [0], [0], [1], [0, 0, 1, 1], [], []>} : vector<128x512xbf16>, vector<512x512xbf16>, vector<128x512xf32> -> vector<128x512xf32>
    %c0_74 = arith.constant 0 : index
    %c0_75 = arith.constant 0 : index
    %208 = vector.load %arg9[%c0_74, %c0_75] : memref<1x512xf32, #tpu.memory_space<vmem>>, vector<1x512xf32>
    %209 = vector.broadcast %208 : vector<1x512xf32> to vector<128x512xf32>
    %210 = arith.addf %207, %209 : vector<128x512xf32>
    %c0_76 = arith.constant 0 : index
    %c0_77 = arith.constant 0 : index
    %c0_78 = arith.constant 0 : index
    %211 = vector.load %arg10[%c0_76, %c0_77, %c0_78] : memref<1x128x512xf32, #tpu.memory_space<vmem>>, vector<1x128x512xf32>
    %212 = vector.shape_cast %211 : vector<1x128x512xf32> to vector<128x512xf32>
    %213 = vector.shape_cast %210 : vector<128x512xf32> to vector<1x128x512xf32>
    tpu.vector_store %arg10[%c0_76, %c0_77, %c0_78], %213 {strides = array<i32>} : memref<1x128x512xf32, #tpu.memory_space<vmem>>, vector<1x128x512xf32>,
    return
  }
  func.func @transform_0(%arg0: i32) -> (i32, i32, i32) {
    %c0_i32 = arith.constant 0 : i32
    %c0_i32_0 = arith.constant 0 : i32
    %c0_i32_1 = arith.constant 0 : i32
    return %arg0, %c0_i32, %c0_i32_0 : i32, i32, i32
  }
  func.func @transform_1(%arg0: i32) -> (i32, i32, i32) {
    %c0_i32 = arith.constant 0 : i32
    %c0_i32_0 = arith.constant 0 : i32
    %c0_i32_1 = arith.constant 0 : i32
    return %arg0, %c0_i32, %c0_i32_0 : i32, i32, i32
  }
  func.func @transform_2(%arg0: i32) -> (i32, i32, i32) {
    %c0_i32 = arith.constant 0 : i32
    %c0_i32_0 = arith.constant 0 : i32
    %c0_i32_1 = arith.constant 0 : i32
    return %arg0, %c0_i32, %c0_i32_0 : i32, i32, i32
  }
  func.func @transform_3(%arg0: i32) -> (i32, i32, i32, i32) {
    %c0_i32 = arith.constant 0 : i32
    %c0_i32_0 = arith.constant 0 : i32
    %c0_i32_1 = arith.constant 0 : i32
    %c0_i32_2 = arith.constant 0 : i32
    return %arg0, %c0_i32, %c0_i32_0, %c0_i32_1 : i32, i32, i32, i32
  }
  func.func @transform_4(%arg0: i32) -> (i32, i32) {
    %c0_i32 = arith.constant 0 : i32
    %c0_i32_0 = arith.constant 0 : i32
    %c0_i32_1 = arith.constant 0 : i32
    return %c0_i32, %c0_i32_0 : i32, i32
  }
  func.func @transform_5(%arg0: i32) -> (i32, i32) {
    %c0_i32 = arith.constant 0 : i32
    %c0_i32_0 = arith.constant 0 : i32
    %c0_i32_1 = arith.constant 0 : i32
    return %c0_i32, %c0_i32_0 : i32, i32
  }
  func.func @transform_6(%arg0: i32) -> (i32, i32) {
    %c0_i32 = arith.constant 0 : i32
    %c0_i32_0 = arith.constant 0 : i32
    %c0_i32_1 = arith.constant 0 : i32
    return %c0_i32, %c0_i32_0 : i32, i32
  }
  func.func @transform_7(%arg0: i32) -> (i32, i32) {
    %c0_i32 = arith.constant 0 : i32
    %c0_i32_0 = arith.constant 0 : i32
    %c0_i32_1 = arith.constant 0 : i32
    return %c0_i32, %c0_i32_0 : i32, i32
  }
  func.func @transform_8(%arg0: i32) -> (i32, i32) {
    %c0_i32 = arith.constant 0 : i32
    %c0_i32_0 = arith.constant 0 : i32
    %c0_i32_1 = arith.constant 0 : i32
    return %c0_i32, %c0_i32_0 : i32, i32
  }
  func.func @transform_9(%arg0: i32) -> (i32, i32, i32) {
    %c0_i32 = arith.constant 0 : i32
    %c0_i32_0 = arith.constant 0 : i32
    %c0_i32_1 = arith.constant 0 : i32
    return %arg0, %c0_i32, %c0_i32_0 : i32, i32, i32
  }
}

</mosaic_0001>

<llo_original>
// kernel: self_attention_forward.1
$region0: #{self_attention_forward.1}
  #allocation0 [shape = 'u32[]', space=smem, size = 0x4, offset = 0x4, fixed_abs, tag = 'smem constant byte address 0x4 - core index']
  #allocation1 [shape = 'u32[144,128]{1,0:T(1,128)}', space=vmem, size = 0x12000, scoped, tag = 'internal scratch']
  #allocation2 [shape = 'f32[128,512]{1,0:T(8,128)}', space=vmem, size = 0x40000, scoped, tag = 'scratch operand']
  %s0 = inlined_call_operand.vmem [shape: f32[2,128,512], index: 0, kind: input, shape index: {}]
  %s1 = inlined_call_operand.vmem [shape: f32[2,128,512], index: 1, kind: input, shape index: {}]
  %s2 = inlined_call_operand.vmem [shape: f32[2,128,512], index: 2, kind: input, shape index: {}]
  %s3 = inlined_call_operand.vmem [shape: bf16[2,1,128,128], index: 3, kind: input, shape index: {}]
  %s4 = inlined_call_operand.vmem [shape: bf16[512,512], index: 4, kind: input, shape index: {}]
  %s5 = inlined_call_operand.vmem [shape: bf16[512,512], index: 5, kind: input, shape index: {}]
  %s6 = inlined_call_operand.vmem [shape: bf16[512,512], index: 6, kind: input, shape index: {}]
  %s7 = inlined_call_operand.vmem [shape: bf16[512,512], index: 7, kind: input, shape index: {}]
  %s8 = inlined_call_operand.vmem [shape: f32[1,512], index: 8, kind: input, shape index: {}]
  %s9 = inlined_call_operand.hbm [shape: f32[2,128,512], index: 9, kind: output, shape index: {}]
  %s10 = sld [smem:[#allocation0]]
  $region69: #{self_attention_forward.1} parent=0
    _
  %s12 = ssub.s32 1, %s10
  %s13 = scalar_select 0, %s12, %s10
  $region1: #{self_attention_forward.1} parent=0
    #allocation3 [shape = 'u8[524288]{0}', space=vmem, size = 0x80000, scoped, tag = 'output window, operand 0']
    #allocation4 [shape = 's32[2]{0}', space=sflag, size = 0x8, scoped, tag = 'scoped memory for self_attention_forward.1']
    %14 = vsyncpa [#allocation4], 0
    %s15 = scalar_lea.sflag [#allocation4], 1
    %16 = vsyncpa %s15, 0
    loop: start=0, step=1, limit=4
    $region2: #{self_attention_forward.1} parent=1 // loop_pre_header
      _
    $region3: #{self_attention_forward.1} parent=1 // loop_header
      %s18 = sphi 0, %s22
      %p19 = scmp.ge.s32.totalorder %s18, 4
      %s28 = sphi 0, %s30
      %s31 = sphi 0, %s28
      %s32 = sphi 0, %s31
      %s48 = sphi 0, %s32
      %s54 = sphi 0, %s56
      %s57 = sphi 0, %s54
      %s58 = sphi 0, %s57
      %s74 = sphi 0, %s58
      %s80 = sphi 0, %s82
      %s83 = sphi 0, %s80
      %s84 = sphi 0, %s83
      %s100 = sphi 0, %s84
      %s106 = sphi 0, %s108
      %s109 = sphi 0, %s106
      %s110 = sphi 0, %s109
      %s126 = sphi 0, %s110
      %s130 = sphi 0, %s130
      %s132 = sphi 0, %s130
      %s133 = sphi 0, %s132
      %s147 = sphi 0, %s133
      %s151 = sphi 0, %s151
      %s153 = sphi 0, %s151
      %s154 = sphi 0, %s153
      %s168 = sphi 0, %s154
      %s172 = sphi 0, %s172
      %s174 = sphi 0, %s172
      %s175 = sphi 0, %s174
      %s189 = sphi 0, %s175
      %s193 = sphi 0, %s193
      %s195 = sphi 0, %s193
      %s196 = sphi 0, %s195
      %s210 = sphi 0, %s196
      %s214 = sphi 0, %s214
      %s216 = sphi 0, %s214
      %s217 = sphi 0, %s216
      %s231 = sphi 0, %s217
      %s237 = sphi 0, %s239
      %s240 = sphi 0, %s237
      %s241 = sphi 0, %s240
      %s257 = sphi 0, %s241
    $region4: #{self_attention_forward.1} parent=1 // loop_header_branch
      %21 = sbr.rel (%p19) target = $region8
    $region5: #{self_attention_forward.1} parent=1 // loop_body
      %s23 = ssub.s32 %s18, 1
      %s24 = ssub.s32 %s18, 2
      %s25 = sadd.s32 %s18, 1
      %s26 = ssub.s32 %s18, %s25
      %p27 = scmp.eq.s32.totalorder %s26, 0
      %s29 = sadd.s32 %s28, 1
      %s30 = scalar_select %p27, %s28, %s29
      %p33 = pneg %p27
      %p34 = scmp.eq.s32.totalorder %s18, 1
      %p35 = por %p33, %p34
      %p36 = scmp.ne.s32.totalorder %s28, %s31
      %p37 = scmp.eq.s32.totalorder %s18, 0
      %p38 = por %p36, %p37
      %p39 = scmp.ne.s32.totalorder %s28, %s31
      %p40 = scmp.eq.s32.totalorder %s23, 1
      %p41 = por %p39, %p40
      %p42 = scmp.ne.s32.totalorder %s31, %s32
      %p43 = scmp.eq.s32.totalorder %s23, 0
      %p44 = por %p42, %p43
      %p45 = scmp.ne.s32.totalorder %s31, %s32
      %p46 = scmp.eq.s32.totalorder %s24, 1
      %p47 = por %p45, %p46
      %p49 = scmp.ne.s32.totalorder %s32, %s48
      %p50 = scmp.eq.s32.totalorder %s24, 0
      %p51 = por %p49, %p50
      %s52 = ssub.s32 %s18, %s25
      %p53 = scmp.eq.s32.totalorder %s52, 0
      %s55 = sadd.s32 %s54, 1
      %s56 = scalar_select %p53, %s54, %s55
      %p59 = pneg %p53
      %p60 = scmp.eq.s32.totalorder %s18, 1
      %p61 = por %p59, %p60
      %p62 = scmp.ne.s32.totalorder %s54, %s57
      %p63 = scmp.eq.s32.totalorder %s18, 0
      %p64 = por %p62, %p63
      %p65 = scmp.ne.s32.totalorder %s54, %s57
      %p66 = scmp.eq.s32.totalorder %s23, 1
      %p67 = por %p65, %p66
      %p68 = scmp.ne.s32.totalorder %s57, %s58
      %p69 = scmp.eq.s32.totalorder %s23, 0
      %p70 = por %p68, %p69
      %p71 = scmp.ne.s32.totalorder %s57, %s58
      %p72 = scmp.eq.s32.totalorder %s24, 1
      %p73 = por %p71, %p72
      %p75 = scmp.ne.s32.totalorder %s58, %s74
      %p76 = scmp.eq.s32.totalorder %s24, 0
      %p77 = por %p75, %p76
      %s78 = ssub.s32 %s18, %s25
      %p79 = scmp.eq.s32.totalorder %s78, 0
      %s81 = sadd.s32 %s80, 1
      %s82 = scalar_select %p79, %s80, %s81
      %p85 = pneg %p79
      %p86 = scmp.eq.s32.totalorder %s18, 1
      %p87 = por %p85, %p86
      %p88 = scmp.ne.s32.totalorder %s80, %s83
      %p89 = scmp.eq.s32.totalorder %s18, 0
      %p90 = por %p88, %p89
      %p91 = scmp.ne.s32.totalorder %s80, %s83
      %p92 = scmp.eq.s32.totalorder %s23, 1
      %p93 = por %p91, %p92
      %p94 = scmp.ne.s32.totalorder %s83, %s84
      %p95 = scmp.eq.s32.totalorder %s23, 0
      %p96 = por %p94, %p95
      %p97 = scmp.ne.s32.totalorder %s83, %s84
      %p98 = scmp.eq.s32.totalorder %s24, 1
      %p99 = por %p97, %p98
      %p101 = scmp.ne.s32.totalorder %s84, %s100
      %p102 = scmp.eq.s32.totalorder %s24, 0
      %p103 = por %p101, %p102
      %s104 = ssub.s32 %s18, %s25
      %p105 = scmp.eq.s32.totalorder %s104, 0
      %s107 = sadd.s32 %s106, 1
      %s108 = scalar_select %p105, %s106, %s107
      %p111 = pneg %p105
      %p112 = scmp.eq.s32.totalorder %s18, 1
      %p113 = por %p111, %p112
      %p114 = scmp.ne.s32.totalorder %s106, %s109
      %p115 = scmp.eq.s32.totalorder %s18, 0
      %p116 = por %p114, %p115
      %p117 = scmp.ne.s32.totalorder %s106, %s109
      %p118 = scmp.eq.s32.totalorder %s23, 1
      %p119 = por %p117, %p118
      %p120 = scmp.ne.s32.totalorder %s109, %s110
      %p121 = scmp.eq.s32.totalorder %s23, 0
      %p122 = por %p120, %p121
      %p123 = scmp.ne.s32.totalorder %s109, %s110
      %p124 = scmp.eq.s32.totalorder %s24, 1
      %p125 = por %p123, %p124
      %p127 = scmp.ne.s32.totalorder %s110, %s126
      %p128 = scmp.eq.s32.totalorder %s24, 0
      %p129 = por %p127, %p128
      %s131 = sadd.s32 %s130, 1
      %p134 = scmp.eq.s32.totalorder %s18, 1
      %p135 = scmp.ne.s32.totalorder %s130, %s132
      %p136 = scmp.eq.s32.totalorder %s18, 0
      %p137 = por %p135, %p136
      %p138 = scmp.ne.s32.totalorder %s130, %s132
      %p139 = scmp.eq.s32.totalorder %s23, 1
      %p140 = por %p138, %p139
      %p141 = scmp.ne.s32.totalorder %s132, %s133
      %p142 = scmp.eq.s32.totalorder %s23, 0
      %p143 = por %p141, %p142
      %p144 = scmp.ne.s32.totalorder %s132, %s133
      %p145 = scmp.eq.s32.totalorder %s24, 1
      %p146 = por %p144, %p145
      %p148 = scmp.ne.s32.totalorder %s133, %s147
      %p149 = scmp.eq.s32.totalorder %s24, 0
      %p150 = por %p148, %p149
      %s152 = sadd.s32 %s151, 1
      %p155 = scmp.eq.s32.totalorder %s18, 1
      %p156 = scmp.ne.s32.totalorder %s151, %s153
      %p157 = scmp.eq.s32.totalorder %s18, 0
      %p158 = por %p156, %p157
      %p159 = scmp.ne.s32.totalorder %s151, %s153
      %p160 = scmp.eq.s32.totalorder %s23, 1
      %p161 = por %p159, %p160
      %p162 = scmp.ne.s32.totalorder %s153, %s154
      %p163 = scmp.eq.s32.totalorder %s23, 0
      %p164 = por %p162, %p163
      %p165 = scmp.ne.s32.totalorder %s153, %s154
      %p166 = scmp.eq.s32.totalorder %s24, 1
      %p167 = por %p165, %p166
      %p169 = scmp.ne.s32.totalorder %s154, %s168
      %p170 = scmp.eq.s32.totalorder %s24, 0
      %p171 = por %p169, %p170
      %s173 = sadd.s32 %s172, 1
      %p176 = scmp.eq.s32.totalorder %s18, 1
      %p177 = scmp.ne.s32.totalorder %s172, %s174
      %p178 = scmp.eq.s32.totalorder %s18, 0
      %p179 = por %p177, %p178
      %p180 = scmp.ne.s32.totalorder %s172, %s174
      %p181 = scmp.eq.s32.totalorder %s23, 1
      %p182 = por %p180, %p181
      %p183 = scmp.ne.s32.totalorder %s174, %s175
      %p184 = scmp.eq.s32.totalorder %s23, 0
      %p185 = por %p183, %p184
      %p186 = scmp.ne.s32.totalorder %s174, %s175
      %p187 = scmp.eq.s32.totalorder %s24, 1
      %p188 = por %p186, %p187
      %p190 = scmp.ne.s32.totalorder %s175, %s189
      %p191 = scmp.eq.s32.totalorder %s24, 0
      %p192 = por %p190, %p191
      %s194 = sadd.s32 %s193, 1
      %p197 = scmp.eq.s32.totalorder %s18, 1
      %p198 = scmp.ne.s32.totalorder %s193, %s195
      %p199 = scmp.eq.s32.totalorder %s18, 0
      %p200 = por %p198, %p199
      %p201 = scmp.ne.s32.totalorder %s193, %s195
      %p202 = scmp.eq.s32.totalorder %s23, 1
      %p203 = por %p201, %p202
      %p204 = scmp.ne.s32.totalorder %s195, %s196
      %p205 = scmp.eq.s32.totalorder %s23, 0
      %p206 = por %p204, %p205
      %p207 = scmp.ne.s32.totalorder %s195, %s196
      %p208 = scmp.eq.s32.totalorder %s24, 1
      %p209 = por %p207, %p208
      %p211 = scmp.ne.s32.totalorder %s196, %s210
      %p212 = scmp.eq.s32.totalorder %s24, 0
      %p213 = por %p211, %p212
      %s215 = sadd.s32 %s214, 1
      %p218 = scmp.eq.s32.totalorder %s18, 1
      %p219 = scmp.ne.s32.totalorder %s214, %s216
      %p220 = scmp.eq.s32.totalorder %s18, 0
      %p221 = por %p219, %p220
      %p222 = scmp.ne.s32.totalorder %s214, %s216
      %p223 = scmp.eq.s32.totalorder %s23, 1
      %p224 = por %p222, %p223
      %p225 = scmp.ne.s32.totalorder %s216, %s217
      %p226 = scmp.eq.s32.totalorder %s23, 0
      %p227 = por %p225, %p226
      %p228 = scmp.ne.s32.totalorder %s216, %s217
      %p229 = scmp.eq.s32.totalorder %s24, 1
      %p230 = por %p228, %p229
      %p232 = scmp.ne.s32.totalorder %s217, %s231
      %p233 = scmp.eq.s32.totalorder %s24, 0
      %p234 = por %p232, %p233
      %s235 = ssub.s32 %s18, %s25
      %p236 = scmp.eq.s32.totalorder %s235, 0
      %s238 = sadd.s32 %s237, 1
      %s239 = scalar_select %p236, %s237, %s238
      %p242 = pneg %p236
      %p243 = scmp.eq.s32.totalorder %s18, 1
      %p244 = por %p242, %p243
      %p245 = scmp.ne.s32.totalorder %s237, %s240
      %p246 = scmp.eq.s32.totalorder %s18, 0
      %p247 = por %p245, %p246
      %p248 = scmp.ne.s32.totalorder %s237, %s240
      %p249 = scmp.eq.s32.totalorder %s23, 1
      %p250 = por %p248, %p249
      %p251 = scmp.ne.s32.totalorder %s240, %s241
      %p252 = scmp.eq.s32.totalorder %s23, 0
      %p253 = por %p251, %p252
      %p254 = scmp.ne.s32.totalorder %s240, %s241
      %p255 = scmp.eq.s32.totalorder %s24, 1
      %p256 = por %p254, %p255
      %p258 = scmp.ne.s32.totalorder %s241, %s257
      %p259 = scmp.eq.s32.totalorder %s24, 0
      %p260 = por %p258, %p259
      %p261 = scmp.le.s32.totalorder 1, %s18
      %p262 = scmp.lt.s32.totalorder %s18, 3
      %p263 = pnand %p261, %p262
      %p264 = pneg %p263
      // Predicated region
      $region9: #{self_attention_forward.1} parent=5 // pred_check
        _
      $region10: #{self_attention_forward.1} parent=5 // pred_check_branch
        %266 = sbr.rel (%p263) target = $region12
      $region11: #{self_attention_forward.1} parent=5 // pred_region
        %s267 = ssub.s32 %s18, 1
        // Predicated region
        $region13: #{self_attention_forward.1} parent=11 // pred_check
          %p268 = pneg %p143
        $region14: #{self_attention_forward.1} parent=11 // pred_check_branch
          %270 = sbr.rel (%p268) target = $region16
        $region15: #{self_attention_forward.1} parent=11 // pred_region
          _
        $region16: #{self_attention_forward.1} parent=11 // pred_fallthru
          _
        // Predicated region
        $region17: #{self_attention_forward.1} parent=11 // pred_check
          %p271 = pneg %p164
        $region18: #{self_attention_forward.1} parent=11 // pred_check_branch
          %273 = sbr.rel (%p271) target = $region20
        $region19: #{self_attention_forward.1} parent=11 // pred_region
          _
        $region20: #{self_attention_forward.1} parent=11 // pred_fallthru
          _
        // Predicated region
        $region21: #{self_attention_forward.1} parent=11 // pred_check
          %p274 = pneg %p185
        $region22: #{self_attention_forward.1} parent=11 // pred_check_branch
          %276 = sbr.rel (%p274) target = $region24
        $region23: #{self_attention_forward.1} parent=11 // pred_region
          _
        $region24: #{self_attention_forward.1} parent=11 // pred_fallthru
          _
        // Predicated region
        $region25: #{self_attention_forward.1} parent=11 // pred_check
          %p277 = pneg %p206
        $region26: #{self_attention_forward.1} parent=11 // pred_check_branch
          %279 = sbr.rel (%p277) target = $region28
        $region27: #{self_attention_forward.1} parent=11 // pred_region
          _
        $region28: #{self_attention_forward.1} parent=11 // pred_fallthru
          _
        // Predicated region
        $region29: #{self_attention_forward.1} parent=11 // pred_check
          %p280 = pneg %p227
        $region30: #{self_attention_forward.1} parent=11 // pred_check_branch
          %282 = sbr.rel (%p280) target = $region32
        $region31: #{self_attention_forward.1} parent=11 // pred_region
          _
        $region32: #{self_attention_forward.1} parent=11 // pred_fallthru
          _
      $region12: #{self_attention_forward.1} parent=5 // pred_fallthru
        _
      %p283 = scmp.lt.s32.totalorder %s18, 2
      // Predicated region
      $region33: #{self_attention_forward.1} parent=5 // pred_check
        %p284 = pneg %p283
      $region34: #{self_attention_forward.1} parent=5 // pred_check_branch
        %286 = sbr.rel (%p284) target = $region36
      $region35: #{self_attention_forward.1} parent=5 // pred_region
        // Predicated region
        $region37: #{self_attention_forward.1} parent=35 // pred_check
          %p287 = pneg %p38
        $region38: #{self_attention_forward.1} parent=35 // pred_check_branch
          %289 = sbr.rel (%p287) target = $region40
        $region39: #{self_attention_forward.1} parent=35 // pred_region
          %p290 = scmp.lt.s32.totalorder %s18, 1
          %s291 = scalar_select %p290, %s18, 1
          %s292 = smul.addr %s291, 64
          %s293 = smul.addr %s292, 8
          %s294 = scalar_lea.vmem %s0, %s293
        $region40: #{self_attention_forward.1} parent=35 // pred_fallthru
          _
        // Predicated region
        $region41: #{self_attention_forward.1} parent=35 // pred_check
          %p295 = pneg %p64
        $region42: #{self_attention_forward.1} parent=35 // pred_check_branch
          %297 = sbr.rel (%p295) target = $region44
        $region43: #{self_attention_forward.1} parent=35 // pred_region
          %p298 = scmp.lt.s32.totalorder %s18, 1
          %s299 = scalar_select %p298, %s18, 1
          %s300 = smul.addr %s299, 64
          %s301 = smul.addr %s300, 8
          %s302 = scalar_lea.vmem %s1, %s301
        $region44: #{self_attention_forward.1} parent=35 // pred_fallthru
          _
        // Predicated region
        $region45: #{self_attention_forward.1} parent=35 // pred_check
          %p303 = pneg %p90
        $region46: #{self_attention_forward.1} parent=35 // pred_check_branch
          %305 = sbr.rel (%p303) target = $region48
        $region47: #{self_attention_forward.1} parent=35 // pred_region
          %p306 = scmp.lt.s32.totalorder %s18, 1
          %s307 = scalar_select %p306, %s18, 1
          %s308 = smul.addr %s307, 64
          %s309 = smul.addr %s308, 8
          %s310 = scalar_lea.vmem %s2, %s309
        $region48: #{self_attention_forward.1} parent=35 // pred_fallthru
          _
        // Predicated region
        $region49: #{self_attention_forward.1} parent=35 // pred_check
          %p311 = pneg %p116
        $region50: #{self_attention_forward.1} parent=35 // pred_check_branch
          %313 = sbr.rel (%p311) target = $region52
        $region51: #{self_attention_forward.1} parent=35 // pred_region
          %p314 = scmp.lt.s32.totalorder %s18, 1
          %s315 = scalar_select %p314, %s18, 1
          %s316 = smul.addr %s315, 16
          %s317 = smul.addr %s316, 4
          %s318 = scalar_lea.vmem %s3, %s317
        $region52: #{self_attention_forward.1} parent=35 // pred_fallthru
          _
      $region36: #{self_attention_forward.1} parent=5 // pred_fallthru
        _
      %p319 = scmp.le.s32.totalorder 1, %s18
      %p320 = scmp.lt.s32.totalorder %s18, 3
      %p321 = pnand %p319, %p320
      %p322 = pneg %p321
      // Predicated region
      $region53: #{self_attention_forward.1} parent=5 // pred_check
        _
      $region54: #{self_attention_forward.1} parent=5 // pred_check_branch
        %324 = sbr.rel (%p321) target = $region56
      $region55: #{self_attention_forward.1} parent=5 // pred_region
        %s325 = ssub.s32 %s18, 1
        %p326 = scmp.lt.s32.totalorder %s23, 1
        %s327 = scalar_select %p326, %s23, 1
        %s328 = smul.addr %s327, 64
        %s329 = smul.addr %s328, 8
        %s330 = scalar_lea.vmem %s0, %s329
        %p331 = pneg %p44
        %p332 = pneg %p41
        %p333 = scmp.lt.s32.totalorder %s23, 1
        %s334 = scalar_select %p333, %s23, 1
        %s335 = smul.addr %s334, 64
        %s336 = smul.addr %s335, 8
        %s337 = scalar_lea.vmem %s1, %s336
        %p338 = pneg %p70
        %p339 = pneg %p67
        %p340 = scmp.lt.s32.totalorder %s23, 1
        %s341 = scalar_select %p340, %s23, 1
        %s342 = smul.addr %s341, 64
        %s343 = smul.addr %s342, 8
        %s344 = scalar_lea.vmem %s2, %s343
        %p345 = pneg %p96
        %p346 = pneg %p93
        %p347 = scmp.lt.s32.totalorder %s23, 1
        %s348 = scalar_select %p347, %s23, 1
        %s349 = smul.addr %s348, 16
        %s350 = smul.addr %s349, 4
        %s351 = scalar_lea.vmem %s3, %s350
        %p352 = pneg %p122
        %p353 = pneg %p119
        %p354 = pneg %p143
        %p355 = pneg %p140
        %p356 = pneg %p164
        %p357 = pneg %p161
        %p358 = pneg %p185
        %p359 = pneg %p182
        %p360 = pneg %p206
        %p361 = pneg %p203
        %p362 = pneg %p227
        %p363 = pneg %p224
        %p364 = pneg %p253
        %p365 = pneg %p250
        %s366 = sand.u32 %s240, 1
        %s367 = scalar_lea.sflag [#allocation4], %s366
        %s368 = sand.u32 %s240, 1
        %s369 = smul.addr %s368, 512
        %s370 = scalar_lea.vmem [#allocation3], %s369
        %p371 = scmp.lt.s32.totalorder %s23, 1
        %s372 = scalar_select %p371, %s23, 1
        %s373 = smul.addr %s372, 64
        %s374 = smul.addr %s373, 8
        %s375 = scalar_lea.vmem %s0, %s374
        %p376 = scmp.lt.s32.totalorder %s23, 1
        %s377 = scalar_select %p376, %s23, 1
        %s378 = smul.addr %s377, 64
        %s379 = smul.addr %s378, 8
        %s380 = scalar_lea.vmem %s1, %s379
        %p381 = scmp.lt.s32.totalorder %s23, 1
        %s382 = scalar_select %p381, %s23, 1
        %s383 = smul.addr %s382, 64
        %s384 = smul.addr %s383, 8
        %s385 = scalar_lea.vmem %s2, %s384
        %p386 = scmp.lt.s32.totalorder %s23, 1
        %s387 = scalar_select %p386, %s23, 1
        %s388 = smul.addr %s387, 16
        %s389 = smul.addr %s388, 4
        %s390 = scalar_lea.vmem %s3, %s389
        %v392 = vld [vmem:[%s375] sm:$0xff]
        %v393 = vld [vmem:[%s375 + $0x8] sm:$0xff]
        %v394 = vld [vmem:[%s375 + $0x10] sm:$0xff]
        %v395 = vld [vmem:[%s375 + $0x18] sm:$0xff]
        %v396 = vld [vmem:[%s375 + $0x20] sm:$0xff]
        %v397 = vld [vmem:[%s375 + $0x28] sm:$0xff]
        %v398 = vld [vmem:[%s375 + $0x30] sm:$0xff]
        %v399 = vld [vmem:[%s375 + $0x38] sm:$0xff]
        %v400 = vld [vmem:[%s375 + $0x40] sm:$0xff]
        %v401 = vld [vmem:[%s375 + $0x48] sm:$0xff]
        %v402 = vld [vmem:[%s375 + $0x50] sm:$0xff]
        %v403 = vld [vmem:[%s375 + $0x58] sm:$0xff]
        %v404 = vld [vmem:[%s375 + $0x60] sm:$0xff]
        %v405 = vld [vmem:[%s375 + $0x68] sm:$0xff]
        %v406 = vld [vmem:[%s375 + $0x70] sm:$0xff]
        %v407 = vld [vmem:[%s375 + $0x78] sm:$0xff]
        %v408 = vld [vmem:[%s375 + $0x80] sm:$0xff]
        %v409 = vld [vmem:[%s375 + $0x88] sm:$0xff]
        %v410 = vld [vmem:[%s375 + $0x90] sm:$0xff]
        %v411 = vld [vmem:[%s375 + $0x98] sm:$0xff]
        %v412 = vld [vmem:[%s375 + $0xa0] sm:$0xff]
        %v413 = vld [vmem:[%s375 + $0xa8] sm:$0xff]
        %v414 = vld [vmem:[%s375 + $0xb0] sm:$0xff]
        %v415 = vld [vmem:[%s375 + $0xb8] sm:$0xff]
        %v416 = vld [vmem:[%s375 + $0xc0] sm:$0xff]
        %v417 = vld [vmem:[%s375 + $0xc8] sm:$0xff]
        %v418 = vld [vmem:[%s375 + $0xd0] sm:$0xff]
        %v419 = vld [vmem:[%s375 + $0xd8] sm:$0xff]
        %v420 = vld [vmem:[%s375 + $0xe0] sm:$0xff]
        %v421 = vld [vmem:[%s375 + $0xe8] sm:$0xff]
        %v422 = vld [vmem:[%s375 + $0xf0] sm:$0xff]
        %v423 = vld [vmem:[%s375 + $0xf8] sm:$0xff]
        %v424 = vld [vmem:[%s375 + $0x100] sm:$0xff]
        %v425 = vld [vmem:[%s375 + $0x108] sm:$0xff]
        %v426 = vld [vmem:[%s375 + $0x110] sm:$0xff]
        %v427 = vld [vmem:[%s375 + $0x118] sm:$0xff]
        %v428 = vld [vmem:[%s375 + $0x120] sm:$0xff]
        %v429 = vld [vmem:[%s375 + $0x128] sm:$0xff]
        %v430 = vld [vmem:[%s375 + $0x130] sm:$0xff]
        %v431 = vld [vmem:[%s375 + $0x138] sm:$0xff]
        %v432 = vld [vmem:[%s375 + $0x140] sm:$0xff]
        %v433 = vld [vmem:[%s375 + $0x148] sm:$0xff]
        %v434 = vld [vmem:[%s375 + $0x150] sm:$0xff]
        %v435 = vld [vmem:[%s375 + $0x158] sm:$0xff]
        %v436 = vld [vmem:[%s375 + $0x160] sm:$0xff]
        %v437 = vld [vmem:[%s375 + $0x168] sm:$0xff]
        %v438 = vld [vmem:[%s375 + $0x170] sm:$0xff]
        %v439 = vld [vmem:[%s375 + $0x178] sm:$0xff]
        %v440 = vld [vmem:[%s375 + $0x180] sm:$0xff]
        %v441 = vld [vmem:[%s375 + $0x188] sm:$0xff]
        %v442 = vld [vmem:[%s375 + $0x190] sm:$0xff]
        %v443 = vld [vmem:[%s375 + $0x198] sm:$0xff]
        %v444 = vld [vmem:[%s375 + $0x1a0] sm:$0xff]
        %v445 = vld [vmem:[%s375 + $0x1a8] sm:$0xff]
        %v446 = vld [vmem:[%s375 + $0x1b0] sm:$0xff]
        %v447 = vld [vmem:[%s375 + $0x1b8] sm:$0xff]
        %v448 = vld [vmem:[%s375 + $0x1c0] sm:$0xff]
        %v449 = vld [vmem:[%s375 + $0x1c8] sm:$0xff]
        %v450 = vld [vmem:[%s375 + $0x1d0] sm:$0xff]
        %v451 = vld [vmem:[%s375 + $0x1d8] sm:$0xff]
        %v452 = vld [vmem:[%s375 + $0x1e0] sm:$0xff]
        %v453 = vld [vmem:[%s375 + $0x1e8] sm:$0xff]
        %v454 = vld [vmem:[%s375 + $0x1f0] sm:$0xff]
        %v455 = vld [vmem:[%s375 + $0x1f8] sm:$0xff]
        %v456 = vpack.c.bf16 %v396, %v392
        %v457 = vpack.c.bf16 %v397, %v393
        %v458 = vpack.c.bf16 %v398, %v394
        %v459 = vpack.c.bf16 %v399, %v395
        %v460 = vpack.c.bf16 %v404, %v400
        %v461 = vpack.c.bf16 %v405, %v401
        %v462 = vpack.c.bf16 %v406, %v402
        %v463 = vpack.c.bf16 %v407, %v403
        %v464 = vpack.c.bf16 %v412, %v408
        %v465 = vpack.c.bf16 %v413, %v409
        %v466 = vpack.c.bf16 %v414, %v410
        %v467 = vpack.c.bf16 %v415, %v411
        %v468 = vpack.c.bf16 %v420, %v416
        %v469 = vpack.c.bf16 %v421, %v417
        %v470 = vpack.c.bf16 %v422, %v418
        %v471 = vpack.c.bf16 %v423, %v419
        %v472 = vpack.c.bf16 %v428, %v424
        %v473 = vpack.c.bf16 %v429, %v425
        %v474 = vpack.c.bf16 %v430, %v426
        %v475 = vpack.c.bf16 %v431, %v427
        %v476 = vpack.c.bf16 %v436, %v432
        %v477 = vpack.c.bf16 %v437, %v433
        %v478 = vpack.c.bf16 %v438, %v434
        %v479 = vpack.c.bf16 %v439, %v435
        %v480 = vpack.c.bf16 %v444, %v440
        %v481 = vpack.c.bf16 %v445, %v441
        %v482 = vpack.c.bf16 %v446, %v442
        %v483 = vpack.c.bf16 %v447, %v443
        %v484 = vpack.c.bf16 %v452, %v448
        %v485 = vpack.c.bf16 %v453, %v449
        %v486 = vpack.c.bf16 %v454, %v450
        %v487 = vpack.c.bf16 %v455, %v451
        %v488 = vld [vmem:[%s380] sm:$0xff]
        %v489 = vld [vmem:[%s380 + $0x8] sm:$0xff]
        %v490 = vld [vmem:[%s380 + $0x10] sm:$0xff]
        %v491 = vld [vmem:[%s380 + $0x18] sm:$0xff]
        %v492 = vld [vmem:[%s380 + $0x20] sm:$0xff]
        %v493 = vld [vmem:[%s380 + $0x28] sm:$0xff]
        %v494 = vld [vmem:[%s380 + $0x30] sm:$0xff]
        %v495 = vld [vmem:[%s380 + $0x38] sm:$0xff]
        %v496 = vld [vmem:[%s380 + $0x40] sm:$0xff]
        %v497 = vld [vmem:[%s380 + $0x48] sm:$0xff]
        %v498 = vld [vmem:[%s380 + $0x50] sm:$0xff]
        %v499 = vld [vmem:[%s380 + $0x58] sm:$0xff]
        %v500 = vld [vmem:[%s380 + $0x60] sm:$0xff]
        %v501 = vld [vmem:[%s380 + $0x68] sm:$0xff]
        %v502 = vld [vmem:[%s380 + $0x70] sm:$0xff]
        %v503 = vld [vmem:[%s380 + $0x78] sm:$0xff]
        %v504 = vld [vmem:[%s380 + $0x80] sm:$0xff]
        %v505 = vld [vmem:[%s380 + $0x88] sm:$0xff]
        %v506 = vld [vmem:[%s380 + $0x90] sm:$0xff]
        %v507 = vld [vmem:[%s380 + $0x98] sm:$0xff]
        %v508 = vld [vmem:[%s380 + $0xa0] sm:$0xff]
        %v509 = vld [vmem:[%s380 + $0xa8] sm:$0xff]
        %v510 = vld [vmem:[%s380 + $0xb0] sm:$0xff]
        %v511 = vld [vmem:[%s380 + $0xb8] sm:$0xff]
        %v512 = vld [vmem:[%s380 + $0xc0] sm:$0xff]
        %v513 = vld [vmem:[%s380 + $0xc8] sm:$0xff]
        %v514 = vld [vmem:[%s380 + $0xd0] sm:$0xff]
        %v515 = vld [vmem:[%s380 + $0xd8] sm:$0xff]
        %v516 = vld [vmem:[%s380 + $0xe0] sm:$0xff]
        %v517 = vld [vmem:[%s380 + $0xe8] sm:$0xff]
        %v518 = vld [vmem:[%s380 + $0xf0] sm:$0xff]
        %v519 = vld [vmem:[%s380 + $0xf8] sm:$0xff]
        %v520 = vld [vmem:[%s380 + $0x100] sm:$0xff]
        %v521 = vld [vmem:[%s380 + $0x108] sm:$0xff]
        %v522 = vld [vmem:[%s380 + $0x110] sm:$0xff]
        %v523 = vld [vmem:[%s380 + $0x118] sm:$0xff]
        %v524 = vld [vmem:[%s380 + $0x120] sm:$0xff]
        %v525 = vld [vmem:[%s380 + $0x128] sm:$0xff]
        %v526 = vld [vmem:[%s380 + $0x130] sm:$0xff]
        %v527 = vld [vmem:[%s380 + $0x138] sm:$0xff]
        %v528 = vld [vmem:[%s380 + $0x140] sm:$0xff]
        %v529 = vld [vmem:[%s380 + $0x148] sm:$0xff]
        %v530 = vld [vmem:[%s380 + $0x150] sm:$0xff]
        %v531 = vld [vmem:[%s380 + $0x158] sm:$0xff]
        %v532 = vld [vmem:[%s380 + $0x160] sm:$0xff]
        %v533 = vld [vmem:[%s380 + $0x168] sm:$0xff]
        %v534 = vld [vmem:[%s380 + $0x170] sm:$0xff]
        %v535 = vld [vmem:[%s380 + $0x178] sm:$0xff]
        %v536 = vld [vmem:[%s380 + $0x180] sm:$0xff]
        %v537 = vld [vmem:[%s380 + $0x188] sm:$0xff]
        %v538 = vld [vmem:[%s380 + $0x190] sm:$0xff]
        %v539 = vld [vmem:[%s380 + $0x198] sm:$0xff]
        %v540 = vld [vmem:[%s380 + $0x1a0] sm:$0xff]
        %v541 = vld [vmem:[%s380 + $0x1a8] sm:$0xff]
        %v542 = vld [vmem:[%s380 + $0x1b0] sm:$0xff]
        %v543 = vld [vmem:[%s380 + $0x1b8] sm:$0xff]
        %v544 = vld [vmem:[%s380 + $0x1c0] sm:$0xff]
        %v545 = vld [vmem:[%s380 + $0x1c8] sm:$0xff]
        %v546 = vld [vmem:[%s380 + $0x1d0] sm:$0xff]
        %v547 = vld [vmem:[%s380 + $0x1d8] sm:$0xff]
        %v548 = vld [vmem:[%s380 + $0x1e0] sm:$0xff]
        %v549 = vld [vmem:[%s380 + $0x1e8] sm:$0xff]
        %v550 = vld [vmem:[%s380 + $0x1f0] sm:$0xff]
        %v551 = vld [vmem:[%s380 + $0x1f8] sm:$0xff]
        %v552 = vpack.c.bf16 %v492, %v488
        %v553 = vpack.c.bf16 %v493, %v489
        %v554 = vpack.c.bf16 %v494, %v490
        %v555 = vpack.c.bf16 %v495, %v491
        %v556 = vpack.c.bf16 %v500, %v496
        %v557 = vpack.c.bf16 %v501, %v497
        %v558 = vpack.c.bf16 %v502, %v498
        %v559 = vpack.c.bf16 %v503, %v499
        %v560 = vpack.c.bf16 %v508, %v504
        %v561 = vpack.c.bf16 %v509, %v505
        %v562 = vpack.c.bf16 %v510, %v506
        %v563 = vpack.c.bf16 %v511, %v507
        %v564 = vpack.c.bf16 %v516, %v512
        %v565 = vpack.c.bf16 %v517, %v513
        %v566 = vpack.c.bf16 %v518, %v514
        %v567 = vpack.c.bf16 %v519, %v515
        %v568 = vpack.c.bf16 %v524, %v520
        %v569 = vpack.c.bf16 %v525, %v521
        %v570 = vpack.c.bf16 %v526, %v522
        %v571 = vpack.c.bf16 %v527, %v523
        %v572 = vpack.c.bf16 %v532, %v528
        %v573 = vpack.c.bf16 %v533, %v529
        %v574 = vpack.c.bf16 %v534, %v530
        %v575 = vpack.c.bf16 %v535, %v531
        %v576 = vpack.c.bf16 %v540, %v536
        %v577 = vpack.c.bf16 %v541, %v537
        %v578 = vpack.c.bf16 %v542, %v538
        %v579 = vpack.c.bf16 %v543, %v539
        %v580 = vpack.c.bf16 %v548, %v544
        %v581 = vpack.c.bf16 %v549, %v545
        %v582 = vpack.c.bf16 %v550, %v546
        %v583 = vpack.c.bf16 %v551, %v547
        %v584 = vld [vmem:[%s385] sm:$0xff]
        %v585 = vld [vmem:[%s385 + $0x8] sm:$0xff]
        %v586 = vld [vmem:[%s385 + $0x10] sm:$0xff]
        %v587 = vld [vmem:[%s385 + $0x18] sm:$0xff]
        %v588 = vld [vmem:[%s385 + $0x20] sm:$0xff]
        %v589 = vld [vmem:[%s385 + $0x28] sm:$0xff]
        %v590 = vld [vmem:[%s385 + $0x30] sm:$0xff]
        %v591 = vld [vmem:[%s385 + $0x38] sm:$0xff]
        %v592 = vld [vmem:[%s385 + $0x40] sm:$0xff]
        %v593 = vld [vmem:[%s385 + $0x48] sm:$0xff]
        %v594 = vld [vmem:[%s385 + $0x50] sm:$0xff]
        %v595 = vld [vmem:[%s385 + $0x58] sm:$0xff]
        %v596 = vld [vmem:[%s385 + $0x60] sm:$0xff]
        %v597 = vld [vmem:[%s385 + $0x68] sm:$0xff]
        %v598 = vld [vmem:[%s385 + $0x70] sm:$0xff]
        %v599 = vld [vmem:[%s385 + $0x78] sm:$0xff]
        %v600 = vld [vmem:[%s385 + $0x80] sm:$0xff]
        %v601 = vld [vmem:[%s385 + $0x88] sm:$0xff]
        %v602 = vld [vmem:[%s385 + $0x90] sm:$0xff]
        %v603 = vld [vmem:[%s385 + $0x98] sm:$0xff]
        %v604 = vld [vmem:[%s385 + $0xa0] sm:$0xff]
        %v605 = vld [vmem:[%s385 + $0xa8] sm:$0xff]
        %v606 = vld [vmem:[%s385 + $0xb0] sm:$0xff]
        %v607 = vld [vmem:[%s385 + $0xb8] sm:$0xff]
        %v608 = vld [vmem:[%s385 + $0xc0] sm:$0xff]
        %v609 = vld [vmem:[%s385 + $0xc8] sm:$0xff]
        %v610 = vld [vmem:[%s385 + $0xd0] sm:$0xff]
        %v611 = vld [vmem:[%s385 + $0xd8] sm:$0xff]
        %v612 = vld [vmem:[%s385 + $0xe0] sm:$0xff]
        %v613 = vld [vmem:[%s385 + $0xe8] sm:$0xff]
        %v614 = vld [vmem:[%s385 + $0xf0] sm:$0xff]
        %v615 = vld [vmem:[%s385 + $0xf8] sm:$0xff]
        %v616 = vld [vmem:[%s385 + $0x100] sm:$0xff]
        %v617 = vld [vmem:[%s385 + $0x108] sm:$0xff]
        %v618 = vld [vmem:[%s385 + $0x110] sm:$0xff]
        %v619 = vld [vmem:[%s385 + $0x118] sm:$0xff]
        %v620 = vld [vmem:[%s385 + $0x120] sm:$0xff]
        %v621 = vld [vmem:[%s385 + $0x128] sm:$0xff]
        %v622 = vld [vmem:[%s385 + $0x130] sm:$0xff]
        %v623 = vld [vmem:[%s385 + $0x138] sm:$0xff]
        %v624 = vld [vmem:[%s385 + $0x140] sm:$0xff]
        %v625 = vld [vmem:[%s385 + $0x148] sm:$0xff]
        %v626 = vld [vmem:[%s385 + $0x150] sm:$0xff]
        %v627 = vld [vmem:[%s385 + $0x158] sm:$0xff]
        %v628 = vld [vmem:[%s385 + $0x160] sm:$0xff]
        %v629 = vld [vmem:[%s385 + $0x168] sm:$0xff]
        %v630 = vld [vmem:[%s385 + $0x170] sm:$0xff]
        %v631 = vld [vmem:[%s385 + $0x178] sm:$0xff]
        %v632 = vld [vmem:[%s385 + $0x180] sm:$0xff]
        %v633 = vld [vmem:[%s385 + $0x188] sm:$0xff]
        %v634 = vld [vmem:[%s385 + $0x190] sm:$0xff]
        %v635 = vld [vmem:[%s385 + $0x198] sm:$0xff]
        %v636 = vld [vmem:[%s385 + $0x1a0] sm:$0xff]
        %v637 = vld [vmem:[%s385 + $0x1a8] sm:$0xff]
        %v638 = vld [vmem:[%s385 + $0x1b0] sm:$0xff]
        %v639 = vld [vmem:[%s385 + $0x1b8] sm:$0xff]
        %v640 = vld [vmem:[%s385 + $0x1c0] sm:$0xff]
        %v641 = vld [vmem:[%s385 + $0x1c8] sm:$0xff]
        %v642 = vld [vmem:[%s385 + $0x1d0] sm:$0xff]
        %v643 = vld [vmem:[%s385 + $0x1d8] sm:$0xff]
        %v644 = vld [vmem:[%s385 + $0x1e0] sm:$0xff]
        %v645 = vld [vmem:[%s385 + $0x1e8] sm:$0xff]
        %v646 = vld [vmem:[%s385 + $0x1f0] sm:$0xff]
        %v647 = vld [vmem:[%s385 + $0x1f8] sm:$0xff]
        %v648 = vpack.c.bf16 %v588, %v584
        %v649 = vpack.c.bf16 %v589, %v585
        %v650 = vpack.c.bf16 %v590, %v586
        %v651 = vpack.c.bf16 %v591, %v587
        %v652 = vpack.c.bf16 %v596, %v592
        %v653 = vpack.c.bf16 %v597, %v593
        %v654 = vpack.c.bf16 %v598, %v594
        %v655 = vpack.c.bf16 %v599, %v595
        %v656 = vpack.c.bf16 %v604, %v600
        %v657 = vpack.c.bf16 %v605, %v601
        %v658 = vpack.c.bf16 %v606, %v602
        %v659 = vpack.c.bf16 %v607, %v603
        %v660 = vpack.c.bf16 %v612, %v608
        %v661 = vpack.c.bf16 %v613, %v609
        %v662 = vpack.c.bf16 %v614, %v610
        %v663 = vpack.c.bf16 %v615, %v611
        %v664 = vpack.c.bf16 %v620, %v616
        %v665 = vpack.c.bf16 %v621, %v617
        %v666 = vpack.c.bf16 %v622, %v618
        %v667 = vpack.c.bf16 %v623, %v619
        %v668 = vpack.c.bf16 %v628, %v624
        %v669 = vpack.c.bf16 %v629, %v625
        %v670 = vpack.c.bf16 %v630, %v626
        %v671 = vpack.c.bf16 %v631, %v627
        %v672 = vpack.c.bf16 %v636, %v632
        %v673 = vpack.c.bf16 %v637, %v633
        %v674 = vpack.c.bf16 %v638, %v634
        %v675 = vpack.c.bf16 %v639, %v635
        %v676 = vpack.c.bf16 %v644, %v640
        %v677 = vpack.c.bf16 %v645, %v641
        %v678 = vpack.c.bf16 %v646, %v642
        %v679 = vpack.c.bf16 %v647, %v643
        %v680 = vld [vmem:[%s4] sm:$0xff]
        %v681 = vld [vmem:[%s4 + $0x8] sm:$0xff]
        %v682 = vld [vmem:[%s4 + $0x10] sm:$0xff]
        %v683 = vld [vmem:[%s4 + $0x18] sm:$0xff]
        %v684 = vld [vmem:[%s4 + $0x20] sm:$0xff]
        %v685 = vld [vmem:[%s4 + $0x28] sm:$0xff]
        %v686 = vld [vmem:[%s4 + $0x30] sm:$0xff]
        %v687 = vld [vmem:[%s4 + $0x38] sm:$0xff]
        %v688 = vld [vmem:[%s4 + $0x40] sm:$0xff]
        %v689 = vld [vmem:[%s4 + $0x48] sm:$0xff]
        %v690 = vld [vmem:[%s4 + $0x50] sm:$0xff]
        %v691 = vld [vmem:[%s4 + $0x58] sm:$0xff]
        %v692 = vld [vmem:[%s4 + $0x60] sm:$0xff]
        %v693 = vld [vmem:[%s4 + $0x68] sm:$0xff]
        %v694 = vld [vmem:[%s4 + $0x70] sm:$0xff]
        %v695 = vld [vmem:[%s4 + $0x78] sm:$0xff]
        %v696 = vld [vmem:[%s4 + $0x80] sm:$0xff]
        %v697 = vld [vmem:[%s4 + $0x88] sm:$0xff]
        %v698 = vld [vmem:[%s4 + $0x90] sm:$0xff]
        %v699 = vld [vmem:[%s4 + $0x98] sm:$0xff]
        %v700 = vld [vmem:[%s4 + $0xa0] sm:$0xff]
        %v701 = vld [vmem:[%s4 + $0xa8] sm:$0xff]
        %v702 = vld [vmem:[%s4 + $0xb0] sm:$0xff]
        %v703 = vld [vmem:[%s4 + $0xb8] sm:$0xff]
        %v704 = vld [vmem:[%s4 + $0xc0] sm:$0xff]
        %v705 = vld [vmem:[%s4 + $0xc8] sm:$0xff]
        %v706 = vld [vmem:[%s4 + $0xd0] sm:$0xff]
        %v707 = vld [vmem:[%s4 + $0xd8] sm:$0xff]
        %v708 = vld [vmem:[%s4 + $0xe0] sm:$0xff]
        %v709 = vld [vmem:[%s4 + $0xe8] sm:$0xff]
        %v710 = vld [vmem:[%s4 + $0xf0] sm:$0xff]
        %v711 = vld [vmem:[%s4 + $0xf8] sm:$0xff]
        %v712 = vld [vmem:[%s4 + $0x100] sm:$0xff]
        %v713 = vld [vmem:[%s4 + $0x108] sm:$0xff]
        %v714 = vld [vmem:[%s4 + $0x110] sm:$0xff]
        %v715 = vld [vmem:[%s4 + $0x118] sm:$0xff]
        %v716 = vld [vmem:[%s4 + $0x120] sm:$0xff]
        %v717 = vld [vmem:[%s4 + $0x128] sm:$0xff]
        %v718 = vld [vmem:[%s4 + $0x130] sm:$0xff]
        %v719 = vld [vmem:[%s4 + $0x138] sm:$0xff]
        %v720 = vld [vmem:[%s4 + $0x140] sm:$0xff]
        %v721 = vld [vmem:[%s4 + $0x148] sm:$0xff]
        %v722 = vld [vmem:[%s4 + $0x150] sm:$0xff]
        %v723 = vld [vmem:[%s4 + $0x158] sm:$0xff]
        %v724 = vld [vmem:[%s4 + $0x160] sm:$0xff]
        %v725 = vld [vmem:[%s4 + $0x168] sm:$0xff]
        %v726 = vld [vmem:[%s4 + $0x170] sm:$0xff]
        %v727 = vld [vmem:[%s4 + $0x178] sm:$0xff]
        %v728 = vld [vmem:[%s4 + $0x180] sm:$0xff]
        %v729 = vld [vmem:[%s4 + $0x188] sm:$0xff]
        %v730 = vld [vmem:[%s4 + $0x190] sm:$0xff]
        %v731 = vld [vmem:[%s4 + $0x198] sm:$0xff]
        %v732 = vld [vmem:[%s4 + $0x1a0] sm:$0xff]
        %v733 = vld [vmem:[%s4 + $0x1a8] sm:$0xff]
        %v734 = vld [vmem:[%s4 + $0x1b0] sm:$0xff]
        %v735 = vld [vmem:[%s4 + $0x1b8] sm:$0xff]
        %v736 = vld [vmem:[%s4 + $0x1c0] sm:$0xff]
        %v737 = vld [vmem:[%s4 + $0x1c8] sm:$0xff]
        %v738 = vld [vmem:[%s4 + $0x1d0] sm:$0xff]
        %v739 = vld [vmem:[%s4 + $0x1d8] sm:$0xff]
        %v740 = vld [vmem:[%s4 + $0x1e0] sm:$0xff]
        %v741 = vld [vmem:[%s4 + $0x1e8] sm:$0xff]
        %v742 = vld [vmem:[%s4 + $0x1f0] sm:$0xff]
        %v743 = vld [vmem:[%s4 + $0x1f8] sm:$0xff]
        %v744 = vld [vmem:[%s4 + $0x200] sm:$0xff]
        %v745 = vld [vmem:[%s4 + $0x208] sm:$0xff]
        %v746 = vld [vmem:[%s4 + $0x210] sm:$0xff]
        %v747 = vld [vmem:[%s4 + $0x218] sm:$0xff]
        %v748 = vld [vmem:[%s4 + $0x220] sm:$0xff]
        %v749 = vld [vmem:[%s4 + $0x228] sm:$0xff]
        %v750 = vld [vmem:[%s4 + $0x230] sm:$0xff]
        %v751 = vld [vmem:[%s4 + $0x238] sm:$0xff]
        %v752 = vld [vmem:[%s4 + $0x240] sm:$0xff]
        %v753 = vld [vmem:[%s4 + $0x248] sm:$0xff]
        %v754 = vld [vmem:[%s4 + $0x250] sm:$0xff]
        %v755 = vld [vmem:[%s4 + $0x258] sm:$0xff]
        %v756 = vld [vmem:[%s4 + $0x260] sm:$0xff]
        %v757 = vld [vmem:[%s4 + $0x268] sm:$0xff]
        %v758 = vld [vmem:[%s4 + $0x270] sm:$0xff]
        %v759 = vld [vmem:[%s4 + $0x278] sm:$0xff]
        %v760 = vld [vmem:[%s4 + $0x280] sm:$0xff]
        %v761 = vld [vmem:[%s4 + $0x288] sm:$0xff]
        %v762 = vld [vmem:[%s4 + $0x290] sm:$0xff]
        %v763 = vld [vmem:[%s4 + $0x298] sm:$0xff]
        %v764 = vld [vmem:[%s4 + $0x2a0] sm:$0xff]
        %v765 = vld [vmem:[%s4 + $0x2a8] sm:$0xff]
        %v766 = vld [vmem:[%s4 + $0x2b0] sm:$0xff]
        %v767 = vld [vmem:[%s4 + $0x2b8] sm:$0xff]
        %v768 = vld [vmem:[%s4 + $0x2c0] sm:$0xff]
        %v769 = vld [vmem:[%s4 + $0x2c8] sm:$0xff]
        %v770 = vld [vmem:[%s4 + $0x2d0] sm:$0xff]
        %v771 = vld [vmem:[%s4 + $0x2d8] sm:$0xff]
        %v772 = vld [vmem:[%s4 + $0x2e0] sm:$0xff]
        %v773 = vld [vmem:[%s4 + $0x2e8] sm:$0xff]
        %v774 = vld [vmem:[%s4 + $0x2f0] sm:$0xff]
        %v775 = vld [vmem:[%s4 + $0x2f8] sm:$0xff]
        %v776 = vld [vmem:[%s4 + $0x300] sm:$0xff]
        %v777 = vld [vmem:[%s4 + $0x308] sm:$0xff]
        %v778 = vld [vmem:[%s4 + $0x310] sm:$0xff]
        %v779 = vld [vmem:[%s4 + $0x318] sm:$0xff]
        %v780 = vld [vmem:[%s4 + $0x320] sm:$0xff]
        %v781 = vld [vmem:[%s4 + $0x328] sm:$0xff]
        %v782 = vld [vmem:[%s4 + $0x330] sm:$0xff]
        %v783 = vld [vmem:[%s4 + $0x338] sm:$0xff]
        %v784 = vld [vmem:[%s4 + $0x340] sm:$0xff]
        %v785 = vld [vmem:[%s4 + $0x348] sm:$0xff]
        %v786 = vld [vmem:[%s4 + $0x350] sm:$0xff]
        %v787 = vld [vmem:[%s4 + $0x358] sm:$0xff]
        %v788 = vld [vmem:[%s4 + $0x360] sm:$0xff]
        %v789 = vld [vmem:[%s4 + $0x368] sm:$0xff]
        %v790 = vld [vmem:[%s4 + $0x370] sm:$0xff]
        %v791 = vld [vmem:[%s4 + $0x378] sm:$0xff]
        %v792 = vld [vmem:[%s4 + $0x380] sm:$0xff]
        %v793 = vld [vmem:[%s4 + $0x388] sm:$0xff]
        %v794 = vld [vmem:[%s4 + $0x390] sm:$0xff]
        %v795 = vld [vmem:[%s4 + $0x398] sm:$0xff]
        %v796 = vld [vmem:[%s4 + $0x3a0] sm:$0xff]
        %v797 = vld [vmem:[%s4 + $0x3a8] sm:$0xff]
        %v798 = vld [vmem:[%s4 + $0x3b0] sm:$0xff]
        %v799 = vld [vmem:[%s4 + $0x3b8] sm:$0xff]
        %v800 = vld [vmem:[%s4 + $0x3c0] sm:$0xff]
        %v801 = vld [vmem:[%s4 + $0x3c8] sm:$0xff]
        %v802 = vld [vmem:[%s4 + $0x3d0] sm:$0xff]
        %v803 = vld [vmem:[%s4 + $0x3d8] sm:$0xff]
        %v804 = vld [vmem:[%s4 + $0x3e0] sm:$0xff]
        %v805 = vld [vmem:[%s4 + $0x3e8] sm:$0xff]
        %v806 = vld [vmem:[%s4 + $0x3f0] sm:$0xff]
        %v807 = vld [vmem:[%s4 + $0x3f8] sm:$0xff]
        %v936 = vunpack.c.l.b16 %v680
        %v937 = vunpack.c.h.b16 %v680
        %v938 = vunpack.c.l.b16 %v681
        %v939 = vunpack.c.h.b16 %v681
        %v940 = vunpack.c.l.b16 %v682
        %v941 = vunpack.c.h.b16 %v682
        %v942 = vunpack.c.l.b16 %v683
        %v943 = vunpack.c.h.b16 %v683
        %v944 = vunpack.c.l.b16 %v684
        %v945 = vunpack.c.h.b16 %v684
        %v946 = vunpack.c.l.b16 %v685
        %v947 = vunpack.c.h.b16 %v685
        %v948 = vunpack.c.l.b16 %v686
        %v949 = vunpack.c.h.b16 %v686
        %v950 = vunpack.c.l.b16 %v687
        %v951 = vunpack.c.h.b16 %v687
        %v952 = vunpack.c.l.b16 %v688
        %v953 = vunpack.c.h.b16 %v688
        %v954 = vunpack.c.l.b16 %v689
        %v955 = vunpack.c.h.b16 %v689
        %v956 = vunpack.c.l.b16 %v690
        %v957 = vunpack.c.h.b16 %v690
        %v958 = vunpack.c.l.b16 %v691
        %v959 = vunpack.c.h.b16 %v691
        %v960 = vunpack.c.l.b16 %v692
        %v961 = vunpack.c.h.b16 %v692
        %v962 = vunpack.c.l.b16 %v693
        %v963 = vunpack.c.h.b16 %v693
        %v964 = vunpack.c.l.b16 %v694
        %v965 = vunpack.c.h.b16 %v694
        %v966 = vunpack.c.l.b16 %v695
        %v967 = vunpack.c.h.b16 %v695
        %v968 = vunpack.c.l.b16 %v696
        %v969 = vunpack.c.h.b16 %v696
        %v970 = vunpack.c.l.b16 %v697
        %v971 = vunpack.c.h.b16 %v697
        %v972 = vunpack.c.l.b16 %v698
        %v973 = vunpack.c.h.b16 %v698
        %v974 = vunpack.c.l.b16 %v699
        %v975 = vunpack.c.h.b16 %v699
        %v976 = vunpack.c.l.b16 %v700
        %v977 = vunpack.c.h.b16 %v700
        %v978 = vunpack.c.l.b16 %v701
        %v979 = vunpack.c.h.b16 %v701
        %v980 = vunpack.c.l.b16 %v702
        %v981 = vunpack.c.h.b16 %v702
        %v982 = vunpack.c.l.b16 %v703
        %v983 = vunpack.c.h.b16 %v703
        %v984 = vunpack.c.l.b16 %v704
        %v985 = vunpack.c.h.b16 %v704
        %v986 = vunpack.c.l.b16 %v705
        %v987 = vunpack.c.h.b16 %v705
        %v988 = vunpack.c.l.b16 %v706
        %v989 = vunpack.c.h.b16 %v706
        %v990 = vunpack.c.l.b16 %v707
        %v991 = vunpack.c.h.b16 %v707
        %v992 = vunpack.c.l.b16 %v708
        %v993 = vunpack.c.h.b16 %v708
        %v994 = vunpack.c.l.b16 %v709
        %v995 = vunpack.c.h.b16 %v709
        %v996 = vunpack.c.l.b16 %v710
        %v997 = vunpack.c.h.b16 %v710
        %v998 = vunpack.c.l.b16 %v711
        %v999 = vunpack.c.h.b16 %v711
        %v1000 = vunpack.c.l.b16 %v712
        %v1001 = vunpack.c.h.b16 %v712
        %v1002 = vunpack.c.l.b16 %v713
        %v1003 = vunpack.c.h.b16 %v713
        %v1004 = vunpack.c.l.b16 %v714
        %v1005 = vunpack.c.h.b16 %v714
        %v1006 = vunpack.c.l.b16 %v715
        %v1007 = vunpack.c.h.b16 %v715
        %v1008 = vunpack.c.l.b16 %v716
        %v1009 = vunpack.c.h.b16 %v716
        %v1010 = vunpack.c.l.b16 %v717
        %v1011 = vunpack.c.h.b16 %v717
        %v1012 = vunpack.c.l.b16 %v718
        %v1013 = vunpack.c.h.b16 %v718
        %v1014 = vunpack.c.l.b16 %v719
        %v1015 = vunpack.c.h.b16 %v719
        %v1016 = vunpack.c.l.b16 %v720
        %v1017 = vunpack.c.h.b16 %v720
        %v1018 = vunpack.c.l.b16 %v721
        %v1019 = vunpack.c.h.b16 %v721
        %v1020 = vunpack.c.l.b16 %v722
        %v1021 = vunpack.c.h.b16 %v722
        %v1022 = vunpack.c.l.b16 %v723
        %v1023 = vunpack.c.h.b16 %v723
        %v1024 = vunpack.c.l.b16 %v724
        %v1025 = vunpack.c.h.b16 %v724
        %v1026 = vunpack.c.l.b16 %v725
        %v1027 = vunpack.c.h.b16 %v725
        %v1028 = vunpack.c.l.b16 %v726
        %v1029 = vunpack.c.h.b16 %v726
        %v1030 = vunpack.c.l.b16 %v727
        %v1031 = vunpack.c.h.b16 %v727
        %v1032 = vunpack.c.l.b16 %v728
        %v1033 = vunpack.c.h.b16 %v728
        %v1034 = vunpack.c.l.b16 %v729
        %v1035 = vunpack.c.h.b16 %v729
        %v1036 = vunpack.c.l.b16 %v730
        %v1037 = vunpack.c.h.b16 %v730
        %v1038 = vunpack.c.l.b16 %v731
        %v1039 = vunpack.c.h.b16 %v731
        %v1040 = vunpack.c.l.b16 %v732
        %v1041 = vunpack.c.h.b16 %v732
        %v1042 = vunpack.c.l.b16 %v733
        %v1043 = vunpack.c.h.b16 %v733
        %v1044 = vunpack.c.l.b16 %v734
        %v1045 = vunpack.c.h.b16 %v734
        %v1046 = vunpack.c.l.b16 %v735
        %v1047 = vunpack.c.h.b16 %v735
        %v1048 = vunpack.c.l.b16 %v736
        %v1049 = vunpack.c.h.b16 %v736
        %v1050 = vunpack.c.l.b16 %v737
        %v1051 = vunpack.c.h.b16 %v737
        %v1052 = vunpack.c.l.b16 %v738
        %v1053 = vunpack.c.h.b16 %v738
        %v1054 = vunpack.c.l.b16 %v739
        %v1055 = vunpack.c.h.b16 %v739
        %v1056 = vunpack.c.l.b16 %v740
        %v1057 = vunpack.c.h.b16 %v740
        %v1058 = vunpack.c.l.b16 %v741
        %v1059 = vunpack.c.h.b16 %v741
        %v1060 = vunpack.c.l.b16 %v742
        %v1061 = vunpack.c.h.b16 %v742
        %v1062 = vunpack.c.l.b16 %v743
        %v1063 = vunpack.c.h.b16 %v743
        %v1064 = vunpack.c.l.b16 %v744
        %v1065 = vunpack.c.h.b16 %v744
        %v1066 = vunpack.c.l.b16 %v745
        %v1067 = vunpack.c.h.b16 %v745
        %v1068 = vunpack.c.l.b16 %v746
        %v1069 = vunpack.c.h.b16 %v746
        %v1070 = vunpack.c.l.b16 %v747
        %v1071 = vunpack.c.h.b16 %v747
        %v1072 = vunpack.c.l.b16 %v748
        %v1073 = vunpack.c.h.b16 %v748
        %v1074 = vunpack.c.l.b16 %v749
        %v1075 = vunpack.c.h.b16 %v749
        %v1076 = vunpack.c.l.b16 %v750
        %v1077 = vunpack.c.h.b16 %v750
        %v1078 = vunpack.c.l.b16 %v751
        %v1079 = vunpack.c.h.b16 %v751
        %v1080 = vunpack.c.l.b16 %v752
        %v1081 = vunpack.c.h.b16 %v752
        %v1082 = vunpack.c.l.b16 %v753
        %v1083 = vunpack.c.h.b16 %v753
        %v1084 = vunpack.c.l.b16 %v754
        %v1085 = vunpack.c.h.b16 %v754
        %v1086 = vunpack.c.l.b16 %v755
        %v1087 = vunpack.c.h.b16 %v755
        %v1088 = vunpack.c.l.b16 %v756
        %v1089 = vunpack.c.h.b16 %v756
        %v1090 = vunpack.c.l.b16 %v757
        %v1091 = vunpack.c.h.b16 %v757
        %v1092 = vunpack.c.l.b16 %v758
        %v1093 = vunpack.c.h.b16 %v758
        %v1094 = vunpack.c.l.b16 %v759
        %v1095 = vunpack.c.h.b16 %v759
        %v1096 = vunpack.c.l.b16 %v760
        %v1097 = vunpack.c.h.b16 %v760
        %v1098 = vunpack.c.l.b16 %v761
        %v1099 = vunpack.c.h.b16 %v761
        %v1100 = vunpack.c.l.b16 %v762
        %v1101 = vunpack.c.h.b16 %v762
        %v1102 = vunpack.c.l.b16 %v763
        %v1103 = vunpack.c.h.b16 %v763
        %v1104 = vunpack.c.l.b16 %v764
        %v1105 = vunpack.c.h.b16 %v764
        %v1106 = vunpack.c.l.b16 %v765
        %v1107 = vunpack.c.h.b16 %v765
        %v1108 = vunpack.c.l.b16 %v766
        %v1109 = vunpack.c.h.b16 %v766
        %v1110 = vunpack.c.l.b16 %v767
        %v1111 = vunpack.c.h.b16 %v767
        %v1112 = vunpack.c.l.b16 %v768
        %v1113 = vunpack.c.h.b16 %v768
        %v1114 = vunpack.c.l.b16 %v769
        %v1115 = vunpack.c.h.b16 %v769
        %v1116 = vunpack.c.l.b16 %v770
        %v1117 = vunpack.c.h.b16 %v770
        %v1118 = vunpack.c.l.b16 %v771
        %v1119 = vunpack.c.h.b16 %v771
        %v1120 = vunpack.c.l.b16 %v772
        %v1121 = vunpack.c.h.b16 %v772
        %v1122 = vunpack.c.l.b16 %v773
        %v1123 = vunpack.c.h.b16 %v773
        %v1124 = vunpack.c.l.b16 %v774
        %v1125 = vunpack.c.h.b16 %v774
        %v1126 = vunpack.c.l.b16 %v775
        %v1127 = vunpack.c.h.b16 %v775
        %v1128 = vunpack.c.l.b16 %v776
        %v1129 = vunpack.c.h.b16 %v776
        %v1130 = vunpack.c.l.b16 %v777
        %v1131 = vunpack.c.h.b16 %v777
        %v1132 = vunpack.c.l.b16 %v778
        %v1133 = vunpack.c.h.b16 %v778
        %v1134 = vunpack.c.l.b16 %v779
        %v1135 = vunpack.c.h.b16 %v779
        %v1136 = vunpack.c.l.b16 %v780
        %v1137 = vunpack.c.h.b16 %v780
        %v1138 = vunpack.c.l.b16 %v781
        %v1139 = vunpack.c.h.b16 %v781
        %v1140 = vunpack.c.l.b16 %v782
        %v1141 = vunpack.c.h.b16 %v782
        %v1142 = vunpack.c.l.b16 %v783
        %v1143 = vunpack.c.h.b16 %v783
        %v1144 = vunpack.c.l.b16 %v784
        %v1145 = vunpack.c.h.b16 %v784
        %v1146 = vunpack.c.l.b16 %v785
        %v1147 = vunpack.c.h.b16 %v785
        %v1148 = vunpack.c.l.b16 %v786
        %v1149 = vunpack.c.h.b16 %v786
        %v1150 = vunpack.c.l.b16 %v787
        %v1151 = vunpack.c.h.b16 %v787
        %v1152 = vunpack.c.l.b16 %v788
        %v1153 = vunpack.c.h.b16 %v788
        %v1154 = vunpack.c.l.b16 %v789
        %v1155 = vunpack.c.h.b16 %v789
        %v1156 = vunpack.c.l.b16 %v790
        %v1157 = vunpack.c.h.b16 %v790
        %v1158 = vunpack.c.l.b16 %v791
        %v1159 = vunpack.c.h.b16 %v791
        %v1160 = vunpack.c.l.b16 %v792
        %v1161 = vunpack.c.h.b16 %v792
        %v1162 = vunpack.c.l.b16 %v793
        %v1163 = vunpack.c.h.b16 %v793
        %v1164 = vunpack.c.l.b16 %v794
        %v1165 = vunpack.c.h.b16 %v794
        %v1166 = vunpack.c.l.b16 %v795
        %v1167 = vunpack.c.h.b16 %v795
        %v1168 = vunpack.c.l.b16 %v796
        %v1169 = vunpack.c.h.b16 %v796
        %v1170 = vunpack.c.l.b16 %v797
        %v1171 = vunpack.c.h.b16 %v797
        %v1172 = vunpack.c.l.b16 %v798
        %v1173 = vunpack.c.h.b16 %v798
        %v1174 = vunpack.c.l.b16 %v799
        %v1175 = vunpack.c.h.b16 %v799
        %v1176 = vunpack.c.l.b16 %v800
        %v1177 = vunpack.c.h.b16 %v800
        %v1178 = vunpack.c.l.b16 %v801
        %v1179 = vunpack.c.h.b16 %v801
        %v1180 = vunpack.c.l.b16 %v802
        %v1181 = vunpack.c.h.b16 %v802
        %v1182 = vunpack.c.l.b16 %v803
        %v1183 = vunpack.c.h.b16 %v803
        %v1184 = vunpack.c.l.b16 %v804
        %v1185 = vunpack.c.h.b16 %v804
        %v1186 = vunpack.c.l.b16 %v805
        %v1187 = vunpack.c.h.b16 %v805
        %v1188 = vunpack.c.l.b16 %v806
        %v1189 = vunpack.c.h.b16 %v806
        %v1190 = vunpack.c.l.b16 %v807
        %v1191 = vunpack.c.h.b16 %v807
        %v1192 = vpack.c.b16 %v940, %v936
        %v1193 = vpack.c.b16 %v941, %v937
        %v1194 = vpack.c.b16 %v942, %v938
        %v1195 = vpack.c.b16 %v943, %v939
        %v1196 = vpack.c.b16 %v948, %v944
        %v1197 = vpack.c.b16 %v949, %v945
        %v1198 = vpack.c.b16 %v950, %v946
        %v1199 = vpack.c.b16 %v951, %v947
        %v1200 = vpack.c.b16 %v956, %v952
        %v1201 = vpack.c.b16 %v957, %v953
        %v1202 = vpack.c.b16 %v958, %v954
        %v1203 = vpack.c.b16 %v959, %v955
        %v1204 = vpack.c.b16 %v964, %v960
        %v1205 = vpack.c.b16 %v965, %v961
        %v1206 = vpack.c.b16 %v966, %v962
        %v1207 = vpack.c.b16 %v967, %v963
        %v1208 = vpack.c.b16 %v972, %v968
        %v1209 = vpack.c.b16 %v973, %v969
        %v1210 = vpack.c.b16 %v974, %v970
        %v1211 = vpack.c.b16 %v975, %v971
        %v1212 = vpack.c.b16 %v980, %v976
        %v1213 = vpack.c.b16 %v981, %v977
        %v1214 = vpack.c.b16 %v982, %v978
        %v1215 = vpack.c.b16 %v983, %v979
        %v1216 = vpack.c.b16 %v988, %v984
        %v1217 = vpack.c.b16 %v989, %v985
        %v1218 = vpack.c.b16 %v990, %v986
        %v1219 = vpack.c.b16 %v991, %v987
        %v1220 = vpack.c.b16 %v996, %v992
        %v1221 = vpack.c.b16 %v997, %v993
        %v1222 = vpack.c.b16 %v998, %v994
        %v1223 = vpack.c.b16 %v999, %v995
        %v1224 = vpack.c.b16 %v1004, %v1000
        %v1225 = vpack.c.b16 %v1005, %v1001
        %v1226 = vpack.c.b16 %v1006, %v1002
        %v1227 = vpack.c.b16 %v1007, %v1003
        %v1228 = vpack.c.b16 %v1012, %v1008
        %v1229 = vpack.c.b16 %v1013, %v1009
        %v1230 = vpack.c.b16 %v1014, %v1010
        %v1231 = vpack.c.b16 %v1015, %v1011
        %v1232 = vpack.c.b16 %v1020, %v1016
        %v1233 = vpack.c.b16 %v1021, %v1017
        %v1234 = vpack.c.b16 %v1022, %v1018
        %v1235 = vpack.c.b16 %v1023, %v1019
        %v1236 = vpack.c.b16 %v1028, %v1024
        %v1237 = vpack.c.b16 %v1029, %v1025
        %v1238 = vpack.c.b16 %v1030, %v1026
        %v1239 = vpack.c.b16 %v1031, %v1027
        %v1240 = vpack.c.b16 %v1036, %v1032
        %v1241 = vpack.c.b16 %v1037, %v1033
        %v1242 = vpack.c.b16 %v1038, %v1034
        %v1243 = vpack.c.b16 %v1039, %v1035
        %v1244 = vpack.c.b16 %v1044, %v1040
        %v1245 = vpack.c.b16 %v1045, %v1041
        %v1246 = vpack.c.b16 %v1046, %v1042
        %v1247 = vpack.c.b16 %v1047, %v1043
        %v1248 = vpack.c.b16 %v1052, %v1048
        %v1249 = vpack.c.b16 %v1053, %v1049
        %v1250 = vpack.c.b16 %v1054, %v1050
        %v1251 = vpack.c.b16 %v1055, %v1051
        %v1252 = vpack.c.b16 %v1060, %v1056
        %v1253 = vpack.c.b16 %v1061, %v1057
        %v1254 = vpack.c.b16 %v1062, %v1058
        %v1255 = vpack.c.b16 %v1063, %v1059
        %v1256 = vpack.c.b16 %v1068, %v1064
        %v1257 = vpack.c.b16 %v1069, %v1065
        %v1258 = vpack.c.b16 %v1070, %v1066
        %v1259 = vpack.c.b16 %v1071, %v1067
        %v1260 = vpack.c.b16 %v1076, %v1072
        %v1261 = vpack.c.b16 %v1077, %v1073
        %v1262 = vpack.c.b16 %v1078, %v1074
        %v1263 = vpack.c.b16 %v1079, %v1075
        %v1264 = vpack.c.b16 %v1084, %v1080
        %v1265 = vpack.c.b16 %v1085, %v1081
        %v1266 = vpack.c.b16 %v1086, %v1082
        %v1267 = vpack.c.b16 %v1087, %v1083
        %v1268 = vpack.c.b16 %v1092, %v1088
        %v1269 = vpack.c.b16 %v1093, %v1089
        %v1270 = vpack.c.b16 %v1094, %v1090
        %v1271 = vpack.c.b16 %v1095, %v1091
        %v1272 = vpack.c.b16 %v1100, %v1096
        %v1273 = vpack.c.b16 %v1101, %v1097
        %v1274 = vpack.c.b16 %v1102, %v1098
        %v1275 = vpack.c.b16 %v1103, %v1099
        %v1276 = vpack.c.b16 %v1108, %v1104
        %v1277 = vpack.c.b16 %v1109, %v1105
        %v1278 = vpack.c.b16 %v1110, %v1106
        %v1279 = vpack.c.b16 %v1111, %v1107
        %v1280 = vpack.c.b16 %v1116, %v1112
        %v1281 = vpack.c.b16 %v1117, %v1113
        %v1282 = vpack.c.b16 %v1118, %v1114
        %v1283 = vpack.c.b16 %v1119, %v1115
        %v1284 = vpack.c.b16 %v1124, %v1120
        %v1285 = vpack.c.b16 %v1125, %v1121
        %v1286 = vpack.c.b16 %v1126, %v1122
        %v1287 = vpack.c.b16 %v1127, %v1123
        %v1288 = vpack.c.b16 %v1132, %v1128
        %v1289 = vpack.c.b16 %v1133, %v1129
        %v1290 = vpack.c.b16 %v1134, %v1130
        %v1291 = vpack.c.b16 %v1135, %v1131
        %v1292 = vpack.c.b16 %v1140, %v1136
        %v1293 = vpack.c.b16 %v1141, %v1137
        %v1294 = vpack.c.b16 %v1142, %v1138
        %v1295 = vpack.c.b16 %v1143, %v1139
        %v1296 = vpack.c.b16 %v1148, %v1144
        %v1297 = vpack.c.b16 %v1149, %v1145
        %v1298 = vpack.c.b16 %v1150, %v1146
        %v1299 = vpack.c.b16 %v1151, %v1147
        %v1300 = vpack.c.b16 %v1156, %v1152
        %v1301 = vpack.c.b16 %v1157, %v1153
        %v1302 = vpack.c.b16 %v1158, %v1154
        %v1303 = vpack.c.b16 %v1159, %v1155
        %v1304 = vpack.c.b16 %v1164, %v1160
        %v1305 = vpack.c.b16 %v1165, %v1161
        %v1306 = vpack.c.b16 %v1166, %v1162
        %v1307 = vpack.c.b16 %v1167, %v1163
        %v1308 = vpack.c.b16 %v1172, %v1168
        %v1309 = vpack.c.b16 %v1173, %v1169
        %v1310 = vpack.c.b16 %v1174, %v1170
        %v1311 = vpack.c.b16 %v1175, %v1171
        %v1312 = vpack.c.b16 %v1180, %v1176
        %v1313 = vpack.c.b16 %v1181, %v1177
        %v1314 = vpack.c.b16 %v1182, %v1178
        %v1315 = vpack.c.b16 %v1183, %v1179
        %v1316 = vpack.c.b16 %v1188, %v1184
        %v1317 = vpack.c.b16 %v1189, %v1185
        %v1318 = vpack.c.b16 %v1190, %v1186
        %v1319 = vpack.c.b16 %v1191, %v1187
        %1448 = vmatprep.subr.bf16.mxu0 %v1221
        %1449 = vmatpush1.bf16.msra.mxu0 %v1220
        %1450 = vmatprep.subr.bf16.mxu0 %v1217
        %1451 = vmatpush1.bf16.msra.mxu0 %v1216
        %1452 = vmatprep.subr.bf16.mxu0 %v1213
        %1453 = vmatpush1.bf16.msra.mxu0 %v1212
        %1454 = vmatprep.subr.bf16.mxu0 %v1209
        %1455 = vmatpush1.bf16.msra.mxu0 %v1208
        %1456 = vmatprep.subr.bf16.mxu0 %v1205
        %1457 = vmatpush1.bf16.msra.mxu0 %v1204
        %1458 = vmatprep.subr.bf16.mxu0 %v1201
        %1459 = vmatpush1.bf16.msra.mxu0 %v1200
        %1460 = vmatprep.subr.bf16.mxu0 %v1197
        %1461 = vmatpush1.bf16.msra.mxu0 %v1196
        %1462 = vmatprep.subr.bf16.mxu0 %v1193
        %1463 = vmatpush1.bf16.msra.mxu0 %v1192
        %1464 = vmatprep.subr.bf16.mxu0 %v1253
        %1465 = vmatpush2.bf16.msra.mxu0 %v1252
        %1466 = vmatprep.subr.bf16.mxu0 %v1249
        %1467 = vmatpush2.bf16.msra.mxu0 %v1248
        %1468 = vmatprep.subr.bf16.mxu0 %v1245
        %1469 = vmatpush2.bf16.msra.mxu0 %v1244
        %1470 = vmatprep.subr.bf16.mxu0 %v1241
        %1471 = vmatpush2.bf16.msra.mxu0 %v1240
        %1472 = vmatprep.subr.bf16.mxu0 %v1237
        %1473 = vmatpush2.bf16.msra.mxu0 %v1236
        %1474 = vmatprep.subr.bf16.mxu0 %v1233
        %1475 = vmatpush2.bf16.msra.mxu0 %v1232
        %1476 = vmatprep.subr.bf16.mxu0 %v1229
        %1477 = vmatpush2.bf16.msra.mxu0 %v1228
        %1478 = vmatprep.subr.bf16.mxu0 %v1225
        %1479 = vmatpush2.bf16.msra.mxu0 %v1224
        %1480 = vmatprep.mubr.bf16.mxu0 %v457
        %1481 = vmatmul.mubr.bf16.gmra.mxu0 %v456
        %v1482 = vpop.f32.mrf.mxu0
        %v1483 = vadd.f32 0.0, %v1482
        %v1484 = vpop.f32.mrf.mxu0
        %v1485 = vadd.f32 0.0, %v1484
        %v1486 = vpop.f32.mrf.mxu0
        %v1487 = vadd.f32 0.0, %v1486
        %v1488 = vpop.f32.mrf.mxu0
        %v1489 = vadd.f32 0.0, %v1488
        %1490 = vmatprep.mubr.bf16.mxu0 %v461
        %1491 = vmatmul.mubr.bf16.gmra.mxu0 %v460
        %v1492 = vpop.f32.mrf.mxu0
        %v1493 = vadd.f32 0.0, %v1492
        %v1494 = vpop.f32.mrf.mxu0
        %v1495 = vadd.f32 0.0, %v1494
        %v1496 = vpop.f32.mrf.mxu0
        %v1497 = vadd.f32 0.0, %v1496
        %v1498 = vpop.f32.mrf.mxu0
        %v1499 = vadd.f32 0.0, %v1498
        %1500 = vmatprep.mubr.bf16.mxu0 %v465
        %1501 = vmatmul.mubr.bf16.gmra.mxu0 %v464
        %v1502 = vpop.f32.mrf.mxu0
        %v1503 = vadd.f32 0.0, %v1502
        %v1504 = vpop.f32.mrf.mxu0
        %v1505 = vadd.f32 0.0, %v1504
        %v1506 = vpop.f32.mrf.mxu0
        %v1507 = vadd.f32 0.0, %v1506
        %v1508 = vpop.f32.mrf.mxu0
        %v1509 = vadd.f32 0.0, %v1508
        %1510 = vmatprep.mubr.bf16.mxu0 %v469
        %1511 = vmatmul.mubr.bf16.gmra.mxu0 %v468
        %v1512 = vpop.f32.mrf.mxu0
        %v1513 = vadd.f32 0.0, %v1512
        %v1514 = vpop.f32.mrf.mxu0
        %v1515 = vadd.f32 0.0, %v1514
        %v1516 = vpop.f32.mrf.mxu0
        %v1517 = vadd.f32 0.0, %v1516
        %v1518 = vpop.f32.mrf.mxu0
        %v1519 = vadd.f32 0.0, %v1518
        %1520 = vmatprep.mubr.bf16.mxu0 %v473
        %1521 = vmatmul.mubr.bf16.gmra.mxu0 %v472
        %v1522 = vpop.f32.mrf.mxu0
        %v1523 = vadd.f32 0.0, %v1522
        %v1524 = vpop.f32.mrf.mxu0
        %v1525 = vadd.f32 0.0, %v1524
        %v1526 = vpop.f32.mrf.mxu0
        %v1527 = vadd.f32 0.0, %v1526
        %v1528 = vpop.f32.mrf.mxu0
        %v1529 = vadd.f32 0.0, %v1528
        %1530 = vmatprep.mubr.bf16.mxu0 %v477
        %1531 = vmatmul.mubr.bf16.gmra.mxu0 %v476
        %v1532 = vpop.f32.mrf.mxu0
        %v1533 = vadd.f32 0.0, %v1532
        %v1534 = vpop.f32.mrf.mxu0
        %v1535 = vadd.f32 0.0, %v1534
        %v1536 = vpop.f32.mrf.mxu0
        %v1537 = vadd.f32 0.0, %v1536
        %v1538 = vpop.f32.mrf.mxu0
        %v1539 = vadd.f32 0.0, %v1538
        %1540 = vmatprep.mubr.bf16.mxu0 %v481
        %1541 = vmatmul.mubr.bf16.gmra.mxu0 %v480
        %v1542 = vpop.f32.mrf.mxu0
        %v1543 = vadd.f32 0.0, %v1542
        %v1544 = vpop.f32.mrf.mxu0
        %v1545 = vadd.f32 0.0, %v1544
        %v1546 = vpop.f32.mrf.mxu0
        %v1547 = vadd.f32 0.0, %v1546
        %v1548 = vpop.f32.mrf.mxu0
        %v1549 = vadd.f32 0.0, %v1548
        %1550 = vmatprep.mubr.bf16.mxu0 %v485
        %1551 = vmatmul.mubr.bf16.gmra.mxu0 %v484
        %v1552 = vpop.f32.mrf.mxu0
        %v1553 = vadd.f32 0.0, %v1552
        %v1554 = vpop.f32.mrf.mxu0
        %v1555 = vadd.f32 0.0, %v1554
        %v1556 = vpop.f32.mrf.mxu0
        %v1557 = vadd.f32 0.0, %v1556
        %v1558 = vpop.f32.mrf.mxu0
        %v1559 = vadd.f32 0.0, %v1558
        %1560 = vdwg.mxu0
        %1561 = vmatprep.subr.bf16.mxu0 %v1285
        %1562 = vmatpush1.bf16.msra.mxu0 %v1284
        %1563 = vmatprep.subr.bf16.mxu0 %v1281
        %1564 = vmatpush1.bf16.msra.mxu0 %v1280
        %1565 = vmatprep.subr.bf16.mxu0 %v1277
        %1566 = vmatpush1.bf16.msra.mxu0 %v1276
        %1567 = vmatprep.subr.bf16.mxu0 %v1273
        %1568 = vmatpush1.bf16.msra.mxu0 %v1272
        %1569 = vmatprep.subr.bf16.mxu0 %v1269
        %1570 = vmatpush1.bf16.msra.mxu0 %v1268
        %1571 = vmatprep.subr.bf16.mxu0 %v1265
        %1572 = vmatpush1.bf16.msra.mxu0 %v1264
        %1573 = vmatprep.subr.bf16.mxu0 %v1261
        %1574 = vmatpush1.bf16.msra.mxu0 %v1260
        %1575 = vmatprep.subr.bf16.mxu0 %v1257
        %1576 = vmatpush1.bf16.msra.mxu0 %v1256
        %1577 = vmatprep.subr.bf16.mxu0 %v1317
        %1578 = vmatpush2.bf16.msra.mxu0 %v1316
        %1579 = vmatprep.subr.bf16.mxu0 %v1313
        %1580 = vmatpush2.bf16.msra.mxu0 %v1312
        %1581 = vmatprep.subr.bf16.mxu0 %v1309
        %1582 = vmatpush2.bf16.msra.mxu0 %v1308
        %1583 = vmatprep.subr.bf16.mxu0 %v1305
        %1584 = vmatpush2.bf16.msra.mxu0 %v1304
        %1585 = vmatprep.subr.bf16.mxu0 %v1301
        %1586 = vmatpush2.bf16.msra.mxu0 %v1300
        %1587 = vmatprep.subr.bf16.mxu0 %v1297
        %1588 = vmatpush2.bf16.msra.mxu0 %v1296
        %1589 = vmatprep.subr.bf16.mxu0 %v1293
        %1590 = vmatpush2.bf16.msra.mxu0 %v1292
        %1591 = vmatprep.subr.bf16.mxu0 %v1289
        %1592 = vmatpush2.bf16.msra.mxu0 %v1288
        %1593 = vmatprep.mubr.bf16.mxu0 %v459
        %1594 = vmatmul.mubr.bf16.gmra.mxu0 %v458
        %v1595 = vpop.f32.mrf.mxu0
        %v1596 = vadd.f32 %v1483, %v1595
        %v1597 = vpop.f32.mrf.mxu0
        %v1598 = vadd.f32 %v1485, %v1597
        %v1599 = vpop.f32.mrf.mxu0
        %v1600 = vadd.f32 %v1487, %v1599
        %v1601 = vpop.f32.mrf.mxu0
        %v1602 = vadd.f32 %v1489, %v1601
        %1603 = vmatprep.mubr.bf16.mxu0 %v463
        %1604 = vmatmul.mubr.bf16.gmra.mxu0 %v462
        %v1605 = vpop.f32.mrf.mxu0
        %v1606 = vadd.f32 %v1493, %v1605
        %v1607 = vpop.f32.mrf.mxu0
        %v1608 = vadd.f32 %v1495, %v1607
        %v1609 = vpop.f32.mrf.mxu0
        %v1610 = vadd.f32 %v1497, %v1609
        %v1611 = vpop.f32.mrf.mxu0
        %v1612 = vadd.f32 %v1499, %v1611
        %1613 = vmatprep.mubr.bf16.mxu0 %v467
        %1614 = vmatmul.mubr.bf16.gmra.mxu0 %v466
        %v1615 = vpop.f32.mrf.mxu0
        %v1616 = vadd.f32 %v1503, %v1615
        %v1617 = vpop.f32.mrf.mxu0
        %v1618 = vadd.f32 %v1505, %v1617
        %v1619 = vpop.f32.mrf.mxu0
        %v1620 = vadd.f32 %v1507, %v1619
        %v1621 = vpop.f32.mrf.mxu0
        %v1622 = vadd.f32 %v1509, %v1621
        %1623 = vmatprep.mubr.bf16.mxu0 %v471
        %1624 = vmatmul.mubr.bf16.gmra.mxu0 %v470
        %v1625 = vpop.f32.mrf.mxu0
        %v1626 = vadd.f32 %v1513, %v1625
        %v1627 = vpop.f32.mrf.mxu0
        %v1628 = vadd.f32 %v1515, %v1627
        %v1629 = vpop.f32.mrf.mxu0
        %v1630 = vadd.f32 %v1517, %v1629
        %v1631 = vpop.f32.mrf.mxu0
        %v1632 = vadd.f32 %v1519, %v1631
        %1633 = vmatprep.mubr.bf16.mxu0 %v475
        %1634 = vmatmul.mubr.bf16.gmra.mxu0 %v474
        %v1635 = vpop.f32.mrf.mxu0
        %v1636 = vadd.f32 %v1523, %v1635
        %v1637 = vpop.f32.mrf.mxu0
        %v1638 = vadd.f32 %v1525, %v1637
        %v1639 = vpop.f32.mrf.mxu0
        %v1640 = vadd.f32 %v1527, %v1639
        %v1641 = vpop.f32.mrf.mxu0
        %v1642 = vadd.f32 %v1529, %v1641
        %1643 = vmatprep.mubr.bf16.mxu0 %v479
        %1644 = vmatmul.mubr.bf16.gmra.mxu0 %v478
        %v1645 = vpop.f32.mrf.mxu0
        %v1646 = vadd.f32 %v1533, %v1645
        %v1647 = vpop.f32.mrf.mxu0
        %v1648 = vadd.f32 %v1535, %v1647
        %v1649 = vpop.f32.mrf.mxu0
        %v1650 = vadd.f32 %v1537, %v1649
        %v1651 = vpop.f32.mrf.mxu0
        %v1652 = vadd.f32 %v1539, %v1651
        %1653 = vmatprep.mubr.bf16.mxu0 %v483
        %1654 = vmatmul.mubr.bf16.gmra.mxu0 %v482
        %v1655 = vpop.f32.mrf.mxu0
        %v1656 = vadd.f32 %v1543, %v1655
        %v1657 = vpop.f32.mrf.mxu0
        %v1658 = vadd.f32 %v1545, %v1657
        %v1659 = vpop.f32.mrf.mxu0
        %v1660 = vadd.f32 %v1547, %v1659
        %v1661 = vpop.f32.mrf.mxu0
        %v1662 = vadd.f32 %v1549, %v1661
        %1663 = vmatprep.mubr.bf16.mxu0 %v487
        %1664 = vmatmul.mubr.bf16.gmra.mxu0 %v486
        %v1665 = vpop.f32.mrf.mxu0
        %v1666 = vadd.f32 %v1553, %v1665
        %v1667 = vpop.f32.mrf.mxu0
        %v1668 = vadd.f32 %v1555, %v1667
        %v1669 = vpop.f32.mrf.mxu0
        %v1670 = vadd.f32 %v1557, %v1669
        %v1671 = vpop.f32.mrf.mxu0
        %v1672 = vadd.f32 %v1559, %v1671
        %1673 = vdwg.mxu0
        %1674 = vmatprep.subr.bf16.mxu0 %v1223
        %1675 = vmatpush1.bf16.msra.mxu0 %v1222
        %1676 = vmatprep.subr.bf16.mxu0 %v1219
        %1677 = vmatpush1.bf16.msra.mxu0 %v1218
        %1678 = vmatprep.subr.bf16.mxu0 %v1215
        %1679 = vmatpush1.bf16.msra.mxu0 %v1214
        %1680 = vmatprep.subr.bf16.mxu0 %v1211
        %1681 = vmatpush1.bf16.msra.mxu0 %v1210
        %1682 = vmatprep.subr.bf16.mxu0 %v1207
        %1683 = vmatpush1.bf16.msra.mxu0 %v1206
        %1684 = vmatprep.subr.bf16.mxu0 %v1203
        %1685 = vmatpush1.bf16.msra.mxu0 %v1202
        %1686 = vmatprep.subr.bf16.mxu0 %v1199
        %1687 = vmatpush1.bf16.msra.mxu0 %v1198
        %1688 = vmatprep.subr.bf16.mxu0 %v1195
        %1689 = vmatpush1.bf16.msra.mxu0 %v1194
        %1690 = vmatprep.subr.bf16.mxu0 %v1255
        %1691 = vmatpush2.bf16.msra.mxu0 %v1254
        %1692 = vmatprep.subr.bf16.mxu0 %v1251
        %1693 = vmatpush2.bf16.msra.mxu0 %v1250
        %1694 = vmatprep.subr.bf16.mxu0 %v1247
        %1695 = vmatpush2.bf16.msra.mxu0 %v1246
        %1696 = vmatprep.subr.bf16.mxu0 %v1243
        %1697 = vmatpush2.bf16.msra.mxu0 %v1242
        %1698 = vmatprep.subr.bf16.mxu0 %v1239
        %1699 = vmatpush2.bf16.msra.mxu0 %v1238
        %1700 = vmatprep.subr.bf16.mxu0 %v1235
        %1701 = vmatpush2.bf16.msra.mxu0 %v1234
        %1702 = vmatprep.subr.bf16.mxu0 %v1231
        %1703 = vmatpush2.bf16.msra.mxu0 %v1230
        %1704 = vmatprep.subr.bf16.mxu0 %v1227
        %1705 = vmatpush2.bf16.msra.mxu0 %v1226
        %1706 = vmatprep.mubr.bf16.mxu0 %v457
        %1707 = vmatmul.mubr.bf16.gmra.mxu0 %v456
        %v1708 = vpop.f32.mrf.mxu0
        %v1709 = vadd.f32 0.0, %v1708
        %v1710 = vpop.f32.mrf.mxu0
        %v1711 = vadd.f32 0.0, %v1710
        %v1712 = vpop.f32.mrf.mxu0
        %v1713 = vadd.f32 0.0, %v1712
        %v1714 = vpop.f32.mrf.mxu0
        %v1715 = vadd.f32 0.0, %v1714
        %1716 = vmatprep.mubr.bf16.mxu0 %v461
        %1717 = vmatmul.mubr.bf16.gmra.mxu0 %v460
        %v1718 = vpop.f32.mrf.mxu0
        %v1719 = vadd.f32 0.0, %v1718
        %v1720 = vpop.f32.mrf.mxu0
        %v1721 = vadd.f32 0.0, %v1720
        %v1722 = vpop.f32.mrf.mxu0
        %v1723 = vadd.f32 0.0, %v1722
        %v1724 = vpop.f32.mrf.mxu0
        %v1725 = vadd.f32 0.0, %v1724
        %1726 = vmatprep.mubr.bf16.mxu0 %v465
        %1727 = vmatmul.mubr.bf16.gmra.mxu0 %v464
        %v1728 = vpop.f32.mrf.mxu0
        %v1729 = vadd.f32 0.0, %v1728
        %v1730 = vpop.f32.mrf.mxu0
        %v1731 = vadd.f32 0.0, %v1730
        %v1732 = vpop.f32.mrf.mxu0
        %v1733 = vadd.f32 0.0, %v1732
        %v1734 = vpop.f32.mrf.mxu0
        %v1735 = vadd.f32 0.0, %v1734
        %1736 = vmatprep.mubr.bf16.mxu0 %v469
        %1737 = vmatmul.mubr.bf16.gmra.mxu0 %v468
        %v1738 = vpop.f32.mrf.mxu0
        %v1739 = vadd.f32 0.0, %v1738
        %v1740 = vpop.f32.mrf.mxu0
        %v1741 = vadd.f32 0.0, %v1740
        %v1742 = vpop.f32.mrf.mxu0
        %v1743 = vadd.f32 0.0, %v1742
        %v1744 = vpop.f32.mrf.mxu0
        %v1745 = vadd.f32 0.0, %v1744
        %1746 = vmatprep.mubr.bf16.mxu0 %v473
        %1747 = vmatmul.mubr.bf16.gmra.mxu0 %v472
        %v1748 = vpop.f32.mrf.mxu0
        %v1749 = vadd.f32 0.0, %v1748
        %v1750 = vpop.f32.mrf.mxu0
        %v1751 = vadd.f32 0.0, %v1750
        %v1752 = vpop.f32.mrf.mxu0
        %v1753 = vadd.f32 0.0, %v1752
        %v1754 = vpop.f32.mrf.mxu0
        %v1755 = vadd.f32 0.0, %v1754
        %1756 = vmatprep.mubr.bf16.mxu0 %v477
        %1757 = vmatmul.mubr.bf16.gmra.mxu0 %v476
        %v1758 = vpop.f32.mrf.mxu0
        %v1759 = vadd.f32 0.0, %v1758
        %v1760 = vpop.f32.mrf.mxu0
        %v1761 = vadd.f32 0.0, %v1760
        %v1762 = vpop.f32.mrf.mxu0
        %v1763 = vadd.f32 0.0, %v1762
        %v1764 = vpop.f32.mrf.mxu0
        %v1765 = vadd.f32 0.0, %v1764
        %1766 = vmatprep.mubr.bf16.mxu0 %v481
        %1767 = vmatmul.mubr.bf16.gmra.mxu0 %v480
        %v1768 = vpop.f32.mrf.mxu0
        %v1769 = vadd.f32 0.0, %v1768
        %v1770 = vpop.f32.mrf.mxu0
        %v1771 = vadd.f32 0.0, %v1770
        %v1772 = vpop.f32.mrf.mxu0
        %v1773 = vadd.f32 0.0, %v1772
        %v1774 = vpop.f32.mrf.mxu0
        %v1775 = vadd.f32 0.0, %v1774
        %1776 = vmatprep.mubr.bf16.mxu0 %v485
        %1777 = vmatmul.mubr.bf16.gmra.mxu0 %v484
        %v1778 = vpop.f32.mrf.mxu0
        %v1779 = vadd.f32 0.0, %v1778
        %v1780 = vpop.f32.mrf.mxu0
        %v1781 = vadd.f32 0.0, %v1780
        %v1782 = vpop.f32.mrf.mxu0
        %v1783 = vadd.f32 0.0, %v1782
        %v1784 = vpop.f32.mrf.mxu0
        %v1785 = vadd.f32 0.0, %v1784
        %1786 = vdwg.mxu0
        %1787 = vmatprep.subr.bf16.mxu0 %v1287
        %1788 = vmatpush1.bf16.msra.mxu0 %v1286
        %1789 = vmatprep.subr.bf16.mxu0 %v1283
        %1790 = vmatpush1.bf16.msra.mxu0 %v1282
        %1791 = vmatprep.subr.bf16.mxu0 %v1279
        %1792 = vmatpush1.bf16.msra.mxu0 %v1278
        %1793 = vmatprep.subr.bf16.mxu0 %v1275
        %1794 = vmatpush1.bf16.msra.mxu0 %v1274
        %1795 = vmatprep.subr.bf16.mxu0 %v1271
        %1796 = vmatpush1.bf16.msra.mxu0 %v1270
        %1797 = vmatprep.subr.bf16.mxu0 %v1267
        %1798 = vmatpush1.bf16.msra.mxu0 %v1266
        %1799 = vmatprep.subr.bf16.mxu0 %v1263
        %1800 = vmatpush1.bf16.msra.mxu0 %v1262
        %1801 = vmatprep.subr.bf16.mxu0 %v1259
        %1802 = vmatpush1.bf16.msra.mxu0 %v1258
        %1803 = vmatprep.subr.bf16.mxu0 %v1319
        %1804 = vmatpush2.bf16.msra.mxu0 %v1318
        %1805 = vmatprep.subr.bf16.mxu0 %v1315
        %1806 = vmatpush2.bf16.msra.mxu0 %v1314
        %1807 = vmatprep.subr.bf16.mxu0 %v1311
        %1808 = vmatpush2.bf16.msra.mxu0 %v1310
        %1809 = vmatprep.subr.bf16.mxu0 %v1307
        %1810 = vmatpush2.bf16.msra.mxu0 %v1306
        %1811 = vmatprep.subr.bf16.mxu0 %v1303
        %1812 = vmatpush2.bf16.msra.mxu0 %v1302
        %1813 = vmatprep.subr.bf16.mxu0 %v1299
        %1814 = vmatpush2.bf16.msra.mxu0 %v1298
        %1815 = vmatprep.subr.bf16.mxu0 %v1295
        %1816 = vmatpush2.bf16.msra.mxu0 %v1294
        %1817 = vmatprep.subr.bf16.mxu0 %v1291
        %1818 = vmatpush2.bf16.msra.mxu0 %v1290
        %1819 = vmatprep.mubr.bf16.mxu0 %v459
        %1820 = vmatmul.mubr.bf16.gmra.mxu0 %v458
        %v1821 = vpop.f32.mrf.mxu0
        %v1822 = vadd.f32 %v1709, %v1821
        %v1823 = vpop.f32.mrf.mxu0
        %v1824 = vadd.f32 %v1711, %v1823
        %v1825 = vpop.f32.mrf.mxu0
        %v1826 = vadd.f32 %v1713, %v1825
        %v1827 = vpop.f32.mrf.mxu0
        %v1828 = vadd.f32 %v1715, %v1827
        %1829 = vmatprep.mubr.bf16.mxu0 %v463
        %1830 = vmatmul.mubr.bf16.gmra.mxu0 %v462
        %v1831 = vpop.f32.mrf.mxu0
        %v1832 = vadd.f32 %v1719, %v1831
        %v1833 = vpop.f32.mrf.mxu0
        %v1834 = vadd.f32 %v1721, %v1833
        %v1835 = vpop.f32.mrf.mxu0
        %v1836 = vadd.f32 %v1723, %v1835
        %v1837 = vpop.f32.mrf.mxu0
        %v1838 = vadd.f32 %v1725, %v1837
        %1839 = vmatprep.mubr.bf16.mxu0 %v467
        %1840 = vmatmul.mubr.bf16.gmra.mxu0 %v466
        %v1841 = vpop.f32.mrf.mxu0
        %v1842 = vadd.f32 %v1729, %v1841
        %v1843 = vpop.f32.mrf.mxu0
        %v1844 = vadd.f32 %v1731, %v1843
        %v1845 = vpop.f32.mrf.mxu0
        %v1846 = vadd.f32 %v1733, %v1845
        %v1847 = vpop.f32.mrf.mxu0
        %v1848 = vadd.f32 %v1735, %v1847
        %1849 = vmatprep.mubr.bf16.mxu0 %v471
        %1850 = vmatmul.mubr.bf16.gmra.mxu0 %v470
        %v1851 = vpop.f32.mrf.mxu0
        %v1852 = vadd.f32 %v1739, %v1851
        %v1853 = vpop.f32.mrf.mxu0
        %v1854 = vadd.f32 %v1741, %v1853
        %v1855 = vpop.f32.mrf.mxu0
        %v1856 = vadd.f32 %v1743, %v1855
        %v1857 = vpop.f32.mrf.mxu0
        %v1858 = vadd.f32 %v1745, %v1857
        %1859 = vmatprep.mubr.bf16.mxu0 %v475
        %1860 = vmatmul.mubr.bf16.gmra.mxu0 %v474
        %v1861 = vpop.f32.mrf.mxu0
        %v1862 = vadd.f32 %v1749, %v1861
        %v1863 = vpop.f32.mrf.mxu0
        %v1864 = vadd.f32 %v1751, %v1863
        %v1865 = vpop.f32.mrf.mxu0
        %v1866 = vadd.f32 %v1753, %v1865
        %v1867 = vpop.f32.mrf.mxu0
        %v1868 = vadd.f32 %v1755, %v1867
        %1869 = vmatprep.mubr.bf16.mxu0 %v479
        %1870 = vmatmul.mubr.bf16.gmra.mxu0 %v478
        %v1871 = vpop.f32.mrf.mxu0
        %v1872 = vadd.f32 %v1759, %v1871
        %v1873 = vpop.f32.mrf.mxu0
        %v1874 = vadd.f32 %v1761, %v1873
        %v1875 = vpop.f32.mrf.mxu0
        %v1876 = vadd.f32 %v1763, %v1875
        %v1877 = vpop.f32.mrf.mxu0
        %v1878 = vadd.f32 %v1765, %v1877
        %1879 = vmatprep.mubr.bf16.mxu0 %v483
        %1880 = vmatmul.mubr.bf16.gmra.mxu0 %v482
        %v1881 = vpop.f32.mrf.mxu0
        %v1882 = vadd.f32 %v1769, %v1881
        %v1883 = vpop.f32.mrf.mxu0
        %v1884 = vadd.f32 %v1771, %v1883
        %v1885 = vpop.f32.mrf.mxu0
        %v1886 = vadd.f32 %v1773, %v1885
        %v1887 = vpop.f32.mrf.mxu0
        %v1888 = vadd.f32 %v1775, %v1887
        %1889 = vmatprep.mubr.bf16.mxu0 %v487
        %1890 = vmatmul.mubr.bf16.gmra.mxu0 %v486
        %v1891 = vpop.f32.mrf.mxu0
        %v1892 = vadd.f32 %v1779, %v1891
        %v1893 = vpop.f32.mrf.mxu0
        %v1894 = vadd.f32 %v1781, %v1893
        %v1895 = vpop.f32.mrf.mxu0
        %v1896 = vadd.f32 %v1783, %v1895
        %v1897 = vpop.f32.mrf.mxu0
        %v1898 = vadd.f32 %v1785, %v1897
        %1899 = vdwg.mxu0
        %v1900 = vld [vmem:[%s5] sm:$0xff]
        %v1901 = vld [vmem:[%s5 + $0x8] sm:$0xff]
        %v1902 = vld [vmem:[%s5 + $0x10] sm:$0xff]
        %v1903 = vld [vmem:[%s5 + $0x18] sm:$0xff]
        %v1904 = vld [vmem:[%s5 + $0x20] sm:$0xff]
        %v1905 = vld [vmem:[%s5 + $0x28] sm:$0xff]
        %v1906 = vld [vmem:[%s5 + $0x30] sm:$0xff]
        %v1907 = vld [vmem:[%s5 + $0x38] sm:$0xff]
        %v1908 = vld [vmem:[%s5 + $0x40] sm:$0xff]
        %v1909 = vld [vmem:[%s5 + $0x48] sm:$0xff]
        %v1910 = vld [vmem:[%s5 + $0x50] sm:$0xff]
        %v1911 = vld [vmem:[%s5 + $0x58] sm:$0xff]
        %v1912 = vld [vmem:[%s5 + $0x60] sm:$0xff]
        %v1913 = vld [vmem:[%s5 + $0x68] sm:$0xff]
        %v1914 = vld [vmem:[%s5 + $0x70] sm:$0xff]
        %v1915 = vld [vmem:[%s5 + $0x78] sm:$0xff]
        %v1916 = vld [vmem:[%s5 + $0x80] sm:$0xff]
        %v1917 = vld [vmem:[%s5 + $0x88] sm:$0xff]
        %v1918 = vld [vmem:[%s5 + $0x90] sm:$0xff]
        %v1919 = vld [vmem:[%s5 + $0x98] sm:$0xff]
        %v1920 = vld [vmem:[%s5 + $0xa0] sm:$0xff]
        %v1921 = vld [vmem:[%s5 + $0xa8] sm:$0xff]
        %v1922 = vld [vmem:[%s5 + $0xb0] sm:$0xff]
        %v1923 = vld [vmem:[%s5 + $0xb8] sm:$0xff]
        %v1924 = vld [vmem:[%s5 + $0xc0] sm:$0xff]
        %v1925 = vld [vmem:[%s5 + $0xc8] sm:$0xff]
        %v1926 = vld [vmem:[%s5 + $0xd0] sm:$0xff]
        %v1927 = vld [vmem:[%s5 + $0xd8] sm:$0xff]
        %v1928 = vld [vmem:[%s5 + $0xe0] sm:$0xff]
        %v1929 = vld [vmem:[%s5 + $0xe8] sm:$0xff]
        %v1930 = vld [vmem:[%s5 + $0xf0] sm:$0xff]
        %v1931 = vld [vmem:[%s5 + $0xf8] sm:$0xff]
        %v1932 = vld [vmem:[%s5 + $0x100] sm:$0xff]
        %v1933 = vld [vmem:[%s5 + $0x108] sm:$0xff]
        %v1934 = vld [vmem:[%s5 + $0x110] sm:$0xff]
        %v1935 = vld [vmem:[%s5 + $0x118] sm:$0xff]
        %v1936 = vld [vmem:[%s5 + $0x120] sm:$0xff]
        %v1937 = vld [vmem:[%s5 + $0x128] sm:$0xff]
        %v1938 = vld [vmem:[%s5 + $0x130] sm:$0xff]
        %v1939 = vld [vmem:[%s5 + $0x138] sm:$0xff]
        %v1940 = vld [vmem:[%s5 + $0x140] sm:$0xff]
        %v1941 = vld [vmem:[%s5 + $0x148] sm:$0xff]
        %v1942 = vld [vmem:[%s5 + $0x150] sm:$0xff]
        %v1943 = vld [vmem:[%s5 + $0x158] sm:$0xff]
        %v1944 = vld [vmem:[%s5 + $0x160] sm:$0xff]
        %v1945 = vld [vmem:[%s5 + $0x168] sm:$0xff]
        %v1946 = vld [vmem:[%s5 + $0x170] sm:$0xff]
        %v1947 = vld [vmem:[%s5 + $0x178] sm:$0xff]
        %v1948 = vld [vmem:[%s5 + $0x180] sm:$0xff]
        %v1949 = vld [vmem:[%s5 + $0x188] sm:$0xff]
        %v1950 = vld [vmem:[%s5 + $0x190] sm:$0xff]
        %v1951 = vld [vmem:[%s5 + $0x198] sm:$0xff]
        %v1952 = vld [vmem:[%s5 + $0x1a0] sm:$0xff]
        %v1953 = vld [vmem:[%s5 + $0x1a8] sm:$0xff]
        %v1954 = vld [vmem:[%s5 + $0x1b0] sm:$0xff]
        %v1955 = vld [vmem:[%s5 + $0x1b8] sm:$0xff]
        %v1956 = vld [vmem:[%s5 + $0x1c0] sm:$0xff]
        %v1957 = vld [vmem:[%s5 + $0x1c8] sm:$0xff]
        %v1958 = vld [vmem:[%s5 + $0x1d0] sm:$0xff]
        %v1959 = vld [vmem:[%s5 + $0x1d8] sm:$0xff]
        %v1960 = vld [vmem:[%s5 + $0x1e0] sm:$0xff]
        %v1961 = vld [vmem:[%s5 + $0x1e8] sm:$0xff]
        %v1962 = vld [vmem:[%s5 + $0x1f0] sm:$0xff]
        %v1963 = vld [vmem:[%s5 + $0x1f8] sm:$0xff]
        %v1964 = vld [vmem:[%s5 + $0x200] sm:$0xff]
        %v1965 = vld [vmem:[%s5 + $0x208] sm:$0xff]
        %v1966 = vld [vmem:[%s5 + $0x210] sm:$0xff]
        %v1967 = vld [vmem:[%s5 + $0x218] sm:$0xff]
        %v1968 = vld [vmem:[%s5 + $0x220] sm:$0xff]
        %v1969 = vld [vmem:[%s5 + $0x228] sm:$0xff]
        %v1970 = vld [vmem:[%s5 + $0x230] sm:$0xff]
        %v1971 = vld [vmem:[%s5 + $0x238] sm:$0xff]
        %v1972 = vld [vmem:[%s5 + $0x240] sm:$0xff]
        %v1973 = vld [vmem:[%s5 + $0x248] sm:$0xff]
        %v1974 = vld [vmem:[%s5 + $0x250] sm:$0xff]
        %v1975 = vld [vmem:[%s5 + $0x258] sm:$0xff]
        %v1976 = vld [vmem:[%s5 + $0x260] sm:$0xff]
        %v1977 = vld [vmem:[%s5 + $0x268] sm:$0xff]
        %v1978 = vld [vmem:[%s5 + $0x270] sm:$0xff]
        %v1979 = vld [vmem:[%s5 + $0x278] sm:$0xff]
        %v1980 = vld [vmem:[%s5 + $0x280] sm:$0xff]
        %v1981 = vld [vmem:[%s5 + $0x288] sm:$0xff]
        %v1982 = vld [vmem:[%s5 + $0x290] sm:$0xff]
        %v1983 = vld [vmem:[%s5 + $0x298] sm:$0xff]
        %v1984 = vld [vmem:[%s5 + $0x2a0] sm:$0xff]
        %v1985 = vld [vmem:[%s5 + $0x2a8] sm:$0xff]
        %v1986 = vld [vmem:[%s5 + $0x2b0] sm:$0xff]
        %v1987 = vld [vmem:[%s5 + $0x2b8] sm:$0xff]
        %v1988 = vld [vmem:[%s5 + $0x2c0] sm:$0xff]
        %v1989 = vld [vmem:[%s5 + $0x2c8] sm:$0xff]
        %v1990 = vld [vmem:[%s5 + $0x2d0] sm:$0xff]
        %v1991 = vld [vmem:[%s5 + $0x2d8] sm:$0xff]
        %v1992 = vld [vmem:[%s5 + $0x2e0] sm:$0xff]
        %v1993 = vld [vmem:[%s5 + $0x2e8] sm:$0xff]
        %v1994 = vld [vmem:[%s5 + $0x2f0] sm:$0xff]
        %v1995 = vld [vmem:[%s5 + $0x2f8] sm:$0xff]
        %v1996 = vld [vmem:[%s5 + $0x300] sm:$0xff]
        %v1997 = vld [vmem:[%s5 + $0x308] sm:$0xff]
        %v1998 = vld [vmem:[%s5 + $0x310] sm:$0xff]
        %v1999 = vld [vmem:[%s5 + $0x318] sm:$0xff]
        %v2000 = vld [vmem:[%s5 + $0x320] sm:$0xff]
        %v2001 = vld [vmem:[%s5 + $0x328] sm:$0xff]
        %v2002 = vld [vmem:[%s5 + $0x330] sm:$0xff]
        %v2003 = vld [vmem:[%s5 + $0x338] sm:$0xff]
        %v2004 = vld [vmem:[%s5 + $0x340] sm:$0xff]
        %v2005 = vld [vmem:[%s5 + $0x348] sm:$0xff]
        %v2006 = vld [vmem:[%s5 + $0x350] sm:$0xff]
        %v2007 = vld [vmem:[%s5 + $0x358] sm:$0xff]
        %v2008 = vld [vmem:[%s5 + $0x360] sm:$0xff]
        %v2009 = vld [vmem:[%s5 + $0x368] sm:$0xff]
        %v2010 = vld [vmem:[%s5 + $0x370] sm:$0xff]
        %v2011 = vld [vmem:[%s5 + $0x378] sm:$0xff]
        %v2012 = vld [vmem:[%s5 + $0x380] sm:$0xff]
        %v2013 = vld [vmem:[%s5 + $0x388] sm:$0xff]
        %v2014 = vld [vmem:[%s5 + $0x390] sm:$0xff]
        %v2015 = vld [vmem:[%s5 + $0x398] sm:$0xff]
        %v2016 = vld [vmem:[%s5 + $0x3a0] sm:$0xff]
        %v2017 = vld [vmem:[%s5 + $0x3a8] sm:$0xff]
        %v2018 = vld [vmem:[%s5 + $0x3b0] sm:$0xff]
        %v2019 = vld [vmem:[%s5 + $0x3b8] sm:$0xff]
        %v2020 = vld [vmem:[%s5 + $0x3c0] sm:$0xff]
        %v2021 = vld [vmem:[%s5 + $0x3c8] sm:$0xff]
        %v2022 = vld [vmem:[%s5 + $0x3d0] sm:$0xff]
        %v2023 = vld [vmem:[%s5 + $0x3d8] sm:$0xff]
        %v2024 = vld [vmem:[%s5 + $0x3e0] sm:$0xff]
        %v2025 = vld [vmem:[%s5 + $0x3e8] sm:$0xff]
        %v2026 = vld [vmem:[%s5 + $0x3f0] sm:$0xff]
        %v2027 = vld [vmem:[%s5 + $0x3f8] sm:$0xff]
        %v2156 = vunpack.c.l.b16 %v1900
        %v2157 = vunpack.c.h.b16 %v1900
        %v2158 = vunpack.c.l.b16 %v1901
        %v2159 = vunpack.c.h.b16 %v1901
        %v2160 = vunpack.c.l.b16 %v1902
        %v2161 = vunpack.c.h.b16 %v1902
        %v2162 = vunpack.c.l.b16 %v1903
        %v2163 = vunpack.c.h.b16 %v1903
        %v2164 = vunpack.c.l.b16 %v1904
        %v2165 = vunpack.c.h.b16 %v1904
        %v2166 = vunpack.c.l.b16 %v1905
        %v2167 = vunpack.c.h.b16 %v1905
        %v2168 = vunpack.c.l.b16 %v1906
        %v2169 = vunpack.c.h.b16 %v1906
        %v2170 = vunpack.c.l.b16 %v1907
        %v2171 = vunpack.c.h.b16 %v1907
        %v2172 = vunpack.c.l.b16 %v1908
        %v2173 = vunpack.c.h.b16 %v1908
        %v2174 = vunpack.c.l.b16 %v1909
        %v2175 = vunpack.c.h.b16 %v1909
        %v2176 = vunpack.c.l.b16 %v1910
        %v2177 = vunpack.c.h.b16 %v1910
        %v2178 = vunpack.c.l.b16 %v1911
        %v2179 = vunpack.c.h.b16 %v1911
        %v2180 = vunpack.c.l.b16 %v1912
        %v2181 = vunpack.c.h.b16 %v1912
        %v2182 = vunpack.c.l.b16 %v1913
        %v2183 = vunpack.c.h.b16 %v1913
        %v2184 = vunpack.c.l.b16 %v1914
        %v2185 = vunpack.c.h.b16 %v1914
        %v2186 = vunpack.c.l.b16 %v1915
        %v2187 = vunpack.c.h.b16 %v1915
        %v2188 = vunpack.c.l.b16 %v1916
        %v2189 = vunpack.c.h.b16 %v1916
        %v2190 = vunpack.c.l.b16 %v1917
        %v2191 = vunpack.c.h.b16 %v1917
        %v2192 = vunpack.c.l.b16 %v1918
        %v2193 = vunpack.c.h.b16 %v1918
        %v2194 = vunpack.c.l.b16 %v1919
        %v2195 = vunpack.c.h.b16 %v1919
        %v2196 = vunpack.c.l.b16 %v1920
        %v2197 = vunpack.c.h.b16 %v1920
        %v2198 = vunpack.c.l.b16 %v1921
        %v2199 = vunpack.c.h.b16 %v1921
        %v2200 = vunpack.c.l.b16 %v1922
        %v2201 = vunpack.c.h.b16 %v1922
        %v2202 = vunpack.c.l.b16 %v1923
        %v2203 = vunpack.c.h.b16 %v1923
        %v2204 = vunpack.c.l.b16 %v1924
        %v2205 = vunpack.c.h.b16 %v1924
        %v2206 = vunpack.c.l.b16 %v1925
        %v2207 = vunpack.c.h.b16 %v1925
        %v2208 = vunpack.c.l.b16 %v1926
        %v2209 = vunpack.c.h.b16 %v1926
        %v2210 = vunpack.c.l.b16 %v1927
        %v2211 = vunpack.c.h.b16 %v1927
        %v2212 = vunpack.c.l.b16 %v1928
        %v2213 = vunpack.c.h.b16 %v1928
        %v2214 = vunpack.c.l.b16 %v1929
        %v2215 = vunpack.c.h.b16 %v1929
        %v2216 = vunpack.c.l.b16 %v1930
        %v2217 = vunpack.c.h.b16 %v1930
        %v2218 = vunpack.c.l.b16 %v1931
        %v2219 = vunpack.c.h.b16 %v1931
        %v2220 = vunpack.c.l.b16 %v1932
        %v2221 = vunpack.c.h.b16 %v1932
        %v2222 = vunpack.c.l.b16 %v1933
        %v2223 = vunpack.c.h.b16 %v1933
        %v2224 = vunpack.c.l.b16 %v1934
        %v2225 = vunpack.c.h.b16 %v1934
        %v2226 = vunpack.c.l.b16 %v1935
        %v2227 = vunpack.c.h.b16 %v1935
        %v2228 = vunpack.c.l.b16 %v1936
        %v2229 = vunpack.c.h.b16 %v1936
        %v2230 = vunpack.c.l.b16 %v1937
        %v2231 = vunpack.c.h.b16 %v1937
        %v2232 = vunpack.c.l.b16 %v1938
        %v2233 = vunpack.c.h.b16 %v1938
        %v2234 = vunpack.c.l.b16 %v1939
        %v2235 = vunpack.c.h.b16 %v1939
        %v2236 = vunpack.c.l.b16 %v1940
        %v2237 = vunpack.c.h.b16 %v1940
        %v2238 = vunpack.c.l.b16 %v1941
        %v2239 = vunpack.c.h.b16 %v1941
        %v2240 = vunpack.c.l.b16 %v1942
        %v2241 = vunpack.c.h.b16 %v1942
        %v2242 = vunpack.c.l.b16 %v1943
        %v2243 = vunpack.c.h.b16 %v1943
        %v2244 = vunpack.c.l.b16 %v1944
        %v2245 = vunpack.c.h.b16 %v1944
        %v2246 = vunpack.c.l.b16 %v1945
        %v2247 = vunpack.c.h.b16 %v1945
        %v2248 = vunpack.c.l.b16 %v1946
        %v2249 = vunpack.c.h.b16 %v1946
        %v2250 = vunpack.c.l.b16 %v1947
        %v2251 = vunpack.c.h.b16 %v1947
        %v2252 = vunpack.c.l.b16 %v1948
        %v2253 = vunpack.c.h.b16 %v1948
        %v2254 = vunpack.c.l.b16 %v1949
        %v2255 = vunpack.c.h.b16 %v1949
        %v2256 = vunpack.c.l.b16 %v1950
        %v2257 = vunpack.c.h.b16 %v1950
        %v2258 = vunpack.c.l.b16 %v1951
        %v2259 = vunpack.c.h.b16 %v1951
        %v2260 = vunpack.c.l.b16 %v1952
        %v2261 = vunpack.c.h.b16 %v1952
        %v2262 = vunpack.c.l.b16 %v1953
        %v2263 = vunpack.c.h.b16 %v1953
        %v2264 = vunpack.c.l.b16 %v1954
        %v2265 = vunpack.c.h.b16 %v1954
        %v2266 = vunpack.c.l.b16 %v1955
        %v2267 = vunpack.c.h.b16 %v1955
        %v2268 = vunpack.c.l.b16 %v1956
        %v2269 = vunpack.c.h.b16 %v1956
        %v2270 = vunpack.c.l.b16 %v1957
        %v2271 = vunpack.c.h.b16 %v1957
        %v2272 = vunpack.c.l.b16 %v1958
        %v2273 = vunpack.c.h.b16 %v1958
        %v2274 = vunpack.c.l.b16 %v1959
        %v2275 = vunpack.c.h.b16 %v1959
        %v2276 = vunpack.c.l.b16 %v1960
        %v2277 = vunpack.c.h.b16 %v1960
        %v2278 = vunpack.c.l.b16 %v1961
        %v2279 = vunpack.c.h.b16 %v1961
        %v2280 = vunpack.c.l.b16 %v1962
        %v2281 = vunpack.c.h.b16 %v1962
        %v2282 = vunpack.c.l.b16 %v1963
        %v2283 = vunpack.c.h.b16 %v1963
        %v2284 = vunpack.c.l.b16 %v1964
        %v2285 = vunpack.c.h.b16 %v1964
        %v2286 = vunpack.c.l.b16 %v1965
        %v2287 = vunpack.c.h.b16 %v1965
        %v2288 = vunpack.c.l.b16 %v1966
        %v2289 = vunpack.c.h.b16 %v1966
        %v2290 = vunpack.c.l.b16 %v1967
        %v2291 = vunpack.c.h.b16 %v1967
        %v2292 = vunpack.c.l.b16 %v1968
        %v2293 = vunpack.c.h.b16 %v1968
        %v2294 = vunpack.c.l.b16 %v1969
        %v2295 = vunpack.c.h.b16 %v1969
        %v2296 = vunpack.c.l.b16 %v1970
        %v2297 = vunpack.c.h.b16 %v1970
        %v2298 = vunpack.c.l.b16 %v1971
        %v2299 = vunpack.c.h.b16 %v1971
        %v2300 = vunpack.c.l.b16 %v1972
        %v2301 = vunpack.c.h.b16 %v1972
        %v2302 = vunpack.c.l.b16 %v1973
        %v2303 = vunpack.c.h.b16 %v1973
        %v2304 = vunpack.c.l.b16 %v1974
        %v2305 = vunpack.c.h.b16 %v1974
        %v2306 = vunpack.c.l.b16 %v1975
        %v2307 = vunpack.c.h.b16 %v1975
        %v2308 = vunpack.c.l.b16 %v1976
        %v2309 = vunpack.c.h.b16 %v1976
        %v2310 = vunpack.c.l.b16 %v1977
        %v2311 = vunpack.c.h.b16 %v1977
        %v2312 = vunpack.c.l.b16 %v1978
        %v2313 = vunpack.c.h.b16 %v1978
        %v2314 = vunpack.c.l.b16 %v1979
        %v2315 = vunpack.c.h.b16 %v1979
        %v2316 = vunpack.c.l.b16 %v1980
        %v2317 = vunpack.c.h.b16 %v1980
        %v2318 = vunpack.c.l.b16 %v1981
        %v2319 = vunpack.c.h.b16 %v1981
        %v2320 = vunpack.c.l.b16 %v1982
        %v2321 = vunpack.c.h.b16 %v1982
        %v2322 = vunpack.c.l.b16 %v1983
        %v2323 = vunpack.c.h.b16 %v1983
        %v2324 = vunpack.c.l.b16 %v1984
        %v2325 = vunpack.c.h.b16 %v1984
        %v2326 = vunpack.c.l.b16 %v1985
        %v2327 = vunpack.c.h.b16 %v1985
        %v2328 = vunpack.c.l.b16 %v1986
        %v2329 = vunpack.c.h.b16 %v1986
        %v2330 = vunpack.c.l.b16 %v1987
        %v2331 = vunpack.c.h.b16 %v1987
        %v2332 = vunpack.c.l.b16 %v1988
        %v2333 = vunpack.c.h.b16 %v1988
        %v2334 = vunpack.c.l.b16 %v1989
        %v2335 = vunpack.c.h.b16 %v1989
        %v2336 = vunpack.c.l.b16 %v1990
        %v2337 = vunpack.c.h.b16 %v1990
        %v2338 = vunpack.c.l.b16 %v1991
        %v2339 = vunpack.c.h.b16 %v1991
        %v2340 = vunpack.c.l.b16 %v1992
        %v2341 = vunpack.c.h.b16 %v1992
        %v2342 = vunpack.c.l.b16 %v1993
        %v2343 = vunpack.c.h.b16 %v1993
        %v2344 = vunpack.c.l.b16 %v1994
        %v2345 = vunpack.c.h.b16 %v1994
        %v2346 = vunpack.c.l.b16 %v1995
        %v2347 = vunpack.c.h.b16 %v1995
        %v2348 = vunpack.c.l.b16 %v1996
        %v2349 = vunpack.c.h.b16 %v1996
        %v2350 = vunpack.c.l.b16 %v1997
        %v2351 = vunpack.c.h.b16 %v1997
        %v2352 = vunpack.c.l.b16 %v1998
        %v2353 = vunpack.c.h.b16 %v1998
        %v2354 = vunpack.c.l.b16 %v1999
        %v2355 = vunpack.c.h.b16 %v1999
        %v2356 = vunpack.c.l.b16 %v2000
        %v2357 = vunpack.c.h.b16 %v2000
        %v2358 = vunpack.c.l.b16 %v2001
        %v2359 = vunpack.c.h.b16 %v2001
        %v2360 = vunpack.c.l.b16 %v2002
        %v2361 = vunpack.c.h.b16 %v2002
        %v2362 = vunpack.c.l.b16 %v2003
        %v2363 = vunpack.c.h.b16 %v2003
        %v2364 = vunpack.c.l.b16 %v2004
        %v2365 = vunpack.c.h.b16 %v2004
        %v2366 = vunpack.c.l.b16 %v2005
        %v2367 = vunpack.c.h.b16 %v2005
        %v2368 = vunpack.c.l.b16 %v2006
        %v2369 = vunpack.c.h.b16 %v2006
        %v2370 = vunpack.c.l.b16 %v2007
        %v2371 = vunpack.c.h.b16 %v2007
        %v2372 = vunpack.c.l.b16 %v2008
        %v2373 = vunpack.c.h.b16 %v2008
        %v2374 = vunpack.c.l.b16 %v2009
        %v2375 = vunpack.c.h.b16 %v2009
        %v2376 = vunpack.c.l.b16 %v2010
        %v2377 = vunpack.c.h.b16 %v2010
        %v2378 = vunpack.c.l.b16 %v2011
        %v2379 = vunpack.c.h.b16 %v2011
        %v2380 = vunpack.c.l.b16 %v2012
        %v2381 = vunpack.c.h.b16 %v2012
        %v2382 = vunpack.c.l.b16 %v2013
        %v2383 = vunpack.c.h.b16 %v2013
        %v2384 = vunpack.c.l.b16 %v2014
        %v2385 = vunpack.c.h.b16 %v2014
        %v2386 = vunpack.c.l.b16 %v2015
        %v2387 = vunpack.c.h.b16 %v2015
        %v2388 = vunpack.c.l.b16 %v2016
        %v2389 = vunpack.c.h.b16 %v2016
        %v2390 = vunpack.c.l.b16 %v2017
        %v2391 = vunpack.c.h.b16 %v2017
        %v2392 = vunpack.c.l.b16 %v2018
        %v2393 = vunpack.c.h.b16 %v2018
        %v2394 = vunpack.c.l.b16 %v2019
        %v2395 = vunpack.c.h.b16 %v2019
        %v2396 = vunpack.c.l.b16 %v2020
        %v2397 = vunpack.c.h.b16 %v2020
        %v2398 = vunpack.c.l.b16 %v2021
        %v2399 = vunpack.c.h.b16 %v2021
        %v2400 = vunpack.c.l.b16 %v2022
        %v2401 = vunpack.c.h.b16 %v2022
        %v2402 = vunpack.c.l.b16 %v2023
        %v2403 = vunpack.c.h.b16 %v2023
        %v2404 = vunpack.c.l.b16 %v2024
        %v2405 = vunpack.c.h.b16 %v2024
        %v2406 = vunpack.c.l.b16 %v2025
        %v2407 = vunpack.c.h.b16 %v2025
        %v2408 = vunpack.c.l.b16 %v2026
        %v2409 = vunpack.c.h.b16 %v2026
        %v2410 = vunpack.c.l.b16 %v2027
        %v2411 = vunpack.c.h.b16 %v2027
        %v2412 = vpack.c.b16 %v2160, %v2156
        %v2413 = vpack.c.b16 %v2161, %v2157
        %v2414 = vpack.c.b16 %v2162, %v2158
        %v2415 = vpack.c.b16 %v2163, %v2159
        %v2416 = vpack.c.b16 %v2168, %v2164
        %v2417 = vpack.c.b16 %v2169, %v2165
        %v2418 = vpack.c.b16 %v2170, %v2166
        %v2419 = vpack.c.b16 %v2171, %v2167
        %v2420 = vpack.c.b16 %v2176, %v2172
        %v2421 = vpack.c.b16 %v2177, %v2173
        %v2422 = vpack.c.b16 %v2178, %v2174
        %v2423 = vpack.c.b16 %v2179, %v2175
        %v2424 = vpack.c.b16 %v2184, %v2180
        %v2425 = vpack.c.b16 %v2185, %v2181
        %v2426 = vpack.c.b16 %v2186, %v2182
        %v2427 = vpack.c.b16 %v2187, %v2183
        %v2428 = vpack.c.b16 %v2192, %v2188
        %v2429 = vpack.c.b16 %v2193, %v2189
        %v2430 = vpack.c.b16 %v2194, %v2190
        %v2431 = vpack.c.b16 %v2195, %v2191
        %v2432 = vpack.c.b16 %v2200, %v2196
        %v2433 = vpack.c.b16 %v2201, %v2197
        %v2434 = vpack.c.b16 %v2202, %v2198
        %v2435 = vpack.c.b16 %v2203, %v2199
        %v2436 = vpack.c.b16 %v2208, %v2204
        %v2437 = vpack.c.b16 %v2209, %v2205
        %v2438 = vpack.c.b16 %v2210, %v2206
        %v2439 = vpack.c.b16 %v2211, %v2207
        %v2440 = vpack.c.b16 %v2216, %v2212
        %v2441 = vpack.c.b16 %v2217, %v2213
        %v2442 = vpack.c.b16 %v2218, %v2214
        %v2443 = vpack.c.b16 %v2219, %v2215
        %v2444 = vpack.c.b16 %v2224, %v2220
        %v2445 = vpack.c.b16 %v2225, %v2221
        %v2446 = vpack.c.b16 %v2226, %v2222
        %v2447 = vpack.c.b16 %v2227, %v2223
        %v2448 = vpack.c.b16 %v2232, %v2228
        %v2449 = vpack.c.b16 %v2233, %v2229
        %v2450 = vpack.c.b16 %v2234, %v2230
        %v2451 = vpack.c.b16 %v2235, %v2231
        %v2452 = vpack.c.b16 %v2240, %v2236
        %v2453 = vpack.c.b16 %v2241, %v2237
        %v2454 = vpack.c.b16 %v2242, %v2238
        %v2455 = vpack.c.b16 %v2243, %v2239
        %v2456 = vpack.c.b16 %v2248, %v2244
        %v2457 = vpack.c.b16 %v2249, %v2245
        %v2458 = vpack.c.b16 %v2250, %v2246
        %v2459 = vpack.c.b16 %v2251, %v2247
        %v2460 = vpack.c.b16 %v2256, %v2252
        %v2461 = vpack.c.b16 %v2257, %v2253
        %v2462 = vpack.c.b16 %v2258, %v2254
        %v2463 = vpack.c.b16 %v2259, %v2255
        %v2464 = vpack.c.b16 %v2264, %v2260
        %v2465 = vpack.c.b16 %v2265, %v2261
        %v2466 = vpack.c.b16 %v2266, %v2262
        %v2467 = vpack.c.b16 %v2267, %v2263
        %v2468 = vpack.c.b16 %v2272, %v2268
        %v2469 = vpack.c.b16 %v2273, %v2269
        %v2470 = vpack.c.b16 %v2274, %v2270
        %v2471 = vpack.c.b16 %v2275, %v2271
        %v2472 = vpack.c.b16 %v2280, %v2276
        %v2473 = vpack.c.b16 %v2281, %v2277
        %v2474 = vpack.c.b16 %v2282, %v2278
        %v2475 = vpack.c.b16 %v2283, %v2279
        %v2476 = vpack.c.b16 %v2288, %v2284
        %v2477 = vpack.c.b16 %v2289, %v2285
        %v2478 = vpack.c.b16 %v2290, %v2286
        %v2479 = vpack.c.b16 %v2291, %v2287
        %v2480 = vpack.c.b16 %v2296, %v2292
        %v2481 = vpack.c.b16 %v2297, %v2293
        %v2482 = vpack.c.b16 %v2298, %v2294
        %v2483 = vpack.c.b16 %v2299, %v2295
        %v2484 = vpack.c.b16 %v2304, %v2300
        %v2485 = vpack.c.b16 %v2305, %v2301
        %v2486 = vpack.c.b16 %v2306, %v2302
        %v2487 = vpack.c.b16 %v2307, %v2303
        %v2488 = vpack.c.b16 %v2312, %v2308
        %v2489 = vpack.c.b16 %v2313, %v2309
        %v2490 = vpack.c.b16 %v2314, %v2310
        %v2491 = vpack.c.b16 %v2315, %v2311
        %v2492 = vpack.c.b16 %v2320, %v2316
        %v2493 = vpack.c.b16 %v2321, %v2317
        %v2494 = vpack.c.b16 %v2322, %v2318
        %v2495 = vpack.c.b16 %v2323, %v2319
        %v2496 = vpack.c.b16 %v2328, %v2324
        %v2497 = vpack.c.b16 %v2329, %v2325
        %v2498 = vpack.c.b16 %v2330, %v2326
        %v2499 = vpack.c.b16 %v2331, %v2327
        %v2500 = vpack.c.b16 %v2336, %v2332
        %v2501 = vpack.c.b16 %v2337, %v2333
        %v2502 = vpack.c.b16 %v2338, %v2334
        %v2503 = vpack.c.b16 %v2339, %v2335
        %v2504 = vpack.c.b16 %v2344, %v2340
        %v2505 = vpack.c.b16 %v2345, %v2341
        %v2506 = vpack.c.b16 %v2346, %v2342
        %v2507 = vpack.c.b16 %v2347, %v2343
        %v2508 = vpack.c.b16 %v2352, %v2348
        %v2509 = vpack.c.b16 %v2353, %v2349
        %v2510 = vpack.c.b16 %v2354, %v2350
        %v2511 = vpack.c.b16 %v2355, %v2351
        %v2512 = vpack.c.b16 %v2360, %v2356
        %v2513 = vpack.c.b16 %v2361, %v2357
        %v2514 = vpack.c.b16 %v2362, %v2358
        %v2515 = vpack.c.b16 %v2363, %v2359
        %v2516 = vpack.c.b16 %v2368, %v2364
        %v2517 = vpack.c.b16 %v2369, %v2365
        %v2518 = vpack.c.b16 %v2370, %v2366
        %v2519 = vpack.c.b16 %v2371, %v2367
        %v2520 = vpack.c.b16 %v2376, %v2372
        %v2521 = vpack.c.b16 %v2377, %v2373
        %v2522 = vpack.c.b16 %v2378, %v2374
        %v2523 = vpack.c.b16 %v2379, %v2375
        %v2524 = vpack.c.b16 %v2384, %v2380
        %v2525 = vpack.c.b16 %v2385, %v2381
        %v2526 = vpack.c.b16 %v2386, %v2382
        %v2527 = vpack.c.b16 %v2387, %v2383
        %v2528 = vpack.c.b16 %v2392, %v2388
        %v2529 = vpack.c.b16 %v2393, %v2389
        %v2530 = vpack.c.b16 %v2394, %v2390
        %v2531 = vpack.c.b16 %v2395, %v2391
        %v2532 = vpack.c.b16 %v2400, %v2396
        %v2533 = vpack.c.b16 %v2401, %v2397
        %v2534 = vpack.c.b16 %v2402, %v2398
        %v2535 = vpack.c.b16 %v2403, %v2399
        %v2536 = vpack.c.b16 %v2408, %v2404
        %v2537 = vpack.c.b16 %v2409, %v2405
        %v2538 = vpack.c.b16 %v2410, %v2406
        %v2539 = vpack.c.b16 %v2411, %v2407
        %2668 = vmatprep.subr.bf16.mxu0 %v2441
        %2669 = vmatpush1.bf16.msra.mxu0 %v2440
        %2670 = vmatprep.subr.bf16.mxu0 %v2437
        %2671 = vmatpush1.bf16.msra.mxu0 %v2436
        %2672 = vmatprep.subr.bf16.mxu0 %v2433
        %2673 = vmatpush1.bf16.msra.mxu0 %v2432
        %2674 = vmatprep.subr.bf16.mxu0 %v2429
        %2675 = vmatpush1.bf16.msra.mxu0 %v2428
        %2676 = vmatprep.subr.bf16.mxu0 %v2425
        %2677 = vmatpush1.bf16.msra.mxu0 %v2424
        %2678 = vmatprep.subr.bf16.mxu0 %v2421
        %2679 = vmatpush1.bf16.msra.mxu0 %v2420
        %2680 = vmatprep.subr.bf16.mxu0 %v2417
        %2681 = vmatpush1.bf16.msra.mxu0 %v2416
        %2682 = vmatprep.subr.bf16.mxu0 %v2413
        %2683 = vmatpush1.bf16.msra.mxu0 %v2412
        %2684 = vmatprep.subr.bf16.mxu0 %v2473
        %2685 = vmatpush2.bf16.msra.mxu0 %v2472
        %2686 = vmatprep.subr.bf16.mxu0 %v2469
        %2687 = vmatpush2.bf16.msra.mxu0 %v2468
        %2688 = vmatprep.subr.bf16.mxu0 %v2465
        %2689 = vmatpush2.bf16.msra.mxu0 %v2464
        %2690 = vmatprep.subr.bf16.mxu0 %v2461
        %2691 = vmatpush2.bf16.msra.mxu0 %v2460
        %2692 = vmatprep.subr.bf16.mxu0 %v2457
        %2693 = vmatpush2.bf16.msra.mxu0 %v2456
        %2694 = vmatprep.subr.bf16.mxu0 %v2453
        %2695 = vmatpush2.bf16.msra.mxu0 %v2452
        %2696 = vmatprep.subr.bf16.mxu0 %v2449
        %2697 = vmatpush2.bf16.msra.mxu0 %v2448
        %2698 = vmatprep.subr.bf16.mxu0 %v2445
        %2699 = vmatpush2.bf16.msra.mxu0 %v2444
        %2700 = vmatprep.mubr.bf16.mxu0 %v553
        %2701 = vmatmul.mubr.bf16.gmra.mxu0 %v552
        %v2702 = vpop.f32.mrf.mxu0
        %v2703 = vadd.f32 0.0, %v2702
        %v2704 = vpop.f32.mrf.mxu0
        %v2705 = vadd.f32 0.0, %v2704
        %v2706 = vpop.f32.mrf.mxu0
        %v2707 = vadd.f32 0.0, %v2706
        %v2708 = vpop.f32.mrf.mxu0
        %v2709 = vadd.f32 0.0, %v2708
        %2710 = vmatprep.mubr.bf16.mxu0 %v557
        %2711 = vmatmul.mubr.bf16.gmra.mxu0 %v556
        %v2712 = vpop.f32.mrf.mxu0
        %v2713 = vadd.f32 0.0, %v2712
        %v2714 = vpop.f32.mrf.mxu0
        %v2715 = vadd.f32 0.0, %v2714
        %v2716 = vpop.f32.mrf.mxu0
        %v2717 = vadd.f32 0.0, %v2716
        %v2718 = vpop.f32.mrf.mxu0
        %v2719 = vadd.f32 0.0, %v2718
        %2720 = vmatprep.mubr.bf16.mxu0 %v561
        %2721 = vmatmul.mubr.bf16.gmra.mxu0 %v560
        %v2722 = vpop.f32.mrf.mxu0
        %v2723 = vadd.f32 0.0, %v2722
        %v2724 = vpop.f32.mrf.mxu0
        %v2725 = vadd.f32 0.0, %v2724
        %v2726 = vpop.f32.mrf.mxu0
        %v2727 = vadd.f32 0.0, %v2726
        %v2728 = vpop.f32.mrf.mxu0
        %v2729 = vadd.f32 0.0, %v2728
        %2730 = vmatprep.mubr.bf16.mxu0 %v565
        %2731 = vmatmul.mubr.bf16.gmra.mxu0 %v564
        %v2732 = vpop.f32.mrf.mxu0
        %v2733 = vadd.f32 0.0, %v2732
        %v2734 = vpop.f32.mrf.mxu0
        %v2735 = vadd.f32 0.0, %v2734
        %v2736 = vpop.f32.mrf.mxu0
        %v2737 = vadd.f32 0.0, %v2736
        %v2738 = vpop.f32.mrf.mxu0
        %v2739 = vadd.f32 0.0, %v2738
        %2740 = vmatprep.mubr.bf16.mxu0 %v569
        %2741 = vmatmul.mubr.bf16.gmra.mxu0 %v568
        %v2742 = vpop.f32.mrf.mxu0
        %v2743 = vadd.f32 0.0, %v2742
        %v2744 = vpop.f32.mrf.mxu0
        %v2745 = vadd.f32 0.0, %v2744
        %v2746 = vpop.f32.mrf.mxu0
        %v2747 = vadd.f32 0.0, %v2746
        %v2748 = vpop.f32.mrf.mxu0
        %v2749 = vadd.f32 0.0, %v2748
        %2750 = vmatprep.mubr.bf16.mxu0 %v573
        %2751 = vmatmul.mubr.bf16.gmra.mxu0 %v572
        %v2752 = vpop.f32.mrf.mxu0
        %v2753 = vadd.f32 0.0, %v2752
        %v2754 = vpop.f32.mrf.mxu0
        %v2755 = vadd.f32 0.0, %v2754
        %v2756 = vpop.f32.mrf.mxu0
        %v2757 = vadd.f32 0.0, %v2756
        %v2758 = vpop.f32.mrf.mxu0
        %v2759 = vadd.f32 0.0, %v2758
        %2760 = vmatprep.mubr.bf16.mxu0 %v577
        %2761 = vmatmul.mubr.bf16.gmra.mxu0 %v576
        %v2762 = vpop.f32.mrf.mxu0
        %v2763 = vadd.f32 0.0, %v2762
        %v2764 = vpop.f32.mrf.mxu0
        %v2765 = vadd.f32 0.0, %v2764
        %v2766 = vpop.f32.mrf.mxu0
        %v2767 = vadd.f32 0.0, %v2766
        %v2768 = vpop.f32.mrf.mxu0
        %v2769 = vadd.f32 0.0, %v2768
        %2770 = vmatprep.mubr.bf16.mxu0 %v581
        %2771 = vmatmul.mubr.bf16.gmra.mxu0 %v580
        %v2772 = vpop.f32.mrf.mxu0
        %v2773 = vadd.f32 0.0, %v2772
        %v2774 = vpop.f32.mrf.mxu0
        %v2775 = vadd.f32 0.0, %v2774
        %v2776 = vpop.f32.mrf.mxu0
        %v2777 = vadd.f32 0.0, %v2776
        %v2778 = vpop.f32.mrf.mxu0
        %v2779 = vadd.f32 0.0, %v2778
        %2780 = vdwg.mxu0
        %2781 = vmatprep.subr.bf16.mxu0 %v2505
        %2782 = vmatpush1.bf16.msra.mxu0 %v2504
        %2783 = vmatprep.subr.bf16.mxu0 %v2501
        %2784 = vmatpush1.bf16.msra.mxu0 %v2500
        %2785 = vmatprep.subr.bf16.mxu0 %v2497
        %2786 = vmatpush1.bf16.msra.mxu0 %v2496
        %2787 = vmatprep.subr.bf16.mxu0 %v2493
        %2788 = vmatpush1.bf16.msra.mxu0 %v2492
        %2789 = vmatprep.subr.bf16.mxu0 %v2489
        %2790 = vmatpush1.bf16.msra.mxu0 %v2488
        %2791 = vmatprep.subr.bf16.mxu0 %v2485
        %2792 = vmatpush1.bf16.msra.mxu0 %v2484
        %2793 = vmatprep.subr.bf16.mxu0 %v2481
        %2794 = vmatpush1.bf16.msra.mxu0 %v2480
        %2795 = vmatprep.subr.bf16.mxu0 %v2477
        %2796 = vmatpush1.bf16.msra.mxu0 %v2476
        %2797 = vmatprep.subr.bf16.mxu0 %v2537
        %2798 = vmatpush2.bf16.msra.mxu0 %v2536
        %2799 = vmatprep.subr.bf16.mxu0 %v2533
        %2800 = vmatpush2.bf16.msra.mxu0 %v2532
        %2801 = vmatprep.subr.bf16.mxu0 %v2529
        %2802 = vmatpush2.bf16.msra.mxu0 %v2528
        %2803 = vmatprep.subr.bf16.mxu0 %v2525
        %2804 = vmatpush2.bf16.msra.mxu0 %v2524
        %2805 = vmatprep.subr.bf16.mxu0 %v2521
        %2806 = vmatpush2.bf16.msra.mxu0 %v2520
        %2807 = vmatprep.subr.bf16.mxu0 %v2517
        %2808 = vmatpush2.bf16.msra.mxu0 %v2516
        %2809 = vmatprep.subr.bf16.mxu0 %v2513
        %2810 = vmatpush2.bf16.msra.mxu0 %v2512
        %2811 = vmatprep.subr.bf16.mxu0 %v2509
        %2812 = vmatpush2.bf16.msra.mxu0 %v2508
        %2813 = vmatprep.mubr.bf16.mxu0 %v555
        %2814 = vmatmul.mubr.bf16.gmra.mxu0 %v554
        %v2815 = vpop.f32.mrf.mxu0
        %v2816 = vadd.f32 %v2703, %v2815
        %v2817 = vpop.f32.mrf.mxu0
        %v2818 = vadd.f32 %v2705, %v2817
        %v2819 = vpop.f32.mrf.mxu0
        %v2820 = vadd.f32 %v2707, %v2819
        %v2821 = vpop.f32.mrf.mxu0
        %v2822 = vadd.f32 %v2709, %v2821
        %2823 = vmatprep.mubr.bf16.mxu0 %v559
        %2824 = vmatmul.mubr.bf16.gmra.mxu0 %v558
        %v2825 = vpop.f32.mrf.mxu0
        %v2826 = vadd.f32 %v2713, %v2825
        %v2827 = vpop.f32.mrf.mxu0
        %v2828 = vadd.f32 %v2715, %v2827
        %v2829 = vpop.f32.mrf.mxu0
        %v2830 = vadd.f32 %v2717, %v2829
        %v2831 = vpop.f32.mrf.mxu0
        %v2832 = vadd.f32 %v2719, %v2831
        %2833 = vmatprep.mubr.bf16.mxu0 %v563
        %2834 = vmatmul.mubr.bf16.gmra.mxu0 %v562
        %v2835 = vpop.f32.mrf.mxu0
        %v2836 = vadd.f32 %v2723, %v2835
        %v2837 = vpop.f32.mrf.mxu0
        %v2838 = vadd.f32 %v2725, %v2837
        %v2839 = vpop.f32.mrf.mxu0
        %v2840 = vadd.f32 %v2727, %v2839
        %v2841 = vpop.f32.mrf.mxu0
        %v2842 = vadd.f32 %v2729, %v2841
        %2843 = vmatprep.mubr.bf16.mxu0 %v567
        %2844 = vmatmul.mubr.bf16.gmra.mxu0 %v566
        %v2845 = vpop.f32.mrf.mxu0
        %v2846 = vadd.f32 %v2733, %v2845
        %v2847 = vpop.f32.mrf.mxu0
        %v2848 = vadd.f32 %v2735, %v2847
        %v2849 = vpop.f32.mrf.mxu0
        %v2850 = vadd.f32 %v2737, %v2849
        %v2851 = vpop.f32.mrf.mxu0
        %v2852 = vadd.f32 %v2739, %v2851
        %2853 = vmatprep.mubr.bf16.mxu0 %v571
        %2854 = vmatmul.mubr.bf16.gmra.mxu0 %v570
        %v2855 = vpop.f32.mrf.mxu0
        %v2856 = vadd.f32 %v2743, %v2855
        %v2857 = vpop.f32.mrf.mxu0
        %v2858 = vadd.f32 %v2745, %v2857
        %v2859 = vpop.f32.mrf.mxu0
        %v2860 = vadd.f32 %v2747, %v2859
        %v2861 = vpop.f32.mrf.mxu0
        %v2862 = vadd.f32 %v2749, %v2861
        %2863 = vmatprep.mubr.bf16.mxu0 %v575
        %2864 = vmatmul.mubr.bf16.gmra.mxu0 %v574
        %v2865 = vpop.f32.mrf.mxu0
        %v2866 = vadd.f32 %v2753, %v2865
        %v2867 = vpop.f32.mrf.mxu0
        %v2868 = vadd.f32 %v2755, %v2867
        %v2869 = vpop.f32.mrf.mxu0
        %v2870 = vadd.f32 %v2757, %v2869
        %v2871 = vpop.f32.mrf.mxu0
        %v2872 = vadd.f32 %v2759, %v2871
        %2873 = vmatprep.mubr.bf16.mxu0 %v579
        %2874 = vmatmul.mubr.bf16.gmra.mxu0 %v578
        %v2875 = vpop.f32.mrf.mxu0
        %v2876 = vadd.f32 %v2763, %v2875
        %v2877 = vpop.f32.mrf.mxu0
        %v2878 = vadd.f32 %v2765, %v2877
        %v2879 = vpop.f32.mrf.mxu0
        %v2880 = vadd.f32 %v2767, %v2879
        %v2881 = vpop.f32.mrf.mxu0
        %v2882 = vadd.f32 %v2769, %v2881
        %2883 = vmatprep.mubr.bf16.mxu0 %v583
        %2884 = vmatmul.mubr.bf16.gmra.mxu0 %v582
        %v2885 = vpop.f32.mrf.mxu0
        %v2886 = vadd.f32 %v2773, %v2885
        %v2887 = vpop.f32.mrf.mxu0
        %v2888 = vadd.f32 %v2775, %v2887
        %v2889 = vpop.f32.mrf.mxu0
        %v2890 = vadd.f32 %v2777, %v2889
        %v2891 = vpop.f32.mrf.mxu0
        %v2892 = vadd.f32 %v2779, %v2891
        %2893 = vdwg.mxu0
        %2894 = vmatprep.subr.bf16.mxu0 %v2443
        %2895 = vmatpush1.bf16.msra.mxu0 %v2442
        %2896 = vmatprep.subr.bf16.mxu0 %v2439
        %2897 = vmatpush1.bf16.msra.mxu0 %v2438
        %2898 = vmatprep.subr.bf16.mxu0 %v2435
        %2899 = vmatpush1.bf16.msra.mxu0 %v2434
        %2900 = vmatprep.subr.bf16.mxu0 %v2431
        %2901 = vmatpush1.bf16.msra.mxu0 %v2430
        %2902 = vmatprep.subr.bf16.mxu0 %v2427
        %2903 = vmatpush1.bf16.msra.mxu0 %v2426
        %2904 = vmatprep.subr.bf16.mxu0 %v2423
        %2905 = vmatpush1.bf16.msra.mxu0 %v2422
        %2906 = vmatprep.subr.bf16.mxu0 %v2419
        %2907 = vmatpush1.bf16.msra.mxu0 %v2418
        %2908 = vmatprep.subr.bf16.mxu0 %v2415
        %2909 = vmatpush1.bf16.msra.mxu0 %v2414
        %2910 = vmatprep.subr.bf16.mxu0 %v2475
        %2911 = vmatpush2.bf16.msra.mxu0 %v2474
        %2912 = vmatprep.subr.bf16.mxu0 %v2471
        %2913 = vmatpush2.bf16.msra.mxu0 %v2470
        %2914 = vmatprep.subr.bf16.mxu0 %v2467
        %2915 = vmatpush2.bf16.msra.mxu0 %v2466
        %2916 = vmatprep.subr.bf16.mxu0 %v2463
        %2917 = vmatpush2.bf16.msra.mxu0 %v2462
        %2918 = vmatprep.subr.bf16.mxu0 %v2459
        %2919 = vmatpush2.bf16.msra.mxu0 %v2458
        %2920 = vmatprep.subr.bf16.mxu0 %v2455
        %2921 = vmatpush2.bf16.msra.mxu0 %v2454
        %2922 = vmatprep.subr.bf16.mxu0 %v2451
        %2923 = vmatpush2.bf16.msra.mxu0 %v2450
        %2924 = vmatprep.subr.bf16.mxu0 %v2447
        %2925 = vmatpush2.bf16.msra.mxu0 %v2446
        %2926 = vmatprep.mubr.bf16.mxu0 %v553
        %2927 = vmatmul.mubr.bf16.gmra.mxu0 %v552
        %v2928 = vpop.f32.mrf.mxu0
        %v2929 = vadd.f32 0.0, %v2928
        %v2930 = vpop.f32.mrf.mxu0
        %v2931 = vadd.f32 0.0, %v2930
        %v2932 = vpop.f32.mrf.mxu0
        %v2933 = vadd.f32 0.0, %v2932
        %v2934 = vpop.f32.mrf.mxu0
        %v2935 = vadd.f32 0.0, %v2934
        %2936 = vmatprep.mubr.bf16.mxu0 %v557
        %2937 = vmatmul.mubr.bf16.gmra.mxu0 %v556
        %v2938 = vpop.f32.mrf.mxu0
        %v2939 = vadd.f32 0.0, %v2938
        %v2940 = vpop.f32.mrf.mxu0
        %v2941 = vadd.f32 0.0, %v2940
        %v2942 = vpop.f32.mrf.mxu0
        %v2943 = vadd.f32 0.0, %v2942
        %v2944 = vpop.f32.mrf.mxu0
        %v2945 = vadd.f32 0.0, %v2944
        %2946 = vmatprep.mubr.bf16.mxu0 %v561
        %2947 = vmatmul.mubr.bf16.gmra.mxu0 %v560
        %v2948 = vpop.f32.mrf.mxu0
        %v2949 = vadd.f32 0.0, %v2948
        %v2950 = vpop.f32.mrf.mxu0
        %v2951 = vadd.f32 0.0, %v2950
        %v2952 = vpop.f32.mrf.mxu0
        %v2953 = vadd.f32 0.0, %v2952
        %v2954 = vpop.f32.mrf.mxu0
        %v2955 = vadd.f32 0.0, %v2954
        %2956 = vmatprep.mubr.bf16.mxu0 %v565
        %2957 = vmatmul.mubr.bf16.gmra.mxu0 %v564
        %v2958 = vpop.f32.mrf.mxu0
        %v2959 = vadd.f32 0.0, %v2958
        %v2960 = vpop.f32.mrf.mxu0
        %v2961 = vadd.f32 0.0, %v2960
        %v2962 = vpop.f32.mrf.mxu0
        %v2963 = vadd.f32 0.0, %v2962
        %v2964 = vpop.f32.mrf.mxu0
        %v2965 = vadd.f32 0.0, %v2964
        %2966 = vmatprep.mubr.bf16.mxu0 %v569
        %2967 = vmatmul.mubr.bf16.gmra.mxu0 %v568
        %v2968 = vpop.f32.mrf.mxu0
        %v2969 = vadd.f32 0.0, %v2968
        %v2970 = vpop.f32.mrf.mxu0
        %v2971 = vadd.f32 0.0, %v2970
        %v2972 = vpop.f32.mrf.mxu0
        %v2973 = vadd.f32 0.0, %v2972
        %v2974 = vpop.f32.mrf.mxu0
        %v2975 = vadd.f32 0.0, %v2974
        %2976 = vmatprep.mubr.bf16.mxu0 %v573
        %2977 = vmatmul.mubr.bf16.gmra.mxu0 %v572
        %v2978 = vpop.f32.mrf.mxu0
        %v2979 = vadd.f32 0.0, %v2978
        %v2980 = vpop.f32.mrf.mxu0
        %v2981 = vadd.f32 0.0, %v2980
        %v2982 = vpop.f32.mrf.mxu0
        %v2983 = vadd.f32 0.0, %v2982
        %v2984 = vpop.f32.mrf.mxu0
        %v2985 = vadd.f32 0.0, %v2984
        %2986 = vmatprep.mubr.bf16.mxu0 %v577
        %2987 = vmatmul.mubr.bf16.gmra.mxu0 %v576
        %v2988 = vpop.f32.mrf.mxu0
        %v2989 = vadd.f32 0.0, %v2988
        %v2990 = vpop.f32.mrf.mxu0
        %v2991 = vadd.f32 0.0, %v2990
        %v2992 = vpop.f32.mrf.mxu0
        %v2993 = vadd.f32 0.0, %v2992
        %v2994 = vpop.f32.mrf.mxu0
        %v2995 = vadd.f32 0.0, %v2994
        %2996 = vmatprep.mubr.bf16.mxu0 %v581
        %2997 = vmatmul.mubr.bf16.gmra.mxu0 %v580
        %v2998 = vpop.f32.mrf.mxu0
        %v2999 = vadd.f32 0.0, %v2998
        %v3000 = vpop.f32.mrf.mxu0
        %v3001 = vadd.f32 0.0, %v3000
        %v3002 = vpop.f32.mrf.mxu0
        %v3003 = vadd.f32 0.0, %v3002
        %v3004 = vpop.f32.mrf.mxu0
        %v3005 = vadd.f32 0.0, %v3004
        %3006 = vdwg.mxu0
        %3007 = vmatprep.subr.bf16.mxu0 %v2507
        %3008 = vmatpush1.bf16.msra.mxu0 %v2506
        %3009 = vmatprep.subr.bf16.mxu0 %v2503
        %3010 = vmatpush1.bf16.msra.mxu0 %v2502
        %3011 = vmatprep.subr.bf16.mxu0 %v2499
        %3012 = vmatpush1.bf16.msra.mxu0 %v2498
        %3013 = vmatprep.subr.bf16.mxu0 %v2495
        %3014 = vmatpush1.bf16.msra.mxu0 %v2494
        %3015 = vmatprep.subr.bf16.mxu0 %v2491
        %3016 = vmatpush1.bf16.msra.mxu0 %v2490
        %3017 = vmatprep.subr.bf16.mxu0 %v2487
        %3018 = vmatpush1.bf16.msra.mxu0 %v2486
        %3019 = vmatprep.subr.bf16.mxu0 %v2483
        %3020 = vmatpush1.bf16.msra.mxu0 %v2482
        %3021 = vmatprep.subr.bf16.mxu0 %v2479
        %3022 = vmatpush1.bf16.msra.mxu0 %v2478
        %3023 = vmatprep.subr.bf16.mxu0 %v2539
        %3024 = vmatpush2.bf16.msra.mxu0 %v2538
        %3025 = vmatprep.subr.bf16.mxu0 %v2535
        %3026 = vmatpush2.bf16.msra.mxu0 %v2534
        %3027 = vmatprep.subr.bf16.mxu0 %v2531
        %3028 = vmatpush2.bf16.msra.mxu0 %v2530
        %3029 = vmatprep.subr.bf16.mxu0 %v2527
        %3030 = vmatpush2.bf16.msra.mxu0 %v2526
        %3031 = vmatprep.subr.bf16.mxu0 %v2523
        %3032 = vmatpush2.bf16.msra.mxu0 %v2522
        %3033 = vmatprep.subr.bf16.mxu0 %v2519
        %3034 = vmatpush2.bf16.msra.mxu0 %v2518
        %3035 = vmatprep.subr.bf16.mxu0 %v2515
        %3036 = vmatpush2.bf16.msra.mxu0 %v2514
        %3037 = vmatprep.subr.bf16.mxu0 %v2511
        %3038 = vmatpush2.bf16.msra.mxu0 %v2510
        %3039 = vmatprep.mubr.bf16.mxu0 %v555
        %3040 = vmatmul.mubr.bf16.gmra.mxu0 %v554
        %v3041 = vpop.f32.mrf.mxu0
        %v3042 = vadd.f32 %v2929, %v3041
        %v3043 = vpop.f32.mrf.mxu0
        %v3044 = vadd.f32 %v2931, %v3043
        %v3045 = vpop.f32.mrf.mxu0
        %v3046 = vadd.f32 %v2933, %v3045
        %v3047 = vpop.f32.mrf.mxu0
        %v3048 = vadd.f32 %v2935, %v3047
        %3049 = vmatprep.mubr.bf16.mxu0 %v559
        %3050 = vmatmul.mubr.bf16.gmra.mxu0 %v558
        %v3051 = vpop.f32.mrf.mxu0
        %v3052 = vadd.f32 %v2939, %v3051
        %v3053 = vpop.f32.mrf.mxu0
        %v3054 = vadd.f32 %v2941, %v3053
        %v3055 = vpop.f32.mrf.mxu0
        %v3056 = vadd.f32 %v2943, %v3055
        %v3057 = vpop.f32.mrf.mxu0
        %v3058 = vadd.f32 %v2945, %v3057
        %3059 = vmatprep.mubr.bf16.mxu0 %v563
        %3060 = vmatmul.mubr.bf16.gmra.mxu0 %v562
        %v3061 = vpop.f32.mrf.mxu0
        %v3062 = vadd.f32 %v2949, %v3061
        %v3063 = vpop.f32.mrf.mxu0
        %v3064 = vadd.f32 %v2951, %v3063
        %v3065 = vpop.f32.mrf.mxu0
        %v3066 = vadd.f32 %v2953, %v3065
        %v3067 = vpop.f32.mrf.mxu0
        %v3068 = vadd.f32 %v2955, %v3067
        %3069 = vmatprep.mubr.bf16.mxu0 %v567
        %3070 = vmatmul.mubr.bf16.gmra.mxu0 %v566
        %v3071 = vpop.f32.mrf.mxu0
        %v3072 = vadd.f32 %v2959, %v3071
        %v3073 = vpop.f32.mrf.mxu0
        %v3074 = vadd.f32 %v2961, %v3073
        %v3075 = vpop.f32.mrf.mxu0
        %v3076 = vadd.f32 %v2963, %v3075
        %v3077 = vpop.f32.mrf.mxu0
        %v3078 = vadd.f32 %v2965, %v3077
        %3079 = vmatprep.mubr.bf16.mxu0 %v571
        %3080 = vmatmul.mubr.bf16.gmra.mxu0 %v570
        %v3081 = vpop.f32.mrf.mxu0
        %v3082 = vadd.f32 %v2969, %v3081
        %v3083 = vpop.f32.mrf.mxu0
        %v3084 = vadd.f32 %v2971, %v3083
        %v3085 = vpop.f32.mrf.mxu0
        %v3086 = vadd.f32 %v2973, %v3085
        %v3087 = vpop.f32.mrf.mxu0
        %v3088 = vadd.f32 %v2975, %v3087
        %3089 = vmatprep.mubr.bf16.mxu0 %v575
        %3090 = vmatmul.mubr.bf16.gmra.mxu0 %v574
        %v3091 = vpop.f32.mrf.mxu0
        %v3092 = vadd.f32 %v2979, %v3091
        %v3093 = vpop.f32.mrf.mxu0
        %v3094 = vadd.f32 %v2981, %v3093
        %v3095 = vpop.f32.mrf.mxu0
        %v3096 = vadd.f32 %v2983, %v3095
        %v3097 = vpop.f32.mrf.mxu0
        %v3098 = vadd.f32 %v2985, %v3097
        %3099 = vmatprep.mubr.bf16.mxu0 %v579
        %3100 = vmatmul.mubr.bf16.gmra.mxu0 %v578
        %v3101 = vpop.f32.mrf.mxu0
        %v3102 = vadd.f32 %v2989, %v3101
        %v3103 = vpop.f32.mrf.mxu0
        %v3104 = vadd.f32 %v2991, %v3103
        %v3105 = vpop.f32.mrf.mxu0
        %v3106 = vadd.f32 %v2993, %v3105
        %v3107 = vpop.f32.mrf.mxu0
        %v3108 = vadd.f32 %v2995, %v3107
        %3109 = vmatprep.mubr.bf16.mxu0 %v583
        %3110 = vmatmul.mubr.bf16.gmra.mxu0 %v582
        %v3111 = vpop.f32.mrf.mxu0
        %v3112 = vadd.f32 %v2999, %v3111
        %v3113 = vpop.f32.mrf.mxu0
        %v3114 = vadd.f32 %v3001, %v3113
        %v3115 = vpop.f32.mrf.mxu0
        %v3116 = vadd.f32 %v3003, %v3115
        %v3117 = vpop.f32.mrf.mxu0
        %v3118 = vadd.f32 %v3005, %v3117
        %3119 = vdwg.mxu0
        %v3120 = vld [vmem:[%s6] sm:$0xff]
        %v3121 = vld [vmem:[%s6 + $0x8] sm:$0xff]
        %v3122 = vld [vmem:[%s6 + $0x10] sm:$0xff]
        %v3123 = vld [vmem:[%s6 + $0x18] sm:$0xff]
        %v3124 = vld [vmem:[%s6 + $0x20] sm:$0xff]
        %v3125 = vld [vmem:[%s6 + $0x28] sm:$0xff]
        %v3126 = vld [vmem:[%s6 + $0x30] sm:$0xff]
        %v3127 = vld [vmem:[%s6 + $0x38] sm:$0xff]
        %v3128 = vld [vmem:[%s6 + $0x40] sm:$0xff]
        %v3129 = vld [vmem:[%s6 + $0x48] sm:$0xff]
        %v3130 = vld [vmem:[%s6 + $0x50] sm:$0xff]
        %v3131 = vld [vmem:[%s6 + $0x58] sm:$0xff]
        %v3132 = vld [vmem:[%s6 + $0x60] sm:$0xff]
        %v3133 = vld [vmem:[%s6 + $0x68] sm:$0xff]
        %v3134 = vld [vmem:[%s6 + $0x70] sm:$0xff]
        %v3135 = vld [vmem:[%s6 + $0x78] sm:$0xff]
        %v3136 = vld [vmem:[%s6 + $0x80] sm:$0xff]
        %v3137 = vld [vmem:[%s6 + $0x88] sm:$0xff]
        %v3138 = vld [vmem:[%s6 + $0x90] sm:$0xff]
        %v3139 = vld [vmem:[%s6 + $0x98] sm:$0xff]
        %v3140 = vld [vmem:[%s6 + $0xa0] sm:$0xff]
        %v3141 = vld [vmem:[%s6 + $0xa8] sm:$0xff]
        %v3142 = vld [vmem:[%s6 + $0xb0] sm:$0xff]
        %v3143 = vld [vmem:[%s6 + $0xb8] sm:$0xff]
        %v3144 = vld [vmem:[%s6 + $0xc0] sm:$0xff]
        %v3145 = vld [vmem:[%s6 + $0xc8] sm:$0xff]
        %v3146 = vld [vmem:[%s6 + $0xd0] sm:$0xff]
        %v3147 = vld [vmem:[%s6 + $0xd8] sm:$0xff]
        %v3148 = vld [vmem:[%s6 + $0xe0] sm:$0xff]
        %v3149 = vld [vmem:[%s6 + $0xe8] sm:$0xff]
        %v3150 = vld [vmem:[%s6 + $0xf0] sm:$0xff]
        %v3151 = vld [vmem:[%s6 + $0xf8] sm:$0xff]
        %v3152 = vld [vmem:[%s6 + $0x100] sm:$0xff]
        %v3153 = vld [vmem:[%s6 + $0x108] sm:$0xff]
        %v3154 = vld [vmem:[%s6 + $0x110] sm:$0xff]
        %v3155 = vld [vmem:[%s6 + $0x118] sm:$0xff]
        %v3156 = vld [vmem:[%s6 + $0x120] sm:$0xff]
        %v3157 = vld [vmem:[%s6 + $0x128] sm:$0xff]
        %v3158 = vld [vmem:[%s6 + $0x130] sm:$0xff]
        %v3159 = vld [vmem:[%s6 + $0x138] sm:$0xff]
        %v3160 = vld [vmem:[%s6 + $0x140] sm:$0xff]
        %v3161 = vld [vmem:[%s6 + $0x148] sm:$0xff]
        %v3162 = vld [vmem:[%s6 + $0x150] sm:$0xff]
        %v3163 = vld [vmem:[%s6 + $0x158] sm:$0xff]
        %v3164 = vld [vmem:[%s6 + $0x160] sm:$0xff]
        %v3165 = vld [vmem:[%s6 + $0x168] sm:$0xff]
        %v3166 = vld [vmem:[%s6 + $0x170] sm:$0xff]
        %v3167 = vld [vmem:[%s6 + $0x178] sm:$0xff]
        %v3168 = vld [vmem:[%s6 + $0x180] sm:$0xff]
        %v3169 = vld [vmem:[%s6 + $0x188] sm:$0xff]
        %v3170 = vld [vmem:[%s6 + $0x190] sm:$0xff]
        %v3171 = vld [vmem:[%s6 + $0x198] sm:$0xff]
        %v3172 = vld [vmem:[%s6 + $0x1a0] sm:$0xff]
        %v3173 = vld [vmem:[%s6 + $0x1a8] sm:$0xff]
        %v3174 = vld [vmem:[%s6 + $0x1b0] sm:$0xff]
        %v3175 = vld [vmem:[%s6 + $0x1b8] sm:$0xff]
        %v3176 = vld [vmem:[%s6 + $0x1c0] sm:$0xff]
        %v3177 = vld [vmem:[%s6 + $0x1c8] sm:$0xff]
        %v3178 = vld [vmem:[%s6 + $0x1d0] sm:$0xff]
        %v3179 = vld [vmem:[%s6 + $0x1d8] sm:$0xff]
        %v3180 = vld [vmem:[%s6 + $0x1e0] sm:$0xff]
        %v3181 = vld [vmem:[%s6 + $0x1e8] sm:$0xff]
        %v3182 = vld [vmem:[%s6 + $0x1f0] sm:$0xff]
        %v3183 = vld [vmem:[%s6 + $0x1f8] sm:$0xff]
        %v3184 = vld [vmem:[%s6 + $0x200] sm:$0xff]
        %v3185 = vld [vmem:[%s6 + $0x208] sm:$0xff]
        %v3186 = vld [vmem:[%s6 + $0x210] sm:$0xff]
        %v3187 = vld [vmem:[%s6 + $0x218] sm:$0xff]
        %v3188 = vld [vmem:[%s6 + $0x220] sm:$0xff]
        %v3189 = vld [vmem:[%s6 + $0x228] sm:$0xff]
        %v3190 = vld [vmem:[%s6 + $0x230] sm:$0xff]
        %v3191 = vld [vmem:[%s6 + $0x238] sm:$0xff]
        %v3192 = vld [vmem:[%s6 + $0x240] sm:$0xff]
        %v3193 = vld [vmem:[%s6 + $0x248] sm:$0xff]
        %v3194 = vld [vmem:[%s6 + $0x250] sm:$0xff]
        %v3195 = vld [vmem:[%s6 + $0x258] sm:$0xff]
        %v3196 = vld [vmem:[%s6 + $0x260] sm:$0xff]
        %v3197 = vld [vmem:[%s6 + $0x268] sm:$0xff]
        %v3198 = vld [vmem:[%s6 + $0x270] sm:$0xff]
        %v3199 = vld [vmem:[%s6 + $0x278] sm:$0xff]
        %v3200 = vld [vmem:[%s6 + $0x280] sm:$0xff]
        %v3201 = vld [vmem:[%s6 + $0x288] sm:$0xff]
        %v3202 = vld [vmem:[%s6 + $0x290] sm:$0xff]
        %v3203 = vld [vmem:[%s6 + $0x298] sm:$0xff]
        %v3204 = vld [vmem:[%s6 + $0x2a0] sm:$0xff]
        %v3205 = vld [vmem:[%s6 + $0x2a8] sm:$0xff]
        %v3206 = vld [vmem:[%s6 + $0x2b0] sm:$0xff]
        %v3207 = vld [vmem:[%s6 + $0x2b8] sm:$0xff]
        %v3208 = vld [vmem:[%s6 + $0x2c0] sm:$0xff]
        %v3209 = vld [vmem:[%s6 + $0x2c8] sm:$0xff]
        %v3210 = vld [vmem:[%s6 + $0x2d0] sm:$0xff]
        %v3211 = vld [vmem:[%s6 + $0x2d8] sm:$0xff]
        %v3212 = vld [vmem:[%s6 + $0x2e0] sm:$0xff]
        %v3213 = vld [vmem:[%s6 + $0x2e8] sm:$0xff]
        %v3214 = vld [vmem:[%s6 + $0x2f0] sm:$0xff]
        %v3215 = vld [vmem:[%s6 + $0x2f8] sm:$0xff]
        %v3216 = vld [vmem:[%s6 + $0x300] sm:$0xff]
        %v3217 = vld [vmem:[%s6 + $0x308] sm:$0xff]
        %v3218 = vld [vmem:[%s6 + $0x310] sm:$0xff]
        %v3219 = vld [vmem:[%s6 + $0x318] sm:$0xff]
        %v3220 = vld [vmem:[%s6 + $0x320] sm:$0xff]
        %v3221 = vld [vmem:[%s6 + $0x328] sm:$0xff]
        %v3222 = vld [vmem:[%s6 + $0x330] sm:$0xff]
        %v3223 = vld [vmem:[%s6 + $0x338] sm:$0xff]
        %v3224 = vld [vmem:[%s6 + $0x340] sm:$0xff]
        %v3225 = vld [vmem:[%s6 + $0x348] sm:$0xff]
        %v3226 = vld [vmem:[%s6 + $0x350] sm:$0xff]
        %v3227 = vld [vmem:[%s6 + $0x358] sm:$0xff]
        %v3228 = vld [vmem:[%s6 + $0x360] sm:$0xff]
        %v3229 = vld [vmem:[%s6 + $0x368] sm:$0xff]
        %v3230 = vld [vmem:[%s6 + $0x370] sm:$0xff]
        %v3231 = vld [vmem:[%s6 + $0x378] sm:$0xff]
        %v3232 = vld [vmem:[%s6 + $0x380] sm:$0xff]
        %v3233 = vld [vmem:[%s6 + $0x388] sm:$0xff]
        %v3234 = vld [vmem:[%s6 + $0x390] sm:$0xff]
        %v3235 = vld [vmem:[%s6 + $0x398] sm:$0xff]
        %v3236 = vld [vmem:[%s6 + $0x3a0] sm:$0xff]
        %v3237 = vld [vmem:[%s6 + $0x3a8] sm:$0xff]
        %v3238 = vld [vmem:[%s6 + $0x3b0] sm:$0xff]
        %v3239 = vld [vmem:[%s6 + $0x3b8] sm:$0xff]
        %v3240 = vld [vmem:[%s6 + $0x3c0] sm:$0xff]
        %v3241 = vld [vmem:[%s6 + $0x3c8] sm:$0xff]
        %v3242 = vld [vmem:[%s6 + $0x3d0] sm:$0xff]
        %v3243 = vld [vmem:[%s6 + $0x3d8] sm:$0xff]
        %v3244 = vld [vmem:[%s6 + $0x3e0] sm:$0xff]
        %v3245 = vld [vmem:[%s6 + $0x3e8] sm:$0xff]
        %v3246 = vld [vmem:[%s6 + $0x3f0] sm:$0xff]
        %v3247 = vld [vmem:[%s6 + $0x3f8] sm:$0xff]
        %v3376 = vunpack.c.l.b16 %v3120
        %v3377 = vunpack.c.h.b16 %v3120
        %v3378 = vunpack.c.l.b16 %v3121
        %v3379 = vunpack.c.h.b16 %v3121
        %v3380 = vunpack.c.l.b16 %v3122
        %v3381 = vunpack.c.h.b16 %v3122
        %v3382 = vunpack.c.l.b16 %v3123
        %v3383 = vunpack.c.h.b16 %v3123
        %v3384 = vunpack.c.l.b16 %v3124
        %v3385 = vunpack.c.h.b16 %v3124
        %v3386 = vunpack.c.l.b16 %v3125
        %v3387 = vunpack.c.h.b16 %v3125
        %v3388 = vunpack.c.l.b16 %v3126
        %v3389 = vunpack.c.h.b16 %v3126
        %v3390 = vunpack.c.l.b16 %v3127
        %v3391 = vunpack.c.h.b16 %v3127
        %v3392 = vunpack.c.l.b16 %v3128
        %v3393 = vunpack.c.h.b16 %v3128
        %v3394 = vunpack.c.l.b16 %v3129
        %v3395 = vunpack.c.h.b16 %v3129
        %v3396 = vunpack.c.l.b16 %v3130
        %v3397 = vunpack.c.h.b16 %v3130
        %v3398 = vunpack.c.l.b16 %v3131
        %v3399 = vunpack.c.h.b16 %v3131
        %v3400 = vunpack.c.l.b16 %v3132
        %v3401 = vunpack.c.h.b16 %v3132
        %v3402 = vunpack.c.l.b16 %v3133
        %v3403 = vunpack.c.h.b16 %v3133
        %v3404 = vunpack.c.l.b16 %v3134
        %v3405 = vunpack.c.h.b16 %v3134
        %v3406 = vunpack.c.l.b16 %v3135
        %v3407 = vunpack.c.h.b16 %v3135
        %v3408 = vunpack.c.l.b16 %v3136
        %v3409 = vunpack.c.h.b16 %v3136
        %v3410 = vunpack.c.l.b16 %v3137
        %v3411 = vunpack.c.h.b16 %v3137
        %v3412 = vunpack.c.l.b16 %v3138
        %v3413 = vunpack.c.h.b16 %v3138
        %v3414 = vunpack.c.l.b16 %v3139
        %v3415 = vunpack.c.h.b16 %v3139
        %v3416 = vunpack.c.l.b16 %v3140
        %v3417 = vunpack.c.h.b16 %v3140
        %v3418 = vunpack.c.l.b16 %v3141
        %v3419 = vunpack.c.h.b16 %v3141
        %v3420 = vunpack.c.l.b16 %v3142
        %v3421 = vunpack.c.h.b16 %v3142
        %v3422 = vunpack.c.l.b16 %v3143
        %v3423 = vunpack.c.h.b16 %v3143
        %v3424 = vunpack.c.l.b16 %v3144
        %v3425 = vunpack.c.h.b16 %v3144
        %v3426 = vunpack.c.l.b16 %v3145
        %v3427 = vunpack.c.h.b16 %v3145
        %v3428 = vunpack.c.l.b16 %v3146
        %v3429 = vunpack.c.h.b16 %v3146
        %v3430 = vunpack.c.l.b16 %v3147
        %v3431 = vunpack.c.h.b16 %v3147
        %v3432 = vunpack.c.l.b16 %v3148
        %v3433 = vunpack.c.h.b16 %v3148
        %v3434 = vunpack.c.l.b16 %v3149
        %v3435 = vunpack.c.h.b16 %v3149
        %v3436 = vunpack.c.l.b16 %v3150
        %v3437 = vunpack.c.h.b16 %v3150
        %v3438 = vunpack.c.l.b16 %v3151
        %v3439 = vunpack.c.h.b16 %v3151
        %v3440 = vunpack.c.l.b16 %v3152
        %v3441 = vunpack.c.h.b16 %v3152
        %v3442 = vunpack.c.l.b16 %v3153
        %v3443 = vunpack.c.h.b16 %v3153
        %v3444 = vunpack.c.l.b16 %v3154
        %v3445 = vunpack.c.h.b16 %v3154
        %v3446 = vunpack.c.l.b16 %v3155
        %v3447 = vunpack.c.h.b16 %v3155
        %v3448 = vunpack.c.l.b16 %v3156
        %v3449 = vunpack.c.h.b16 %v3156
        %v3450 = vunpack.c.l.b16 %v3157
        %v3451 = vunpack.c.h.b16 %v3157
        %v3452 = vunpack.c.l.b16 %v3158
        %v3453 = vunpack.c.h.b16 %v3158
        %v3454 = vunpack.c.l.b16 %v3159
        %v3455 = vunpack.c.h.b16 %v3159
        %v3456 = vunpack.c.l.b16 %v3160
        %v3457 = vunpack.c.h.b16 %v3160
        %v3458 = vunpack.c.l.b16 %v3161
        %v3459 = vunpack.c.h.b16 %v3161
        %v3460 = vunpack.c.l.b16 %v3162
        %v3461 = vunpack.c.h.b16 %v3162
        %v3462 = vunpack.c.l.b16 %v3163
        %v3463 = vunpack.c.h.b16 %v3163
        %v3464 = vunpack.c.l.b16 %v3164
        %v3465 = vunpack.c.h.b16 %v3164
        %v3466 = vunpack.c.l.b16 %v3165
        %v3467 = vunpack.c.h.b16 %v3165
        %v3468 = vunpack.c.l.b16 %v3166
        %v3469 = vunpack.c.h.b16 %v3166
        %v3470 = vunpack.c.l.b16 %v3167
        %v3471 = vunpack.c.h.b16 %v3167
        %v3472 = vunpack.c.l.b16 %v3168
        %v3473 = vunpack.c.h.b16 %v3168
        %v3474 = vunpack.c.l.b16 %v3169
        %v3475 = vunpack.c.h.b16 %v3169
        %v3476 = vunpack.c.l.b16 %v3170
        %v3477 = vunpack.c.h.b16 %v3170
        %v3478 = vunpack.c.l.b16 %v3171
        %v3479 = vunpack.c.h.b16 %v3171
        %v3480 = vunpack.c.l.b16 %v3172
        %v3481 = vunpack.c.h.b16 %v3172
        %v3482 = vunpack.c.l.b16 %v3173
        %v3483 = vunpack.c.h.b16 %v3173
        %v3484 = vunpack.c.l.b16 %v3174
        %v3485 = vunpack.c.h.b16 %v3174
        %v3486 = vunpack.c.l.b16 %v3175
        %v3487 = vunpack.c.h.b16 %v3175
        %v3488 = vunpack.c.l.b16 %v3176
        %v3489 = vunpack.c.h.b16 %v3176
        %v3490 = vunpack.c.l.b16 %v3177
        %v3491 = vunpack.c.h.b16 %v3177
        %v3492 = vunpack.c.l.b16 %v3178
        %v3493 = vunpack.c.h.b16 %v3178
        %v3494 = vunpack.c.l.b16 %v3179
        %v3495 = vunpack.c.h.b16 %v3179
        %v3496 = vunpack.c.l.b16 %v3180
        %v3497 = vunpack.c.h.b16 %v3180
        %v3498 = vunpack.c.l.b16 %v3181
        %v3499 = vunpack.c.h.b16 %v3181
        %v3500 = vunpack.c.l.b16 %v3182
        %v3501 = vunpack.c.h.b16 %v3182
        %v3502 = vunpack.c.l.b16 %v3183
        %v3503 = vunpack.c.h.b16 %v3183
        %v3504 = vunpack.c.l.b16 %v3184
        %v3505 = vunpack.c.h.b16 %v3184
        %v3506 = vunpack.c.l.b16 %v3185
        %v3507 = vunpack.c.h.b16 %v3185
        %v3508 = vunpack.c.l.b16 %v3186
        %v3509 = vunpack.c.h.b16 %v3186
        %v3510 = vunpack.c.l.b16 %v3187
        %v3511 = vunpack.c.h.b16 %v3187
        %v3512 = vunpack.c.l.b16 %v3188
        %v3513 = vunpack.c.h.b16 %v3188
        %v3514 = vunpack.c.l.b16 %v3189
        %v3515 = vunpack.c.h.b16 %v3189
        %v3516 = vunpack.c.l.b16 %v3190
        %v3517 = vunpack.c.h.b16 %v3190
        %v3518 = vunpack.c.l.b16 %v3191
        %v3519 = vunpack.c.h.b16 %v3191
        %v3520 = vunpack.c.l.b16 %v3192
        %v3521 = vunpack.c.h.b16 %v3192
        %v3522 = vunpack.c.l.b16 %v3193
        %v3523 = vunpack.c.h.b16 %v3193
        %v3524 = vunpack.c.l.b16 %v3194
        %v3525 = vunpack.c.h.b16 %v3194
        %v3526 = vunpack.c.l.b16 %v3195
        %v3527 = vunpack.c.h.b16 %v3195
        %v3528 = vunpack.c.l.b16 %v3196
        %v3529 = vunpack.c.h.b16 %v3196
        %v3530 = vunpack.c.l.b16 %v3197
        %v3531 = vunpack.c.h.b16 %v3197
        %v3532 = vunpack.c.l.b16 %v3198
        %v3533 = vunpack.c.h.b16 %v3198
        %v3534 = vunpack.c.l.b16 %v3199
        %v3535 = vunpack.c.h.b16 %v3199
        %v3536 = vunpack.c.l.b16 %v3200
        %v3537 = vunpack.c.h.b16 %v3200
        %v3538 = vunpack.c.l.b16 %v3201
        %v3539 = vunpack.c.h.b16 %v3201
        %v3540 = vunpack.c.l.b16 %v3202
        %v3541 = vunpack.c.h.b16 %v3202
        %v3542 = vunpack.c.l.b16 %v3203
        %v3543 = vunpack.c.h.b16 %v3203
        %v3544 = vunpack.c.l.b16 %v3204
        %v3545 = vunpack.c.h.b16 %v3204
        %v3546 = vunpack.c.l.b16 %v3205
        %v3547 = vunpack.c.h.b16 %v3205
        %v3548 = vunpack.c.l.b16 %v3206
        %v3549 = vunpack.c.h.b16 %v3206
        %v3550 = vunpack.c.l.b16 %v3207
        %v3551 = vunpack.c.h.b16 %v3207
        %v3552 = vunpack.c.l.b16 %v3208
        %v3553 = vunpack.c.h.b16 %v3208
        %v3554 = vunpack.c.l.b16 %v3209
        %v3555 = vunpack.c.h.b16 %v3209
        %v3556 = vunpack.c.l.b16 %v3210
        %v3557 = vunpack.c.h.b16 %v3210
        %v3558 = vunpack.c.l.b16 %v3211
        %v3559 = vunpack.c.h.b16 %v3211
        %v3560 = vunpack.c.l.b16 %v3212
        %v3561 = vunpack.c.h.b16 %v3212
        %v3562 = vunpack.c.l.b16 %v3213
        %v3563 = vunpack.c.h.b16 %v3213
        %v3564 = vunpack.c.l.b16 %v3214
        %v3565 = vunpack.c.h.b16 %v3214
        %v3566 = vunpack.c.l.b16 %v3215
        %v3567 = vunpack.c.h.b16 %v3215
        %v3568 = vunpack.c.l.b16 %v3216
        %v3569 = vunpack.c.h.b16 %v3216
        %v3570 = vunpack.c.l.b16 %v3217
        %v3571 = vunpack.c.h.b16 %v3217
        %v3572 = vunpack.c.l.b16 %v3218
        %v3573 = vunpack.c.h.b16 %v3218
        %v3574 = vunpack.c.l.b16 %v3219
        %v3575 = vunpack.c.h.b16 %v3219
        %v3576 = vunpack.c.l.b16 %v3220
        %v3577 = vunpack.c.h.b16 %v3220
        %v3578 = vunpack.c.l.b16 %v3221
        %v3579 = vunpack.c.h.b16 %v3221
        %v3580 = vunpack.c.l.b16 %v3222
        %v3581 = vunpack.c.h.b16 %v3222
        %v3582 = vunpack.c.l.b16 %v3223
        %v3583 = vunpack.c.h.b16 %v3223
        %v3584 = vunpack.c.l.b16 %v3224
        %v3585 = vunpack.c.h.b16 %v3224
        %v3586 = vunpack.c.l.b16 %v3225
        %v3587 = vunpack.c.h.b16 %v3225
        %v3588 = vunpack.c.l.b16 %v3226
        %v3589 = vunpack.c.h.b16 %v3226
        %v3590 = vunpack.c.l.b16 %v3227
        %v3591 = vunpack.c.h.b16 %v3227
        %v3592 = vunpack.c.l.b16 %v3228
        %v3593 = vunpack.c.h.b16 %v3228
        %v3594 = vunpack.c.l.b16 %v3229
        %v3595 = vunpack.c.h.b16 %v3229
        %v3596 = vunpack.c.l.b16 %v3230
        %v3597 = vunpack.c.h.b16 %v3230
        %v3598 = vunpack.c.l.b16 %v3231
        %v3599 = vunpack.c.h.b16 %v3231
        %v3600 = vunpack.c.l.b16 %v3232
        %v3601 = vunpack.c.h.b16 %v3232
        %v3602 = vunpack.c.l.b16 %v3233
        %v3603 = vunpack.c.h.b16 %v3233
        %v3604 = vunpack.c.l.b16 %v3234
        %v3605 = vunpack.c.h.b16 %v3234
        %v3606 = vunpack.c.l.b16 %v3235
        %v3607 = vunpack.c.h.b16 %v3235
        %v3608 = vunpack.c.l.b16 %v3236
        %v3609 = vunpack.c.h.b16 %v3236
        %v3610 = vunpack.c.l.b16 %v3237
        %v3611 = vunpack.c.h.b16 %v3237
        %v3612 = vunpack.c.l.b16 %v3238
        %v3613 = vunpack.c.h.b16 %v3238
        %v3614 = vunpack.c.l.b16 %v3239
        %v3615 = vunpack.c.h.b16 %v3239
        %v3616 = vunpack.c.l.b16 %v3240
        %v3617 = vunpack.c.h.b16 %v3240
        %v3618 = vunpack.c.l.b16 %v3241
        %v3619 = vunpack.c.h.b16 %v3241
        %v3620 = vunpack.c.l.b16 %v3242
        %v3621 = vunpack.c.h.b16 %v3242
        %v3622 = vunpack.c.l.b16 %v3243
        %v3623 = vunpack.c.h.b16 %v3243
        %v3624 = vunpack.c.l.b16 %v3244
        %v3625 = vunpack.c.h.b16 %v3244
        %v3626 = vunpack.c.l.b16 %v3245
        %v3627 = vunpack.c.h.b16 %v3245
        %v3628 = vunpack.c.l.b16 %v3246
        %v3629 = vunpack.c.h.b16 %v3246
        %v3630 = vunpack.c.l.b16 %v3247
        %v3631 = vunpack.c.h.b16 %v3247
        %v3632 = vpack.c.b16 %v3380, %v3376
        %v3633 = vpack.c.b16 %v3381, %v3377
        %v3634 = vpack.c.b16 %v3382, %v3378
        %v3635 = vpack.c.b16 %v3383, %v3379
        %v3636 = vpack.c.b16 %v3388, %v3384
        %v3637 = vpack.c.b16 %v3389, %v3385
        %v3638 = vpack.c.b16 %v3390, %v3386
        %v3639 = vpack.c.b16 %v3391, %v3387
        %v3640 = vpack.c.b16 %v3396, %v3392
        %v3641 = vpack.c.b16 %v3397, %v3393
        %v3642 = vpack.c.b16 %v3398, %v3394
        %v3643 = vpack.c.b16 %v3399, %v3395
        %v3644 = vpack.c.b16 %v3404, %v3400
        %v3645 = vpack.c.b16 %v3405, %v3401
        %v3646 = vpack.c.b16 %v3406, %v3402
        %v3647 = vpack.c.b16 %v3407, %v3403
        %v3648 = vpack.c.b16 %v3412, %v3408
        %v3649 = vpack.c.b16 %v3413, %v3409
        %v3650 = vpack.c.b16 %v3414, %v3410
        %v3651 = vpack.c.b16 %v3415, %v3411
        %v3652 = vpack.c.b16 %v3420, %v3416
        %v3653 = vpack.c.b16 %v3421, %v3417
        %v3654 = vpack.c.b16 %v3422, %v3418
        %v3655 = vpack.c.b16 %v3423, %v3419
        %v3656 = vpack.c.b16 %v3428, %v3424
        %v3657 = vpack.c.b16 %v3429, %v3425
        %v3658 = vpack.c.b16 %v3430, %v3426
        %v3659 = vpack.c.b16 %v3431, %v3427
        %v3660 = vpack.c.b16 %v3436, %v3432
        %v3661 = vpack.c.b16 %v3437, %v3433
        %v3662 = vpack.c.b16 %v3438, %v3434
        %v3663 = vpack.c.b16 %v3439, %v3435
        %v3664 = vpack.c.b16 %v3444, %v3440
        %v3665 = vpack.c.b16 %v3445, %v3441
        %v3666 = vpack.c.b16 %v3446, %v3442
        %v3667 = vpack.c.b16 %v3447, %v3443
        %v3668 = vpack.c.b16 %v3452, %v3448
        %v3669 = vpack.c.b16 %v3453, %v3449
        %v3670 = vpack.c.b16 %v3454, %v3450
        %v3671 = vpack.c.b16 %v3455, %v3451
        %v3672 = vpack.c.b16 %v3460, %v3456
        %v3673 = vpack.c.b16 %v3461, %v3457
        %v3674 = vpack.c.b16 %v3462, %v3458
        %v3675 = vpack.c.b16 %v3463, %v3459
        %v3676 = vpack.c.b16 %v3468, %v3464
        %v3677 = vpack.c.b16 %v3469, %v3465
        %v3678 = vpack.c.b16 %v3470, %v3466
        %v3679 = vpack.c.b16 %v3471, %v3467
        %v3680 = vpack.c.b16 %v3476, %v3472
        %v3681 = vpack.c.b16 %v3477, %v3473
        %v3682 = vpack.c.b16 %v3478, %v3474
        %v3683 = vpack.c.b16 %v3479, %v3475
        %v3684 = vpack.c.b16 %v3484, %v3480
        %v3685 = vpack.c.b16 %v3485, %v3481
        %v3686 = vpack.c.b16 %v3486, %v3482
        %v3687 = vpack.c.b16 %v3487, %v3483
        %v3688 = vpack.c.b16 %v3492, %v3488
        %v3689 = vpack.c.b16 %v3493, %v3489
        %v3690 = vpack.c.b16 %v3494, %v3490
        %v3691 = vpack.c.b16 %v3495, %v3491
        %v3692 = vpack.c.b16 %v3500, %v3496
        %v3693 = vpack.c.b16 %v3501, %v3497
        %v3694 = vpack.c.b16 %v3502, %v3498
        %v3695 = vpack.c.b16 %v3503, %v3499
        %v3696 = vpack.c.b16 %v3508, %v3504
        %v3697 = vpack.c.b16 %v3509, %v3505
        %v3698 = vpack.c.b16 %v3510, %v3506
        %v3699 = vpack.c.b16 %v3511, %v3507
        %v3700 = vpack.c.b16 %v3516, %v3512
        %v3701 = vpack.c.b16 %v3517, %v3513
        %v3702 = vpack.c.b16 %v3518, %v3514
        %v3703 = vpack.c.b16 %v3519, %v3515
        %v3704 = vpack.c.b16 %v3524, %v3520
        %v3705 = vpack.c.b16 %v3525, %v3521
        %v3706 = vpack.c.b16 %v3526, %v3522
        %v3707 = vpack.c.b16 %v3527, %v3523
        %v3708 = vpack.c.b16 %v3532, %v3528
        %v3709 = vpack.c.b16 %v3533, %v3529
        %v3710 = vpack.c.b16 %v3534, %v3530
        %v3711 = vpack.c.b16 %v3535, %v3531
        %v3712 = vpack.c.b16 %v3540, %v3536
        %v3713 = vpack.c.b16 %v3541, %v3537
        %v3714 = vpack.c.b16 %v3542, %v3538
        %v3715 = vpack.c.b16 %v3543, %v3539
        %v3716 = vpack.c.b16 %v3548, %v3544
        %v3717 = vpack.c.b16 %v3549, %v3545
        %v3718 = vpack.c.b16 %v3550, %v3546
        %v3719 = vpack.c.b16 %v3551, %v3547
        %v3720 = vpack.c.b16 %v3556, %v3552
        %v3721 = vpack.c.b16 %v3557, %v3553
        %v3722 = vpack.c.b16 %v3558, %v3554
        %v3723 = vpack.c.b16 %v3559, %v3555
        %v3724 = vpack.c.b16 %v3564, %v3560
        %v3725 = vpack.c.b16 %v3565, %v3561
        %v3726 = vpack.c.b16 %v3566, %v3562
        %v3727 = vpack.c.b16 %v3567, %v3563
        %v3728 = vpack.c.b16 %v3572, %v3568
        %v3729 = vpack.c.b16 %v3573, %v3569
        %v3730 = vpack.c.b16 %v3574, %v3570
        %v3731 = vpack.c.b16 %v3575, %v3571
        %v3732 = vpack.c.b16 %v3580, %v3576
        %v3733 = vpack.c.b16 %v3581, %v3577
        %v3734 = vpack.c.b16 %v3582, %v3578
        %v3735 = vpack.c.b16 %v3583, %v3579
        %v3736 = vpack.c.b16 %v3588, %v3584
        %v3737 = vpack.c.b16 %v3589, %v3585
        %v3738 = vpack.c.b16 %v3590, %v3586
        %v3739 = vpack.c.b16 %v3591, %v3587
        %v3740 = vpack.c.b16 %v3596, %v3592
        %v3741 = vpack.c.b16 %v3597, %v3593
        %v3742 = vpack.c.b16 %v3598, %v3594
        %v3743 = vpack.c.b16 %v3599, %v3595
        %v3744 = vpack.c.b16 %v3604, %v3600
        %v3745 = vpack.c.b16 %v3605, %v3601
        %v3746 = vpack.c.b16 %v3606, %v3602
        %v3747 = vpack.c.b16 %v3607, %v3603
        %v3748 = vpack.c.b16 %v3612, %v3608
        %v3749 = vpack.c.b16 %v3613, %v3609
        %v3750 = vpack.c.b16 %v3614, %v3610
        %v3751 = vpack.c.b16 %v3615, %v3611
        %v3752 = vpack.c.b16 %v3620, %v3616
        %v3753 = vpack.c.b16 %v3621, %v3617
        %v3754 = vpack.c.b16 %v3622, %v3618
        %v3755 = vpack.c.b16 %v3623, %v3619
        %v3756 = vpack.c.b16 %v3628, %v3624
        %v3757 = vpack.c.b16 %v3629, %v3625
        %v3758 = vpack.c.b16 %v3630, %v3626
        %v3759 = vpack.c.b16 %v3631, %v3627
        %3888 = vmatprep.subr.bf16.mxu0 %v3661
        %3889 = vmatpush1.bf16.msra.mxu0 %v3660
        %3890 = vmatprep.subr.bf16.mxu0 %v3657
        %3891 = vmatpush1.bf16.msra.mxu0 %v3656
        %3892 = vmatprep.subr.bf16.mxu0 %v3653
        %3893 = vmatpush1.bf16.msra.mxu0 %v3652
        %3894 = vmatprep.subr.bf16.mxu0 %v3649
        %3895 = vmatpush1.bf16.msra.mxu0 %v3648
        %3896 = vmatprep.subr.bf16.mxu0 %v3645
        %3897 = vmatpush1.bf16.msra.mxu0 %v3644
        %3898 = vmatprep.subr.bf16.mxu0 %v3641
        %3899 = vmatpush1.bf16.msra.mxu0 %v3640
        %3900 = vmatprep.subr.bf16.mxu0 %v3637
        %3901 = vmatpush1.bf16.msra.mxu0 %v3636
        %3902 = vmatprep.subr.bf16.mxu0 %v3633
        %3903 = vmatpush1.bf16.msra.mxu0 %v3632
        %3904 = vmatprep.subr.bf16.mxu0 %v3693
        %3905 = vmatpush2.bf16.msra.mxu0 %v3692
        %3906 = vmatprep.subr.bf16.mxu0 %v3689
        %3907 = vmatpush2.bf16.msra.mxu0 %v3688
        %3908 = vmatprep.subr.bf16.mxu0 %v3685
        %3909 = vmatpush2.bf16.msra.mxu0 %v3684
        %3910 = vmatprep.subr.bf16.mxu0 %v3681
        %3911 = vmatpush2.bf16.msra.mxu0 %v3680
        %3912 = vmatprep.subr.bf16.mxu0 %v3677
        %3913 = vmatpush2.bf16.msra.mxu0 %v3676
        %3914 = vmatprep.subr.bf16.mxu0 %v3673
        %3915 = vmatpush2.bf16.msra.mxu0 %v3672
        %3916 = vmatprep.subr.bf16.mxu0 %v3669
        %3917 = vmatpush2.bf16.msra.mxu0 %v3668
        %3918 = vmatprep.subr.bf16.mxu0 %v3665
        %3919 = vmatpush2.bf16.msra.mxu0 %v3664
        %3920 = vmatprep.mubr.bf16.mxu0 %v649
        %3921 = vmatmul.mubr.bf16.gmra.mxu0 %v648
        %v3922 = vpop.f32.mrf.mxu0
        %v3923 = vadd.f32 0.0, %v3922
        %v3924 = vpop.f32.mrf.mxu0
        %v3925 = vadd.f32 0.0, %v3924
        %v3926 = vpop.f32.mrf.mxu0
        %v3927 = vadd.f32 0.0, %v3926
        %v3928 = vpop.f32.mrf.mxu0
        %v3929 = vadd.f32 0.0, %v3928
        %3930 = vmatprep.mubr.bf16.mxu0 %v653
        %3931 = vmatmul.mubr.bf16.gmra.mxu0 %v652
        %v3932 = vpop.f32.mrf.mxu0
        %v3933 = vadd.f32 0.0, %v3932
        %v3934 = vpop.f32.mrf.mxu0
        %v3935 = vadd.f32 0.0, %v3934
        %v3936 = vpop.f32.mrf.mxu0
        %v3937 = vadd.f32 0.0, %v3936
        %v3938 = vpop.f32.mrf.mxu0
        %v3939 = vadd.f32 0.0, %v3938
        %3940 = vmatprep.mubr.bf16.mxu0 %v657
        %3941 = vmatmul.mubr.bf16.gmra.mxu0 %v656
        %v3942 = vpop.f32.mrf.mxu0
        %v3943 = vadd.f32 0.0, %v3942
        %v3944 = vpop.f32.mrf.mxu0
        %v3945 = vadd.f32 0.0, %v3944
        %v3946 = vpop.f32.mrf.mxu0
        %v3947 = vadd.f32 0.0, %v3946
        %v3948 = vpop.f32.mrf.mxu0
        %v3949 = vadd.f32 0.0, %v3948
        %3950 = vmatprep.mubr.bf16.mxu0 %v661
        %3951 = vmatmul.mubr.bf16.gmra.mxu0 %v660
        %v3952 = vpop.f32.mrf.mxu0
        %v3953 = vadd.f32 0.0, %v3952
        %v3954 = vpop.f32.mrf.mxu0
        %v3955 = vadd.f32 0.0, %v3954
        %v3956 = vpop.f32.mrf.mxu0
        %v3957 = vadd.f32 0.0, %v3956
        %v3958 = vpop.f32.mrf.mxu0
        %v3959 = vadd.f32 0.0, %v3958
        %3960 = vmatprep.mubr.bf16.mxu0 %v665
        %3961 = vmatmul.mubr.bf16.gmra.mxu0 %v664
        %v3962 = vpop.f32.mrf.mxu0
        %v3963 = vadd.f32 0.0, %v3962
        %v3964 = vpop.f32.mrf.mxu0
        %v3965 = vadd.f32 0.0, %v3964
        %v3966 = vpop.f32.mrf.mxu0
        %v3967 = vadd.f32 0.0, %v3966
        %v3968 = vpop.f32.mrf.mxu0
        %v3969 = vadd.f32 0.0, %v3968
        %3970 = vmatprep.mubr.bf16.mxu0 %v669
        %3971 = vmatmul.mubr.bf16.gmra.mxu0 %v668
        %v3972 = vpop.f32.mrf.mxu0
        %v3973 = vadd.f32 0.0, %v3972
        %v3974 = vpop.f32.mrf.mxu0
        %v3975 = vadd.f32 0.0, %v3974
        %v3976 = vpop.f32.mrf.mxu0
        %v3977 = vadd.f32 0.0, %v3976
        %v3978 = vpop.f32.mrf.mxu0
        %v3979 = vadd.f32 0.0, %v3978
        %3980 = vmatprep.mubr.bf16.mxu0 %v673
        %3981 = vmatmul.mubr.bf16.gmra.mxu0 %v672
        %v3982 = vpop.f32.mrf.mxu0
        %v3983 = vadd.f32 0.0, %v3982
        %v3984 = vpop.f32.mrf.mxu0
        %v3985 = vadd.f32 0.0, %v3984
        %v3986 = vpop.f32.mrf.mxu0
        %v3987 = vadd.f32 0.0, %v3986
        %v3988 = vpop.f32.mrf.mxu0
        %v3989 = vadd.f32 0.0, %v3988
        %3990 = vmatprep.mubr.bf16.mxu0 %v677
        %3991 = vmatmul.mubr.bf16.gmra.mxu0 %v676
        %v3992 = vpop.f32.mrf.mxu0
        %v3993 = vadd.f32 0.0, %v3992
        %v3994 = vpop.f32.mrf.mxu0
        %v3995 = vadd.f32 0.0, %v3994
        %v3996 = vpop.f32.mrf.mxu0
        %v3997 = vadd.f32 0.0, %v3996
        %v3998 = vpop.f32.mrf.mxu0
        %v3999 = vadd.f32 0.0, %v3998
        %4000 = vdwg.mxu0
        %4001 = vmatprep.subr.bf16.mxu0 %v3725
        %4002 = vmatpush1.bf16.msra.mxu0 %v3724
        %4003 = vmatprep.subr.bf16.mxu0 %v3721
        %4004 = vmatpush1.bf16.msra.mxu0 %v3720
        %4005 = vmatprep.subr.bf16.mxu0 %v3717
        %4006 = vmatpush1.bf16.msra.mxu0 %v3716
        %4007 = vmatprep.subr.bf16.mxu0 %v3713
        %4008 = vmatpush1.bf16.msra.mxu0 %v3712
        %4009 = vmatprep.subr.bf16.mxu0 %v3709
        %4010 = vmatpush1.bf16.msra.mxu0 %v3708
        %4011 = vmatprep.subr.bf16.mxu0 %v3705
        %4012 = vmatpush1.bf16.msra.mxu0 %v3704
        %4013 = vmatprep.subr.bf16.mxu0 %v3701
        %4014 = vmatpush1.bf16.msra.mxu0 %v3700
        %4015 = vmatprep.subr.bf16.mxu0 %v3697
        %4016 = vmatpush1.bf16.msra.mxu0 %v3696
        %4017 = vmatprep.subr.bf16.mxu0 %v3757
        %4018 = vmatpush2.bf16.msra.mxu0 %v3756
        %4019 = vmatprep.subr.bf16.mxu0 %v3753
        %4020 = vmatpush2.bf16.msra.mxu0 %v3752
        %4021 = vmatprep.subr.bf16.mxu0 %v3749
        %4022 = vmatpush2.bf16.msra.mxu0 %v3748
        %4023 = vmatprep.subr.bf16.mxu0 %v3745
        %4024 = vmatpush2.bf16.msra.mxu0 %v3744
        %4025 = vmatprep.subr.bf16.mxu0 %v3741
        %4026 = vmatpush2.bf16.msra.mxu0 %v3740
        %4027 = vmatprep.subr.bf16.mxu0 %v3737
        %4028 = vmatpush2.bf16.msra.mxu0 %v3736
        %4029 = vmatprep.subr.bf16.mxu0 %v3733
        %4030 = vmatpush2.bf16.msra.mxu0 %v3732
        %4031 = vmatprep.subr.bf16.mxu0 %v3729
        %4032 = vmatpush2.bf16.msra.mxu0 %v3728
        %4033 = vmatprep.mubr.bf16.mxu0 %v651
        %4034 = vmatmul.mubr.bf16.gmra.mxu0 %v650
        %v4035 = vpop.f32.mrf.mxu0
        %v4036 = vadd.f32 %v3923, %v4035
        %v4037 = vpop.f32.mrf.mxu0
        %v4038 = vadd.f32 %v3925, %v4037
        %v4039 = vpop.f32.mrf.mxu0
        %v4040 = vadd.f32 %v3927, %v4039
        %v4041 = vpop.f32.mrf.mxu0
        %v4042 = vadd.f32 %v3929, %v4041
        %4043 = vmatprep.mubr.bf16.mxu0 %v655
        %4044 = vmatmul.mubr.bf16.gmra.mxu0 %v654
        %v4045 = vpop.f32.mrf.mxu0
        %v4046 = vadd.f32 %v3933, %v4045
        %v4047 = vpop.f32.mrf.mxu0
        %v4048 = vadd.f32 %v3935, %v4047
        %v4049 = vpop.f32.mrf.mxu0
        %v4050 = vadd.f32 %v3937, %v4049
        %v4051 = vpop.f32.mrf.mxu0
        %v4052 = vadd.f32 %v3939, %v4051
        %4053 = vmatprep.mubr.bf16.mxu0 %v659
        %4054 = vmatmul.mubr.bf16.gmra.mxu0 %v658
        %v4055 = vpop.f32.mrf.mxu0
        %v4056 = vadd.f32 %v3943, %v4055
        %v4057 = vpop.f32.mrf.mxu0
        %v4058 = vadd.f32 %v3945, %v4057
        %v4059 = vpop.f32.mrf.mxu0
        %v4060 = vadd.f32 %v3947, %v4059
        %v4061 = vpop.f32.mrf.mxu0
        %v4062 = vadd.f32 %v3949, %v4061
        %4063 = vmatprep.mubr.bf16.mxu0 %v663
        %4064 = vmatmul.mubr.bf16.gmra.mxu0 %v662
        %v4065 = vpop.f32.mrf.mxu0
        %v4066 = vadd.f32 %v3953, %v4065
        %v4067 = vpop.f32.mrf.mxu0
        %v4068 = vadd.f32 %v3955, %v4067
        %v4069 = vpop.f32.mrf.mxu0
        %v4070 = vadd.f32 %v3957, %v4069
        %v4071 = vpop.f32.mrf.mxu0
        %v4072 = vadd.f32 %v3959, %v4071
        %4073 = vmatprep.mubr.bf16.mxu0 %v667
        %4074 = vmatmul.mubr.bf16.gmra.mxu0 %v666
        %v4075 = vpop.f32.mrf.mxu0
        %v4076 = vadd.f32 %v3963, %v4075
        %v4077 = vpop.f32.mrf.mxu0
        %v4078 = vadd.f32 %v3965, %v4077
        %v4079 = vpop.f32.mrf.mxu0
        %v4080 = vadd.f32 %v3967, %v4079
        %v4081 = vpop.f32.mrf.mxu0
        %v4082 = vadd.f32 %v3969, %v4081
        %4083 = vmatprep.mubr.bf16.mxu0 %v671
        %4084 = vmatmul.mubr.bf16.gmra.mxu0 %v670
        %v4085 = vpop.f32.mrf.mxu0
        %v4086 = vadd.f32 %v3973, %v4085
        %v4087 = vpop.f32.mrf.mxu0
        %v4088 = vadd.f32 %v3975, %v4087
        %v4089 = vpop.f32.mrf.mxu0
        %v4090 = vadd.f32 %v3977, %v4089
        %v4091 = vpop.f32.mrf.mxu0
        %v4092 = vadd.f32 %v3979, %v4091
        %4093 = vmatprep.mubr.bf16.mxu0 %v675
        %4094 = vmatmul.mubr.bf16.gmra.mxu0 %v674
        %v4095 = vpop.f32.mrf.mxu0
        %v4096 = vadd.f32 %v3983, %v4095
        %v4097 = vpop.f32.mrf.mxu0
        %v4098 = vadd.f32 %v3985, %v4097
        %v4099 = vpop.f32.mrf.mxu0
        %v4100 = vadd.f32 %v3987, %v4099
        %v4101 = vpop.f32.mrf.mxu0
        %v4102 = vadd.f32 %v3989, %v4101
        %4103 = vmatprep.mubr.bf16.mxu0 %v679
        %4104 = vmatmul.mubr.bf16.gmra.mxu0 %v678
        %v4105 = vpop.f32.mrf.mxu0
        %v4106 = vadd.f32 %v3993, %v4105
        %v4107 = vpop.f32.mrf.mxu0
        %v4108 = vadd.f32 %v3995, %v4107
        %v4109 = vpop.f32.mrf.mxu0
        %v4110 = vadd.f32 %v3997, %v4109
        %v4111 = vpop.f32.mrf.mxu0
        %v4112 = vadd.f32 %v3999, %v4111
        %4113 = vdwg.mxu0
        %4114 = vmatprep.subr.bf16.mxu0 %v3663
        %4115 = vmatpush1.bf16.msra.mxu0 %v3662
        %4116 = vmatprep.subr.bf16.mxu0 %v3659
        %4117 = vmatpush1.bf16.msra.mxu0 %v3658
        %4118 = vmatprep.subr.bf16.mxu0 %v3655
        %4119 = vmatpush1.bf16.msra.mxu0 %v3654
        %4120 = vmatprep.subr.bf16.mxu0 %v3651
        %4121 = vmatpush1.bf16.msra.mxu0 %v3650
        %4122 = vmatprep.subr.bf16.mxu0 %v3647
        %4123 = vmatpush1.bf16.msra.mxu0 %v3646
        %4124 = vmatprep.subr.bf16.mxu0 %v3643
        %4125 = vmatpush1.bf16.msra.mxu0 %v3642
        %4126 = vmatprep.subr.bf16.mxu0 %v3639
        %4127 = vmatpush1.bf16.msra.mxu0 %v3638
        %4128 = vmatprep.subr.bf16.mxu0 %v3635
        %4129 = vmatpush1.bf16.msra.mxu0 %v3634
        %4130 = vmatprep.subr.bf16.mxu0 %v3695
        %4131 = vmatpush2.bf16.msra.mxu0 %v3694
        %4132 = vmatprep.subr.bf16.mxu0 %v3691
        %4133 = vmatpush2.bf16.msra.mxu0 %v3690
        %4134 = vmatprep.subr.bf16.mxu0 %v3687
        %4135 = vmatpush2.bf16.msra.mxu0 %v3686
        %4136 = vmatprep.subr.bf16.mxu0 %v3683
        %4137 = vmatpush2.bf16.msra.mxu0 %v3682
        %4138 = vmatprep.subr.bf16.mxu0 %v3679
        %4139 = vmatpush2.bf16.msra.mxu0 %v3678
        %4140 = vmatprep.subr.bf16.mxu0 %v3675
        %4141 = vmatpush2.bf16.msra.mxu0 %v3674
        %4142 = vmatprep.subr.bf16.mxu0 %v3671
        %4143 = vmatpush2.bf16.msra.mxu0 %v3670
        %4144 = vmatprep.subr.bf16.mxu0 %v3667
        %4145 = vmatpush2.bf16.msra.mxu0 %v3666
        %4146 = vmatprep.mubr.bf16.mxu0 %v649
        %4147 = vmatmul.mubr.bf16.gmra.mxu0 %v648
        %v4148 = vpop.f32.mrf.mxu0
        %v4149 = vadd.f32 0.0, %v4148
        %v4150 = vpop.f32.mrf.mxu0
        %v4151 = vadd.f32 0.0, %v4150
        %v4152 = vpop.f32.mrf.mxu0
        %v4153 = vadd.f32 0.0, %v4152
        %v4154 = vpop.f32.mrf.mxu0
        %v4155 = vadd.f32 0.0, %v4154
        %4156 = vmatprep.mubr.bf16.mxu0 %v653
        %4157 = vmatmul.mubr.bf16.gmra.mxu0 %v652
        %v4158 = vpop.f32.mrf.mxu0
        %v4159 = vadd.f32 0.0, %v4158
        %v4160 = vpop.f32.mrf.mxu0
        %v4161 = vadd.f32 0.0, %v4160
        %v4162 = vpop.f32.mrf.mxu0
        %v4163 = vadd.f32 0.0, %v4162
        %v4164 = vpop.f32.mrf.mxu0
        %v4165 = vadd.f32 0.0, %v4164
        %4166 = vmatprep.mubr.bf16.mxu0 %v657
        %4167 = vmatmul.mubr.bf16.gmra.mxu0 %v656
        %v4168 = vpop.f32.mrf.mxu0
        %v4169 = vadd.f32 0.0, %v4168
        %v4170 = vpop.f32.mrf.mxu0
        %v4171 = vadd.f32 0.0, %v4170
        %v4172 = vpop.f32.mrf.mxu0
        %v4173 = vadd.f32 0.0, %v4172
        %v4174 = vpop.f32.mrf.mxu0
        %v4175 = vadd.f32 0.0, %v4174
        %4176 = vmatprep.mubr.bf16.mxu0 %v661
        %4177 = vmatmul.mubr.bf16.gmra.mxu0 %v660
        %v4178 = vpop.f32.mrf.mxu0
        %v4179 = vadd.f32 0.0, %v4178
        %v4180 = vpop.f32.mrf.mxu0
        %v4181 = vadd.f32 0.0, %v4180
        %v4182 = vpop.f32.mrf.mxu0
        %v4183 = vadd.f32 0.0, %v4182
        %v4184 = vpop.f32.mrf.mxu0
        %v4185 = vadd.f32 0.0, %v4184
        %4186 = vmatprep.mubr.bf16.mxu0 %v665
        %4187 = vmatmul.mubr.bf16.gmra.mxu0 %v664
        %v4188 = vpop.f32.mrf.mxu0
        %v4189 = vadd.f32 0.0, %v4188
        %v4190 = vpop.f32.mrf.mxu0
        %v4191 = vadd.f32 0.0, %v4190
        %v4192 = vpop.f32.mrf.mxu0
        %v4193 = vadd.f32 0.0, %v4192
        %v4194 = vpop.f32.mrf.mxu0
        %v4195 = vadd.f32 0.0, %v4194
        %4196 = vmatprep.mubr.bf16.mxu0 %v669
        %4197 = vmatmul.mubr.bf16.gmra.mxu0 %v668
        %v4198 = vpop.f32.mrf.mxu0
        %v4199 = vadd.f32 0.0, %v4198
        %v4200 = vpop.f32.mrf.mxu0
        %v4201 = vadd.f32 0.0, %v4200
        %v4202 = vpop.f32.mrf.mxu0
        %v4203 = vadd.f32 0.0, %v4202
        %v4204 = vpop.f32.mrf.mxu0
        %v4205 = vadd.f32 0.0, %v4204
        %4206 = vmatprep.mubr.bf16.mxu0 %v673
        %4207 = vmatmul.mubr.bf16.gmra.mxu0 %v672
        %v4208 = vpop.f32.mrf.mxu0
        %v4209 = vadd.f32 0.0, %v4208
        %v4210 = vpop.f32.mrf.mxu0
        %v4211 = vadd.f32 0.0, %v4210
        %v4212 = vpop.f32.mrf.mxu0
        %v4213 = vadd.f32 0.0, %v4212
        %v4214 = vpop.f32.mrf.mxu0
        %v4215 = vadd.f32 0.0, %v4214
        %4216 = vmatprep.mubr.bf16.mxu0 %v677
        %4217 = vmatmul.mubr.bf16.gmra.mxu0 %v676
        %v4218 = vpop.f32.mrf.mxu0
        %v4219 = vadd.f32 0.0, %v4218
        %v4220 = vpop.f32.mrf.mxu0
        %v4221 = vadd.f32 0.0, %v4220
        %v4222 = vpop.f32.mrf.mxu0
        %v4223 = vadd.f32 0.0, %v4222
        %v4224 = vpop.f32.mrf.mxu0
        %v4225 = vadd.f32 0.0, %v4224
        %4226 = vdwg.mxu0
        %4227 = vmatprep.subr.bf16.mxu0 %v3727
        %4228 = vmatpush1.bf16.msra.mxu0 %v3726
        %4229 = vmatprep.subr.bf16.mxu0 %v3723
        %4230 = vmatpush1.bf16.msra.mxu0 %v3722
        %4231 = vmatprep.subr.bf16.mxu0 %v3719
        %4232 = vmatpush1.bf16.msra.mxu0 %v3718
        %4233 = vmatprep.subr.bf16.mxu0 %v3715
        %4234 = vmatpush1.bf16.msra.mxu0 %v3714
        %4235 = vmatprep.subr.bf16.mxu0 %v3711
        %4236 = vmatpush1.bf16.msra.mxu0 %v3710
        %4237 = vmatprep.subr.bf16.mxu0 %v3707
        %4238 = vmatpush1.bf16.msra.mxu0 %v3706
        %4239 = vmatprep.subr.bf16.mxu0 %v3703
        %4240 = vmatpush1.bf16.msra.mxu0 %v3702
        %4241 = vmatprep.subr.bf16.mxu0 %v3699
        %4242 = vmatpush1.bf16.msra.mxu0 %v3698
        %4243 = vmatprep.subr.bf16.mxu0 %v3759
        %4244 = vmatpush2.bf16.msra.mxu0 %v3758
        %4245 = vmatprep.subr.bf16.mxu0 %v3755
        %4246 = vmatpush2.bf16.msra.mxu0 %v3754
        %4247 = vmatprep.subr.bf16.mxu0 %v3751
        %4248 = vmatpush2.bf16.msra.mxu0 %v3750
        %4249 = vmatprep.subr.bf16.mxu0 %v3747
        %4250 = vmatpush2.bf16.msra.mxu0 %v3746
        %4251 = vmatprep.subr.bf16.mxu0 %v3743
        %4252 = vmatpush2.bf16.msra.mxu0 %v3742
        %4253 = vmatprep.subr.bf16.mxu0 %v3739
        %4254 = vmatpush2.bf16.msra.mxu0 %v3738
        %4255 = vmatprep.subr.bf16.mxu0 %v3735
        %4256 = vmatpush2.bf16.msra.mxu0 %v3734
        %4257 = vmatprep.subr.bf16.mxu0 %v3731
        %4258 = vmatpush2.bf16.msra.mxu0 %v3730
        %4259 = vmatprep.mubr.bf16.mxu0 %v651
        %4260 = vmatmul.mubr.bf16.gmra.mxu0 %v650
        %v4261 = vpop.f32.mrf.mxu0
        %v4262 = vadd.f32 %v4149, %v4261
        %v4263 = vpop.f32.mrf.mxu0
        %v4264 = vadd.f32 %v4151, %v4263
        %v4265 = vpop.f32.mrf.mxu0
        %v4266 = vadd.f32 %v4153, %v4265
        %v4267 = vpop.f32.mrf.mxu0
        %v4268 = vadd.f32 %v4155, %v4267
        %4269 = vmatprep.mubr.bf16.mxu0 %v655
        %4270 = vmatmul.mubr.bf16.gmra.mxu0 %v654
        %v4271 = vpop.f32.mrf.mxu0
        %v4272 = vadd.f32 %v4159, %v4271
        %v4273 = vpop.f32.mrf.mxu0
        %v4274 = vadd.f32 %v4161, %v4273
        %v4275 = vpop.f32.mrf.mxu0
        %v4276 = vadd.f32 %v4163, %v4275
        %v4277 = vpop.f32.mrf.mxu0
        %v4278 = vadd.f32 %v4165, %v4277
        %4279 = vmatprep.mubr.bf16.mxu0 %v659
        %4280 = vmatmul.mubr.bf16.gmra.mxu0 %v658
        %v4281 = vpop.f32.mrf.mxu0
        %v4282 = vadd.f32 %v4169, %v4281
        %v4283 = vpop.f32.mrf.mxu0
        %v4284 = vadd.f32 %v4171, %v4283
        %v4285 = vpop.f32.mrf.mxu0
        %v4286 = vadd.f32 %v4173, %v4285
        %v4287 = vpop.f32.mrf.mxu0
        %v4288 = vadd.f32 %v4175, %v4287
        %4289 = vmatprep.mubr.bf16.mxu0 %v663
        %4290 = vmatmul.mubr.bf16.gmra.mxu0 %v662
        %v4291 = vpop.f32.mrf.mxu0
        %v4292 = vadd.f32 %v4179, %v4291
        %v4293 = vpop.f32.mrf.mxu0
        %v4294 = vadd.f32 %v4181, %v4293
        %v4295 = vpop.f32.mrf.mxu0
        %v4296 = vadd.f32 %v4183, %v4295
        %v4297 = vpop.f32.mrf.mxu0
        %v4298 = vadd.f32 %v4185, %v4297
        %4299 = vmatprep.mubr.bf16.mxu0 %v667
        %4300 = vmatmul.mubr.bf16.gmra.mxu0 %v666
        %v4301 = vpop.f32.mrf.mxu0
        %v4302 = vadd.f32 %v4189, %v4301
        %v4303 = vpop.f32.mrf.mxu0
        %v4304 = vadd.f32 %v4191, %v4303
        %v4305 = vpop.f32.mrf.mxu0
        %v4306 = vadd.f32 %v4193, %v4305
        %v4307 = vpop.f32.mrf.mxu0
        %v4308 = vadd.f32 %v4195, %v4307
        %4309 = vmatprep.mubr.bf16.mxu0 %v671
        %4310 = vmatmul.mubr.bf16.gmra.mxu0 %v670
        %v4311 = vpop.f32.mrf.mxu0
        %v4312 = vadd.f32 %v4199, %v4311
        %v4313 = vpop.f32.mrf.mxu0
        %v4314 = vadd.f32 %v4201, %v4313
        %v4315 = vpop.f32.mrf.mxu0
        %v4316 = vadd.f32 %v4203, %v4315
        %v4317 = vpop.f32.mrf.mxu0
        %v4318 = vadd.f32 %v4205, %v4317
        %4319 = vmatprep.mubr.bf16.mxu0 %v675
        %4320 = vmatmul.mubr.bf16.gmra.mxu0 %v674
        %v4321 = vpop.f32.mrf.mxu0
        %v4322 = vadd.f32 %v4209, %v4321
        %v4323 = vpop.f32.mrf.mxu0
        %v4324 = vadd.f32 %v4211, %v4323
        %v4325 = vpop.f32.mrf.mxu0
        %v4326 = vadd.f32 %v4213, %v4325
        %v4327 = vpop.f32.mrf.mxu0
        %v4328 = vadd.f32 %v4215, %v4327
        %4329 = vmatprep.mubr.bf16.mxu0 %v679
        %4330 = vmatmul.mubr.bf16.gmra.mxu0 %v678
        %v4331 = vpop.f32.mrf.mxu0
        %v4332 = vadd.f32 %v4219, %v4331
        %v4333 = vpop.f32.mrf.mxu0
        %v4334 = vadd.f32 %v4221, %v4333
        %v4335 = vpop.f32.mrf.mxu0
        %v4336 = vadd.f32 %v4223, %v4335
        %v4337 = vpop.f32.mrf.mxu0
        %v4338 = vadd.f32 %v4225, %v4337
        %4339 = vdwg.mxu0
        %v4340 = vld [vmem:[%s390] sm:$0xf]
        %v4341 = vld [vmem:[%s390 + $0x4] sm:$0xf]
        %v4342 = vld [vmem:[%s390 + $0x8] sm:$0xf]
        %v4343 = vld [vmem:[%s390 + $0xc] sm:$0xf]
        %v4344 = vld [vmem:[%s390 + $0x10] sm:$0xf]
        %v4345 = vld [vmem:[%s390 + $0x14] sm:$0xf]
        %v4346 = vld [vmem:[%s390 + $0x18] sm:$0xf]
        %v4347 = vld [vmem:[%s390 + $0x1c] sm:$0xf]
        %v4348 = vld [vmem:[%s390 + $0x20] sm:$0xf]
        %v4349 = vld [vmem:[%s390 + $0x24] sm:$0xf]
        %v4350 = vld [vmem:[%s390 + $0x28] sm:$0xf]
        %v4351 = vld [vmem:[%s390 + $0x2c] sm:$0xf]
        %v4352 = vld [vmem:[%s390 + $0x30] sm:$0xf]
        %v4353 = vld [vmem:[%s390 + $0x34] sm:$0xf]
        %v4354 = vld [vmem:[%s390 + $0x38] sm:$0xf]
        %v4355 = vld [vmem:[%s390 + $0x3c] sm:$0xf]
        %v4356 = vunpack.c.l.bf16 %v4340
        %v4357 = vunpack.c.l.bf16 %v4341
        %v4358 = vunpack.c.l.bf16 %v4342
        %v4359 = vunpack.c.l.bf16 %v4343
        %v4360 = vunpack.c.l.bf16 %v4344
        %v4361 = vunpack.c.l.bf16 %v4345
        %v4362 = vunpack.c.l.bf16 %v4346
        %v4363 = vunpack.c.l.bf16 %v4347
        %v4364 = vunpack.c.l.bf16 %v4348
        %v4365 = vunpack.c.l.bf16 %v4349
        %v4366 = vunpack.c.l.bf16 %v4350
        %v4367 = vunpack.c.l.bf16 %v4351
        %v4368 = vunpack.c.l.bf16 %v4352
        %v4369 = vunpack.c.l.bf16 %v4353
        %v4370 = vunpack.c.l.bf16 %v4354
        %v4371 = vunpack.c.l.bf16 %v4355
        %v4372 = vpack.c.bf16 %v1600, %v1596
        %v4373 = vpack.c.bf16 %v1602, %v1598
        %v4374 = vpack.c.bf16 %v1826, %v1822
        %v4375 = vpack.c.bf16 %v1828, %v1824
        %v4376 = vpack.c.bf16 %v1610, %v1606
        %v4377 = vpack.c.bf16 %v1612, %v1608
        %v4378 = vpack.c.bf16 %v1836, %v1832
        %v4379 = vpack.c.bf16 %v1838, %v1834
        %v4380 = vpack.c.bf16 %v1620, %v1616
        %v4381 = vpack.c.bf16 %v1622, %v1618
        %v4382 = vpack.c.bf16 %v1846, %v1842
        %v4383 = vpack.c.bf16 %v1848, %v1844
        %v4384 = vpack.c.bf16 %v1630, %v1626
        %v4385 = vpack.c.bf16 %v1632, %v1628
        %v4386 = vpack.c.bf16 %v1856, %v1852
        %v4387 = vpack.c.bf16 %v1858, %v1854
        %v4388 = vpack.c.bf16 %v1640, %v1636
        %v4389 = vpack.c.bf16 %v1642, %v1638
        %v4390 = vpack.c.bf16 %v1866, %v1862
        %v4391 = vpack.c.bf16 %v1868, %v1864
        %v4392 = vpack.c.bf16 %v1650, %v1646
        %v4393 = vpack.c.bf16 %v1652, %v1648
        %v4394 = vpack.c.bf16 %v1876, %v1872
        %v4395 = vpack.c.bf16 %v1878, %v1874
        %v4396 = vpack.c.bf16 %v1660, %v1656
        %v4397 = vpack.c.bf16 %v1662, %v1658
        %v4398 = vpack.c.bf16 %v1886, %v1882
        %v4399 = vpack.c.bf16 %v1888, %v1884
        %v4400 = vpack.c.bf16 %v1670, %v1666
        %v4401 = vpack.c.bf16 %v1672, %v1668
        %v4402 = vpack.c.bf16 %v1896, %v1892
        %v4403 = vpack.c.bf16 %v1898, %v1894
        %v4404 = vpack.c.bf16 %v2820, %v2816
        %v4405 = vpack.c.bf16 %v2822, %v2818
        %v4406 = vpack.c.bf16 %v3046, %v3042
        %v4407 = vpack.c.bf16 %v3048, %v3044
        %v4408 = vpack.c.bf16 %v2830, %v2826
        %v4409 = vpack.c.bf16 %v2832, %v2828
        %v4410 = vpack.c.bf16 %v3056, %v3052
        %v4411 = vpack.c.bf16 %v3058, %v3054
        %v4412 = vpack.c.bf16 %v2840, %v2836
        %v4413 = vpack.c.bf16 %v2842, %v2838
        %v4414 = vpack.c.bf16 %v3066, %v3062
        %v4415 = vpack.c.bf16 %v3068, %v3064
        %v4416 = vpack.c.bf16 %v2850, %v2846
        %v4417 = vpack.c.bf16 %v2852, %v2848
        %v4418 = vpack.c.bf16 %v3076, %v3072
        %v4419 = vpack.c.bf16 %v3078, %v3074
        %v4420 = vpack.c.bf16 %v2860, %v2856
        %v4421 = vpack.c.bf16 %v2862, %v2858
        %v4422 = vpack.c.bf16 %v3086, %v3082
        %v4423 = vpack.c.bf16 %v3088, %v3084
        %v4424 = vpack.c.bf16 %v2870, %v2866
        %v4425 = vpack.c.bf16 %v2872, %v2868
        %v4426 = vpack.c.bf16 %v3096, %v3092
        %v4427 = vpack.c.bf16 %v3098, %v3094
        %v4428 = vpack.c.bf16 %v2880, %v2876
        %v4429 = vpack.c.bf16 %v2882, %v2878
        %v4430 = vpack.c.bf16 %v3106, %v3102
        %v4431 = vpack.c.bf16 %v3108, %v3104
        %v4432 = vpack.c.bf16 %v2890, %v2886
        %v4433 = vpack.c.bf16 %v2892, %v2888
        %v4434 = vpack.c.bf16 %v3116, %v3112
        %v4435 = vpack.c.bf16 %v3118, %v3114
        %vm4436 = vcmask 523264
        %v4438 = vsel %vm4436, %v4372, 0
        %v4441 = vsel %vm4436, %v4376, 0
        %v4444 = vsel %vm4436, %v4380, 0
        %v4447 = vsel %vm4436, %v4384, 0
        %v4450 = vsel %vm4436, %v4388, 0
        %v4453 = vsel %vm4436, %v4392, 0
        %v4456 = vsel %vm4436, %v4396, 0
        %v4459 = vsel %vm4436, %v4400, 0
        %v4462 = vsel %vm4436, %v4404, 0
        %v4465 = vsel %vm4436, %v4408, 0
        %v4468 = vsel %vm4436, %v4412, 0
        %v4471 = vsel %vm4436, %v4416, 0
        %v4474 = vsel %vm4436, %v4420, 0
        %v4477 = vsel %vm4436, %v4424, 0
        %v4480 = vsel %vm4436, %v4428, 0
        %v4483 = vsel %vm4436, %v4432, 0
        %4485 = vmatprep.subr.bf16.mxu0 0
        %4486 = vmatpush1.bf16.xpose.msra.mxu0 %v4483
        %4487 = vmatprep.subr.bf16.mxu0 0
        %4488 = vmatpush1.bf16.xpose.msra.mxu0 %v4480
        %4489 = vmatprep.subr.bf16.mxu0 0
        %4490 = vmatpush1.bf16.xpose.msra.mxu0 %v4477
        %4491 = vmatprep.subr.bf16.mxu0 0
        %4492 = vmatpush1.bf16.xpose.msra.mxu0 %v4474
        %4493 = vmatprep.subr.bf16.mxu0 0
        %4494 = vmatpush1.bf16.xpose.msra.mxu0 %v4471
        %4495 = vmatprep.subr.bf16.mxu0 0
        %4496 = vmatpush1.bf16.xpose.msra.mxu0 %v4468
        %4497 = vmatprep.subr.bf16.mxu0 0
        %4498 = vmatpush1.bf16.xpose.msra.mxu0 %v4465
        %4499 = vmatprep.subr.bf16.mxu0 0
        %4500 = vmatpush1.bf16.xpose.msra.mxu0 %v4462
        %4501 = vmatprep.subr.bf16.mxu0 0
        %4502 = vmatpush2.bf16.xpose.msra.mxu0 0
        %4503 = vmatprep.subr.bf16.mxu0 0
        %4504 = vmatpush2.bf16.xpose.msra.mxu0 0
        %4505 = vmatprep.subr.bf16.mxu0 0
        %4506 = vmatpush2.bf16.xpose.msra.mxu0 0
        %4507 = vmatprep.subr.bf16.mxu0 0
        %4508 = vmatpush2.bf16.xpose.msra.mxu0 0
        %4509 = vmatprep.subr.bf16.mxu0 0
        %4510 = vmatpush2.bf16.xpose.msra.mxu0 0
        %4511 = vmatprep.subr.bf16.mxu0 0
        %4512 = vmatpush2.bf16.xpose.msra.mxu0 0
        %4513 = vmatprep.subr.bf16.mxu0 0
        %4514 = vmatpush2.bf16.xpose.msra.mxu0 0
        %4515 = vmatprep.subr.bf16.mxu0 0
        %4516 = vmatpush2.bf16.xpose.msra.mxu0 0
        %4517 = vmatprep.mubr.bf16.mxu0 0
        %4518 = vmatmul.mubr.bf16.gmra.mxu0 %v4438
        %v4519 = vpop.f32.mrf.mxu0
        %v4520 = vadd.f32 %v4356, %v4519
        %v4521 = vpop.f32.mrf.mxu0
        %v4522 = vpop.f32.mrf.mxu0
        %v4523 = vadd.f32 %v4357, %v4522
        %v4524 = vpop.f32.mrf.mxu0
        %4525 = vmatprep.mubr.bf16.mxu0 0
        %4526 = vmatmul.mubr.bf16.gmra.mxu0 %v4441
        %v4527 = vpop.f32.mrf.mxu0
        %v4528 = vadd.f32 %v4358, %v4527
        %v4529 = vpop.f32.mrf.mxu0
        %v4530 = vpop.f32.mrf.mxu0
        %v4531 = vadd.f32 %v4359, %v4530
        %v4532 = vpop.f32.mrf.mxu0
        %4533 = vmatprep.mubr.bf16.mxu0 0
        %4534 = vmatmul.mubr.bf16.gmra.mxu0 %v4444
        %v4535 = vpop.f32.mrf.mxu0
        %v4536 = vadd.f32 %v4360, %v4535
        %v4537 = vpop.f32.mrf.mxu0
        %v4538 = vpop.f32.mrf.mxu0
        %v4539 = vadd.f32 %v4361, %v4538
        %v4540 = vpop.f32.mrf.mxu0
        %4541 = vmatprep.mubr.bf16.mxu0 0
        %4542 = vmatmul.mubr.bf16.gmra.mxu0 %v4447
        %v4543 = vpop.f32.mrf.mxu0
        %v4544 = vadd.f32 %v4362, %v4543
        %v4545 = vpop.f32.mrf.mxu0
        %v4546 = vpop.f32.mrf.mxu0
        %v4547 = vadd.f32 %v4363, %v4546
        %v4548 = vpop.f32.mrf.mxu0
        %4549 = vmatprep.mubr.bf16.mxu0 0
        %4550 = vmatmul.mubr.bf16.gmra.mxu0 %v4450
        %v4551 = vpop.f32.mrf.mxu0
        %v4552 = vadd.f32 %v4364, %v4551
        %v4553 = vpop.f32.mrf.mxu0
        %v4554 = vpop.f32.mrf.mxu0
        %v4555 = vadd.f32 %v4365, %v4554
        %v4556 = vpop.f32.mrf.mxu0
        %4557 = vmatprep.mubr.bf16.mxu0 0
        %4558 = vmatmul.mubr.bf16.gmra.mxu0 %v4453
        %v4559 = vpop.f32.mrf.mxu0
        %v4560 = vadd.f32 %v4366, %v4559
        %v4561 = vpop.f32.mrf.mxu0
        %v4562 = vpop.f32.mrf.mxu0
        %v4563 = vadd.f32 %v4367, %v4562
        %v4564 = vpop.f32.mrf.mxu0
        %4565 = vmatprep.mubr.bf16.mxu0 0
        %4566 = vmatmul.mubr.bf16.gmra.mxu0 %v4456
        %v4567 = vpop.f32.mrf.mxu0
        %v4568 = vadd.f32 %v4368, %v4567
        %v4569 = vpop.f32.mrf.mxu0
        %v4570 = vpop.f32.mrf.mxu0
        %v4571 = vadd.f32 %v4369, %v4570
        %v4572 = vpop.f32.mrf.mxu0
        %4573 = vmatprep.mubr.bf16.mxu0 0
        %4574 = vmatmul.mubr.bf16.gmra.mxu0 %v4459
        %v4575 = vpop.f32.mrf.mxu0
        %v4576 = vadd.f32 %v4370, %v4575
        %v4577 = vpop.f32.mrf.mxu0
        %v4578 = vpop.f32.mrf.mxu0
        %v4579 = vadd.f32 %v4371, %v4578
        %v4580 = vpop.f32.mrf.mxu0
        %4581 = vdwg.mxu0
        %4582 = vmax.xlane.f32.xlu0 %v4520
        %v4583 = vpop.xlane.xlu0 %4582
        %4584 = vmax.xlane.f32.xlu0 %v4523
        %v4585 = vpop.xlane.xlu0 %4584
        %4586 = vmax.xlane.f32.xlu0 %v4528
        %v4587 = vpop.xlane.xlu0 %4586
        %4588 = vmax.xlane.f32.xlu0 %v4531
        %v4589 = vpop.xlane.xlu0 %4588
        %4590 = vmax.xlane.f32.xlu0 %v4536
        %v4591 = vpop.xlane.xlu0 %4590
        %4592 = vmax.xlane.f32.xlu0 %v4539
        %v4593 = vpop.xlane.xlu0 %4592
        %4594 = vmax.xlane.f32.xlu0 %v4544
        %v4595 = vpop.xlane.xlu0 %4594
        %4596 = vmax.xlane.f32.xlu0 %v4547
        %v4597 = vpop.xlane.xlu0 %4596
        %4598 = vmax.xlane.f32.xlu0 %v4552
        %v4599 = vpop.xlane.xlu0 %4598
        %4600 = vmax.xlane.f32.xlu0 %v4555
        %v4601 = vpop.xlane.xlu0 %4600
        %4602 = vmax.xlane.f32.xlu0 %v4560
        %v4603 = vpop.xlane.xlu0 %4602
        %4604 = vmax.xlane.f32.xlu0 %v4563
        %v4605 = vpop.xlane.xlu0 %4604
        %4606 = vmax.xlane.f32.xlu0 %v4568
        %v4607 = vpop.xlane.xlu0 %4606
        %4608 = vmax.xlane.f32.xlu0 %v4571
        %v4609 = vpop.xlane.xlu0 %4608
        %4610 = vmax.xlane.f32.xlu0 %v4576
        %v4611 = vpop.xlane.xlu0 %4610
        %4612 = vmax.xlane.f32.xlu0 %v4579
        %v4613 = vpop.xlane.xlu0 %4612
        %v4614 = vsub.f32 %v4520, %v4583
        %v4615 = vsub.f32 %v4523, %v4585
        %v4616 = vsub.f32 %v4528, %v4587
        %v4617 = vsub.f32 %v4531, %v4589
        %v4618 = vsub.f32 %v4536, %v4591
        %v4619 = vsub.f32 %v4539, %v4593
        %v4620 = vsub.f32 %v4544, %v4595
        %v4621 = vsub.f32 %v4547, %v4597
        %v4622 = vsub.f32 %v4552, %v4599
        %v4623 = vsub.f32 %v4555, %v4601
        %v4624 = vsub.f32 %v4560, %v4603
        %v4625 = vsub.f32 %v4563, %v4605
        %v4626 = vsub.f32 %v4568, %v4607
        %v4627 = vsub.f32 %v4571, %v4609
        %v4628 = vsub.f32 %v4576, %v4611
        %v4629 = vsub.f32 %v4579, %v4613
        %v4630 = vmul.f32 %v4614, 1.442695
        %v4631 = vpow.pop %v4630
        %v4632 = vmul.f32 %v4615, 1.442695
        %v4633 = vpow.pop %v4632
        %v4634 = vmul.f32 %v4616, 1.442695
        %v4635 = vpow.pop %v4634
        %v4636 = vmul.f32 %v4617, 1.442695
        %v4637 = vpow.pop %v4636
        %v4638 = vmul.f32 %v4618, 1.442695
        %v4639 = vpow.pop %v4638
        %v4640 = vmul.f32 %v4619, 1.442695
        %v4641 = vpow.pop %v4640
        %v4642 = vmul.f32 %v4620, 1.442695
        %v4643 = vpow.pop %v4642
        %v4644 = vmul.f32 %v4621, 1.442695
        %v4645 = vpow.pop %v4644
        %v4646 = vmul.f32 %v4622, 1.442695
        %v4647 = vpow.pop %v4646
        %v4648 = vmul.f32 %v4623, 1.442695
        %v4649 = vpow.pop %v4648
        %v4650 = vmul.f32 %v4624, 1.442695
        %v4651 = vpow.pop %v4650
        %v4652 = vmul.f32 %v4625, 1.442695
        %v4653 = vpow.pop %v4652
        %v4654 = vmul.f32 %v4626, 1.442695
        %v4655 = vpow.pop %v4654
        %v4656 = vmul.f32 %v4627, 1.442695
        %v4657 = vpow.pop %v4656
        %v4658 = vmul.f32 %v4628, 1.442695
        %v4659 = vpow.pop %v4658
        %v4660 = vmul.f32 %v4629, 1.442695
        %v4661 = vpow.pop %v4660
        %4662 = vadd.xlane.f32.xlu0 %v4631
        %v4663 = vpop.xlane.xlu0 %4662
        %4664 = vadd.xlane.f32.xlu0 %v4633
        %v4665 = vpop.xlane.xlu0 %4664
        %4666 = vadd.xlane.f32.xlu0 %v4635
        %v4667 = vpop.xlane.xlu0 %4666
        %4668 = vadd.xlane.f32.xlu0 %v4637
        %v4669 = vpop.xlane.xlu0 %4668
        %4670 = vadd.xlane.f32.xlu0 %v4639
        %v4671 = vpop.xlane.xlu0 %4670
        %4672 = vadd.xlane.f32.xlu0 %v4641
        %v4673 = vpop.xlane.xlu0 %4672
        %4674 = vadd.xlane.f32.xlu0 %v4643
        %v4675 = vpop.xlane.xlu0 %4674
        %4676 = vadd.xlane.f32.xlu0 %v4645
        %v4677 = vpop.xlane.xlu0 %4676
        %4678 = vadd.xlane.f32.xlu0 %v4647
        %v4679 = vpop.xlane.xlu0 %4678
        %4680 = vadd.xlane.f32.xlu0 %v4649
        %v4681 = vpop.xlane.xlu0 %4680
        %4682 = vadd.xlane.f32.xlu0 %v4651
        %v4683 = vpop.xlane.xlu0 %4682
        %4684 = vadd.xlane.f32.xlu0 %v4653
        %v4685 = vpop.xlane.xlu0 %4684
        %4686 = vadd.xlane.f32.xlu0 %v4655
        %v4687 = vpop.xlane.xlu0 %4686
        %4688 = vadd.xlane.f32.xlu0 %v4657
        %v4689 = vpop.xlane.xlu0 %4688
        %4690 = vadd.xlane.f32.xlu0 %v4659
        %v4691 = vpop.xlane.xlu0 %4690
        %4692 = vadd.xlane.f32.xlu0 %v4661
        %v4693 = vpop.xlane.xlu0 %4692
        %v4694 = vrcp.pop %v4663
        %v4695 = vrcp.pop %v4665
        %v4696 = vrcp.pop %v4667
        %v4697 = vrcp.pop %v4669
        %v4698 = vrcp.pop %v4671
        %v4699 = vrcp.pop %v4673
        %v4700 = vrcp.pop %v4675
        %v4701 = vrcp.pop %v4677
        %v4702 = vrcp.pop %v4679
        %v4703 = vrcp.pop %v4681
        %v4704 = vrcp.pop %v4683
        %v4705 = vrcp.pop %v4685
        %v4706 = vrcp.pop %v4687
        %v4707 = vrcp.pop %v4689
        %v4708 = vrcp.pop %v4691
        %v4709 = vrcp.pop %v4693
        %v4710 = vmul.f32 %v4631, %v4694
        %v4711 = vmul.f32 %v4633, %v4695
        %v4712 = vmul.f32 %v4635, %v4696
        %v4713 = vmul.f32 %v4637, %v4697
        %v4714 = vmul.f32 %v4639, %v4698
        %v4715 = vmul.f32 %v4641, %v4699
        %v4716 = vmul.f32 %v4643, %v4700
        %v4717 = vmul.f32 %v4645, %v4701
        %v4718 = vmul.f32 %v4647, %v4702
        %v4719 = vmul.f32 %v4649, %v4703
        %v4720 = vmul.f32 %v4651, %v4704
        %v4721 = vmul.f32 %v4653, %v4705
        %v4722 = vmul.f32 %v4655, %v4706
        %v4723 = vmul.f32 %v4657, %v4707
        %v4724 = vmul.f32 %v4659, %v4708
        %v4725 = vmul.f32 %v4661, %v4709
        %4726 = vadd.xlane.f32.xlu0 %v4710
        %v4727 = vpop.xlane.xlu0 %4726
        %4728 = vadd.xlane.f32.xlu0 %v4711
        %v4729 = vpop.xlane.xlu0 %4728
        %4730 = vadd.xlane.f32.xlu0 %v4712
        %v4731 = vpop.xlane.xlu0 %4730
        %4732 = vadd.xlane.f32.xlu0 %v4713
        %v4733 = vpop.xlane.xlu0 %4732
        %4734 = vadd.xlane.f32.xlu0 %v4714
        %v4735 = vpop.xlane.xlu0 %4734
        %4736 = vadd.xlane.f32.xlu0 %v4715
        %v4737 = vpop.xlane.xlu0 %4736
        %4738 = vadd.xlane.f32.xlu0 %v4716
        %v4739 = vpop.xlane.xlu0 %4738
        %4740 = vadd.xlane.f32.xlu0 %v4717
        %v4741 = vpop.xlane.xlu0 %4740
        %4742 = vadd.xlane.f32.xlu0 %v4718
        %v4743 = vpop.xlane.xlu0 %4742
        %4744 = vadd.xlane.f32.xlu0 %v4719
        %v4745 = vpop.xlane.xlu0 %4744
        %4746 = vadd.xlane.f32.xlu0 %v4720
        %v4747 = vpop.xlane.xlu0 %4746
        %4748 = vadd.xlane.f32.xlu0 %v4721
        %v4749 = vpop.xlane.xlu0 %4748
        %4750 = vadd.xlane.f32.xlu0 %v4722
        %v4751 = vpop.xlane.xlu0 %4750
        %4752 = vadd.xlane.f32.xlu0 %v4723
        %v4753 = vpop.xlane.xlu0 %4752
        %4754 = vadd.xlane.f32.xlu0 %v4724
        %v4755 = vpop.xlane.xlu0 %4754
        %4756 = vadd.xlane.f32.xlu0 %v4725
        %v4757 = vpop.xlane.xlu0 %4756
        %v4758 = vsel %vm4436, %v4036, 0.0
        %v4759 = vsel %vm4436, %v4040, 0.0
        %v4760 = vadd.f32 %v4758, %v4759
        %v4761 = vsel %vm4436, %v4046, 0.0
        %v4762 = vadd.f32 %v4760, %v4761
        %v4763 = vsel %vm4436, %v4050, 0.0
        %v4764 = vadd.f32 %v4762, %v4763
        %v4765 = vsel %vm4436, %v4056, 0.0
        %v4766 = vadd.f32 %v4764, %v4765
        %v4767 = vsel %vm4436, %v4060, 0.0
        %v4768 = vadd.f32 %v4766, %v4767
        %v4769 = vsel %vm4436, %v4066, 0.0
        %v4770 = vadd.f32 %v4768, %v4769
        %v4771 = vsel %vm4436, %v4070, 0.0
        %v4772 = vadd.f32 %v4770, %v4771
        %v4773 = vsel %vm4436, %v4076, 0.0
        %v4774 = vadd.f32 %v4772, %v4773
        %v4775 = vsel %vm4436, %v4080, 0.0
        %v4776 = vadd.f32 %v4774, %v4775
        %v4777 = vsel %vm4436, %v4086, 0.0
        %v4778 = vadd.f32 %v4776, %v4777
        %v4779 = vsel %vm4436, %v4090, 0.0
        %v4780 = vadd.f32 %v4778, %v4779
        %v4781 = vsel %vm4436, %v4096, 0.0
        %v4782 = vadd.f32 %v4780, %v4781
        %v4783 = vsel %vm4436, %v4100, 0.0
        %v4784 = vadd.f32 %v4782, %v4783
        %v4785 = vsel %vm4436, %v4106, 0.0
        %v4786 = vadd.f32 %v4784, %v4785
        %v4787 = vsel %vm4436, %v4110, 0.0
        %v4788 = vadd.f32 %v4786, %v4787
        %v4789 = vrot.slane %v4788, 4
        %v4790 = vadd.f32 %v4788, %v4789
        %v4791 = vrot.slane %v4790, 2
        %v4792 = vadd.f32 %v4790, %v4791
        %v4793 = vrot.slane %v4792, 1
        %v4794 = vadd.f32 %v4792, %v4793
        %v4795 = vmul.f32 %v4727, %v4794
        %v4796 = vmul.f32 %v4729, %v4794
        %v4797 = vmul.f32 %v4731, %v4794
        %v4798 = vmul.f32 %v4733, %v4794
        %v4799 = vmul.f32 %v4735, %v4794
        %v4800 = vmul.f32 %v4737, %v4794
        %v4801 = vmul.f32 %v4739, %v4794
        %v4802 = vmul.f32 %v4741, %v4794
        %v4803 = vmul.f32 %v4743, %v4794
        %v4804 = vmul.f32 %v4745, %v4794
        %v4805 = vmul.f32 %v4747, %v4794
        %v4806 = vmul.f32 %v4749, %v4794
        %v4807 = vmul.f32 %v4751, %v4794
        %v4808 = vmul.f32 %v4753, %v4794
        %v4809 = vmul.f32 %v4755, %v4794
        %v4810 = vmul.f32 %v4757, %v4794
        %4811 = vst.msk [vmem:[#allocation2] sm:$0xff] %vm4436, %v4795
        %4812 = vst.msk [vmem:[#allocation2 + $0x20] sm:$0xff] %vm4436, %v4796
        %4813 = vst.msk [vmem:[#allocation2 + $0x40] sm:$0xff] %vm4436, %v4797
        %4814 = vst.msk [vmem:[#allocation2 + $0x60] sm:$0xff] %vm4436, %v4798
        %4815 = vst.msk [vmem:[#allocation2 + $0x80] sm:$0xff] %vm4436, %v4799
        %4816 = vst.msk [vmem:[#allocation2 + $0xa0] sm:$0xff] %vm4436, %v4800
        %4817 = vst.msk [vmem:[#allocation2 + $0xc0] sm:$0xff] %vm4436, %v4801
        %4818 = vst.msk [vmem:[#allocation2 + $0xe0] sm:$0xff] %vm4436, %v4802
        %4819 = vst.msk [vmem:[#allocation2 + $0x100] sm:$0xff] %vm4436, %v4803
        %4820 = vst.msk [vmem:[#allocation2 + $0x120] sm:$0xff] %vm4436, %v4804
        %4821 = vst.msk [vmem:[#allocation2 + $0x140] sm:$0xff] %vm4436, %v4805
        %4822 = vst.msk [vmem:[#allocation2 + $0x160] sm:$0xff] %vm4436, %v4806
        %4823 = vst.msk [vmem:[#allocation2 + $0x180] sm:$0xff] %vm4436, %v4807
        %4824 = vst.msk [vmem:[#allocation2 + $0x1a0] sm:$0xff] %vm4436, %v4808
        %4825 = vst.msk [vmem:[#allocation2 + $0x1c0] sm:$0xff] %vm4436, %v4809
        %4826 = vst.msk [vmem:[#allocation2 + $0x1e0] sm:$0xff] %vm4436, %v4810
        %4835 = vrot.lane.b32.xlu0 %v4372, 64
        %v4836 = vpop.permute.xlu0 %4835
        %4837 = vrot.lane.b32.xlu0 %v4376, 64
        %v4838 = vpop.permute.xlu0 %4837
        %4839 = vrot.lane.b32.xlu0 %v4380, 64
        %v4840 = vpop.permute.xlu0 %4839
        %4841 = vrot.lane.b32.xlu0 %v4384, 64
        %v4842 = vpop.permute.xlu0 %4841
        %4843 = vrot.lane.b32.xlu0 %v4388, 64
        %v4844 = vpop.permute.xlu0 %4843
        %4845 = vrot.lane.b32.xlu0 %v4392, 64
        %v4846 = vpop.permute.xlu0 %4845
        %4847 = vrot.lane.b32.xlu0 %v4396, 64
        %v4848 = vpop.permute.xlu0 %4847
        %4849 = vrot.lane.b32.xlu0 %v4400, 64
        %v4850 = vpop.permute.xlu0 %4849
        %4859 = vrot.lane.b32.xlu0 %v4404, 64
        %v4860 = vpop.permute.xlu0 %4859
        %4861 = vrot.lane.b32.xlu0 %v4408, 64
        %v4862 = vpop.permute.xlu0 %4861
        %4863 = vrot.lane.b32.xlu0 %v4412, 64
        %v4864 = vpop.permute.xlu0 %4863
        %4865 = vrot.lane.b32.xlu0 %v4416, 64
        %v4866 = vpop.permute.xlu0 %4865
        %4867 = vrot.lane.b32.xlu0 %v4420, 64
        %v4868 = vpop.permute.xlu0 %4867
        %4869 = vrot.lane.b32.xlu0 %v4424, 64
        %v4870 = vpop.permute.xlu0 %4869
        %4871 = vrot.lane.b32.xlu0 %v4428, 64
        %v4872 = vpop.permute.xlu0 %4871
        %4873 = vrot.lane.b32.xlu0 %v4432, 64
        %v4874 = vpop.permute.xlu0 %4873
        %v4876 = vsel %vm4436, %v4836, 0
        %v4879 = vsel %vm4436, %v4838, 0
        %v4882 = vsel %vm4436, %v4840, 0
        %v4885 = vsel %vm4436, %v4842, 0
        %v4888 = vsel %vm4436, %v4844, 0
        %v4891 = vsel %vm4436, %v4846, 0
        %v4894 = vsel %vm4436, %v4848, 0
        %v4897 = vsel %vm4436, %v4850, 0
        %v4900 = vsel %vm4436, %v4860, 0
        %v4903 = vsel %vm4436, %v4862, 0
        %v4906 = vsel %vm4436, %v4864, 0
        %v4909 = vsel %vm4436, %v4866, 0
        %v4912 = vsel %vm4436, %v4868, 0
        %v4915 = vsel %vm4436, %v4870, 0
        %v4918 = vsel %vm4436, %v4872, 0
        %v4921 = vsel %vm4436, %v4874, 0
        %4923 = vmatprep.subr.bf16.mxu0 0
        %4924 = vmatpush1.bf16.xpose.msra.mxu0 %v4921
        %4925 = vmatprep.subr.bf16.mxu0 0
        %4926 = vmatpush1.bf16.xpose.msra.mxu0 %v4918
        %4927 = vmatprep.subr.bf16.mxu0 0
        %4928 = vmatpush1.bf16.xpose.msra.mxu0 %v4915
        %4929 = vmatprep.subr.bf16.mxu0 0
        %4930 = vmatpush1.bf16.xpose.msra.mxu0 %v4912
        %4931 = vmatprep.subr.bf16.mxu0 0
        %4932 = vmatpush1.bf16.xpose.msra.mxu0 %v4909
        %4933 = vmatprep.subr.bf16.mxu0 0
        %4934 = vmatpush1.bf16.xpose.msra.mxu0 %v4906
        %4935 = vmatprep.subr.bf16.mxu0 0
        %4936 = vmatpush1.bf16.xpose.msra.mxu0 %v4903
        %4937 = vmatprep.subr.bf16.mxu0 0
        %4938 = vmatpush1.bf16.xpose.msra.mxu0 %v4900
        %4939 = vmatprep.subr.bf16.mxu0 0
        %4940 = vmatpush2.bf16.xpose.msra.mxu0 0
        %4941 = vmatprep.subr.bf16.mxu0 0
        %4942 = vmatpush2.bf16.xpose.msra.mxu0 0
        %4943 = vmatprep.subr.bf16.mxu0 0
        %4944 = vmatpush2.bf16.xpose.msra.mxu0 0
        %4945 = vmatprep.subr.bf16.mxu0 0
        %4946 = vmatpush2.bf16.xpose.msra.mxu0 0
        %4947 = vmatprep.subr.bf16.mxu0 0
        %4948 = vmatpush2.bf16.xpose.msra.mxu0 0
        %4949 = vmatprep.subr.bf16.mxu0 0
        %4950 = vmatpush2.bf16.xpose.msra.mxu0 0
        %4951 = vmatprep.subr.bf16.mxu0 0
        %4952 = vmatpush2.bf16.xpose.msra.mxu0 0
        %4953 = vmatprep.subr.bf16.mxu0 0
        %4954 = vmatpush2.bf16.xpose.msra.mxu0 0
        %4955 = vmatprep.mubr.bf16.mxu0 0
        %4956 = vmatmul.mubr.bf16.gmra.mxu0 %v4876
        %v4957 = vpop.f32.mrf.mxu0
        %v4958 = vadd.f32 %v4356, %v4957
        %v4959 = vpop.f32.mrf.mxu0
        %v4960 = vpop.f32.mrf.mxu0
        %v4961 = vadd.f32 %v4357, %v4960
        %v4962 = vpop.f32.mrf.mxu0
        %4963 = vmatprep.mubr.bf16.mxu0 0
        %4964 = vmatmul.mubr.bf16.gmra.mxu0 %v4879
        %v4965 = vpop.f32.mrf.mxu0
        %v4966 = vadd.f32 %v4358, %v4965
        %v4967 = vpop.f32.mrf.mxu0
        %v4968 = vpop.f32.mrf.mxu0
        %v4969 = vadd.f32 %v4359, %v4968
        %v4970 = vpop.f32.mrf.mxu0
        %4971 = vmatprep.mubr.bf16.mxu0 0
        %4972 = vmatmul.mubr.bf16.gmra.mxu0 %v4882
        %v4973 = vpop.f32.mrf.mxu0
        %v4974 = vadd.f32 %v4360, %v4973
        %v4975 = vpop.f32.mrf.mxu0
        %v4976 = vpop.f32.mrf.mxu0
        %v4977 = vadd.f32 %v4361, %v4976
        %v4978 = vpop.f32.mrf.mxu0
        %4979 = vmatprep.mubr.bf16.mxu0 0
        %4980 = vmatmul.mubr.bf16.gmra.mxu0 %v4885
        %v4981 = vpop.f32.mrf.mxu0
        %v4982 = vadd.f32 %v4362, %v4981
        %v4983 = vpop.f32.mrf.mxu0
        %v4984 = vpop.f32.mrf.mxu0
        %v4985 = vadd.f32 %v4363, %v4984
        %v4986 = vpop.f32.mrf.mxu0
        %4987 = vmatprep.mubr.bf16.mxu0 0
        %4988 = vmatmul.mubr.bf16.gmra.mxu0 %v4888
        %v4989 = vpop.f32.mrf.mxu0
        %v4990 = vadd.f32 %v4364, %v4989
        %v4991 = vpop.f32.mrf.mxu0
        %v4992 = vpop.f32.mrf.mxu0
        %v4993 = vadd.f32 %v4365, %v4992
        %v4994 = vpop.f32.mrf.mxu0
        %4995 = vmatprep.mubr.bf16.mxu0 0
        %4996 = vmatmul.mubr.bf16.gmra.mxu0 %v4891
        %v4997 = vpop.f32.mrf.mxu0
        %v4998 = vadd.f32 %v4366, %v4997
        %v4999 = vpop.f32.mrf.mxu0
        %v5000 = vpop.f32.mrf.mxu0
        %v5001 = vadd.f32 %v4367, %v5000
        %v5002 = vpop.f32.mrf.mxu0
        %5003 = vmatprep.mubr.bf16.mxu0 0
        %5004 = vmatmul.mubr.bf16.gmra.mxu0 %v4894
        %v5005 = vpop.f32.mrf.mxu0
        %v5006 = vadd.f32 %v4368, %v5005
        %v5007 = vpop.f32.mrf.mxu0
        %v5008 = vpop.f32.mrf.mxu0
        %v5009 = vadd.f32 %v4369, %v5008
        %v5010 = vpop.f32.mrf.mxu0
        %5011 = vmatprep.mubr.bf16.mxu0 0
        %5012 = vmatmul.mubr.bf16.gmra.mxu0 %v4897
        %v5013 = vpop.f32.mrf.mxu0
        %v5014 = vadd.f32 %v4370, %v5013
        %v5015 = vpop.f32.mrf.mxu0
        %v5016 = vpop.f32.mrf.mxu0
        %v5017 = vadd.f32 %v4371, %v5016
        %v5018 = vpop.f32.mrf.mxu0
        %5019 = vdwg.mxu0
        %5020 = vmax.xlane.f32.xlu0 %v4958
        %v5021 = vpop.xlane.xlu0 %5020
        %5022 = vmax.xlane.f32.xlu0 %v4961
        %v5023 = vpop.xlane.xlu0 %5022
        %5024 = vmax.xlane.f32.xlu0 %v4966
        %v5025 = vpop.xlane.xlu0 %5024
        %5026 = vmax.xlane.f32.xlu0 %v4969
        %v5027 = vpop.xlane.xlu0 %5026
        %5028 = vmax.xlane.f32.xlu0 %v4974
        %v5029 = vpop.xlane.xlu0 %5028
        %5030 = vmax.xlane.f32.xlu0 %v4977
        %v5031 = vpop.xlane.xlu0 %5030
        %5032 = vmax.xlane.f32.xlu0 %v4982
        %v5033 = vpop.xlane.xlu0 %5032
        %5034 = vmax.xlane.f32.xlu0 %v4985
        %v5035 = vpop.xlane.xlu0 %5034
        %5036 = vmax.xlane.f32.xlu0 %v4990
        %v5037 = vpop.xlane.xlu0 %5036
        %5038 = vmax.xlane.f32.xlu0 %v4993
        %v5039 = vpop.xlane.xlu0 %5038
        %5040 = vmax.xlane.f32.xlu0 %v4998
        %v5041 = vpop.xlane.xlu0 %5040
        %5042 = vmax.xlane.f32.xlu0 %v5001
        %v5043 = vpop.xlane.xlu0 %5042
        %5044 = vmax.xlane.f32.xlu0 %v5006
        %v5045 = vpop.xlane.xlu0 %5044
        %5046 = vmax.xlane.f32.xlu0 %v5009
        %v5047 = vpop.xlane.xlu0 %5046
        %5048 = vmax.xlane.f32.xlu0 %v5014
        %v5049 = vpop.xlane.xlu0 %5048
        %5050 = vmax.xlane.f32.xlu0 %v5017
        %v5051 = vpop.xlane.xlu0 %5050
        %v5052 = vsub.f32 %v4958, %v5021
        %v5053 = vsub.f32 %v4961, %v5023
        %v5054 = vsub.f32 %v4966, %v5025
        %v5055 = vsub.f32 %v4969, %v5027
        %v5056 = vsub.f32 %v4974, %v5029
        %v5057 = vsub.f32 %v4977, %v5031
        %v5058 = vsub.f32 %v4982, %v5033
        %v5059 = vsub.f32 %v4985, %v5035
        %v5060 = vsub.f32 %v4990, %v5037
        %v5061 = vsub.f32 %v4993, %v5039
        %v5062 = vsub.f32 %v4998, %v5041
        %v5063 = vsub.f32 %v5001, %v5043
        %v5064 = vsub.f32 %v5006, %v5045
        %v5065 = vsub.f32 %v5009, %v5047
        %v5066 = vsub.f32 %v5014, %v5049
        %v5067 = vsub.f32 %v5017, %v5051
        %v5068 = vmul.f32 %v5052, 1.442695
        %v5069 = vpow.pop %v5068
        %v5070 = vmul.f32 %v5053, 1.442695
        %v5071 = vpow.pop %v5070
        %v5072 = vmul.f32 %v5054, 1.442695
        %v5073 = vpow.pop %v5072
        %v5074 = vmul.f32 %v5055, 1.442695
        %v5075 = vpow.pop %v5074
        %v5076 = vmul.f32 %v5056, 1.442695
        %v5077 = vpow.pop %v5076
        %v5078 = vmul.f32 %v5057, 1.442695
        %v5079 = vpow.pop %v5078
        %v5080 = vmul.f32 %v5058, 1.442695
        %v5081 = vpow.pop %v5080
        %v5082 = vmul.f32 %v5059, 1.442695
        %v5083 = vpow.pop %v5082
        %v5084 = vmul.f32 %v5060, 1.442695
        %v5085 = vpow.pop %v5084
        %v5086 = vmul.f32 %v5061, 1.442695
        %v5087 = vpow.pop %v5086
        %v5088 = vmul.f32 %v5062, 1.442695
        %v5089 = vpow.pop %v5088
        %v5090 = vmul.f32 %v5063, 1.442695
        %v5091 = vpow.pop %v5090
        %v5092 = vmul.f32 %v5064, 1.442695
        %v5093 = vpow.pop %v5092
        %v5094 = vmul.f32 %v5065, 1.442695
        %v5095 = vpow.pop %v5094
        %v5096 = vmul.f32 %v5066, 1.442695
        %v5097 = vpow.pop %v5096
        %v5098 = vmul.f32 %v5067, 1.442695
        %v5099 = vpow.pop %v5098
        %5100 = vadd.xlane.f32.xlu0 %v5069
        %v5101 = vpop.xlane.xlu0 %5100
        %5102 = vadd.xlane.f32.xlu0 %v5071
        %v5103 = vpop.xlane.xlu0 %5102
        %5104 = vadd.xlane.f32.xlu0 %v5073
        %v5105 = vpop.xlane.xlu0 %5104
        %5106 = vadd.xlane.f32.xlu0 %v5075
        %v5107 = vpop.xlane.xlu0 %5106
        %5108 = vadd.xlane.f32.xlu0 %v5077
        %v5109 = vpop.xlane.xlu0 %5108
        %5110 = vadd.xlane.f32.xlu0 %v5079
        %v5111 = vpop.xlane.xlu0 %5110
        %5112 = vadd.xlane.f32.xlu0 %v5081
        %v5113 = vpop.xlane.xlu0 %5112
        %5114 = vadd.xlane.f32.xlu0 %v5083
        %v5115 = vpop.xlane.xlu0 %5114
        %5116 = vadd.xlane.f32.xlu0 %v5085
        %v5117 = vpop.xlane.xlu0 %5116
        %5118 = vadd.xlane.f32.xlu0 %v5087
        %v5119 = vpop.xlane.xlu0 %5118
        %5120 = vadd.xlane.f32.xlu0 %v5089
        %v5121 = vpop.xlane.xlu0 %5120
        %5122 = vadd.xlane.f32.xlu0 %v5091
        %v5123 = vpop.xlane.xlu0 %5122
        %5124 = vadd.xlane.f32.xlu0 %v5093
        %v5125 = vpop.xlane.xlu0 %5124
        %5126 = vadd.xlane.f32.xlu0 %v5095
        %v5127 = vpop.xlane.xlu0 %5126
        %5128 = vadd.xlane.f32.xlu0 %v5097
        %v5129 = vpop.xlane.xlu0 %5128
        %5130 = vadd.xlane.f32.xlu0 %v5099
        %v5131 = vpop.xlane.xlu0 %5130
        %v5132 = vrcp.pop %v5101
        %v5133 = vrcp.pop %v5103
        %v5134 = vrcp.pop %v5105
        %v5135 = vrcp.pop %v5107
        %v5136 = vrcp.pop %v5109
        %v5137 = vrcp.pop %v5111
        %v5138 = vrcp.pop %v5113
        %v5139 = vrcp.pop %v5115
        %v5140 = vrcp.pop %v5117
        %v5141 = vrcp.pop %v5119
        %v5142 = vrcp.pop %v5121
        %v5143 = vrcp.pop %v5123
        %v5144 = vrcp.pop %v5125
        %v5145 = vrcp.pop %v5127
        %v5146 = vrcp.pop %v5129
        %v5147 = vrcp.pop %v5131
        %v5148 = vmul.f32 %v5069, %v5132
        %v5149 = vmul.f32 %v5071, %v5133
        %v5150 = vmul.f32 %v5073, %v5134
        %v5151 = vmul.f32 %v5075, %v5135
        %v5152 = vmul.f32 %v5077, %v5136
        %v5153 = vmul.f32 %v5079, %v5137
        %v5154 = vmul.f32 %v5081, %v5138
        %v5155 = vmul.f32 %v5083, %v5139
        %v5156 = vmul.f32 %v5085, %v5140
        %v5157 = vmul.f32 %v5087, %v5141
        %v5158 = vmul.f32 %v5089, %v5142
        %v5159 = vmul.f32 %v5091, %v5143
        %v5160 = vmul.f32 %v5093, %v5144
        %v5161 = vmul.f32 %v5095, %v5145
        %v5162 = vmul.f32 %v5097, %v5146
        %v5163 = vmul.f32 %v5099, %v5147
        %5164 = vadd.xlane.f32.xlu0 %v5148
        %v5165 = vpop.xlane.xlu0 %5164
        %5166 = vadd.xlane.f32.xlu0 %v5149
        %v5167 = vpop.xlane.xlu0 %5166
        %5168 = vadd.xlane.f32.xlu0 %v5150
        %v5169 = vpop.xlane.xlu0 %5168
        %5170 = vadd.xlane.f32.xlu0 %v5151
        %v5171 = vpop.xlane.xlu0 %5170
        %5172 = vadd.xlane.f32.xlu0 %v5152
        %v5173 = vpop.xlane.xlu0 %5172
        %5174 = vadd.xlane.f32.xlu0 %v5153
        %v5175 = vpop.xlane.xlu0 %5174
        %5176 = vadd.xlane.f32.xlu0 %v5154
        %v5177 = vpop.xlane.xlu0 %5176
        %5178 = vadd.xlane.f32.xlu0 %v5155
        %v5179 = vpop.xlane.xlu0 %5178
        %5180 = vadd.xlane.f32.xlu0 %v5156
        %v5181 = vpop.xlane.xlu0 %5180
        %5182 = vadd.xlane.f32.xlu0 %v5157
        %v5183 = vpop.xlane.xlu0 %5182
        %5184 = vadd.xlane.f32.xlu0 %v5158
        %v5185 = vpop.xlane.xlu0 %5184
        %5186 = vadd.xlane.f32.xlu0 %v5159
        %v5187 = vpop.xlane.xlu0 %5186
        %5188 = vadd.xlane.f32.xlu0 %v5160
        %v5189 = vpop.xlane.xlu0 %5188
        %5190 = vadd.xlane.f32.xlu0 %v5161
        %v5191 = vpop.xlane.xlu0 %5190
        %5192 = vadd.xlane.f32.xlu0 %v5162
        %v5193 = vpop.xlane.xlu0 %5192
        %5194 = vadd.xlane.f32.xlu0 %v5163
        %v5195 = vpop.xlane.xlu0 %5194
        %vm5196 = vcmask 1048064
        %v5197 = vsel %vm5196, %v4036, 0.0
        %v5198 = vsel %vm5196, %v4040, 0.0
        %v5199 = vadd.f32 %v5197, %v5198
        %v5200 = vsel %vm5196, %v4046, 0.0
        %v5201 = vadd.f32 %v5199, %v5200
        %v5202 = vsel %vm5196, %v4050, 0.0
        %v5203 = vadd.f32 %v5201, %v5202
        %v5204 = vsel %vm5196, %v4056, 0.0
        %v5205 = vadd.f32 %v5203, %v5204
        %v5206 = vsel %vm5196, %v4060, 0.0
        %v5207 = vadd.f32 %v5205, %v5206
        %v5208 = vsel %vm5196, %v4066, 0.0
        %v5209 = vadd.f32 %v5207, %v5208
        %v5210 = vsel %vm5196, %v4070, 0.0
        %v5211 = vadd.f32 %v5209, %v5210
        %v5212 = vsel %vm5196, %v4076, 0.0
        %v5213 = vadd.f32 %v5211, %v5212
        %v5214 = vsel %vm5196, %v4080, 0.0
        %v5215 = vadd.f32 %v5213, %v5214
        %v5216 = vsel %vm5196, %v4086, 0.0
        %v5217 = vadd.f32 %v5215, %v5216
        %v5218 = vsel %vm5196, %v4090, 0.0
        %v5219 = vadd.f32 %v5217, %v5218
        %v5220 = vsel %vm5196, %v4096, 0.0
        %v5221 = vadd.f32 %v5219, %v5220
        %v5222 = vsel %vm5196, %v4100, 0.0
        %v5223 = vadd.f32 %v5221, %v5222
        %v5224 = vsel %vm5196, %v4106, 0.0
        %v5225 = vadd.f32 %v5223, %v5224
        %v5226 = vsel %vm5196, %v4110, 0.0
        %v5227 = vadd.f32 %v5225, %v5226
        %v5228 = vrot.slane %v5227, 4
        %v5229 = vadd.f32 %v5227, %v5228
        %v5230 = vrot.slane %v5229, 2
        %v5231 = vadd.f32 %v5229, %v5230
        %v5232 = vrot.slane %v5231, 1
        %v5233 = vadd.f32 %v5231, %v5232
        %v5234 = vmul.f32 %v5165, %v5233
        %v5235 = vmul.f32 %v5167, %v5233
        %v5236 = vmul.f32 %v5169, %v5233
        %v5237 = vmul.f32 %v5171, %v5233
        %v5238 = vmul.f32 %v5173, %v5233
        %v5239 = vmul.f32 %v5175, %v5233
        %v5240 = vmul.f32 %v5177, %v5233
        %v5241 = vmul.f32 %v5179, %v5233
        %v5242 = vmul.f32 %v5181, %v5233
        %v5243 = vmul.f32 %v5183, %v5233
        %v5244 = vmul.f32 %v5185, %v5233
        %v5245 = vmul.f32 %v5187, %v5233
        %v5246 = vmul.f32 %v5189, %v5233
        %v5247 = vmul.f32 %v5191, %v5233
        %v5248 = vmul.f32 %v5193, %v5233
        %v5249 = vmul.f32 %v5195, %v5233
        %5250 = vst.msk [vmem:[#allocation2] sm:$0xff] %vm5196, %v5234
        %5251 = vst.msk [vmem:[#allocation2 + $0x20] sm:$0xff] %vm5196, %v5235
        %5252 = vst.msk [vmem:[#allocation2 + $0x40] sm:$0xff] %vm5196, %v5236
        %5253 = vst.msk [vmem:[#allocation2 + $0x60] sm:$0xff] %vm5196, %v5237
        %5254 = vst.msk [vmem:[#allocation2 + $0x80] sm:$0xff] %vm5196, %v5238
        %5255 = vst.msk [vmem:[#allocation2 + $0xa0] sm:$0xff] %vm5196, %v5239
        %5256 = vst.msk [vmem:[#allocation2 + $0xc0] sm:$0xff] %vm5196, %v5240
        %5257 = vst.msk [vmem:[#allocation2 + $0xe0] sm:$0xff] %vm5196, %v5241
        %5258 = vst.msk [vmem:[#allocation2 + $0x100] sm:$0xff] %vm5196, %v5242
        %5259 = vst.msk [vmem:[#allocation2 + $0x120] sm:$0xff] %vm5196, %v5243
        %5260 = vst.msk [vmem:[#allocation2 + $0x140] sm:$0xff] %vm5196, %v5244
        %5261 = vst.msk [vmem:[#allocation2 + $0x160] sm:$0xff] %vm5196, %v5245
        %5262 = vst.msk [vmem:[#allocation2 + $0x180] sm:$0xff] %vm5196, %v5246
        %5263 = vst.msk [vmem:[#allocation2 + $0x1a0] sm:$0xff] %vm5196, %v5247
        %5264 = vst.msk [vmem:[#allocation2 + $0x1c0] sm:$0xff] %vm5196, %v5248
        %5265 = vst.msk [vmem:[#allocation2 + $0x1e0] sm:$0xff] %vm5196, %v5249
        %v5267 = vsel %vm4436, %v4373, 0
        %v5270 = vsel %vm4436, %v4377, 0
        %v5273 = vsel %vm4436, %v4381, 0
        %v5276 = vsel %vm4436, %v4385, 0
        %v5279 = vsel %vm4436, %v4389, 0
        %v5282 = vsel %vm4436, %v4393, 0
        %v5285 = vsel %vm4436, %v4397, 0
        %v5288 = vsel %vm4436, %v4401, 0
        %v5291 = vsel %vm4436, %v4405, 0
        %v5294 = vsel %vm4436, %v4409, 0
        %v5297 = vsel %vm4436, %v4413, 0
        %v5300 = vsel %vm4436, %v4417, 0
        %v5303 = vsel %vm4436, %v4421, 0
        %v5306 = vsel %vm4436, %v4425, 0
        %v5309 = vsel %vm4436, %v4429, 0
        %v5312 = vsel %vm4436, %v4433, 0
        %5314 = vmatprep.subr.bf16.mxu0 0
        %5315 = vmatpush1.bf16.xpose.msra.mxu0 %v5312
        %5316 = vmatprep.subr.bf16.mxu0 0
        %5317 = vmatpush1.bf16.xpose.msra.mxu0 %v5309
        %5318 = vmatprep.subr.bf16.mxu0 0
        %5319 = vmatpush1.bf16.xpose.msra.mxu0 %v5306
        %5320 = vmatprep.subr.bf16.mxu0 0
        %5321 = vmatpush1.bf16.xpose.msra.mxu0 %v5303
        %5322 = vmatprep.subr.bf16.mxu0 0
        %5323 = vmatpush1.bf16.xpose.msra.mxu0 %v5300
        %5324 = vmatprep.subr.bf16.mxu0 0
        %5325 = vmatpush1.bf16.xpose.msra.mxu0 %v5297
        %5326 = vmatprep.subr.bf16.mxu0 0
        %5327 = vmatpush1.bf16.xpose.msra.mxu0 %v5294
        %5328 = vmatprep.subr.bf16.mxu0 0
        %5329 = vmatpush1.bf16.xpose.msra.mxu0 %v5291
        %5330 = vmatprep.subr.bf16.mxu0 0
        %5331 = vmatpush2.bf16.xpose.msra.mxu0 0
        %5332 = vmatprep.subr.bf16.mxu0 0
        %5333 = vmatpush2.bf16.xpose.msra.mxu0 0
        %5334 = vmatprep.subr.bf16.mxu0 0
        %5335 = vmatpush2.bf16.xpose.msra.mxu0 0
        %5336 = vmatprep.subr.bf16.mxu0 0
        %5337 = vmatpush2.bf16.xpose.msra.mxu0 0
        %5338 = vmatprep.subr.bf16.mxu0 0
        %5339 = vmatpush2.bf16.xpose.msra.mxu0 0
        %5340 = vmatprep.subr.bf16.mxu0 0
        %5341 = vmatpush2.bf16.xpose.msra.mxu0 0
        %5342 = vmatprep.subr.bf16.mxu0 0
        %5343 = vmatpush2.bf16.xpose.msra.mxu0 0
        %5344 = vmatprep.subr.bf16.mxu0 0
        %5345 = vmatpush2.bf16.xpose.msra.mxu0 0
        %5346 = vmatprep.mubr.bf16.mxu0 0
        %5347 = vmatmul.mubr.bf16.gmra.mxu0 %v5267
        %v5348 = vpop.f32.mrf.mxu0
        %v5349 = vadd.f32 %v4356, %v5348
        %v5350 = vpop.f32.mrf.mxu0
        %v5351 = vpop.f32.mrf.mxu0
        %v5352 = vadd.f32 %v4357, %v5351
        %v5353 = vpop.f32.mrf.mxu0
        %5354 = vmatprep.mubr.bf16.mxu0 0
        %5355 = vmatmul.mubr.bf16.gmra.mxu0 %v5270
        %v5356 = vpop.f32.mrf.mxu0
        %v5357 = vadd.f32 %v4358, %v5356
        %v5358 = vpop.f32.mrf.mxu0
        %v5359 = vpop.f32.mrf.mxu0
        %v5360 = vadd.f32 %v4359, %v5359
        %v5361 = vpop.f32.mrf.mxu0
        %5362 = vmatprep.mubr.bf16.mxu0 0
        %5363 = vmatmul.mubr.bf16.gmra.mxu0 %v5273
        %v5364 = vpop.f32.mrf.mxu0
        %v5365 = vadd.f32 %v4360, %v5364
        %v5366 = vpop.f32.mrf.mxu0
        %v5367 = vpop.f32.mrf.mxu0
        %v5368 = vadd.f32 %v4361, %v5367
        %v5369 = vpop.f32.mrf.mxu0
        %5370 = vmatprep.mubr.bf16.mxu0 0
        %5371 = vmatmul.mubr.bf16.gmra.mxu0 %v5276
        %v5372 = vpop.f32.mrf.mxu0
        %v5373 = vadd.f32 %v4362, %v5372
        %v5374 = vpop.f32.mrf.mxu0
        %v5375 = vpop.f32.mrf.mxu0
        %v5376 = vadd.f32 %v4363, %v5375
        %v5377 = vpop.f32.mrf.mxu0
        %5378 = vmatprep.mubr.bf16.mxu0 0
        %5379 = vmatmul.mubr.bf16.gmra.mxu0 %v5279
        %v5380 = vpop.f32.mrf.mxu0
        %v5381 = vadd.f32 %v4364, %v5380
        %v5382 = vpop.f32.mrf.mxu0
        %v5383 = vpop.f32.mrf.mxu0
        %v5384 = vadd.f32 %v4365, %v5383
        %v5385 = vpop.f32.mrf.mxu0
        %5386 = vmatprep.mubr.bf16.mxu0 0
        %5387 = vmatmul.mubr.bf16.gmra.mxu0 %v5282
        %v5388 = vpop.f32.mrf.mxu0
        %v5389 = vadd.f32 %v4366, %v5388
        %v5390 = vpop.f32.mrf.mxu0
        %v5391 = vpop.f32.mrf.mxu0
        %v5392 = vadd.f32 %v4367, %v5391
        %v5393 = vpop.f32.mrf.mxu0
        %5394 = vmatprep.mubr.bf16.mxu0 0
        %5395 = vmatmul.mubr.bf16.gmra.mxu0 %v5285
        %v5396 = vpop.f32.mrf.mxu0
        %v5397 = vadd.f32 %v4368, %v5396
        %v5398 = vpop.f32.mrf.mxu0
        %v5399 = vpop.f32.mrf.mxu0
        %v5400 = vadd.f32 %v4369, %v5399
        %v5401 = vpop.f32.mrf.mxu0
        %5402 = vmatprep.mubr.bf16.mxu0 0
        %5403 = vmatmul.mubr.bf16.gmra.mxu0 %v5288
        %v5404 = vpop.f32.mrf.mxu0
        %v5405 = vadd.f32 %v4370, %v5404
        %v5406 = vpop.f32.mrf.mxu0
        %v5407 = vpop.f32.mrf.mxu0
        %v5408 = vadd.f32 %v4371, %v5407
        %v5409 = vpop.f32.mrf.mxu0
        %5410 = vdwg.mxu0
        %5411 = vmax.xlane.f32.xlu0 %v5349
        %v5412 = vpop.xlane.xlu0 %5411
        %5413 = vmax.xlane.f32.xlu0 %v5352
        %v5414 = vpop.xlane.xlu0 %5413
        %5415 = vmax.xlane.f32.xlu0 %v5357
        %v5416 = vpop.xlane.xlu0 %5415
        %5417 = vmax.xlane.f32.xlu0 %v5360
        %v5418 = vpop.xlane.xlu0 %5417
        %5419 = vmax.xlane.f32.xlu0 %v5365
        %v5420 = vpop.xlane.xlu0 %5419
        %5421 = vmax.xlane.f32.xlu0 %v5368
        %v5422 = vpop.xlane.xlu0 %5421
        %5423 = vmax.xlane.f32.xlu0 %v5373
        %v5424 = vpop.xlane.xlu0 %5423
        %5425 = vmax.xlane.f32.xlu0 %v5376
        %v5426 = vpop.xlane.xlu0 %5425
        %5427 = vmax.xlane.f32.xlu0 %v5381
        %v5428 = vpop.xlane.xlu0 %5427
        %5429 = vmax.xlane.f32.xlu0 %v5384
        %v5430 = vpop.xlane.xlu0 %5429
        %5431 = vmax.xlane.f32.xlu0 %v5389
        %v5432 = vpop.xlane.xlu0 %5431
        %5433 = vmax.xlane.f32.xlu0 %v5392
        %v5434 = vpop.xlane.xlu0 %5433
        %5435 = vmax.xlane.f32.xlu0 %v5397
        %v5436 = vpop.xlane.xlu0 %5435
        %5437 = vmax.xlane.f32.xlu0 %v5400
        %v5438 = vpop.xlane.xlu0 %5437
        %5439 = vmax.xlane.f32.xlu0 %v5405
        %v5440 = vpop.xlane.xlu0 %5439
        %5441 = vmax.xlane.f32.xlu0 %v5408
        %v5442 = vpop.xlane.xlu0 %5441
        %v5443 = vsub.f32 %v5349, %v5412
        %v5444 = vsub.f32 %v5352, %v5414
        %v5445 = vsub.f32 %v5357, %v5416
        %v5446 = vsub.f32 %v5360, %v5418
        %v5447 = vsub.f32 %v5365, %v5420
        %v5448 = vsub.f32 %v5368, %v5422
        %v5449 = vsub.f32 %v5373, %v5424
        %v5450 = vsub.f32 %v5376, %v5426
        %v5451 = vsub.f32 %v5381, %v5428
        %v5452 = vsub.f32 %v5384, %v5430
        %v5453 = vsub.f32 %v5389, %v5432
        %v5454 = vsub.f32 %v5392, %v5434
        %v5455 = vsub.f32 %v5397, %v5436
        %v5456 = vsub.f32 %v5400, %v5438
        %v5457 = vsub.f32 %v5405, %v5440
        %v5458 = vsub.f32 %v5408, %v5442
        %v5459 = vmul.f32 %v5443, 1.442695
        %v5460 = vpow.pop %v5459
        %v5461 = vmul.f32 %v5444, 1.442695
        %v5462 = vpow.pop %v5461
        %v5463 = vmul.f32 %v5445, 1.442695
        %v5464 = vpow.pop %v5463
        %v5465 = vmul.f32 %v5446, 1.442695
        %v5466 = vpow.pop %v5465
        %v5467 = vmul.f32 %v5447, 1.442695
        %v5468 = vpow.pop %v5467
        %v5469 = vmul.f32 %v5448, 1.442695
        %v5470 = vpow.pop %v5469
        %v5471 = vmul.f32 %v5449, 1.442695
        %v5472 = vpow.pop %v5471
        %v5473 = vmul.f32 %v5450, 1.442695
        %v5474 = vpow.pop %v5473
        %v5475 = vmul.f32 %v5451, 1.442695
        %v5476 = vpow.pop %v5475
        %v5477 = vmul.f32 %v5452, 1.442695
        %v5478 = vpow.pop %v5477
        %v5479 = vmul.f32 %v5453, 1.442695
        %v5480 = vpow.pop %v5479
        %v5481 = vmul.f32 %v5454, 1.442695
        %v5482 = vpow.pop %v5481
        %v5483 = vmul.f32 %v5455, 1.442695
        %v5484 = vpow.pop %v5483
        %v5485 = vmul.f32 %v5456, 1.442695
        %v5486 = vpow.pop %v5485
        %v5487 = vmul.f32 %v5457, 1.442695
        %v5488 = vpow.pop %v5487
        %v5489 = vmul.f32 %v5458, 1.442695
        %v5490 = vpow.pop %v5489
        %5491 = vadd.xlane.f32.xlu0 %v5460
        %v5492 = vpop.xlane.xlu0 %5491
        %5493 = vadd.xlane.f32.xlu0 %v5462
        %v5494 = vpop.xlane.xlu0 %5493
        %5495 = vadd.xlane.f32.xlu0 %v5464
        %v5496 = vpop.xlane.xlu0 %5495
        %5497 = vadd.xlane.f32.xlu0 %v5466
        %v5498 = vpop.xlane.xlu0 %5497
        %5499 = vadd.xlane.f32.xlu0 %v5468
        %v5500 = vpop.xlane.xlu0 %5499
        %5501 = vadd.xlane.f32.xlu0 %v5470
        %v5502 = vpop.xlane.xlu0 %5501
        %5503 = vadd.xlane.f32.xlu0 %v5472
        %v5504 = vpop.xlane.xlu0 %5503
        %5505 = vadd.xlane.f32.xlu0 %v5474
        %v5506 = vpop.xlane.xlu0 %5505
        %5507 = vadd.xlane.f32.xlu0 %v5476
        %v5508 = vpop.xlane.xlu0 %5507
        %5509 = vadd.xlane.f32.xlu0 %v5478
        %v5510 = vpop.xlane.xlu0 %5509
        %5511 = vadd.xlane.f32.xlu0 %v5480
        %v5512 = vpop.xlane.xlu0 %5511
        %5513 = vadd.xlane.f32.xlu0 %v5482
        %v5514 = vpop.xlane.xlu0 %5513
        %5515 = vadd.xlane.f32.xlu0 %v5484
        %v5516 = vpop.xlane.xlu0 %5515
        %5517 = vadd.xlane.f32.xlu0 %v5486
        %v5518 = vpop.xlane.xlu0 %5517
        %5519 = vadd.xlane.f32.xlu0 %v5488
        %v5520 = vpop.xlane.xlu0 %5519
        %5521 = vadd.xlane.f32.xlu0 %v5490
        %v5522 = vpop.xlane.xlu0 %5521
        %v5523 = vrcp.pop %v5492
        %v5524 = vrcp.pop %v5494
        %v5525 = vrcp.pop %v5496
        %v5526 = vrcp.pop %v5498
        %v5527 = vrcp.pop %v5500
        %v5528 = vrcp.pop %v5502
        %v5529 = vrcp.pop %v5504
        %v5530 = vrcp.pop %v5506
        %v5531 = vrcp.pop %v5508
        %v5532 = vrcp.pop %v5510
        %v5533 = vrcp.pop %v5512
        %v5534 = vrcp.pop %v5514
        %v5535 = vrcp.pop %v5516
        %v5536 = vrcp.pop %v5518
        %v5537 = vrcp.pop %v5520
        %v5538 = vrcp.pop %v5522
        %v5539 = vmul.f32 %v5460, %v5523
        %v5540 = vmul.f32 %v5462, %v5524
        %v5541 = vmul.f32 %v5464, %v5525
        %v5542 = vmul.f32 %v5466, %v5526
        %v5543 = vmul.f32 %v5468, %v5527
        %v5544 = vmul.f32 %v5470, %v5528
        %v5545 = vmul.f32 %v5472, %v5529
        %v5546 = vmul.f32 %v5474, %v5530
        %v5547 = vmul.f32 %v5476, %v5531
        %v5548 = vmul.f32 %v5478, %v5532
        %v5549 = vmul.f32 %v5480, %v5533
        %v5550 = vmul.f32 %v5482, %v5534
        %v5551 = vmul.f32 %v5484, %v5535
        %v5552 = vmul.f32 %v5486, %v5536
        %v5553 = vmul.f32 %v5488, %v5537
        %v5554 = vmul.f32 %v5490, %v5538
        %5555 = vadd.xlane.f32.xlu0 %v5539
        %v5556 = vpop.xlane.xlu0 %5555
        %5557 = vadd.xlane.f32.xlu0 %v5540
        %v5558 = vpop.xlane.xlu0 %5557
        %5559 = vadd.xlane.f32.xlu0 %v5541
        %v5560 = vpop.xlane.xlu0 %5559
        %5561 = vadd.xlane.f32.xlu0 %v5542
        %v5562 = vpop.xlane.xlu0 %5561
        %5563 = vadd.xlane.f32.xlu0 %v5543
        %v5564 = vpop.xlane.xlu0 %5563
        %5565 = vadd.xlane.f32.xlu0 %v5544
        %v5566 = vpop.xlane.xlu0 %5565
        %5567 = vadd.xlane.f32.xlu0 %v5545
        %v5568 = vpop.xlane.xlu0 %5567
        %5569 = vadd.xlane.f32.xlu0 %v5546
        %v5570 = vpop.xlane.xlu0 %5569
        %5571 = vadd.xlane.f32.xlu0 %v5547
        %v5572 = vpop.xlane.xlu0 %5571
        %5573 = vadd.xlane.f32.xlu0 %v5548
        %v5574 = vpop.xlane.xlu0 %5573
        %5575 = vadd.xlane.f32.xlu0 %v5549
        %v5576 = vpop.xlane.xlu0 %5575
        %5577 = vadd.xlane.f32.xlu0 %v5550
        %v5578 = vpop.xlane.xlu0 %5577
        %5579 = vadd.xlane.f32.xlu0 %v5551
        %v5580 = vpop.xlane.xlu0 %5579
        %5581 = vadd.xlane.f32.xlu0 %v5552
        %v5582 = vpop.xlane.xlu0 %5581
        %5583 = vadd.xlane.f32.xlu0 %v5553
        %v5584 = vpop.xlane.xlu0 %5583
        %5585 = vadd.xlane.f32.xlu0 %v5554
        %v5586 = vpop.xlane.xlu0 %5585
        %v5587 = vsel %vm4436, %v4038, 0.0
        %v5588 = vsel %vm4436, %v4042, 0.0
        %v5589 = vadd.f32 %v5587, %v5588
        %v5590 = vsel %vm4436, %v4048, 0.0
        %v5591 = vadd.f32 %v5589, %v5590
        %v5592 = vsel %vm4436, %v4052, 0.0
        %v5593 = vadd.f32 %v5591, %v5592
        %v5594 = vsel %vm4436, %v4058, 0.0
        %v5595 = vadd.f32 %v5593, %v5594
        %v5596 = vsel %vm4436, %v4062, 0.0
        %v5597 = vadd.f32 %v5595, %v5596
        %v5598 = vsel %vm4436, %v4068, 0.0
        %v5599 = vadd.f32 %v5597, %v5598
        %v5600 = vsel %vm4436, %v4072, 0.0
        %v5601 = vadd.f32 %v5599, %v5600
        %v5602 = vsel %vm4436, %v4078, 0.0
        %v5603 = vadd.f32 %v5601, %v5602
        %v5604 = vsel %vm4436, %v4082, 0.0
        %v5605 = vadd.f32 %v5603, %v5604
        %v5606 = vsel %vm4436, %v4088, 0.0
        %v5607 = vadd.f32 %v5605, %v5606
        %v5608 = vsel %vm4436, %v4092, 0.0
        %v5609 = vadd.f32 %v5607, %v5608
        %v5610 = vsel %vm4436, %v4098, 0.0
        %v5611 = vadd.f32 %v5609, %v5610
        %v5612 = vsel %vm4436, %v4102, 0.0
        %v5613 = vadd.f32 %v5611, %v5612
        %v5614 = vsel %vm4436, %v4108, 0.0
        %v5615 = vadd.f32 %v5613, %v5614
        %v5616 = vsel %vm4436, %v4112, 0.0
        %v5617 = vadd.f32 %v5615, %v5616
        %v5618 = vrot.slane %v5617, 4
        %v5619 = vadd.f32 %v5617, %v5618
        %v5620 = vrot.slane %v5619, 2
        %v5621 = vadd.f32 %v5619, %v5620
        %v5622 = vrot.slane %v5621, 1
        %v5623 = vadd.f32 %v5621, %v5622
        %v5624 = vmul.f32 %v5556, %v5623
        %v5625 = vmul.f32 %v5558, %v5623
        %v5626 = vmul.f32 %v5560, %v5623
        %v5627 = vmul.f32 %v5562, %v5623
        %v5628 = vmul.f32 %v5564, %v5623
        %v5629 = vmul.f32 %v5566, %v5623
        %v5630 = vmul.f32 %v5568, %v5623
        %v5631 = vmul.f32 %v5570, %v5623
        %v5632 = vmul.f32 %v5572, %v5623
        %v5633 = vmul.f32 %v5574, %v5623
        %v5634 = vmul.f32 %v5576, %v5623
        %v5635 = vmul.f32 %v5578, %v5623
        %v5636 = vmul.f32 %v5580, %v5623
        %v5637 = vmul.f32 %v5582, %v5623
        %v5638 = vmul.f32 %v5584, %v5623
        %v5639 = vmul.f32 %v5586, %v5623
        %5640 = vst.msk [vmem:[#allocation2 + $0x8] sm:$0xff] %vm4436, %v5624
        %5641 = vst.msk [vmem:[#allocation2 + $0x28] sm:$0xff] %vm4436, %v5625
        %5642 = vst.msk [vmem:[#allocation2 + $0x48] sm:$0xff] %vm4436, %v5626
        %5643 = vst.msk [vmem:[#allocation2 + $0x68] sm:$0xff] %vm4436, %v5627
        %5644 = vst.msk [vmem:[#allocation2 + $0x88] sm:$0xff] %vm4436, %v5628
        %5645 = vst.msk [vmem:[#allocation2 + $0xa8] sm:$0xff] %vm4436, %v5629
        %5646 = vst.msk [vmem:[#allocation2 + $0xc8] sm:$0xff] %vm4436, %v5630
        %5647 = vst.msk [vmem:[#allocation2 + $0xe8] sm:$0xff] %vm4436, %v5631
        %5648 = vst.msk [vmem:[#allocation2 + $0x108] sm:$0xff] %vm4436, %v5632
        %5649 = vst.msk [vmem:[#allocation2 + $0x128] sm:$0xff] %vm4436, %v5633
        %5650 = vst.msk [vmem:[#allocation2 + $0x148] sm:$0xff] %vm4436, %v5634
        %5651 = vst.msk [vmem:[#allocation2 + $0x168] sm:$0xff] %vm4436, %v5635
        %5652 = vst.msk [vmem:[#allocation2 + $0x188] sm:$0xff] %vm4436, %v5636
        %5653 = vst.msk [vmem:[#allocation2 + $0x1a8] sm:$0xff] %vm4436, %v5637
        %5654 = vst.msk [vmem:[#allocation2 + $0x1c8] sm:$0xff] %vm4436, %v5638
        %5655 = vst.msk [vmem:[#allocation2 + $0x1e8] sm:$0xff] %vm4436, %v5639
        %5664 = vrot.lane.b32.xlu0 %v4373, 64
        %v5665 = vpop.permute.xlu0 %5664
        %5666 = vrot.lane.b32.xlu0 %v4377, 64
        %v5667 = vpop.permute.xlu0 %5666
        %5668 = vrot.lane.b32.xlu0 %v4381, 64
        %v5669 = vpop.permute.xlu0 %5668
        %5670 = vrot.lane.b32.xlu0 %v4385, 64
        %v5671 = vpop.permute.xlu0 %5670
        %5672 = vrot.lane.b32.xlu0 %v4389, 64
        %v5673 = vpop.permute.xlu0 %5672
        %5674 = vrot.lane.b32.xlu0 %v4393, 64
        %v5675 = vpop.permute.xlu0 %5674
        %5676 = vrot.lane.b32.xlu0 %v4397, 64
        %v5677 = vpop.permute.xlu0 %5676
        %5678 = vrot.lane.b32.xlu0 %v4401, 64
        %v5679 = vpop.permute.xlu0 %5678
        %5688 = vrot.lane.b32.xlu0 %v4405, 64
        %v5689 = vpop.permute.xlu0 %5688
        %5690 = vrot.lane.b32.xlu0 %v4409, 64
        %v5691 = vpop.permute.xlu0 %5690
        %5692 = vrot.lane.b32.xlu0 %v4413, 64
        %v5693 = vpop.permute.xlu0 %5692
        %5694 = vrot.lane.b32.xlu0 %v4417, 64
        %v5695 = vpop.permute.xlu0 %5694
        %5696 = vrot.lane.b32.xlu0 %v4421, 64
        %v5697 = vpop.permute.xlu0 %5696
        %5698 = vrot.lane.b32.xlu0 %v4425, 64
        %v5699 = vpop.permute.xlu0 %5698
        %5700 = vrot.lane.b32.xlu0 %v4429, 64
        %v5701 = vpop.permute.xlu0 %5700
        %5702 = vrot.lane.b32.xlu0 %v4433, 64
        %v5703 = vpop.permute.xlu0 %5702
        %v5705 = vsel %vm4436, %v5665, 0
        %v5708 = vsel %vm4436, %v5667, 0
        %v5711 = vsel %vm4436, %v5669, 0
        %v5714 = vsel %vm4436, %v5671, 0
        %v5717 = vsel %vm4436, %v5673, 0
        %v5720 = vsel %vm4436, %v5675, 0
        %v5723 = vsel %vm4436, %v5677, 0
        %v5726 = vsel %vm4436, %v5679, 0
        %v5729 = vsel %vm4436, %v5689, 0
        %v5732 = vsel %vm4436, %v5691, 0
        %v5735 = vsel %vm4436, %v5693, 0
        %v5738 = vsel %vm4436, %v5695, 0
        %v5741 = vsel %vm4436, %v5697, 0
        %v5744 = vsel %vm4436, %v5699, 0
        %v5747 = vsel %vm4436, %v5701, 0
        %v5750 = vsel %vm4436, %v5703, 0
        %5752 = vmatprep.subr.bf16.mxu0 0
        %5753 = vmatpush1.bf16.xpose.msra.mxu0 %v5750
        %5754 = vmatprep.subr.bf16.mxu0 0
        %5755 = vmatpush1.bf16.xpose.msra.mxu0 %v5747
        %5756 = vmatprep.subr.bf16.mxu0 0
        %5757 = vmatpush1.bf16.xpose.msra.mxu0 %v5744
        %5758 = vmatprep.subr.bf16.mxu0 0
        %5759 = vmatpush1.bf16.xpose.msra.mxu0 %v5741
        %5760 = vmatprep.subr.bf16.mxu0 0
        %5761 = vmatpush1.bf16.xpose.msra.mxu0 %v5738
        %5762 = vmatprep.subr.bf16.mxu0 0
        %5763 = vmatpush1.bf16.xpose.msra.mxu0 %v5735
        %5764 = vmatprep.subr.bf16.mxu0 0
        %5765 = vmatpush1.bf16.xpose.msra.mxu0 %v5732
        %5766 = vmatprep.subr.bf16.mxu0 0
        %5767 = vmatpush1.bf16.xpose.msra.mxu0 %v5729
        %5768 = vmatprep.subr.bf16.mxu0 0
        %5769 = vmatpush2.bf16.xpose.msra.mxu0 0
        %5770 = vmatprep.subr.bf16.mxu0 0
        %5771 = vmatpush2.bf16.xpose.msra.mxu0 0
        %5772 = vmatprep.subr.bf16.mxu0 0
        %5773 = vmatpush2.bf16.xpose.msra.mxu0 0
        %5774 = vmatprep.subr.bf16.mxu0 0
        %5775 = vmatpush2.bf16.xpose.msra.mxu0 0
        %5776 = vmatprep.subr.bf16.mxu0 0
        %5777 = vmatpush2.bf16.xpose.msra.mxu0 0
        %5778 = vmatprep.subr.bf16.mxu0 0
        %5779 = vmatpush2.bf16.xpose.msra.mxu0 0
        %5780 = vmatprep.subr.bf16.mxu0 0
        %5781 = vmatpush2.bf16.xpose.msra.mxu0 0
        %5782 = vmatprep.subr.bf16.mxu0 0
        %5783 = vmatpush2.bf16.xpose.msra.mxu0 0
        %5784 = vmatprep.mubr.bf16.mxu0 0
        %5785 = vmatmul.mubr.bf16.gmra.mxu0 %v5705
        %v5786 = vpop.f32.mrf.mxu0
        %v5787 = vadd.f32 %v4356, %v5786
        %v5788 = vpop.f32.mrf.mxu0
        %v5789 = vpop.f32.mrf.mxu0
        %v5790 = vadd.f32 %v4357, %v5789
        %v5791 = vpop.f32.mrf.mxu0
        %5792 = vmatprep.mubr.bf16.mxu0 0
        %5793 = vmatmul.mubr.bf16.gmra.mxu0 %v5708
        %v5794 = vpop.f32.mrf.mxu0
        %v5795 = vadd.f32 %v4358, %v5794
        %v5796 = vpop.f32.mrf.mxu0
        %v5797 = vpop.f32.mrf.mxu0
        %v5798 = vadd.f32 %v4359, %v5797
        %v5799 = vpop.f32.mrf.mxu0
        %5800 = vmatprep.mubr.bf16.mxu0 0
        %5801 = vmatmul.mubr.bf16.gmra.mxu0 %v5711
        %v5802 = vpop.f32.mrf.mxu0
        %v5803 = vadd.f32 %v4360, %v5802
        %v5804 = vpop.f32.mrf.mxu0
        %v5805 = vpop.f32.mrf.mxu0
        %v5806 = vadd.f32 %v4361, %v5805
        %v5807 = vpop.f32.mrf.mxu0
        %5808 = vmatprep.mubr.bf16.mxu0 0
        %5809 = vmatmul.mubr.bf16.gmra.mxu0 %v5714
        %v5810 = vpop.f32.mrf.mxu0
        %v5811 = vadd.f32 %v4362, %v5810
        %v5812 = vpop.f32.mrf.mxu0
        %v5813 = vpop.f32.mrf.mxu0
        %v5814 = vadd.f32 %v4363, %v5813
        %v5815 = vpop.f32.mrf.mxu0
        %5816 = vmatprep.mubr.bf16.mxu0 0
        %5817 = vmatmul.mubr.bf16.gmra.mxu0 %v5717
        %v5818 = vpop.f32.mrf.mxu0
        %v5819 = vadd.f32 %v4364, %v5818
        %v5820 = vpop.f32.mrf.mxu0
        %v5821 = vpop.f32.mrf.mxu0
        %v5822 = vadd.f32 %v4365, %v5821
        %v5823 = vpop.f32.mrf.mxu0
        %5824 = vmatprep.mubr.bf16.mxu0 0
        %5825 = vmatmul.mubr.bf16.gmra.mxu0 %v5720
        %v5826 = vpop.f32.mrf.mxu0
        %v5827 = vadd.f32 %v4366, %v5826
        %v5828 = vpop.f32.mrf.mxu0
        %v5829 = vpop.f32.mrf.mxu0
        %v5830 = vadd.f32 %v4367, %v5829
        %v5831 = vpop.f32.mrf.mxu0
        %5832 = vmatprep.mubr.bf16.mxu0 0
        %5833 = vmatmul.mubr.bf16.gmra.mxu0 %v5723
        %v5834 = vpop.f32.mrf.mxu0
        %v5835 = vadd.f32 %v4368, %v5834
        %v5836 = vpop.f32.mrf.mxu0
        %v5837 = vpop.f32.mrf.mxu0
        %v5838 = vadd.f32 %v4369, %v5837
        %v5839 = vpop.f32.mrf.mxu0
        %5840 = vmatprep.mubr.bf16.mxu0 0
        %5841 = vmatmul.mubr.bf16.gmra.mxu0 %v5726
        %v5842 = vpop.f32.mrf.mxu0
        %v5843 = vadd.f32 %v4370, %v5842
        %v5844 = vpop.f32.mrf.mxu0
        %v5845 = vpop.f32.mrf.mxu0
        %v5846 = vadd.f32 %v4371, %v5845
        %v5847 = vpop.f32.mrf.mxu0
        %5848 = vdwg.mxu0
        %5849 = vmax.xlane.f32.xlu0 %v5787
        %v5850 = vpop.xlane.xlu0 %5849
        %5851 = vmax.xlane.f32.xlu0 %v5790
        %v5852 = vpop.xlane.xlu0 %5851
        %5853 = vmax.xlane.f32.xlu0 %v5795
        %v5854 = vpop.xlane.xlu0 %5853
        %5855 = vmax.xlane.f32.xlu0 %v5798
        %v5856 = vpop.xlane.xlu0 %5855
        %5857 = vmax.xlane.f32.xlu0 %v5803
        %v5858 = vpop.xlane.xlu0 %5857
        %5859 = vmax.xlane.f32.xlu0 %v5806
        %v5860 = vpop.xlane.xlu0 %5859
        %5861 = vmax.xlane.f32.xlu0 %v5811
        %v5862 = vpop.xlane.xlu0 %5861
        %5863 = vmax.xlane.f32.xlu0 %v5814
        %v5864 = vpop.xlane.xlu0 %5863
        %5865 = vmax.xlane.f32.xlu0 %v5819
        %v5866 = vpop.xlane.xlu0 %5865
        %5867 = vmax.xlane.f32.xlu0 %v5822
        %v5868 = vpop.xlane.xlu0 %5867
        %5869 = vmax.xlane.f32.xlu0 %v5827
        %v5870 = vpop.xlane.xlu0 %5869
        %5871 = vmax.xlane.f32.xlu0 %v5830
        %v5872 = vpop.xlane.xlu0 %5871
        %5873 = vmax.xlane.f32.xlu0 %v5835
        %v5874 = vpop.xlane.xlu0 %5873
        %5875 = vmax.xlane.f32.xlu0 %v5838
        %v5876 = vpop.xlane.xlu0 %5875
        %5877 = vmax.xlane.f32.xlu0 %v5843
        %v5878 = vpop.xlane.xlu0 %5877
        %5879 = vmax.xlane.f32.xlu0 %v5846
        %v5880 = vpop.xlane.xlu0 %5879
        %v5881 = vsub.f32 %v5787, %v5850
        %v5882 = vsub.f32 %v5790, %v5852
        %v5883 = vsub.f32 %v5795, %v5854
        %v5884 = vsub.f32 %v5798, %v5856
        %v5885 = vsub.f32 %v5803, %v5858
        %v5886 = vsub.f32 %v5806, %v5860
        %v5887 = vsub.f32 %v5811, %v5862
        %v5888 = vsub.f32 %v5814, %v5864
        %v5889 = vsub.f32 %v5819, %v5866
        %v5890 = vsub.f32 %v5822, %v5868
        %v5891 = vsub.f32 %v5827, %v5870
        %v5892 = vsub.f32 %v5830, %v5872
        %v5893 = vsub.f32 %v5835, %v5874
        %v5894 = vsub.f32 %v5838, %v5876
        %v5895 = vsub.f32 %v5843, %v5878
        %v5896 = vsub.f32 %v5846, %v5880
        %v5897 = vmul.f32 %v5881, 1.442695
        %v5898 = vpow.pop %v5897
        %v5899 = vmul.f32 %v5882, 1.442695
        %v5900 = vpow.pop %v5899
        %v5901 = vmul.f32 %v5883, 1.442695
        %v5902 = vpow.pop %v5901
        %v5903 = vmul.f32 %v5884, 1.442695
        %v5904 = vpow.pop %v5903
        %v5905 = vmul.f32 %v5885, 1.442695
        %v5906 = vpow.pop %v5905
        %v5907 = vmul.f32 %v5886, 1.442695
        %v5908 = vpow.pop %v5907
        %v5909 = vmul.f32 %v5887, 1.442695
        %v5910 = vpow.pop %v5909
        %v5911 = vmul.f32 %v5888, 1.442695
        %v5912 = vpow.pop %v5911
        %v5913 = vmul.f32 %v5889, 1.442695
        %v5914 = vpow.pop %v5913
        %v5915 = vmul.f32 %v5890, 1.442695
        %v5916 = vpow.pop %v5915
        %v5917 = vmul.f32 %v5891, 1.442695
        %v5918 = vpow.pop %v5917
        %v5919 = vmul.f32 %v5892, 1.442695
        %v5920 = vpow.pop %v5919
        %v5921 = vmul.f32 %v5893, 1.442695
        %v5922 = vpow.pop %v5921
        %v5923 = vmul.f32 %v5894, 1.442695
        %v5924 = vpow.pop %v5923
        %v5925 = vmul.f32 %v5895, 1.442695
        %v5926 = vpow.pop %v5925
        %v5927 = vmul.f32 %v5896, 1.442695
        %v5928 = vpow.pop %v5927
        %5929 = vadd.xlane.f32.xlu0 %v5898
        %v5930 = vpop.xlane.xlu0 %5929
        %5931 = vadd.xlane.f32.xlu0 %v5900
        %v5932 = vpop.xlane.xlu0 %5931
        %5933 = vadd.xlane.f32.xlu0 %v5902
        %v5934 = vpop.xlane.xlu0 %5933
        %5935 = vadd.xlane.f32.xlu0 %v5904
        %v5936 = vpop.xlane.xlu0 %5935
        %5937 = vadd.xlane.f32.xlu0 %v5906
        %v5938 = vpop.xlane.xlu0 %5937
        %5939 = vadd.xlane.f32.xlu0 %v5908
        %v5940 = vpop.xlane.xlu0 %5939
        %5941 = vadd.xlane.f32.xlu0 %v5910
        %v5942 = vpop.xlane.xlu0 %5941
        %5943 = vadd.xlane.f32.xlu0 %v5912
        %v5944 = vpop.xlane.xlu0 %5943
        %5945 = vadd.xlane.f32.xlu0 %v5914
        %v5946 = vpop.xlane.xlu0 %5945
        %5947 = vadd.xlane.f32.xlu0 %v5916
        %v5948 = vpop.xlane.xlu0 %5947
        %5949 = vadd.xlane.f32.xlu0 %v5918
        %v5950 = vpop.xlane.xlu0 %5949
        %5951 = vadd.xlane.f32.xlu0 %v5920
        %v5952 = vpop.xlane.xlu0 %5951
        %5953 = vadd.xlane.f32.xlu0 %v5922
        %v5954 = vpop.xlane.xlu0 %5953
        %5955 = vadd.xlane.f32.xlu0 %v5924
        %v5956 = vpop.xlane.xlu0 %5955
        %5957 = vadd.xlane.f32.xlu0 %v5926
        %v5958 = vpop.xlane.xlu0 %5957
        %5959 = vadd.xlane.f32.xlu0 %v5928
        %v5960 = vpop.xlane.xlu0 %5959
        %v5961 = vrcp.pop %v5930
        %v5962 = vrcp.pop %v5932
        %v5963 = vrcp.pop %v5934
        %v5964 = vrcp.pop %v5936
        %v5965 = vrcp.pop %v5938
        %v5966 = vrcp.pop %v5940
        %v5967 = vrcp.pop %v5942
        %v5968 = vrcp.pop %v5944
        %v5969 = vrcp.pop %v5946
        %v5970 = vrcp.pop %v5948
        %v5971 = vrcp.pop %v5950
        %v5972 = vrcp.pop %v5952
        %v5973 = vrcp.pop %v5954
        %v5974 = vrcp.pop %v5956
        %v5975 = vrcp.pop %v5958
        %v5976 = vrcp.pop %v5960
        %v5977 = vmul.f32 %v5898, %v5961
        %v5978 = vmul.f32 %v5900, %v5962
        %v5979 = vmul.f32 %v5902, %v5963
        %v5980 = vmul.f32 %v5904, %v5964
        %v5981 = vmul.f32 %v5906, %v5965
        %v5982 = vmul.f32 %v5908, %v5966
        %v5983 = vmul.f32 %v5910, %v5967
        %v5984 = vmul.f32 %v5912, %v5968
        %v5985 = vmul.f32 %v5914, %v5969
        %v5986 = vmul.f32 %v5916, %v5970
        %v5987 = vmul.f32 %v5918, %v5971
        %v5988 = vmul.f32 %v5920, %v5972
        %v5989 = vmul.f32 %v5922, %v5973
        %v5990 = vmul.f32 %v5924, %v5974
        %v5991 = vmul.f32 %v5926, %v5975
        %v5992 = vmul.f32 %v5928, %v5976
        %5993 = vadd.xlane.f32.xlu0 %v5977
        %v5994 = vpop.xlane.xlu0 %5993
        %5995 = vadd.xlane.f32.xlu0 %v5978
        %v5996 = vpop.xlane.xlu0 %5995
        %5997 = vadd.xlane.f32.xlu0 %v5979
        %v5998 = vpop.xlane.xlu0 %5997
        %5999 = vadd.xlane.f32.xlu0 %v5980
        %v6000 = vpop.xlane.xlu0 %5999
        %6001 = vadd.xlane.f32.xlu0 %v5981
        %v6002 = vpop.xlane.xlu0 %6001
        %6003 = vadd.xlane.f32.xlu0 %v5982
        %v6004 = vpop.xlane.xlu0 %6003
        %6005 = vadd.xlane.f32.xlu0 %v5983
        %v6006 = vpop.xlane.xlu0 %6005
        %6007 = vadd.xlane.f32.xlu0 %v5984
        %v6008 = vpop.xlane.xlu0 %6007
        %6009 = vadd.xlane.f32.xlu0 %v5985
        %v6010 = vpop.xlane.xlu0 %6009
        %6011 = vadd.xlane.f32.xlu0 %v5986
        %v6012 = vpop.xlane.xlu0 %6011
        %6013 = vadd.xlane.f32.xlu0 %v5987
        %v6014 = vpop.xlane.xlu0 %6013
        %6015 = vadd.xlane.f32.xlu0 %v5988
        %v6016 = vpop.xlane.xlu0 %6015
        %6017 = vadd.xlane.f32.xlu0 %v5989
        %v6018 = vpop.xlane.xlu0 %6017
        %6019 = vadd.xlane.f32.xlu0 %v5990
        %v6020 = vpop.xlane.xlu0 %6019
        %6021 = vadd.xlane.f32.xlu0 %v5991
        %v6022 = vpop.xlane.xlu0 %6021
        %6023 = vadd.xlane.f32.xlu0 %v5992
        %v6024 = vpop.xlane.xlu0 %6023
        %v6025 = vsel %vm5196, %v4038, 0.0
        %v6026 = vsel %vm5196, %v4042, 0.0
        %v6027 = vadd.f32 %v6025, %v6026
        %v6028 = vsel %vm5196, %v4048, 0.0
        %v6029 = vadd.f32 %v6027, %v6028
        %v6030 = vsel %vm5196, %v4052, 0.0
        %v6031 = vadd.f32 %v6029, %v6030
        %v6032 = vsel %vm5196, %v4058, 0.0
        %v6033 = vadd.f32 %v6031, %v6032
        %v6034 = vsel %vm5196, %v4062, 0.0
        %v6035 = vadd.f32 %v6033, %v6034
        %v6036 = vsel %vm5196, %v4068, 0.0
        %v6037 = vadd.f32 %v6035, %v6036
        %v6038 = vsel %vm5196, %v4072, 0.0
        %v6039 = vadd.f32 %v6037, %v6038
        %v6040 = vsel %vm5196, %v4078, 0.0
        %v6041 = vadd.f32 %v6039, %v6040
        %v6042 = vsel %vm5196, %v4082, 0.0
        %v6043 = vadd.f32 %v6041, %v6042
        %v6044 = vsel %vm5196, %v4088, 0.0
        %v6045 = vadd.f32 %v6043, %v6044
        %v6046 = vsel %vm5196, %v4092, 0.0
        %v6047 = vadd.f32 %v6045, %v6046
        %v6048 = vsel %vm5196, %v4098, 0.0
        %v6049 = vadd.f32 %v6047, %v6048
        %v6050 = vsel %vm5196, %v4102, 0.0
        %v6051 = vadd.f32 %v6049, %v6050
        %v6052 = vsel %vm5196, %v4108, 0.0
        %v6053 = vadd.f32 %v6051, %v6052
        %v6054 = vsel %vm5196, %v4112, 0.0
        %v6055 = vadd.f32 %v6053, %v6054
        %v6056 = vrot.slane %v6055, 4
        %v6057 = vadd.f32 %v6055, %v6056
        %v6058 = vrot.slane %v6057, 2
        %v6059 = vadd.f32 %v6057, %v6058
        %v6060 = vrot.slane %v6059, 1
        %v6061 = vadd.f32 %v6059, %v6060
        %v6062 = vmul.f32 %v5994, %v6061
        %v6063 = vmul.f32 %v5996, %v6061
        %v6064 = vmul.f32 %v5998, %v6061
        %v6065 = vmul.f32 %v6000, %v6061
        %v6066 = vmul.f32 %v6002, %v6061
        %v6067 = vmul.f32 %v6004, %v6061
        %v6068 = vmul.f32 %v6006, %v6061
        %v6069 = vmul.f32 %v6008, %v6061
        %v6070 = vmul.f32 %v6010, %v6061
        %v6071 = vmul.f32 %v6012, %v6061
        %v6072 = vmul.f32 %v6014, %v6061
        %v6073 = vmul.f32 %v6016, %v6061
        %v6074 = vmul.f32 %v6018, %v6061
        %v6075 = vmul.f32 %v6020, %v6061
        %v6076 = vmul.f32 %v6022, %v6061
        %v6077 = vmul.f32 %v6024, %v6061
        %6078 = vst.msk [vmem:[#allocation2 + $0x8] sm:$0xff] %vm5196, %v6062
        %6079 = vst.msk [vmem:[#allocation2 + $0x28] sm:$0xff] %vm5196, %v6063
        %6080 = vst.msk [vmem:[#allocation2 + $0x48] sm:$0xff] %vm5196, %v6064
        %6081 = vst.msk [vmem:[#allocation2 + $0x68] sm:$0xff] %vm5196, %v6065
        %6082 = vst.msk [vmem:[#allocation2 + $0x88] sm:$0xff] %vm5196, %v6066
        %6083 = vst.msk [vmem:[#allocation2 + $0xa8] sm:$0xff] %vm5196, %v6067
        %6084 = vst.msk [vmem:[#allocation2 + $0xc8] sm:$0xff] %vm5196, %v6068
        %6085 = vst.msk [vmem:[#allocation2 + $0xe8] sm:$0xff] %vm5196, %v6069
        %6086 = vst.msk [vmem:[#allocation2 + $0x108] sm:$0xff] %vm5196, %v6070
        %6087 = vst.msk [vmem:[#allocation2 + $0x128] sm:$0xff] %vm5196, %v6071
        %6088 = vst.msk [vmem:[#allocation2 + $0x148] sm:$0xff] %vm5196, %v6072
        %6089 = vst.msk [vmem:[#allocation2 + $0x168] sm:$0xff] %vm5196, %v6073
        %6090 = vst.msk [vmem:[#allocation2 + $0x188] sm:$0xff] %vm5196, %v6074
        %6091 = vst.msk [vmem:[#allocation2 + $0x1a8] sm:$0xff] %vm5196, %v6075
        %6092 = vst.msk [vmem:[#allocation2 + $0x1c8] sm:$0xff] %vm5196, %v6076
        %6093 = vst.msk [vmem:[#allocation2 + $0x1e8] sm:$0xff] %vm5196, %v6077
        %v6095 = vsel %vm4436, %v4374, 0
        %v6098 = vsel %vm4436, %v4378, 0
        %v6101 = vsel %vm4436, %v4382, 0
        %v6104 = vsel %vm4436, %v4386, 0
        %v6107 = vsel %vm4436, %v4390, 0
        %v6110 = vsel %vm4436, %v4394, 0
        %v6113 = vsel %vm4436, %v4398, 0
        %v6116 = vsel %vm4436, %v4402, 0
        %v6119 = vsel %vm4436, %v4406, 0
        %v6122 = vsel %vm4436, %v4410, 0
        %v6125 = vsel %vm4436, %v4414, 0
        %v6128 = vsel %vm4436, %v4418, 0
        %v6131 = vsel %vm4436, %v4422, 0
        %v6134 = vsel %vm4436, %v4426, 0
        %v6137 = vsel %vm4436, %v4430, 0
        %v6140 = vsel %vm4436, %v4434, 0
        %6142 = vmatprep.subr.bf16.mxu0 0
        %6143 = vmatpush1.bf16.xpose.msra.mxu0 %v6140
        %6144 = vmatprep.subr.bf16.mxu0 0
        %6145 = vmatpush1.bf16.xpose.msra.mxu0 %v6137
        %6146 = vmatprep.subr.bf16.mxu0 0
        %6147 = vmatpush1.bf16.xpose.msra.mxu0 %v6134
        %6148 = vmatprep.subr.bf16.mxu0 0
        %6149 = vmatpush1.bf16.xpose.msra.mxu0 %v6131
        %6150 = vmatprep.subr.bf16.mxu0 0
        %6151 = vmatpush1.bf16.xpose.msra.mxu0 %v6128
        %6152 = vmatprep.subr.bf16.mxu0 0
        %6153 = vmatpush1.bf16.xpose.msra.mxu0 %v6125
        %6154 = vmatprep.subr.bf16.mxu0 0
        %6155 = vmatpush1.bf16.xpose.msra.mxu0 %v6122
        %6156 = vmatprep.subr.bf16.mxu0 0
        %6157 = vmatpush1.bf16.xpose.msra.mxu0 %v6119
        %6158 = vmatprep.subr.bf16.mxu0 0
        %6159 = vmatpush2.bf16.xpose.msra.mxu0 0
        %6160 = vmatprep.subr.bf16.mxu0 0
        %6161 = vmatpush2.bf16.xpose.msra.mxu0 0
        %6162 = vmatprep.subr.bf16.mxu0 0
        %6163 = vmatpush2.bf16.xpose.msra.mxu0 0
        %6164 = vmatprep.subr.bf16.mxu0 0
        %6165 = vmatpush2.bf16.xpose.msra.mxu0 0
        %6166 = vmatprep.subr.bf16.mxu0 0
        %6167 = vmatpush2.bf16.xpose.msra.mxu0 0
        %6168 = vmatprep.subr.bf16.mxu0 0
        %6169 = vmatpush2.bf16.xpose.msra.mxu0 0
        %6170 = vmatprep.subr.bf16.mxu0 0
        %6171 = vmatpush2.bf16.xpose.msra.mxu0 0
        %6172 = vmatprep.subr.bf16.mxu0 0
        %6173 = vmatpush2.bf16.xpose.msra.mxu0 0
        %6174 = vmatprep.mubr.bf16.mxu0 0
        %6175 = vmatmul.mubr.bf16.gmra.mxu0 %v6095
        %v6176 = vpop.f32.mrf.mxu0
        %v6177 = vadd.f32 %v4356, %v6176
        %v6178 = vpop.f32.mrf.mxu0
        %v6179 = vpop.f32.mrf.mxu0
        %v6180 = vadd.f32 %v4357, %v6179
        %v6181 = vpop.f32.mrf.mxu0
        %6182 = vmatprep.mubr.bf16.mxu0 0
        %6183 = vmatmul.mubr.bf16.gmra.mxu0 %v6098
        %v6184 = vpop.f32.mrf.mxu0
        %v6185 = vadd.f32 %v4358, %v6184
        %v6186 = vpop.f32.mrf.mxu0
        %v6187 = vpop.f32.mrf.mxu0
        %v6188 = vadd.f32 %v4359, %v6187
        %v6189 = vpop.f32.mrf.mxu0
        %6190 = vmatprep.mubr.bf16.mxu0 0
        %6191 = vmatmul.mubr.bf16.gmra.mxu0 %v6101
        %v6192 = vpop.f32.mrf.mxu0
        %v6193 = vadd.f32 %v4360, %v6192
        %v6194 = vpop.f32.mrf.mxu0
        %v6195 = vpop.f32.mrf.mxu0
        %v6196 = vadd.f32 %v4361, %v6195
        %v6197 = vpop.f32.mrf.mxu0
        %6198 = vmatprep.mubr.bf16.mxu0 0
        %6199 = vmatmul.mubr.bf16.gmra.mxu0 %v6104
        %v6200 = vpop.f32.mrf.mxu0
        %v6201 = vadd.f32 %v4362, %v6200
        %v6202 = vpop.f32.mrf.mxu0
        %v6203 = vpop.f32.mrf.mxu0
        %v6204 = vadd.f32 %v4363, %v6203
        %v6205 = vpop.f32.mrf.mxu0
        %6206 = vmatprep.mubr.bf16.mxu0 0
        %6207 = vmatmul.mubr.bf16.gmra.mxu0 %v6107
        %v6208 = vpop.f32.mrf.mxu0
        %v6209 = vadd.f32 %v4364, %v6208
        %v6210 = vpop.f32.mrf.mxu0
        %v6211 = vpop.f32.mrf.mxu0
        %v6212 = vadd.f32 %v4365, %v6211
        %v6213 = vpop.f32.mrf.mxu0
        %6214 = vmatprep.mubr.bf16.mxu0 0
        %6215 = vmatmul.mubr.bf16.gmra.mxu0 %v6110
        %v6216 = vpop.f32.mrf.mxu0
        %v6217 = vadd.f32 %v4366, %v6216
        %v6218 = vpop.f32.mrf.mxu0
        %v6219 = vpop.f32.mrf.mxu0
        %v6220 = vadd.f32 %v4367, %v6219
        %v6221 = vpop.f32.mrf.mxu0
        %6222 = vmatprep.mubr.bf16.mxu0 0
        %6223 = vmatmul.mubr.bf16.gmra.mxu0 %v6113
        %v6224 = vpop.f32.mrf.mxu0
        %v6225 = vadd.f32 %v4368, %v6224
        %v6226 = vpop.f32.mrf.mxu0
        %v6227 = vpop.f32.mrf.mxu0
        %v6228 = vadd.f32 %v4369, %v6227
        %v6229 = vpop.f32.mrf.mxu0
        %6230 = vmatprep.mubr.bf16.mxu0 0
        %6231 = vmatmul.mubr.bf16.gmra.mxu0 %v6116
        %v6232 = vpop.f32.mrf.mxu0
        %v6233 = vadd.f32 %v4370, %v6232
        %v6234 = vpop.f32.mrf.mxu0
        %v6235 = vpop.f32.mrf.mxu0
        %v6236 = vadd.f32 %v4371, %v6235
        %v6237 = vpop.f32.mrf.mxu0
        %6238 = vdwg.mxu0
        %6239 = vmax.xlane.f32.xlu0 %v6177
        %v6240 = vpop.xlane.xlu0 %6239
        %6241 = vmax.xlane.f32.xlu0 %v6180
        %v6242 = vpop.xlane.xlu0 %6241
        %6243 = vmax.xlane.f32.xlu0 %v6185
        %v6244 = vpop.xlane.xlu0 %6243
        %6245 = vmax.xlane.f32.xlu0 %v6188
        %v6246 = vpop.xlane.xlu0 %6245
        %6247 = vmax.xlane.f32.xlu0 %v6193
        %v6248 = vpop.xlane.xlu0 %6247
        %6249 = vmax.xlane.f32.xlu0 %v6196
        %v6250 = vpop.xlane.xlu0 %6249
        %6251 = vmax.xlane.f32.xlu0 %v6201
        %v6252 = vpop.xlane.xlu0 %6251
        %6253 = vmax.xlane.f32.xlu0 %v6204
        %v6254 = vpop.xlane.xlu0 %6253
        %6255 = vmax.xlane.f32.xlu0 %v6209
        %v6256 = vpop.xlane.xlu0 %6255
        %6257 = vmax.xlane.f32.xlu0 %v6212
        %v6258 = vpop.xlane.xlu0 %6257
        %6259 = vmax.xlane.f32.xlu0 %v6217
        %v6260 = vpop.xlane.xlu0 %6259
        %6261 = vmax.xlane.f32.xlu0 %v6220
        %v6262 = vpop.xlane.xlu0 %6261
        %6263 = vmax.xlane.f32.xlu0 %v6225
        %v6264 = vpop.xlane.xlu0 %6263
        %6265 = vmax.xlane.f32.xlu0 %v6228
        %v6266 = vpop.xlane.xlu0 %6265
        %6267 = vmax.xlane.f32.xlu0 %v6233
        %v6268 = vpop.xlane.xlu0 %6267
        %6269 = vmax.xlane.f32.xlu0 %v6236
        %v6270 = vpop.xlane.xlu0 %6269
        %v6271 = vsub.f32 %v6177, %v6240
        %v6272 = vsub.f32 %v6180, %v6242
        %v6273 = vsub.f32 %v6185, %v6244
        %v6274 = vsub.f32 %v6188, %v6246
        %v6275 = vsub.f32 %v6193, %v6248
        %v6276 = vsub.f32 %v6196, %v6250
        %v6277 = vsub.f32 %v6201, %v6252
        %v6278 = vsub.f32 %v6204, %v6254
        %v6279 = vsub.f32 %v6209, %v6256
        %v6280 = vsub.f32 %v6212, %v6258
        %v6281 = vsub.f32 %v6217, %v6260
        %v6282 = vsub.f32 %v6220, %v6262
        %v6283 = vsub.f32 %v6225, %v6264
        %v6284 = vsub.f32 %v6228, %v6266
        %v6285 = vsub.f32 %v6233, %v6268
        %v6286 = vsub.f32 %v6236, %v6270
        %v6287 = vmul.f32 %v6271, 1.442695
        %v6288 = vpow.pop %v6287
        %v6289 = vmul.f32 %v6272, 1.442695
        %v6290 = vpow.pop %v6289
        %v6291 = vmul.f32 %v6273, 1.442695
        %v6292 = vpow.pop %v6291
        %v6293 = vmul.f32 %v6274, 1.442695
        %v6294 = vpow.pop %v6293
        %v6295 = vmul.f32 %v6275, 1.442695
        %v6296 = vpow.pop %v6295
        %v6297 = vmul.f32 %v6276, 1.442695
        %v6298 = vpow.pop %v6297
        %v6299 = vmul.f32 %v6277, 1.442695
        %v6300 = vpow.pop %v6299
        %v6301 = vmul.f32 %v6278, 1.442695
        %v6302 = vpow.pop %v6301
        %v6303 = vmul.f32 %v6279, 1.442695
        %v6304 = vpow.pop %v6303
        %v6305 = vmul.f32 %v6280, 1.442695
        %v6306 = vpow.pop %v6305
        %v6307 = vmul.f32 %v6281, 1.442695
        %v6308 = vpow.pop %v6307
        %v6309 = vmul.f32 %v6282, 1.442695
        %v6310 = vpow.pop %v6309
        %v6311 = vmul.f32 %v6283, 1.442695
        %v6312 = vpow.pop %v6311
        %v6313 = vmul.f32 %v6284, 1.442695
        %v6314 = vpow.pop %v6313
        %v6315 = vmul.f32 %v6285, 1.442695
        %v6316 = vpow.pop %v6315
        %v6317 = vmul.f32 %v6286, 1.442695
        %v6318 = vpow.pop %v6317
        %6319 = vadd.xlane.f32.xlu0 %v6288
        %v6320 = vpop.xlane.xlu0 %6319
        %6321 = vadd.xlane.f32.xlu0 %v6290
        %v6322 = vpop.xlane.xlu0 %6321
        %6323 = vadd.xlane.f32.xlu0 %v6292
        %v6324 = vpop.xlane.xlu0 %6323
        %6325 = vadd.xlane.f32.xlu0 %v6294
        %v6326 = vpop.xlane.xlu0 %6325
        %6327 = vadd.xlane.f32.xlu0 %v6296
        %v6328 = vpop.xlane.xlu0 %6327
        %6329 = vadd.xlane.f32.xlu0 %v6298
        %v6330 = vpop.xlane.xlu0 %6329
        %6331 = vadd.xlane.f32.xlu0 %v6300
        %v6332 = vpop.xlane.xlu0 %6331
        %6333 = vadd.xlane.f32.xlu0 %v6302
        %v6334 = vpop.xlane.xlu0 %6333
        %6335 = vadd.xlane.f32.xlu0 %v6304
        %v6336 = vpop.xlane.xlu0 %6335
        %6337 = vadd.xlane.f32.xlu0 %v6306
        %v6338 = vpop.xlane.xlu0 %6337
        %6339 = vadd.xlane.f32.xlu0 %v6308
        %v6340 = vpop.xlane.xlu0 %6339
        %6341 = vadd.xlane.f32.xlu0 %v6310
        %v6342 = vpop.xlane.xlu0 %6341
        %6343 = vadd.xlane.f32.xlu0 %v6312
        %v6344 = vpop.xlane.xlu0 %6343
        %6345 = vadd.xlane.f32.xlu0 %v6314
        %v6346 = vpop.xlane.xlu0 %6345
        %6347 = vadd.xlane.f32.xlu0 %v6316
        %v6348 = vpop.xlane.xlu0 %6347
        %6349 = vadd.xlane.f32.xlu0 %v6318
        %v6350 = vpop.xlane.xlu0 %6349
        %v6351 = vrcp.pop %v6320
        %v6352 = vrcp.pop %v6322
        %v6353 = vrcp.pop %v6324
        %v6354 = vrcp.pop %v6326
        %v6355 = vrcp.pop %v6328
        %v6356 = vrcp.pop %v6330
        %v6357 = vrcp.pop %v6332
        %v6358 = vrcp.pop %v6334
        %v6359 = vrcp.pop %v6336
        %v6360 = vrcp.pop %v6338
        %v6361 = vrcp.pop %v6340
        %v6362 = vrcp.pop %v6342
        %v6363 = vrcp.pop %v6344
        %v6364 = vrcp.pop %v6346
        %v6365 = vrcp.pop %v6348
        %v6366 = vrcp.pop %v6350
        %v6367 = vmul.f32 %v6288, %v6351
        %v6368 = vmul.f32 %v6290, %v6352
        %v6369 = vmul.f32 %v6292, %v6353
        %v6370 = vmul.f32 %v6294, %v6354
        %v6371 = vmul.f32 %v6296, %v6355
        %v6372 = vmul.f32 %v6298, %v6356
        %v6373 = vmul.f32 %v6300, %v6357
        %v6374 = vmul.f32 %v6302, %v6358
        %v6375 = vmul.f32 %v6304, %v6359
        %v6376 = vmul.f32 %v6306, %v6360
        %v6377 = vmul.f32 %v6308, %v6361
        %v6378 = vmul.f32 %v6310, %v6362
        %v6379 = vmul.f32 %v6312, %v6363
        %v6380 = vmul.f32 %v6314, %v6364
        %v6381 = vmul.f32 %v6316, %v6365
        %v6382 = vmul.f32 %v6318, %v6366
        %6383 = vadd.xlane.f32.xlu0 %v6367
        %v6384 = vpop.xlane.xlu0 %6383
        %6385 = vadd.xlane.f32.xlu0 %v6368
        %v6386 = vpop.xlane.xlu0 %6385
        %6387 = vadd.xlane.f32.xlu0 %v6369
        %v6388 = vpop.xlane.xlu0 %6387
        %6389 = vadd.xlane.f32.xlu0 %v6370
        %v6390 = vpop.xlane.xlu0 %6389
        %6391 = vadd.xlane.f32.xlu0 %v6371
        %v6392 = vpop.xlane.xlu0 %6391
        %6393 = vadd.xlane.f32.xlu0 %v6372
        %v6394 = vpop.xlane.xlu0 %6393
        %6395 = vadd.xlane.f32.xlu0 %v6373
        %v6396 = vpop.xlane.xlu0 %6395
        %6397 = vadd.xlane.f32.xlu0 %v6374
        %v6398 = vpop.xlane.xlu0 %6397
        %6399 = vadd.xlane.f32.xlu0 %v6375
        %v6400 = vpop.xlane.xlu0 %6399
        %6401 = vadd.xlane.f32.xlu0 %v6376
        %v6402 = vpop.xlane.xlu0 %6401
        %6403 = vadd.xlane.f32.xlu0 %v6377
        %v6404 = vpop.xlane.xlu0 %6403
        %6405 = vadd.xlane.f32.xlu0 %v6378
        %v6406 = vpop.xlane.xlu0 %6405
        %6407 = vadd.xlane.f32.xlu0 %v6379
        %v6408 = vpop.xlane.xlu0 %6407
        %6409 = vadd.xlane.f32.xlu0 %v6380
        %v6410 = vpop.xlane.xlu0 %6409
        %6411 = vadd.xlane.f32.xlu0 %v6381
        %v6412 = vpop.xlane.xlu0 %6411
        %6413 = vadd.xlane.f32.xlu0 %v6382
        %v6414 = vpop.xlane.xlu0 %6413
        %v6415 = vsel %vm4436, %v4262, 0.0
        %v6416 = vsel %vm4436, %v4266, 0.0
        %v6417 = vadd.f32 %v6415, %v6416
        %v6418 = vsel %vm4436, %v4272, 0.0
        %v6419 = vadd.f32 %v6417, %v6418
        %v6420 = vsel %vm4436, %v4276, 0.0
        %v6421 = vadd.f32 %v6419, %v6420
        %v6422 = vsel %vm4436, %v4282, 0.0
        %v6423 = vadd.f32 %v6421, %v6422
        %v6424 = vsel %vm4436, %v4286, 0.0
        %v6425 = vadd.f32 %v6423, %v6424
        %v6426 = vsel %vm4436, %v4292, 0.0
        %v6427 = vadd.f32 %v6425, %v6426
        %v6428 = vsel %vm4436, %v4296, 0.0
        %v6429 = vadd.f32 %v6427, %v6428
        %v6430 = vsel %vm4436, %v4302, 0.0
        %v6431 = vadd.f32 %v6429, %v6430
        %v6432 = vsel %vm4436, %v4306, 0.0
        %v6433 = vadd.f32 %v6431, %v6432
        %v6434 = vsel %vm4436, %v4312, 0.0
        %v6435 = vadd.f32 %v6433, %v6434
        %v6436 = vsel %vm4436, %v4316, 0.0
        %v6437 = vadd.f32 %v6435, %v6436
        %v6438 = vsel %vm4436, %v4322, 0.0
        %v6439 = vadd.f32 %v6437, %v6438
        %v6440 = vsel %vm4436, %v4326, 0.0
        %v6441 = vadd.f32 %v6439, %v6440
        %v6442 = vsel %vm4436, %v4332, 0.0
        %v6443 = vadd.f32 %v6441, %v6442
        %v6444 = vsel %vm4436, %v4336, 0.0
        %v6445 = vadd.f32 %v6443, %v6444
        %v6446 = vrot.slane %v6445, 4
        %v6447 = vadd.f32 %v6445, %v6446
        %v6448 = vrot.slane %v6447, 2
        %v6449 = vadd.f32 %v6447, %v6448
        %v6450 = vrot.slane %v6449, 1
        %v6451 = vadd.f32 %v6449, %v6450
        %v6452 = vmul.f32 %v6384, %v6451
        %v6453 = vmul.f32 %v6386, %v6451
        %v6454 = vmul.f32 %v6388, %v6451
        %v6455 = vmul.f32 %v6390, %v6451
        %v6456 = vmul.f32 %v6392, %v6451
        %v6457 = vmul.f32 %v6394, %v6451
        %v6458 = vmul.f32 %v6396, %v6451
        %v6459 = vmul.f32 %v6398, %v6451
        %v6460 = vmul.f32 %v6400, %v6451
        %v6461 = vmul.f32 %v6402, %v6451
        %v6462 = vmul.f32 %v6404, %v6451
        %v6463 = vmul.f32 %v6406, %v6451
        %v6464 = vmul.f32 %v6408, %v6451
        %v6465 = vmul.f32 %v6410, %v6451
        %v6466 = vmul.f32 %v6412, %v6451
        %v6467 = vmul.f32 %v6414, %v6451
        %6468 = vst.msk [vmem:[#allocation2 + $0x10] sm:$0xff] %vm4436, %v6452
        %6469 = vst.msk [vmem:[#allocation2 + $0x30] sm:$0xff] %vm4436, %v6453
        %6470 = vst.msk [vmem:[#allocation2 + $0x50] sm:$0xff] %vm4436, %v6454
        %6471 = vst.msk [vmem:[#allocation2 + $0x70] sm:$0xff] %vm4436, %v6455
        %6472 = vst.msk [vmem:[#allocation2 + $0x90] sm:$0xff] %vm4436, %v6456
        %6473 = vst.msk [vmem:[#allocation2 + $0xb0] sm:$0xff] %vm4436, %v6457
        %6474 = vst.msk [vmem:[#allocation2 + $0xd0] sm:$0xff] %vm4436, %v6458
        %6475 = vst.msk [vmem:[#allocation2 + $0xf0] sm:$0xff] %vm4436, %v6459
        %6476 = vst.msk [vmem:[#allocation2 + $0x110] sm:$0xff] %vm4436, %v6460
        %6477 = vst.msk [vmem:[#allocation2 + $0x130] sm:$0xff] %vm4436, %v6461
        %6478 = vst.msk [vmem:[#allocation2 + $0x150] sm:$0xff] %vm4436, %v6462
        %6479 = vst.msk [vmem:[#allocation2 + $0x170] sm:$0xff] %vm4436, %v6463
        %6480 = vst.msk [vmem:[#allocation2 + $0x190] sm:$0xff] %vm4436, %v6464
        %6481 = vst.msk [vmem:[#allocation2 + $0x1b0] sm:$0xff] %vm4436, %v6465
        %6482 = vst.msk [vmem:[#allocation2 + $0x1d0] sm:$0xff] %vm4436, %v6466
        %6483 = vst.msk [vmem:[#allocation2 + $0x1f0] sm:$0xff] %vm4436, %v6467
        %6492 = vrot.lane.b32.xlu0 %v4374, 64
        %v6493 = vpop.permute.xlu0 %6492
        %6494 = vrot.lane.b32.xlu0 %v4378, 64
        %v6495 = vpop.permute.xlu0 %6494
        %6496 = vrot.lane.b32.xlu0 %v4382, 64
        %v6497 = vpop.permute.xlu0 %6496
        %6498 = vrot.lane.b32.xlu0 %v4386, 64
        %v6499 = vpop.permute.xlu0 %6498
        %6500 = vrot.lane.b32.xlu0 %v4390, 64
        %v6501 = vpop.permute.xlu0 %6500
        %6502 = vrot.lane.b32.xlu0 %v4394, 64
        %v6503 = vpop.permute.xlu0 %6502
        %6504 = vrot.lane.b32.xlu0 %v4398, 64
        %v6505 = vpop.permute.xlu0 %6504
        %6506 = vrot.lane.b32.xlu0 %v4402, 64
        %v6507 = vpop.permute.xlu0 %6506
        %6516 = vrot.lane.b32.xlu0 %v4406, 64
        %v6517 = vpop.permute.xlu0 %6516
        %6518 = vrot.lane.b32.xlu0 %v4410, 64
        %v6519 = vpop.permute.xlu0 %6518
        %6520 = vrot.lane.b32.xlu0 %v4414, 64
        %v6521 = vpop.permute.xlu0 %6520
        %6522 = vrot.lane.b32.xlu0 %v4418, 64
        %v6523 = vpop.permute.xlu0 %6522
        %6524 = vrot.lane.b32.xlu0 %v4422, 64
        %v6525 = vpop.permute.xlu0 %6524
        %6526 = vrot.lane.b32.xlu0 %v4426, 64
        %v6527 = vpop.permute.xlu0 %6526
        %6528 = vrot.lane.b32.xlu0 %v4430, 64
        %v6529 = vpop.permute.xlu0 %6528
        %6530 = vrot.lane.b32.xlu0 %v4434, 64
        %v6531 = vpop.permute.xlu0 %6530
        %v6533 = vsel %vm4436, %v6493, 0
        %v6536 = vsel %vm4436, %v6495, 0
        %v6539 = vsel %vm4436, %v6497, 0
        %v6542 = vsel %vm4436, %v6499, 0
        %v6545 = vsel %vm4436, %v6501, 0
        %v6548 = vsel %vm4436, %v6503, 0
        %v6551 = vsel %vm4436, %v6505, 0
        %v6554 = vsel %vm4436, %v6507, 0
        %v6557 = vsel %vm4436, %v6517, 0
        %v6560 = vsel %vm4436, %v6519, 0
        %v6563 = vsel %vm4436, %v6521, 0
        %v6566 = vsel %vm4436, %v6523, 0
        %v6569 = vsel %vm4436, %v6525, 0
        %v6572 = vsel %vm4436, %v6527, 0
        %v6575 = vsel %vm4436, %v6529, 0
        %v6578 = vsel %vm4436, %v6531, 0
        %6580 = vmatprep.subr.bf16.mxu0 0
        %6581 = vmatpush1.bf16.xpose.msra.mxu0 %v6578
        %6582 = vmatprep.subr.bf16.mxu0 0
        %6583 = vmatpush1.bf16.xpose.msra.mxu0 %v6575
        %6584 = vmatprep.subr.bf16.mxu0 0
        %6585 = vmatpush1.bf16.xpose.msra.mxu0 %v6572
        %6586 = vmatprep.subr.bf16.mxu0 0
        %6587 = vmatpush1.bf16.xpose.msra.mxu0 %v6569
        %6588 = vmatprep.subr.bf16.mxu0 0
        %6589 = vmatpush1.bf16.xpose.msra.mxu0 %v6566
        %6590 = vmatprep.subr.bf16.mxu0 0
        %6591 = vmatpush1.bf16.xpose.msra.mxu0 %v6563
        %6592 = vmatprep.subr.bf16.mxu0 0
        %6593 = vmatpush1.bf16.xpose.msra.mxu0 %v6560
        %6594 = vmatprep.subr.bf16.mxu0 0
        %6595 = vmatpush1.bf16.xpose.msra.mxu0 %v6557
        %6596 = vmatprep.subr.bf16.mxu0 0
        %6597 = vmatpush2.bf16.xpose.msra.mxu0 0
        %6598 = vmatprep.subr.bf16.mxu0 0
        %6599 = vmatpush2.bf16.xpose.msra.mxu0 0
        %6600 = vmatprep.subr.bf16.mxu0 0
        %6601 = vmatpush2.bf16.xpose.msra.mxu0 0
        %6602 = vmatprep.subr.bf16.mxu0 0
        %6603 = vmatpush2.bf16.xpose.msra.mxu0 0
        %6604 = vmatprep.subr.bf16.mxu0 0
        %6605 = vmatpush2.bf16.xpose.msra.mxu0 0
        %6606 = vmatprep.subr.bf16.mxu0 0
        %6607 = vmatpush2.bf16.xpose.msra.mxu0 0
        %6608 = vmatprep.subr.bf16.mxu0 0
        %6609 = vmatpush2.bf16.xpose.msra.mxu0 0
        %6610 = vmatprep.subr.bf16.mxu0 0
        %6611 = vmatpush2.bf16.xpose.msra.mxu0 0
        %6612 = vmatprep.mubr.bf16.mxu0 0
        %6613 = vmatmul.mubr.bf16.gmra.mxu0 %v6533
        %v6614 = vpop.f32.mrf.mxu0
        %v6615 = vadd.f32 %v4356, %v6614
        %v6616 = vpop.f32.mrf.mxu0
        %v6617 = vpop.f32.mrf.mxu0
        %v6618 = vadd.f32 %v4357, %v6617
        %v6619 = vpop.f32.mrf.mxu0
        %6620 = vmatprep.mubr.bf16.mxu0 0
        %6621 = vmatmul.mubr.bf16.gmra.mxu0 %v6536
        %v6622 = vpop.f32.mrf.mxu0
        %v6623 = vadd.f32 %v4358, %v6622
        %v6624 = vpop.f32.mrf.mxu0
        %v6625 = vpop.f32.mrf.mxu0
        %v6626 = vadd.f32 %v4359, %v6625
        %v6627 = vpop.f32.mrf.mxu0
        %6628 = vmatprep.mubr.bf16.mxu0 0
        %6629 = vmatmul.mubr.bf16.gmra.mxu0 %v6539
        %v6630 = vpop.f32.mrf.mxu0
        %v6631 = vadd.f32 %v4360, %v6630
        %v6632 = vpop.f32.mrf.mxu0
        %v6633 = vpop.f32.mrf.mxu0
        %v6634 = vadd.f32 %v4361, %v6633
        %v6635 = vpop.f32.mrf.mxu0
        %6636 = vmatprep.mubr.bf16.mxu0 0
        %6637 = vmatmul.mubr.bf16.gmra.mxu0 %v6542
        %v6638 = vpop.f32.mrf.mxu0
        %v6639 = vadd.f32 %v4362, %v6638
        %v6640 = vpop.f32.mrf.mxu0
        %v6641 = vpop.f32.mrf.mxu0
        %v6642 = vadd.f32 %v4363, %v6641
        %v6643 = vpop.f32.mrf.mxu0
        %6644 = vmatprep.mubr.bf16.mxu0 0
        %6645 = vmatmul.mubr.bf16.gmra.mxu0 %v6545
        %v6646 = vpop.f32.mrf.mxu0
        %v6647 = vadd.f32 %v4364, %v6646
        %v6648 = vpop.f32.mrf.mxu0
        %v6649 = vpop.f32.mrf.mxu0
        %v6650 = vadd.f32 %v4365, %v6649
        %v6651 = vpop.f32.mrf.mxu0
        %6652 = vmatprep.mubr.bf16.mxu0 0
        %6653 = vmatmul.mubr.bf16.gmra.mxu0 %v6548
        %v6654 = vpop.f32.mrf.mxu0
        %v6655 = vadd.f32 %v4366, %v6654
        %v6656 = vpop.f32.mrf.mxu0
        %v6657 = vpop.f32.mrf.mxu0
        %v6658 = vadd.f32 %v4367, %v6657
        %v6659 = vpop.f32.mrf.mxu0
        %6660 = vmatprep.mubr.bf16.mxu0 0
        %6661 = vmatmul.mubr.bf16.gmra.mxu0 %v6551
        %v6662 = vpop.f32.mrf.mxu0
        %v6663 = vadd.f32 %v4368, %v6662
        %v6664 = vpop.f32.mrf.mxu0
        %v6665 = vpop.f32.mrf.mxu0
        %v6666 = vadd.f32 %v4369, %v6665
        %v6667 = vpop.f32.mrf.mxu0
        %6668 = vmatprep.mubr.bf16.mxu0 0
        %6669 = vmatmul.mubr.bf16.gmra.mxu0 %v6554
        %v6670 = vpop.f32.mrf.mxu0
        %v6671 = vadd.f32 %v4370, %v6670
        %v6672 = vpop.f32.mrf.mxu0
        %v6673 = vpop.f32.mrf.mxu0
        %v6674 = vadd.f32 %v4371, %v6673
        %v6675 = vpop.f32.mrf.mxu0
        %6676 = vdwg.mxu0
        %6677 = vmax.xlane.f32.xlu0 %v6615
        %v6678 = vpop.xlane.xlu0 %6677
        %6679 = vmax.xlane.f32.xlu0 %v6618
        %v6680 = vpop.xlane.xlu0 %6679
        %6681 = vmax.xlane.f32.xlu0 %v6623
        %v6682 = vpop.xlane.xlu0 %6681
        %6683 = vmax.xlane.f32.xlu0 %v6626
        %v6684 = vpop.xlane.xlu0 %6683
        %6685 = vmax.xlane.f32.xlu0 %v6631
        %v6686 = vpop.xlane.xlu0 %6685
        %6687 = vmax.xlane.f32.xlu0 %v6634
        %v6688 = vpop.xlane.xlu0 %6687
        %6689 = vmax.xlane.f32.xlu0 %v6639
        %v6690 = vpop.xlane.xlu0 %6689
        %6691 = vmax.xlane.f32.xlu0 %v6642
        %v6692 = vpop.xlane.xlu0 %6691
        %6693 = vmax.xlane.f32.xlu0 %v6647
        %v6694 = vpop.xlane.xlu0 %6693
        %6695 = vmax.xlane.f32.xlu0 %v6650
        %v6696 = vpop.xlane.xlu0 %6695
        %6697 = vmax.xlane.f32.xlu0 %v6655
        %v6698 = vpop.xlane.xlu0 %6697
        %6699 = vmax.xlane.f32.xlu0 %v6658
        %v6700 = vpop.xlane.xlu0 %6699
        %6701 = vmax.xlane.f32.xlu0 %v6663
        %v6702 = vpop.xlane.xlu0 %6701
        %6703 = vmax.xlane.f32.xlu0 %v6666
        %v6704 = vpop.xlane.xlu0 %6703
        %6705 = vmax.xlane.f32.xlu0 %v6671
        %v6706 = vpop.xlane.xlu0 %6705
        %6707 = vmax.xlane.f32.xlu0 %v6674
        %v6708 = vpop.xlane.xlu0 %6707
        %v6709 = vsub.f32 %v6615, %v6678
        %v6710 = vsub.f32 %v6618, %v6680
        %v6711 = vsub.f32 %v6623, %v6682
        %v6712 = vsub.f32 %v6626, %v6684
        %v6713 = vsub.f32 %v6631, %v6686
        %v6714 = vsub.f32 %v6634, %v6688
        %v6715 = vsub.f32 %v6639, %v6690
        %v6716 = vsub.f32 %v6642, %v6692
        %v6717 = vsub.f32 %v6647, %v6694
        %v6718 = vsub.f32 %v6650, %v6696
        %v6719 = vsub.f32 %v6655, %v6698
        %v6720 = vsub.f32 %v6658, %v6700
        %v6721 = vsub.f32 %v6663, %v6702
        %v6722 = vsub.f32 %v6666, %v6704
        %v6723 = vsub.f32 %v6671, %v6706
        %v6724 = vsub.f32 %v6674, %v6708
        %v6725 = vmul.f32 %v6709, 1.442695
        %v6726 = vpow.pop %v6725
        %v6727 = vmul.f32 %v6710, 1.442695
        %v6728 = vpow.pop %v6727
        %v6729 = vmul.f32 %v6711, 1.442695
        %v6730 = vpow.pop %v6729
        %v6731 = vmul.f32 %v6712, 1.442695
        %v6732 = vpow.pop %v6731
        %v6733 = vmul.f32 %v6713, 1.442695
        %v6734 = vpow.pop %v6733
        %v6735 = vmul.f32 %v6714, 1.442695
        %v6736 = vpow.pop %v6735
        %v6737 = vmul.f32 %v6715, 1.442695
        %v6738 = vpow.pop %v6737
        %v6739 = vmul.f32 %v6716, 1.442695
        %v6740 = vpow.pop %v6739
        %v6741 = vmul.f32 %v6717, 1.442695
        %v6742 = vpow.pop %v6741
        %v6743 = vmul.f32 %v6718, 1.442695
        %v6744 = vpow.pop %v6743
        %v6745 = vmul.f32 %v6719, 1.442695
        %v6746 = vpow.pop %v6745
        %v6747 = vmul.f32 %v6720, 1.442695
        %v6748 = vpow.pop %v6747
        %v6749 = vmul.f32 %v6721, 1.442695
        %v6750 = vpow.pop %v6749
        %v6751 = vmul.f32 %v6722, 1.442695
        %v6752 = vpow.pop %v6751
        %v6753 = vmul.f32 %v6723, 1.442695
        %v6754 = vpow.pop %v6753
        %v6755 = vmul.f32 %v6724, 1.442695
        %v6756 = vpow.pop %v6755
        %6757 = vadd.xlane.f32.xlu0 %v6726
        %v6758 = vpop.xlane.xlu0 %6757
        %6759 = vadd.xlane.f32.xlu0 %v6728
        %v6760 = vpop.xlane.xlu0 %6759
        %6761 = vadd.xlane.f32.xlu0 %v6730
        %v6762 = vpop.xlane.xlu0 %6761
        %6763 = vadd.xlane.f32.xlu0 %v6732
        %v6764 = vpop.xlane.xlu0 %6763
        %6765 = vadd.xlane.f32.xlu0 %v6734
        %v6766 = vpop.xlane.xlu0 %6765
        %6767 = vadd.xlane.f32.xlu0 %v6736
        %v6768 = vpop.xlane.xlu0 %6767
        %6769 = vadd.xlane.f32.xlu0 %v6738
        %v6770 = vpop.xlane.xlu0 %6769
        %6771 = vadd.xlane.f32.xlu0 %v6740
        %v6772 = vpop.xlane.xlu0 %6771
        %6773 = vadd.xlane.f32.xlu0 %v6742
        %v6774 = vpop.xlane.xlu0 %6773
        %6775 = vadd.xlane.f32.xlu0 %v6744
        %v6776 = vpop.xlane.xlu0 %6775
        %6777 = vadd.xlane.f32.xlu0 %v6746
        %v6778 = vpop.xlane.xlu0 %6777
        %6779 = vadd.xlane.f32.xlu0 %v6748
        %v6780 = vpop.xlane.xlu0 %6779
        %6781 = vadd.xlane.f32.xlu0 %v6750
        %v6782 = vpop.xlane.xlu0 %6781
        %6783 = vadd.xlane.f32.xlu0 %v6752
        %v6784 = vpop.xlane.xlu0 %6783
        %6785 = vadd.xlane.f32.xlu0 %v6754
        %v6786 = vpop.xlane.xlu0 %6785
        %6787 = vadd.xlane.f32.xlu0 %v6756
        %v6788 = vpop.xlane.xlu0 %6787
        %v6789 = vrcp.pop %v6758
        %v6790 = vrcp.pop %v6760
        %v6791 = vrcp.pop %v6762
        %v6792 = vrcp.pop %v6764
        %v6793 = vrcp.pop %v6766
        %v6794 = vrcp.pop %v6768
        %v6795 = vrcp.pop %v6770
        %v6796 = vrcp.pop %v6772
        %v6797 = vrcp.pop %v6774
        %v6798 = vrcp.pop %v6776
        %v6799 = vrcp.pop %v6778
        %v6800 = vrcp.pop %v6780
        %v6801 = vrcp.pop %v6782
        %v6802 = vrcp.pop %v6784
        %v6803 = vrcp.pop %v6786
        %v6804 = vrcp.pop %v6788
        %v6805 = vmul.f32 %v6726, %v6789
        %v6806 = vmul.f32 %v6728, %v6790
        %v6807 = vmul.f32 %v6730, %v6791
        %v6808 = vmul.f32 %v6732, %v6792
        %v6809 = vmul.f32 %v6734, %v6793
        %v6810 = vmul.f32 %v6736, %v6794
        %v6811 = vmul.f32 %v6738, %v6795
        %v6812 = vmul.f32 %v6740, %v6796
        %v6813 = vmul.f32 %v6742, %v6797
        %v6814 = vmul.f32 %v6744, %v6798
        %v6815 = vmul.f32 %v6746, %v6799
        %v6816 = vmul.f32 %v6748, %v6800
        %v6817 = vmul.f32 %v6750, %v6801
        %v6818 = vmul.f32 %v6752, %v6802
        %v6819 = vmul.f32 %v6754, %v6803
        %v6820 = vmul.f32 %v6756, %v6804
        %6821 = vadd.xlane.f32.xlu0 %v6805
        %v6822 = vpop.xlane.xlu0 %6821
        %6823 = vadd.xlane.f32.xlu0 %v6806
        %v6824 = vpop.xlane.xlu0 %6823
        %6825 = vadd.xlane.f32.xlu0 %v6807
        %v6826 = vpop.xlane.xlu0 %6825
        %6827 = vadd.xlane.f32.xlu0 %v6808
        %v6828 = vpop.xlane.xlu0 %6827
        %6829 = vadd.xlane.f32.xlu0 %v6809
        %v6830 = vpop.xlane.xlu0 %6829
        %6831 = vadd.xlane.f32.xlu0 %v6810
        %v6832 = vpop.xlane.xlu0 %6831
        %6833 = vadd.xlane.f32.xlu0 %v6811
        %v6834 = vpop.xlane.xlu0 %6833
        %6835 = vadd.xlane.f32.xlu0 %v6812
        %v6836 = vpop.xlane.xlu0 %6835
        %6837 = vadd.xlane.f32.xlu0 %v6813
        %v6838 = vpop.xlane.xlu0 %6837
        %6839 = vadd.xlane.f32.xlu0 %v6814
        %v6840 = vpop.xlane.xlu0 %6839
        %6841 = vadd.xlane.f32.xlu0 %v6815
        %v6842 = vpop.xlane.xlu0 %6841
        %6843 = vadd.xlane.f32.xlu0 %v6816
        %v6844 = vpop.xlane.xlu0 %6843
        %6845 = vadd.xlane.f32.xlu0 %v6817
        %v6846 = vpop.xlane.xlu0 %6845
        %6847 = vadd.xlane.f32.xlu0 %v6818
        %v6848 = vpop.xlane.xlu0 %6847
        %6849 = vadd.xlane.f32.xlu0 %v6819
        %v6850 = vpop.xlane.xlu0 %6849
        %6851 = vadd.xlane.f32.xlu0 %v6820
        %v6852 = vpop.xlane.xlu0 %6851
        %v6853 = vsel %vm5196, %v4262, 0.0
        %v6854 = vsel %vm5196, %v4266, 0.0
        %v6855 = vadd.f32 %v6853, %v6854
        %v6856 = vsel %vm5196, %v4272, 0.0
        %v6857 = vadd.f32 %v6855, %v6856
        %v6858 = vsel %vm5196, %v4276, 0.0
        %v6859 = vadd.f32 %v6857, %v6858
        %v6860 = vsel %vm5196, %v4282, 0.0
        %v6861 = vadd.f32 %v6859, %v6860
        %v6862 = vsel %vm5196, %v4286, 0.0
        %v6863 = vadd.f32 %v6861, %v6862
        %v6864 = vsel %vm5196, %v4292, 0.0
        %v6865 = vadd.f32 %v6863, %v6864
        %v6866 = vsel %vm5196, %v4296, 0.0
        %v6867 = vadd.f32 %v6865, %v6866
        %v6868 = vsel %vm5196, %v4302, 0.0
        %v6869 = vadd.f32 %v6867, %v6868
        %v6870 = vsel %vm5196, %v4306, 0.0
        %v6871 = vadd.f32 %v6869, %v6870
        %v6872 = vsel %vm5196, %v4312, 0.0
        %v6873 = vadd.f32 %v6871, %v6872
        %v6874 = vsel %vm5196, %v4316, 0.0
        %v6875 = vadd.f32 %v6873, %v6874
        %v6876 = vsel %vm5196, %v4322, 0.0
        %v6877 = vadd.f32 %v6875, %v6876
        %v6878 = vsel %vm5196, %v4326, 0.0
        %v6879 = vadd.f32 %v6877, %v6878
        %v6880 = vsel %vm5196, %v4332, 0.0
        %v6881 = vadd.f32 %v6879, %v6880
        %v6882 = vsel %vm5196, %v4336, 0.0
        %v6883 = vadd.f32 %v6881, %v6882
        %v6884 = vrot.slane %v6883, 4
        %v6885 = vadd.f32 %v6883, %v6884
        %v6886 = vrot.slane %v6885, 2
        %v6887 = vadd.f32 %v6885, %v6886
        %v6888 = vrot.slane %v6887, 1
        %v6889 = vadd.f32 %v6887, %v6888
        %v6890 = vmul.f32 %v6822, %v6889
        %v6891 = vmul.f32 %v6824, %v6889
        %v6892 = vmul.f32 %v6826, %v6889
        %v6893 = vmul.f32 %v6828, %v6889
        %v6894 = vmul.f32 %v6830, %v6889
        %v6895 = vmul.f32 %v6832, %v6889
        %v6896 = vmul.f32 %v6834, %v6889
        %v6897 = vmul.f32 %v6836, %v6889
        %v6898 = vmul.f32 %v6838, %v6889
        %v6899 = vmul.f32 %v6840, %v6889
        %v6900 = vmul.f32 %v6842, %v6889
        %v6901 = vmul.f32 %v6844, %v6889
        %v6902 = vmul.f32 %v6846, %v6889
        %v6903 = vmul.f32 %v6848, %v6889
        %v6904 = vmul.f32 %v6850, %v6889
        %v6905 = vmul.f32 %v6852, %v6889
        %6906 = vst.msk [vmem:[#allocation2 + $0x10] sm:$0xff] %vm5196, %v6890
        %6907 = vst.msk [vmem:[#allocation2 + $0x30] sm:$0xff] %vm5196, %v6891
        %6908 = vst.msk [vmem:[#allocation2 + $0x50] sm:$0xff] %vm5196, %v6892
        %6909 = vst.msk [vmem:[#allocation2 + $0x70] sm:$0xff] %vm5196, %v6893
        %6910 = vst.msk [vmem:[#allocation2 + $0x90] sm:$0xff] %vm5196, %v6894
        %6911 = vst.msk [vmem:[#allocation2 + $0xb0] sm:$0xff] %vm5196, %v6895
        %6912 = vst.msk [vmem:[#allocation2 + $0xd0] sm:$0xff] %vm5196, %v6896
        %6913 = vst.msk [vmem:[#allocation2 + $0xf0] sm:$0xff] %vm5196, %v6897
        %6914 = vst.msk [vmem:[#allocation2 + $0x110] sm:$0xff] %vm5196, %v6898
        %6915 = vst.msk [vmem:[#allocation2 + $0x130] sm:$0xff] %vm5196, %v6899
        %6916 = vst.msk [vmem:[#allocation2 + $0x150] sm:$0xff] %vm5196, %v6900
        %6917 = vst.msk [vmem:[#allocation2 + $0x170] sm:$0xff] %vm5196, %v6901
        %6918 = vst.msk [vmem:[#allocation2 + $0x190] sm:$0xff] %vm5196, %v6902
        %6919 = vst.msk [vmem:[#allocation2 + $0x1b0] sm:$0xff] %vm5196, %v6903
        %6920 = vst.msk [vmem:[#allocation2 + $0x1d0] sm:$0xff] %vm5196, %v6904
        %6921 = vst.msk [vmem:[#allocation2 + $0x1f0] sm:$0xff] %vm5196, %v6905
        %v6923 = vsel %vm4436, %v4375, 0
        %v6926 = vsel %vm4436, %v4379, 0
        %v6929 = vsel %vm4436, %v4383, 0
        %v6932 = vsel %vm4436, %v4387, 0
        %v6935 = vsel %vm4436, %v4391, 0
        %v6938 = vsel %vm4436, %v4395, 0
        %v6941 = vsel %vm4436, %v4399, 0
        %v6944 = vsel %vm4436, %v4403, 0
        %v6947 = vsel %vm4436, %v4407, 0
        %v6950 = vsel %vm4436, %v4411, 0
        %v6953 = vsel %vm4436, %v4415, 0
        %v6956 = vsel %vm4436, %v4419, 0
        %v6959 = vsel %vm4436, %v4423, 0
        %v6962 = vsel %vm4436, %v4427, 0
        %v6965 = vsel %vm4436, %v4431, 0
        %v6968 = vsel %vm4436, %v4435, 0
        %6970 = vmatprep.subr.bf16.mxu0 0
        %6971 = vmatpush1.bf16.xpose.msra.mxu0 %v6968
        %6972 = vmatprep.subr.bf16.mxu0 0
        %6973 = vmatpush1.bf16.xpose.msra.mxu0 %v6965
        %6974 = vmatprep.subr.bf16.mxu0 0
        %6975 = vmatpush1.bf16.xpose.msra.mxu0 %v6962
        %6976 = vmatprep.subr.bf16.mxu0 0
        %6977 = vmatpush1.bf16.xpose.msra.mxu0 %v6959
        %6978 = vmatprep.subr.bf16.mxu0 0
        %6979 = vmatpush1.bf16.xpose.msra.mxu0 %v6956
        %6980 = vmatprep.subr.bf16.mxu0 0
        %6981 = vmatpush1.bf16.xpose.msra.mxu0 %v6953
        %6982 = vmatprep.subr.bf16.mxu0 0
        %6983 = vmatpush1.bf16.xpose.msra.mxu0 %v6950
        %6984 = vmatprep.subr.bf16.mxu0 0
        %6985 = vmatpush1.bf16.xpose.msra.mxu0 %v6947
        %6986 = vmatprep.subr.bf16.mxu0 0
        %6987 = vmatpush2.bf16.xpose.msra.mxu0 0
        %6988 = vmatprep.subr.bf16.mxu0 0
        %6989 = vmatpush2.bf16.xpose.msra.mxu0 0
        %6990 = vmatprep.subr.bf16.mxu0 0
        %6991 = vmatpush2.bf16.xpose.msra.mxu0 0
        %6992 = vmatprep.subr.bf16.mxu0 0
        %6993 = vmatpush2.bf16.xpose.msra.mxu0 0
        %6994 = vmatprep.subr.bf16.mxu0 0
        %6995 = vmatpush2.bf16.xpose.msra.mxu0 0
        %6996 = vmatprep.subr.bf16.mxu0 0
        %6997 = vmatpush2.bf16.xpose.msra.mxu0 0
        %6998 = vmatprep.subr.bf16.mxu0 0
        %6999 = vmatpush2.bf16.xpose.msra.mxu0 0
        %7000 = vmatprep.subr.bf16.mxu0 0
        %7001 = vmatpush2.bf16.xpose.msra.mxu0 0
        %7002 = vmatprep.mubr.bf16.mxu0 0
        %7003 = vmatmul.mubr.bf16.gmra.mxu0 %v6923
        %v7004 = vpop.f32.mrf.mxu0
        %v7005 = vadd.f32 %v4356, %v7004
        %v7006 = vpop.f32.mrf.mxu0
        %v7007 = vpop.f32.mrf.mxu0
        %v7008 = vadd.f32 %v4357, %v7007
        %v7009 = vpop.f32.mrf.mxu0
        %7010 = vmatprep.mubr.bf16.mxu0 0
        %7011 = vmatmul.mubr.bf16.gmra.mxu0 %v6926
        %v7012 = vpop.f32.mrf.mxu0
        %v7013 = vadd.f32 %v4358, %v7012
        %v7014 = vpop.f32.mrf.mxu0
        %v7015 = vpop.f32.mrf.mxu0
        %v7016 = vadd.f32 %v4359, %v7015
        %v7017 = vpop.f32.mrf.mxu0
        %7018 = vmatprep.mubr.bf16.mxu0 0
        %7019 = vmatmul.mubr.bf16.gmra.mxu0 %v6929
        %v7020 = vpop.f32.mrf.mxu0
        %v7021 = vadd.f32 %v4360, %v7020
        %v7022 = vpop.f32.mrf.mxu0
        %v7023 = vpop.f32.mrf.mxu0
        %v7024 = vadd.f32 %v4361, %v7023
        %v7025 = vpop.f32.mrf.mxu0
        %7026 = vmatprep.mubr.bf16.mxu0 0
        %7027 = vmatmul.mubr.bf16.gmra.mxu0 %v6932
        %v7028 = vpop.f32.mrf.mxu0
        %v7029 = vadd.f32 %v4362, %v7028
        %v7030 = vpop.f32.mrf.mxu0
        %v7031 = vpop.f32.mrf.mxu0
        %v7032 = vadd.f32 %v4363, %v7031
        %v7033 = vpop.f32.mrf.mxu0
        %7034 = vmatprep.mubr.bf16.mxu0 0
        %7035 = vmatmul.mubr.bf16.gmra.mxu0 %v6935
        %v7036 = vpop.f32.mrf.mxu0
        %v7037 = vadd.f32 %v4364, %v7036
        %v7038 = vpop.f32.mrf.mxu0
        %v7039 = vpop.f32.mrf.mxu0
        %v7040 = vadd.f32 %v4365, %v7039
        %v7041 = vpop.f32.mrf.mxu0
        %7042 = vmatprep.mubr.bf16.mxu0 0
        %7043 = vmatmul.mubr.bf16.gmra.mxu0 %v6938
        %v7044 = vpop.f32.mrf.mxu0
        %v7045 = vadd.f32 %v4366, %v7044
        %v7046 = vpop.f32.mrf.mxu0
        %v7047 = vpop.f32.mrf.mxu0
        %v7048 = vadd.f32 %v4367, %v7047
        %v7049 = vpop.f32.mrf.mxu0
        %7050 = vmatprep.mubr.bf16.mxu0 0
        %7051 = vmatmul.mubr.bf16.gmra.mxu0 %v6941
        %v7052 = vpop.f32.mrf.mxu0
        %v7053 = vadd.f32 %v4368, %v7052
        %v7054 = vpop.f32.mrf.mxu0
        %v7055 = vpop.f32.mrf.mxu0
        %v7056 = vadd.f32 %v4369, %v7055
        %v7057 = vpop.f32.mrf.mxu0
        %7058 = vmatprep.mubr.bf16.mxu0 0
        %7059 = vmatmul.mubr.bf16.gmra.mxu0 %v6944
        %v7060 = vpop.f32.mrf.mxu0
        %v7061 = vadd.f32 %v4370, %v7060
        %v7062 = vpop.f32.mrf.mxu0
        %v7063 = vpop.f32.mrf.mxu0
        %v7064 = vadd.f32 %v4371, %v7063
        %v7065 = vpop.f32.mrf.mxu0
        %7066 = vdwg.mxu0
        %7067 = vmax.xlane.f32.xlu0 %v7005
        %v7068 = vpop.xlane.xlu0 %7067
        %7069 = vmax.xlane.f32.xlu0 %v7008
        %v7070 = vpop.xlane.xlu0 %7069
        %7071 = vmax.xlane.f32.xlu0 %v7013
        %v7072 = vpop.xlane.xlu0 %7071
        %7073 = vmax.xlane.f32.xlu0 %v7016
        %v7074 = vpop.xlane.xlu0 %7073
        %7075 = vmax.xlane.f32.xlu0 %v7021
        %v7076 = vpop.xlane.xlu0 %7075
        %7077 = vmax.xlane.f32.xlu0 %v7024
        %v7078 = vpop.xlane.xlu0 %7077
        %7079 = vmax.xlane.f32.xlu0 %v7029
        %v7080 = vpop.xlane.xlu0 %7079
        %7081 = vmax.xlane.f32.xlu0 %v7032
        %v7082 = vpop.xlane.xlu0 %7081
        %7083 = vmax.xlane.f32.xlu0 %v7037
        %v7084 = vpop.xlane.xlu0 %7083
        %7085 = vmax.xlane.f32.xlu0 %v7040
        %v7086 = vpop.xlane.xlu0 %7085
        %7087 = vmax.xlane.f32.xlu0 %v7045
        %v7088 = vpop.xlane.xlu0 %7087
        %7089 = vmax.xlane.f32.xlu0 %v7048
        %v7090 = vpop.xlane.xlu0 %7089
        %7091 = vmax.xlane.f32.xlu0 %v7053
        %v7092 = vpop.xlane.xlu0 %7091
        %7093 = vmax.xlane.f32.xlu0 %v7056
        %v7094 = vpop.xlane.xlu0 %7093
        %7095 = vmax.xlane.f32.xlu0 %v7061
        %v7096 = vpop.xlane.xlu0 %7095
        %7097 = vmax.xlane.f32.xlu0 %v7064
        %v7098 = vpop.xlane.xlu0 %7097
        %v7099 = vsub.f32 %v7005, %v7068
        %v7100 = vsub.f32 %v7008, %v7070
        %v7101 = vsub.f32 %v7013, %v7072
        %v7102 = vsub.f32 %v7016, %v7074
        %v7103 = vsub.f32 %v7021, %v7076
        %v7104 = vsub.f32 %v7024, %v7078
        %v7105 = vsub.f32 %v7029, %v7080
        %v7106 = vsub.f32 %v7032, %v7082
        %v7107 = vsub.f32 %v7037, %v7084
        %v7108 = vsub.f32 %v7040, %v7086
        %v7109 = vsub.f32 %v7045, %v7088
        %v7110 = vsub.f32 %v7048, %v7090
        %v7111 = vsub.f32 %v7053, %v7092
        %v7112 = vsub.f32 %v7056, %v7094
        %v7113 = vsub.f32 %v7061, %v7096
        %v7114 = vsub.f32 %v7064, %v7098
        %v7115 = vmul.f32 %v7099, 1.442695
        %v7116 = vpow.pop %v7115
        %v7117 = vmul.f32 %v7100, 1.442695
        %v7118 = vpow.pop %v7117
        %v7119 = vmul.f32 %v7101, 1.442695
        %v7120 = vpow.pop %v7119
        %v7121 = vmul.f32 %v7102, 1.442695
        %v7122 = vpow.pop %v7121
        %v7123 = vmul.f32 %v7103, 1.442695
        %v7124 = vpow.pop %v7123
        %v7125 = vmul.f32 %v7104, 1.442695
        %v7126 = vpow.pop %v7125
        %v7127 = vmul.f32 %v7105, 1.442695
        %v7128 = vpow.pop %v7127
        %v7129 = vmul.f32 %v7106, 1.442695
        %v7130 = vpow.pop %v7129
        %v7131 = vmul.f32 %v7107, 1.442695
        %v7132 = vpow.pop %v7131
        %v7133 = vmul.f32 %v7108, 1.442695
        %v7134 = vpow.pop %v7133
        %v7135 = vmul.f32 %v7109, 1.442695
        %v7136 = vpow.pop %v7135
        %v7137 = vmul.f32 %v7110, 1.442695
        %v7138 = vpow.pop %v7137
        %v7139 = vmul.f32 %v7111, 1.442695
        %v7140 = vpow.pop %v7139
        %v7141 = vmul.f32 %v7112, 1.442695
        %v7142 = vpow.pop %v7141
        %v7143 = vmul.f32 %v7113, 1.442695
        %v7144 = vpow.pop %v7143
        %v7145 = vmul.f32 %v7114, 1.442695
        %v7146 = vpow.pop %v7145
        %7147 = vadd.xlane.f32.xlu0 %v7116
        %v7148 = vpop.xlane.xlu0 %7147
        %7149 = vadd.xlane.f32.xlu0 %v7118
        %v7150 = vpop.xlane.xlu0 %7149
        %7151 = vadd.xlane.f32.xlu0 %v7120
        %v7152 = vpop.xlane.xlu0 %7151
        %7153 = vadd.xlane.f32.xlu0 %v7122
        %v7154 = vpop.xlane.xlu0 %7153
        %7155 = vadd.xlane.f32.xlu0 %v7124
        %v7156 = vpop.xlane.xlu0 %7155
        %7157 = vadd.xlane.f32.xlu0 %v7126
        %v7158 = vpop.xlane.xlu0 %7157
        %7159 = vadd.xlane.f32.xlu0 %v7128
        %v7160 = vpop.xlane.xlu0 %7159
        %7161 = vadd.xlane.f32.xlu0 %v7130
        %v7162 = vpop.xlane.xlu0 %7161
        %7163 = vadd.xlane.f32.xlu0 %v7132
        %v7164 = vpop.xlane.xlu0 %7163
        %7165 = vadd.xlane.f32.xlu0 %v7134
        %v7166 = vpop.xlane.xlu0 %7165
        %7167 = vadd.xlane.f32.xlu0 %v7136
        %v7168 = vpop.xlane.xlu0 %7167
        %7169 = vadd.xlane.f32.xlu0 %v7138
        %v7170 = vpop.xlane.xlu0 %7169
        %7171 = vadd.xlane.f32.xlu0 %v7140
        %v7172 = vpop.xlane.xlu0 %7171
        %7173 = vadd.xlane.f32.xlu0 %v7142
        %v7174 = vpop.xlane.xlu0 %7173
        %7175 = vadd.xlane.f32.xlu0 %v7144
        %v7176 = vpop.xlane.xlu0 %7175
        %7177 = vadd.xlane.f32.xlu0 %v7146
        %v7178 = vpop.xlane.xlu0 %7177
        %v7179 = vrcp.pop %v7148
        %v7180 = vrcp.pop %v7150
        %v7181 = vrcp.pop %v7152
        %v7182 = vrcp.pop %v7154
        %v7183 = vrcp.pop %v7156
        %v7184 = vrcp.pop %v7158
        %v7185 = vrcp.pop %v7160
        %v7186 = vrcp.pop %v7162
        %v7187 = vrcp.pop %v7164
        %v7188 = vrcp.pop %v7166
        %v7189 = vrcp.pop %v7168
        %v7190 = vrcp.pop %v7170
        %v7191 = vrcp.pop %v7172
        %v7192 = vrcp.pop %v7174
        %v7193 = vrcp.pop %v7176
        %v7194 = vrcp.pop %v7178
        %v7195 = vmul.f32 %v7116, %v7179
        %v7196 = vmul.f32 %v7118, %v7180
        %v7197 = vmul.f32 %v7120, %v7181
        %v7198 = vmul.f32 %v7122, %v7182
        %v7199 = vmul.f32 %v7124, %v7183
        %v7200 = vmul.f32 %v7126, %v7184
        %v7201 = vmul.f32 %v7128, %v7185
        %v7202 = vmul.f32 %v7130, %v7186
        %v7203 = vmul.f32 %v7132, %v7187
        %v7204 = vmul.f32 %v7134, %v7188
        %v7205 = vmul.f32 %v7136, %v7189
        %v7206 = vmul.f32 %v7138, %v7190
        %v7207 = vmul.f32 %v7140, %v7191
        %v7208 = vmul.f32 %v7142, %v7192
        %v7209 = vmul.f32 %v7144, %v7193
        %v7210 = vmul.f32 %v7146, %v7194
        %7211 = vadd.xlane.f32.xlu0 %v7195
        %v7212 = vpop.xlane.xlu0 %7211
        %7213 = vadd.xlane.f32.xlu0 %v7196
        %v7214 = vpop.xlane.xlu0 %7213
        %7215 = vadd.xlane.f32.xlu0 %v7197
        %v7216 = vpop.xlane.xlu0 %7215
        %7217 = vadd.xlane.f32.xlu0 %v7198
        %v7218 = vpop.xlane.xlu0 %7217
        %7219 = vadd.xlane.f32.xlu0 %v7199
        %v7220 = vpop.xlane.xlu0 %7219
        %7221 = vadd.xlane.f32.xlu0 %v7200
        %v7222 = vpop.xlane.xlu0 %7221
        %7223 = vadd.xlane.f32.xlu0 %v7201
        %v7224 = vpop.xlane.xlu0 %7223
        %7225 = vadd.xlane.f32.xlu0 %v7202
        %v7226 = vpop.xlane.xlu0 %7225
        %7227 = vadd.xlane.f32.xlu0 %v7203
        %v7228 = vpop.xlane.xlu0 %7227
        %7229 = vadd.xlane.f32.xlu0 %v7204
        %v7230 = vpop.xlane.xlu0 %7229
        %7231 = vadd.xlane.f32.xlu0 %v7205
        %v7232 = vpop.xlane.xlu0 %7231
        %7233 = vadd.xlane.f32.xlu0 %v7206
        %v7234 = vpop.xlane.xlu0 %7233
        %7235 = vadd.xlane.f32.xlu0 %v7207
        %v7236 = vpop.xlane.xlu0 %7235
        %7237 = vadd.xlane.f32.xlu0 %v7208
        %v7238 = vpop.xlane.xlu0 %7237
        %7239 = vadd.xlane.f32.xlu0 %v7209
        %v7240 = vpop.xlane.xlu0 %7239
        %7241 = vadd.xlane.f32.xlu0 %v7210
        %v7242 = vpop.xlane.xlu0 %7241
        %v7243 = vsel %vm4436, %v4264, 0.0
        %v7244 = vsel %vm4436, %v4268, 0.0
        %v7245 = vadd.f32 %v7243, %v7244
        %v7246 = vsel %vm4436, %v4274, 0.0
        %v7247 = vadd.f32 %v7245, %v7246
        %v7248 = vsel %vm4436, %v4278, 0.0
        %v7249 = vadd.f32 %v7247, %v7248
        %v7250 = vsel %vm4436, %v4284, 0.0
        %v7251 = vadd.f32 %v7249, %v7250
        %v7252 = vsel %vm4436, %v4288, 0.0
        %v7253 = vadd.f32 %v7251, %v7252
        %v7254 = vsel %vm4436, %v4294, 0.0
        %v7255 = vadd.f32 %v7253, %v7254
        %v7256 = vsel %vm4436, %v4298, 0.0
        %v7257 = vadd.f32 %v7255, %v7256
        %v7258 = vsel %vm4436, %v4304, 0.0
        %v7259 = vadd.f32 %v7257, %v7258
        %v7260 = vsel %vm4436, %v4308, 0.0
        %v7261 = vadd.f32 %v7259, %v7260
        %v7262 = vsel %vm4436, %v4314, 0.0
        %v7263 = vadd.f32 %v7261, %v7262
        %v7264 = vsel %vm4436, %v4318, 0.0
        %v7265 = vadd.f32 %v7263, %v7264
        %v7266 = vsel %vm4436, %v4324, 0.0
        %v7267 = vadd.f32 %v7265, %v7266
        %v7268 = vsel %vm4436, %v4328, 0.0
        %v7269 = vadd.f32 %v7267, %v7268
        %v7270 = vsel %vm4436, %v4334, 0.0
        %v7271 = vadd.f32 %v7269, %v7270
        %v7272 = vsel %vm4436, %v4338, 0.0
        %v7273 = vadd.f32 %v7271, %v7272
        %v7274 = vrot.slane %v7273, 4
        %v7275 = vadd.f32 %v7273, %v7274
        %v7276 = vrot.slane %v7275, 2
        %v7277 = vadd.f32 %v7275, %v7276
        %v7278 = vrot.slane %v7277, 1
        %v7279 = vadd.f32 %v7277, %v7278
        %v7280 = vmul.f32 %v7212, %v7279
        %v7281 = vmul.f32 %v7214, %v7279
        %v7282 = vmul.f32 %v7216, %v7279
        %v7283 = vmul.f32 %v7218, %v7279
        %v7284 = vmul.f32 %v7220, %v7279
        %v7285 = vmul.f32 %v7222, %v7279
        %v7286 = vmul.f32 %v7224, %v7279
        %v7287 = vmul.f32 %v7226, %v7279
        %v7288 = vmul.f32 %v7228, %v7279
        %v7289 = vmul.f32 %v7230, %v7279
        %v7290 = vmul.f32 %v7232, %v7279
        %v7291 = vmul.f32 %v7234, %v7279
        %v7292 = vmul.f32 %v7236, %v7279
        %v7293 = vmul.f32 %v7238, %v7279
        %v7294 = vmul.f32 %v7240, %v7279
        %v7295 = vmul.f32 %v7242, %v7279
        %7296 = vst.msk [vmem:[#allocation2 + $0x18] sm:$0xff] %vm4436, %v7280
        %7297 = vst.msk [vmem:[#allocation2 + $0x38] sm:$0xff] %vm4436, %v7281
        %7298 = vst.msk [vmem:[#allocation2 + $0x58] sm:$0xff] %vm4436, %v7282
        %7299 = vst.msk [vmem:[#allocation2 + $0x78] sm:$0xff] %vm4436, %v7283
        %7300 = vst.msk [vmem:[#allocation2 + $0x98] sm:$0xff] %vm4436, %v7284
        %7301 = vst.msk [vmem:[#allocation2 + $0xb8] sm:$0xff] %vm4436, %v7285
        %7302 = vst.msk [vmem:[#allocation2 + $0xd8] sm:$0xff] %vm4436, %v7286
        %7303 = vst.msk [vmem:[#allocation2 + $0xf8] sm:$0xff] %vm4436, %v7287
        %7304 = vst.msk [vmem:[#allocation2 + $0x118] sm:$0xff] %vm4436, %v7288
        %7305 = vst.msk [vmem:[#allocation2 + $0x138] sm:$0xff] %vm4436, %v7289
        %7306 = vst.msk [vmem:[#allocation2 + $0x158] sm:$0xff] %vm4436, %v7290
        %7307 = vst.msk [vmem:[#allocation2 + $0x178] sm:$0xff] %vm4436, %v7291
        %7308 = vst.msk [vmem:[#allocation2 + $0x198] sm:$0xff] %vm4436, %v7292
        %7309 = vst.msk [vmem:[#allocation2 + $0x1b8] sm:$0xff] %vm4436, %v7293
        %7310 = vst.msk [vmem:[#allocation2 + $0x1d8] sm:$0xff] %vm4436, %v7294
        %7311 = vst.msk [vmem:[#allocation2 + $0x1f8] sm:$0xff] %vm4436, %v7295
        %7320 = vrot.lane.b32.xlu0 %v4375, 64
        %v7321 = vpop.permute.xlu0 %7320
        %7322 = vrot.lane.b32.xlu0 %v4379, 64
        %v7323 = vpop.permute.xlu0 %7322
        %7324 = vrot.lane.b32.xlu0 %v4383, 64
        %v7325 = vpop.permute.xlu0 %7324
        %7326 = vrot.lane.b32.xlu0 %v4387, 64
        %v7327 = vpop.permute.xlu0 %7326
        %7328 = vrot.lane.b32.xlu0 %v4391, 64
        %v7329 = vpop.permute.xlu0 %7328
        %7330 = vrot.lane.b32.xlu0 %v4395, 64
        %v7331 = vpop.permute.xlu0 %7330
        %7332 = vrot.lane.b32.xlu0 %v4399, 64
        %v7333 = vpop.permute.xlu0 %7332
        %7334 = vrot.lane.b32.xlu0 %v4403, 64
        %v7335 = vpop.permute.xlu0 %7334
        %7344 = vrot.lane.b32.xlu0 %v4407, 64
        %v7345 = vpop.permute.xlu0 %7344
        %7346 = vrot.lane.b32.xlu0 %v4411, 64
        %v7347 = vpop.permute.xlu0 %7346
        %7348 = vrot.lane.b32.xlu0 %v4415, 64
        %v7349 = vpop.permute.xlu0 %7348
        %7350 = vrot.lane.b32.xlu0 %v4419, 64
        %v7351 = vpop.permute.xlu0 %7350
        %7352 = vrot.lane.b32.xlu0 %v4423, 64
        %v7353 = vpop.permute.xlu0 %7352
        %7354 = vrot.lane.b32.xlu0 %v4427, 64
        %v7355 = vpop.permute.xlu0 %7354
        %7356 = vrot.lane.b32.xlu0 %v4431, 64
        %v7357 = vpop.permute.xlu0 %7356
        %7358 = vrot.lane.b32.xlu0 %v4435, 64
        %v7359 = vpop.permute.xlu0 %7358
        %v7361 = vsel %vm4436, %v7321, 0
        %v7364 = vsel %vm4436, %v7323, 0
        %v7367 = vsel %vm4436, %v7325, 0
        %v7370 = vsel %vm4436, %v7327, 0
        %v7373 = vsel %vm4436, %v7329, 0
        %v7376 = vsel %vm4436, %v7331, 0
        %v7379 = vsel %vm4436, %v7333, 0
        %v7382 = vsel %vm4436, %v7335, 0
        %v7385 = vsel %vm4436, %v7345, 0
        %v7388 = vsel %vm4436, %v7347, 0
        %v7391 = vsel %vm4436, %v7349, 0
        %v7394 = vsel %vm4436, %v7351, 0
        %v7397 = vsel %vm4436, %v7353, 0
        %v7400 = vsel %vm4436, %v7355, 0
        %v7403 = vsel %vm4436, %v7357, 0
        %v7406 = vsel %vm4436, %v7359, 0
        %7408 = vmatprep.subr.bf16.mxu0 0
        %7409 = vmatpush1.bf16.xpose.msra.mxu0 %v7406
        %7410 = vmatprep.subr.bf16.mxu0 0
        %7411 = vmatpush1.bf16.xpose.msra.mxu0 %v7403
        %7412 = vmatprep.subr.bf16.mxu0 0
        %7413 = vmatpush1.bf16.xpose.msra.mxu0 %v7400
        %7414 = vmatprep.subr.bf16.mxu0 0
        %7415 = vmatpush1.bf16.xpose.msra.mxu0 %v7397
        %7416 = vmatprep.subr.bf16.mxu0 0
        %7417 = vmatpush1.bf16.xpose.msra.mxu0 %v7394
        %7418 = vmatprep.subr.bf16.mxu0 0
        %7419 = vmatpush1.bf16.xpose.msra.mxu0 %v7391
        %7420 = vmatprep.subr.bf16.mxu0 0
        %7421 = vmatpush1.bf16.xpose.msra.mxu0 %v7388
        %7422 = vmatprep.subr.bf16.mxu0 0
        %7423 = vmatpush1.bf16.xpose.msra.mxu0 %v7385
        %7424 = vmatprep.subr.bf16.mxu0 0
        %7425 = vmatpush2.bf16.xpose.msra.mxu0 0
        %7426 = vmatprep.subr.bf16.mxu0 0
        %7427 = vmatpush2.bf16.xpose.msra.mxu0 0
        %7428 = vmatprep.subr.bf16.mxu0 0
        %7429 = vmatpush2.bf16.xpose.msra.mxu0 0
        %7430 = vmatprep.subr.bf16.mxu0 0
        %7431 = vmatpush2.bf16.xpose.msra.mxu0 0
        %7432 = vmatprep.subr.bf16.mxu0 0
        %7433 = vmatpush2.bf16.xpose.msra.mxu0 0
        %7434 = vmatprep.subr.bf16.mxu0 0
        %7435 = vmatpush2.bf16.xpose.msra.mxu0 0
        %7436 = vmatprep.subr.bf16.mxu0 0
        %7437 = vmatpush2.bf16.xpose.msra.mxu0 0
        %7438 = vmatprep.subr.bf16.mxu0 0
        %7439 = vmatpush2.bf16.xpose.msra.mxu0 0
        %7440 = vmatprep.mubr.bf16.mxu0 0
        %7441 = vmatmul.mubr.bf16.gmra.mxu0 %v7361
        %v7442 = vpop.f32.mrf.mxu0
        %v7443 = vadd.f32 %v4356, %v7442
        %v7444 = vpop.f32.mrf.mxu0
        %v7445 = vpop.f32.mrf.mxu0
        %v7446 = vadd.f32 %v4357, %v7445
        %v7447 = vpop.f32.mrf.mxu0
        %7448 = vmatprep.mubr.bf16.mxu0 0
        %7449 = vmatmul.mubr.bf16.gmra.mxu0 %v7364
        %v7450 = vpop.f32.mrf.mxu0
        %v7451 = vadd.f32 %v4358, %v7450
        %v7452 = vpop.f32.mrf.mxu0
        %v7453 = vpop.f32.mrf.mxu0
        %v7454 = vadd.f32 %v4359, %v7453
        %v7455 = vpop.f32.mrf.mxu0
        %7456 = vmatprep.mubr.bf16.mxu0 0
        %7457 = vmatmul.mubr.bf16.gmra.mxu0 %v7367
        %v7458 = vpop.f32.mrf.mxu0
        %v7459 = vadd.f32 %v4360, %v7458
        %v7460 = vpop.f32.mrf.mxu0
        %v7461 = vpop.f32.mrf.mxu0
        %v7462 = vadd.f32 %v4361, %v7461
        %v7463 = vpop.f32.mrf.mxu0
        %7464 = vmatprep.mubr.bf16.mxu0 0
        %7465 = vmatmul.mubr.bf16.gmra.mxu0 %v7370
        %v7466 = vpop.f32.mrf.mxu0
        %v7467 = vadd.f32 %v4362, %v7466
        %v7468 = vpop.f32.mrf.mxu0
        %v7469 = vpop.f32.mrf.mxu0
        %v7470 = vadd.f32 %v4363, %v7469
        %v7471 = vpop.f32.mrf.mxu0
        %7472 = vmatprep.mubr.bf16.mxu0 0
        %7473 = vmatmul.mubr.bf16.gmra.mxu0 %v7373
        %v7474 = vpop.f32.mrf.mxu0
        %v7475 = vadd.f32 %v4364, %v7474
        %v7476 = vpop.f32.mrf.mxu0
        %v7477 = vpop.f32.mrf.mxu0
        %v7478 = vadd.f32 %v4365, %v7477
        %v7479 = vpop.f32.mrf.mxu0
        %7480 = vmatprep.mubr.bf16.mxu0 0
        %7481 = vmatmul.mubr.bf16.gmra.mxu0 %v7376
        %v7482 = vpop.f32.mrf.mxu0
        %v7483 = vadd.f32 %v4366, %v7482
        %v7484 = vpop.f32.mrf.mxu0
        %v7485 = vpop.f32.mrf.mxu0
        %v7486 = vadd.f32 %v4367, %v7485
        %v7487 = vpop.f32.mrf.mxu0
        %7488 = vmatprep.mubr.bf16.mxu0 0
        %7489 = vmatmul.mubr.bf16.gmra.mxu0 %v7379
        %v7490 = vpop.f32.mrf.mxu0
        %v7491 = vadd.f32 %v4368, %v7490
        %v7492 = vpop.f32.mrf.mxu0
        %v7493 = vpop.f32.mrf.mxu0
        %v7494 = vadd.f32 %v4369, %v7493
        %v7495 = vpop.f32.mrf.mxu0
        %7496 = vmatprep.mubr.bf16.mxu0 0
        %7497 = vmatmul.mubr.bf16.gmra.mxu0 %v7382
        %v7498 = vpop.f32.mrf.mxu0
        %v7499 = vadd.f32 %v4370, %v7498
        %v7500 = vpop.f32.mrf.mxu0
        %v7501 = vpop.f32.mrf.mxu0
        %v7502 = vadd.f32 %v4371, %v7501
        %v7503 = vpop.f32.mrf.mxu0
        %7504 = vdwg.mxu0
        %7505 = vmax.xlane.f32.xlu0 %v7443
        %v7506 = vpop.xlane.xlu0 %7505
        %7507 = vmax.xlane.f32.xlu0 %v7446
        %v7508 = vpop.xlane.xlu0 %7507
        %7509 = vmax.xlane.f32.xlu0 %v7451
        %v7510 = vpop.xlane.xlu0 %7509
        %7511 = vmax.xlane.f32.xlu0 %v7454
        %v7512 = vpop.xlane.xlu0 %7511
        %7513 = vmax.xlane.f32.xlu0 %v7459
        %v7514 = vpop.xlane.xlu0 %7513
        %7515 = vmax.xlane.f32.xlu0 %v7462
        %v7516 = vpop.xlane.xlu0 %7515
        %7517 = vmax.xlane.f32.xlu0 %v7467
        %v7518 = vpop.xlane.xlu0 %7517
        %7519 = vmax.xlane.f32.xlu0 %v7470
        %v7520 = vpop.xlane.xlu0 %7519
        %7521 = vmax.xlane.f32.xlu0 %v7475
        %v7522 = vpop.xlane.xlu0 %7521
        %7523 = vmax.xlane.f32.xlu0 %v7478
        %v7524 = vpop.xlane.xlu0 %7523
        %7525 = vmax.xlane.f32.xlu0 %v7483
        %v7526 = vpop.xlane.xlu0 %7525
        %7527 = vmax.xlane.f32.xlu0 %v7486
        %v7528 = vpop.xlane.xlu0 %7527
        %7529 = vmax.xlane.f32.xlu0 %v7491
        %v7530 = vpop.xlane.xlu0 %7529
        %7531 = vmax.xlane.f32.xlu0 %v7494
        %v7532 = vpop.xlane.xlu0 %7531
        %7533 = vmax.xlane.f32.xlu0 %v7499
        %v7534 = vpop.xlane.xlu0 %7533
        %7535 = vmax.xlane.f32.xlu0 %v7502
        %v7536 = vpop.xlane.xlu0 %7535
        %v7537 = vsub.f32 %v7443, %v7506
        %v7538 = vsub.f32 %v7446, %v7508
        %v7539 = vsub.f32 %v7451, %v7510
        %v7540 = vsub.f32 %v7454, %v7512
        %v7541 = vsub.f32 %v7459, %v7514
        %v7542 = vsub.f32 %v7462, %v7516
        %v7543 = vsub.f32 %v7467, %v7518
        %v7544 = vsub.f32 %v7470, %v7520
        %v7545 = vsub.f32 %v7475, %v7522
        %v7546 = vsub.f32 %v7478, %v7524
        %v7547 = vsub.f32 %v7483, %v7526
        %v7548 = vsub.f32 %v7486, %v7528
        %v7549 = vsub.f32 %v7491, %v7530
        %v7550 = vsub.f32 %v7494, %v7532
        %v7551 = vsub.f32 %v7499, %v7534
        %v7552 = vsub.f32 %v7502, %v7536
        %v7553 = vmul.f32 %v7537, 1.442695
        %v7554 = vpow.pop %v7553
        %v7555 = vmul.f32 %v7538, 1.442695
        %v7556 = vpow.pop %v7555
        %v7557 = vmul.f32 %v7539, 1.442695
        %v7558 = vpow.pop %v7557
        %v7559 = vmul.f32 %v7540, 1.442695
        %v7560 = vpow.pop %v7559
        %v7561 = vmul.f32 %v7541, 1.442695
        %v7562 = vpow.pop %v7561
        %v7563 = vmul.f32 %v7542, 1.442695
        %v7564 = vpow.pop %v7563
        %v7565 = vmul.f32 %v7543, 1.442695
        %v7566 = vpow.pop %v7565
        %v7567 = vmul.f32 %v7544, 1.442695
        %v7568 = vpow.pop %v7567
        %v7569 = vmul.f32 %v7545, 1.442695
        %v7570 = vpow.pop %v7569
        %v7571 = vmul.f32 %v7546, 1.442695
        %v7572 = vpow.pop %v7571
        %v7573 = vmul.f32 %v7547, 1.442695
        %v7574 = vpow.pop %v7573
        %v7575 = vmul.f32 %v7548, 1.442695
        %v7576 = vpow.pop %v7575
        %v7577 = vmul.f32 %v7549, 1.442695
        %v7578 = vpow.pop %v7577
        %v7579 = vmul.f32 %v7550, 1.442695
        %v7580 = vpow.pop %v7579
        %v7581 = vmul.f32 %v7551, 1.442695
        %v7582 = vpow.pop %v7581
        %v7583 = vmul.f32 %v7552, 1.442695
        %v7584 = vpow.pop %v7583
        %7585 = vadd.xlane.f32.xlu0 %v7554
        %v7586 = vpop.xlane.xlu0 %7585
        %7587 = vadd.xlane.f32.xlu0 %v7556
        %v7588 = vpop.xlane.xlu0 %7587
        %7589 = vadd.xlane.f32.xlu0 %v7558
        %v7590 = vpop.xlane.xlu0 %7589
        %7591 = vadd.xlane.f32.xlu0 %v7560
        %v7592 = vpop.xlane.xlu0 %7591
        %7593 = vadd.xlane.f32.xlu0 %v7562
        %v7594 = vpop.xlane.xlu0 %7593
        %7595 = vadd.xlane.f32.xlu0 %v7564
        %v7596 = vpop.xlane.xlu0 %7595
        %7597 = vadd.xlane.f32.xlu0 %v7566
        %v7598 = vpop.xlane.xlu0 %7597
        %7599 = vadd.xlane.f32.xlu0 %v7568
        %v7600 = vpop.xlane.xlu0 %7599
        %7601 = vadd.xlane.f32.xlu0 %v7570
        %v7602 = vpop.xlane.xlu0 %7601
        %7603 = vadd.xlane.f32.xlu0 %v7572
        %v7604 = vpop.xlane.xlu0 %7603
        %7605 = vadd.xlane.f32.xlu0 %v7574
        %v7606 = vpop.xlane.xlu0 %7605
        %7607 = vadd.xlane.f32.xlu0 %v7576
        %v7608 = vpop.xlane.xlu0 %7607
        %7609 = vadd.xlane.f32.xlu0 %v7578
        %v7610 = vpop.xlane.xlu0 %7609
        %7611 = vadd.xlane.f32.xlu0 %v7580
        %v7612 = vpop.xlane.xlu0 %7611
        %7613 = vadd.xlane.f32.xlu0 %v7582
        %v7614 = vpop.xlane.xlu0 %7613
        %7615 = vadd.xlane.f32.xlu0 %v7584
        %v7616 = vpop.xlane.xlu0 %7615
        %v7617 = vrcp.pop %v7586
        %v7618 = vrcp.pop %v7588
        %v7619 = vrcp.pop %v7590
        %v7620 = vrcp.pop %v7592
        %v7621 = vrcp.pop %v7594
        %v7622 = vrcp.pop %v7596
        %v7623 = vrcp.pop %v7598
        %v7624 = vrcp.pop %v7600
        %v7625 = vrcp.pop %v7602
        %v7626 = vrcp.pop %v7604
        %v7627 = vrcp.pop %v7606
        %v7628 = vrcp.pop %v7608
        %v7629 = vrcp.pop %v7610
        %v7630 = vrcp.pop %v7612
        %v7631 = vrcp.pop %v7614
        %v7632 = vrcp.pop %v7616
        %v7633 = vmul.f32 %v7554, %v7617
        %v7634 = vmul.f32 %v7556, %v7618
        %v7635 = vmul.f32 %v7558, %v7619
        %v7636 = vmul.f32 %v7560, %v7620
        %v7637 = vmul.f32 %v7562, %v7621
        %v7638 = vmul.f32 %v7564, %v7622
        %v7639 = vmul.f32 %v7566, %v7623
        %v7640 = vmul.f32 %v7568, %v7624
        %v7641 = vmul.f32 %v7570, %v7625
        %v7642 = vmul.f32 %v7572, %v7626
        %v7643 = vmul.f32 %v7574, %v7627
        %v7644 = vmul.f32 %v7576, %v7628
        %v7645 = vmul.f32 %v7578, %v7629
        %v7646 = vmul.f32 %v7580, %v7630
        %v7647 = vmul.f32 %v7582, %v7631
        %v7648 = vmul.f32 %v7584, %v7632
        %7649 = vadd.xlane.f32.xlu0 %v7633
        %v7650 = vpop.xlane.xlu0 %7649
        %7651 = vadd.xlane.f32.xlu0 %v7634
        %v7652 = vpop.xlane.xlu0 %7651
        %7653 = vadd.xlane.f32.xlu0 %v7635
        %v7654 = vpop.xlane.xlu0 %7653
        %7655 = vadd.xlane.f32.xlu0 %v7636
        %v7656 = vpop.xlane.xlu0 %7655
        %7657 = vadd.xlane.f32.xlu0 %v7637
        %v7658 = vpop.xlane.xlu0 %7657
        %7659 = vadd.xlane.f32.xlu0 %v7638
        %v7660 = vpop.xlane.xlu0 %7659
        %7661 = vadd.xlane.f32.xlu0 %v7639
        %v7662 = vpop.xlane.xlu0 %7661
        %7663 = vadd.xlane.f32.xlu0 %v7640
        %v7664 = vpop.xlane.xlu0 %7663
        %7665 = vadd.xlane.f32.xlu0 %v7641
        %v7666 = vpop.xlane.xlu0 %7665
        %7667 = vadd.xlane.f32.xlu0 %v7642
        %v7668 = vpop.xlane.xlu0 %7667
        %7669 = vadd.xlane.f32.xlu0 %v7643
        %v7670 = vpop.xlane.xlu0 %7669
        %7671 = vadd.xlane.f32.xlu0 %v7644
        %v7672 = vpop.xlane.xlu0 %7671
        %7673 = vadd.xlane.f32.xlu0 %v7645
        %v7674 = vpop.xlane.xlu0 %7673
        %7675 = vadd.xlane.f32.xlu0 %v7646
        %v7676 = vpop.xlane.xlu0 %7675
        %7677 = vadd.xlane.f32.xlu0 %v7647
        %v7678 = vpop.xlane.xlu0 %7677
        %7679 = vadd.xlane.f32.xlu0 %v7648
        %v7680 = vpop.xlane.xlu0 %7679
        %v7681 = vsel %vm5196, %v4264, 0.0
        %v7682 = vsel %vm5196, %v4268, 0.0
        %v7683 = vadd.f32 %v7681, %v7682
        %v7684 = vsel %vm5196, %v4274, 0.0
        %v7685 = vadd.f32 %v7683, %v7684
        %v7686 = vsel %vm5196, %v4278, 0.0
        %v7687 = vadd.f32 %v7685, %v7686
        %v7688 = vsel %vm5196, %v4284, 0.0
        %v7689 = vadd.f32 %v7687, %v7688
        %v7690 = vsel %vm5196, %v4288, 0.0
        %v7691 = vadd.f32 %v7689, %v7690
        %v7692 = vsel %vm5196, %v4294, 0.0
        %v7693 = vadd.f32 %v7691, %v7692
        %v7694 = vsel %vm5196, %v4298, 0.0
        %v7695 = vadd.f32 %v7693, %v7694
        %v7696 = vsel %vm5196, %v4304, 0.0
        %v7697 = vadd.f32 %v7695, %v7696
        %v7698 = vsel %vm5196, %v4308, 0.0
        %v7699 = vadd.f32 %v7697, %v7698
        %v7700 = vsel %vm5196, %v4314, 0.0
        %v7701 = vadd.f32 %v7699, %v7700
        %v7702 = vsel %vm5196, %v4318, 0.0
        %v7703 = vadd.f32 %v7701, %v7702
        %v7704 = vsel %vm5196, %v4324, 0.0
        %v7705 = vadd.f32 %v7703, %v7704
        %v7706 = vsel %vm5196, %v4328, 0.0
        %v7707 = vadd.f32 %v7705, %v7706
        %v7708 = vsel %vm5196, %v4334, 0.0
        %v7709 = vadd.f32 %v7707, %v7708
        %v7710 = vsel %vm5196, %v4338, 0.0
        %v7711 = vadd.f32 %v7709, %v7710
        %v7712 = vrot.slane %v7711, 4
        %v7713 = vadd.f32 %v7711, %v7712
        %v7714 = vrot.slane %v7713, 2
        %v7715 = vadd.f32 %v7713, %v7714
        %v7716 = vrot.slane %v7715, 1
        %v7717 = vadd.f32 %v7715, %v7716
        %v7718 = vmul.f32 %v7650, %v7717
        %v7719 = vmul.f32 %v7652, %v7717
        %v7720 = vmul.f32 %v7654, %v7717
        %v7721 = vmul.f32 %v7656, %v7717
        %v7722 = vmul.f32 %v7658, %v7717
        %v7723 = vmul.f32 %v7660, %v7717
        %v7724 = vmul.f32 %v7662, %v7717
        %v7725 = vmul.f32 %v7664, %v7717
        %v7726 = vmul.f32 %v7666, %v7717
        %v7727 = vmul.f32 %v7668, %v7717
        %v7728 = vmul.f32 %v7670, %v7717
        %v7729 = vmul.f32 %v7672, %v7717
        %v7730 = vmul.f32 %v7674, %v7717
        %v7731 = vmul.f32 %v7676, %v7717
        %v7732 = vmul.f32 %v7678, %v7717
        %v7733 = vmul.f32 %v7680, %v7717
        %7734 = vst.msk [vmem:[#allocation2 + $0x18] sm:$0xff] %vm5196, %v7718
        %7735 = vst.msk [vmem:[#allocation2 + $0x38] sm:$0xff] %vm5196, %v7719
        %7736 = vst.msk [vmem:[#allocation2 + $0x58] sm:$0xff] %vm5196, %v7720
        %7737 = vst.msk [vmem:[#allocation2 + $0x78] sm:$0xff] %vm5196, %v7721
        %7738 = vst.msk [vmem:[#allocation2 + $0x98] sm:$0xff] %vm5196, %v7722
        %7739 = vst.msk [vmem:[#allocation2 + $0xb8] sm:$0xff] %vm5196, %v7723
        %7740 = vst.msk [vmem:[#allocation2 + $0xd8] sm:$0xff] %vm5196, %v7724
        %7741 = vst.msk [vmem:[#allocation2 + $0xf8] sm:$0xff] %vm5196, %v7725
        %7742 = vst.msk [vmem:[#allocation2 + $0x118] sm:$0xff] %vm5196, %v7726
        %7743 = vst.msk [vmem:[#allocation2 + $0x138] sm:$0xff] %vm5196, %v7727
        %7744 = vst.msk [vmem:[#allocation2 + $0x158] sm:$0xff] %vm5196, %v7728
        %7745 = vst.msk [vmem:[#allocation2 + $0x178] sm:$0xff] %vm5196, %v7729
        %7746 = vst.msk [vmem:[#allocation2 + $0x198] sm:$0xff] %vm5196, %v7730
        %7747 = vst.msk [vmem:[#allocation2 + $0x1b8] sm:$0xff] %vm5196, %v7731
        %7748 = vst.msk [vmem:[#allocation2 + $0x1d8] sm:$0xff] %vm5196, %v7732
        %7749 = vst.msk [vmem:[#allocation2 + $0x1f8] sm:$0xff] %vm5196, %v7733
        %v7750 = vld [vmem:[#allocation2] sm:$0xff]
        %v7751 = vld [vmem:[#allocation2 + $0x8] sm:$0xff]
        %v7752 = vld [vmem:[#allocation2 + $0x10] sm:$0xff]
        %v7753 = vld [vmem:[#allocation2 + $0x18] sm:$0xff]
        %v7754 = vld [vmem:[#allocation2 + $0x20] sm:$0xff]
        %v7755 = vld [vmem:[#allocation2 + $0x28] sm:$0xff]
        %v7756 = vld [vmem:[#allocation2 + $0x30] sm:$0xff]
        %v7757 = vld [vmem:[#allocation2 + $0x38] sm:$0xff]
        %v7758 = vld [vmem:[#allocation2 + $0x40] sm:$0xff]
        %v7759 = vld [vmem:[#allocation2 + $0x48] sm:$0xff]
        %v7760 = vld [vmem:[#allocation2 + $0x50] sm:$0xff]
        %v7761 = vld [vmem:[#allocation2 + $0x58] sm:$0xff]
        %v7762 = vld [vmem:[#allocation2 + $0x60] sm:$0xff]
        %v7763 = vld [vmem:[#allocation2 + $0x68] sm:$0xff]
        %v7764 = vld [vmem:[#allocation2 + $0x70] sm:$0xff]
        %v7765 = vld [vmem:[#allocation2 + $0x78] sm:$0xff]
        %v7766 = vld [vmem:[#allocation2 + $0x80] sm:$0xff]
        %v7767 = vld [vmem:[#allocation2 + $0x88] sm:$0xff]
        %v7768 = vld [vmem:[#allocation2 + $0x90] sm:$0xff]
        %v7769 = vld [vmem:[#allocation2 + $0x98] sm:$0xff]
        %v7770 = vld [vmem:[#allocation2 + $0xa0] sm:$0xff]
        %v7771 = vld [vmem:[#allocation2 + $0xa8] sm:$0xff]
        %v7772 = vld [vmem:[#allocation2 + $0xb0] sm:$0xff]
        %v7773 = vld [vmem:[#allocation2 + $0xb8] sm:$0xff]
        %v7774 = vld [vmem:[#allocation2 + $0xc0] sm:$0xff]
        %v7775 = vld [vmem:[#allocation2 + $0xc8] sm:$0xff]
        %v7776 = vld [vmem:[#allocation2 + $0xd0] sm:$0xff]
        %v7777 = vld [vmem:[#allocation2 + $0xd8] sm:$0xff]
        %v7778 = vld [vmem:[#allocation2 + $0xe0] sm:$0xff]
        %v7779 = vld [vmem:[#allocation2 + $0xe8] sm:$0xff]
        %v7780 = vld [vmem:[#allocation2 + $0xf0] sm:$0xff]
        %v7781 = vld [vmem:[#allocation2 + $0xf8] sm:$0xff]
        %v7782 = vld [vmem:[#allocation2 + $0x100] sm:$0xff]
        %v7783 = vld [vmem:[#allocation2 + $0x108] sm:$0xff]
        %v7784 = vld [vmem:[#allocation2 + $0x110] sm:$0xff]
        %v7785 = vld [vmem:[#allocation2 + $0x118] sm:$0xff]
        %v7786 = vld [vmem:[#allocation2 + $0x120] sm:$0xff]
        %v7787 = vld [vmem:[#allocation2 + $0x128] sm:$0xff]
        %v7788 = vld [vmem:[#allocation2 + $0x130] sm:$0xff]
        %v7789 = vld [vmem:[#allocation2 + $0x138] sm:$0xff]
        %v7790 = vld [vmem:[#allocation2 + $0x140] sm:$0xff]
        %v7791 = vld [vmem:[#allocation2 + $0x148] sm:$0xff]
        %v7792 = vld [vmem:[#allocation2 + $0x150] sm:$0xff]
        %v7793 = vld [vmem:[#allocation2 + $0x158] sm:$0xff]
        %v7794 = vld [vmem:[#allocation2 + $0x160] sm:$0xff]
        %v7795 = vld [vmem:[#allocation2 + $0x168] sm:$0xff]
        %v7796 = vld [vmem:[#allocation2 + $0x170] sm:$0xff]
        %v7797 = vld [vmem:[#allocation2 + $0x178] sm:$0xff]
        %v7798 = vld [vmem:[#allocation2 + $0x180] sm:$0xff]
        %v7799 = vld [vmem:[#allocation2 + $0x188] sm:$0xff]
        %v7800 = vld [vmem:[#allocation2 + $0x190] sm:$0xff]
        %v7801 = vld [vmem:[#allocation2 + $0x198] sm:$0xff]
        %v7802 = vld [vmem:[#allocation2 + $0x1a0] sm:$0xff]
        %v7803 = vld [vmem:[#allocation2 + $0x1a8] sm:$0xff]
        %v7804 = vld [vmem:[#allocation2 + $0x1b0] sm:$0xff]
        %v7805 = vld [vmem:[#allocation2 + $0x1b8] sm:$0xff]
        %v7806 = vld [vmem:[#allocation2 + $0x1c0] sm:$0xff]
        %v7807 = vld [vmem:[#allocation2 + $0x1c8] sm:$0xff]
        %v7808 = vld [vmem:[#allocation2 + $0x1d0] sm:$0xff]
        %v7809 = vld [vmem:[#allocation2 + $0x1d8] sm:$0xff]
        %v7810 = vld [vmem:[#allocation2 + $0x1e0] sm:$0xff]
        %v7811 = vld [vmem:[#allocation2 + $0x1e8] sm:$0xff]
        %v7812 = vld [vmem:[#allocation2 + $0x1f0] sm:$0xff]
        %v7813 = vld [vmem:[#allocation2 + $0x1f8] sm:$0xff]
        %v7814 = vpack.c.bf16 %v7754, %v7750
        %v7815 = vpack.c.bf16 %v7755, %v7751
        %v7816 = vpack.c.bf16 %v7756, %v7752
        %v7817 = vpack.c.bf16 %v7757, %v7753
        %v7818 = vpack.c.bf16 %v7762, %v7758
        %v7819 = vpack.c.bf16 %v7763, %v7759
        %v7820 = vpack.c.bf16 %v7764, %v7760
        %v7821 = vpack.c.bf16 %v7765, %v7761
        %v7822 = vpack.c.bf16 %v7770, %v7766
        %v7823 = vpack.c.bf16 %v7771, %v7767
        %v7824 = vpack.c.bf16 %v7772, %v7768
        %v7825 = vpack.c.bf16 %v7773, %v7769
        %v7826 = vpack.c.bf16 %v7778, %v7774
        %v7827 = vpack.c.bf16 %v7779, %v7775
        %v7828 = vpack.c.bf16 %v7780, %v7776
        %v7829 = vpack.c.bf16 %v7781, %v7777
        %v7830 = vpack.c.bf16 %v7786, %v7782
        %v7831 = vpack.c.bf16 %v7787, %v7783
        %v7832 = vpack.c.bf16 %v7788, %v7784
        %v7833 = vpack.c.bf16 %v7789, %v7785
        %v7834 = vpack.c.bf16 %v7794, %v7790
        %v7835 = vpack.c.bf16 %v7795, %v7791
        %v7836 = vpack.c.bf16 %v7796, %v7792
        %v7837 = vpack.c.bf16 %v7797, %v7793
        %v7838 = vpack.c.bf16 %v7802, %v7798
        %v7839 = vpack.c.bf16 %v7803, %v7799
        %v7840 = vpack.c.bf16 %v7804, %v7800
        %v7841 = vpack.c.bf16 %v7805, %v7801
        %v7842 = vpack.c.bf16 %v7810, %v7806
        %v7843 = vpack.c.bf16 %v7811, %v7807
        %v7844 = vpack.c.bf16 %v7812, %v7808
        %v7845 = vpack.c.bf16 %v7813, %v7809
        %v7846 = vld [vmem:[%s7] sm:$0xff]
        %v7847 = vld [vmem:[%s7 + $0x8] sm:$0xff]
        %v7848 = vld [vmem:[%s7 + $0x10] sm:$0xff]
        %v7849 = vld [vmem:[%s7 + $0x18] sm:$0xff]
        %v7850 = vld [vmem:[%s7 + $0x20] sm:$0xff]
        %v7851 = vld [vmem:[%s7 + $0x28] sm:$0xff]
        %v7852 = vld [vmem:[%s7 + $0x30] sm:$0xff]
        %v7853 = vld [vmem:[%s7 + $0x38] sm:$0xff]
        %v7854 = vld [vmem:[%s7 + $0x40] sm:$0xff]
        %v7855 = vld [vmem:[%s7 + $0x48] sm:$0xff]
        %v7856 = vld [vmem:[%s7 + $0x50] sm:$0xff]
        %v7857 = vld [vmem:[%s7 + $0x58] sm:$0xff]
        %v7858 = vld [vmem:[%s7 + $0x60] sm:$0xff]
        %v7859 = vld [vmem:[%s7 + $0x68] sm:$0xff]
        %v7860 = vld [vmem:[%s7 + $0x70] sm:$0xff]
        %v7861 = vld [vmem:[%s7 + $0x78] sm:$0xff]
        %v7862 = vld [vmem:[%s7 + $0x80] sm:$0xff]
        %v7863 = vld [vmem:[%s7 + $0x88] sm:$0xff]
        %v7864 = vld [vmem:[%s7 + $0x90] sm:$0xff]
        %v7865 = vld [vmem:[%s7 + $0x98] sm:$0xff]
        %v7866 = vld [vmem:[%s7 + $0xa0] sm:$0xff]
        %v7867 = vld [vmem:[%s7 + $0xa8] sm:$0xff]
        %v7868 = vld [vmem:[%s7 + $0xb0] sm:$0xff]
        %v7869 = vld [vmem:[%s7 + $0xb8] sm:$0xff]
        %v7870 = vld [vmem:[%s7 + $0xc0] sm:$0xff]
        %v7871 = vld [vmem:[%s7 + $0xc8] sm:$0xff]
        %v7872 = vld [vmem:[%s7 + $0xd0] sm:$0xff]
        %v7873 = vld [vmem:[%s7 + $0xd8] sm:$0xff]
        %v7874 = vld [vmem:[%s7 + $0xe0] sm:$0xff]
        %v7875 = vld [vmem:[%s7 + $0xe8] sm:$0xff]
        %v7876 = vld [vmem:[%s7 + $0xf0] sm:$0xff]
        %v7877 = vld [vmem:[%s7 + $0xf8] sm:$0xff]
        %v7878 = vld [vmem:[%s7 + $0x100] sm:$0xff]
        %v7879 = vld [vmem:[%s7 + $0x108] sm:$0xff]
        %v7880 = vld [vmem:[%s7 + $0x110] sm:$0xff]
        %v7881 = vld [vmem:[%s7 + $0x118] sm:$0xff]
        %v7882 = vld [vmem:[%s7 + $0x120] sm:$0xff]
        %v7883 = vld [vmem:[%s7 + $0x128] sm:$0xff]
        %v7884 = vld [vmem:[%s7 + $0x130] sm:$0xff]
        %v7885 = vld [vmem:[%s7 + $0x138] sm:$0xff]
        %v7886 = vld [vmem:[%s7 + $0x140] sm:$0xff]
        %v7887 = vld [vmem:[%s7 + $0x148] sm:$0xff]
        %v7888 = vld [vmem:[%s7 + $0x150] sm:$0xff]
        %v7889 = vld [vmem:[%s7 + $0x158] sm:$0xff]
        %v7890 = vld [vmem:[%s7 + $0x160] sm:$0xff]
        %v7891 = vld [vmem:[%s7 + $0x168] sm:$0xff]
        %v7892 = vld [vmem:[%s7 + $0x170] sm:$0xff]
        %v7893 = vld [vmem:[%s7 + $0x178] sm:$0xff]
        %v7894 = vld [vmem:[%s7 + $0x180] sm:$0xff]
        %v7895 = vld [vmem:[%s7 + $0x188] sm:$0xff]
        %v7896 = vld [vmem:[%s7 + $0x190] sm:$0xff]
        %v7897 = vld [vmem:[%s7 + $0x198] sm:$0xff]
        %v7898 = vld [vmem:[%s7 + $0x1a0] sm:$0xff]
        %v7899 = vld [vmem:[%s7 + $0x1a8] sm:$0xff]
        %v7900 = vld [vmem:[%s7 + $0x1b0] sm:$0xff]
        %v7901 = vld [vmem:[%s7 + $0x1b8] sm:$0xff]
        %v7902 = vld [vmem:[%s7 + $0x1c0] sm:$0xff]
        %v7903 = vld [vmem:[%s7 + $0x1c8] sm:$0xff]
        %v7904 = vld [vmem:[%s7 + $0x1d0] sm:$0xff]
        %v7905 = vld [vmem:[%s7 + $0x1d8] sm:$0xff]
        %v7906 = vld [vmem:[%s7 + $0x1e0] sm:$0xff]
        %v7907 = vld [vmem:[%s7 + $0x1e8] sm:$0xff]
        %v7908 = vld [vmem:[%s7 + $0x1f0] sm:$0xff]
        %v7909 = vld [vmem:[%s7 + $0x1f8] sm:$0xff]
        %v7910 = vld [vmem:[%s7 + $0x200] sm:$0xff]
        %v7911 = vld [vmem:[%s7 + $0x208] sm:$0xff]
        %v7912 = vld [vmem:[%s7 + $0x210] sm:$0xff]
        %v7913 = vld [vmem:[%s7 + $0x218] sm:$0xff]
        %v7914 = vld [vmem:[%s7 + $0x220] sm:$0xff]
        %v7915 = vld [vmem:[%s7 + $0x228] sm:$0xff]
        %v7916 = vld [vmem:[%s7 + $0x230] sm:$0xff]
        %v7917 = vld [vmem:[%s7 + $0x238] sm:$0xff]
        %v7918 = vld [vmem:[%s7 + $0x240] sm:$0xff]
        %v7919 = vld [vmem:[%s7 + $0x248] sm:$0xff]
        %v7920 = vld [vmem:[%s7 + $0x250] sm:$0xff]
        %v7921 = vld [vmem:[%s7 + $0x258] sm:$0xff]
        %v7922 = vld [vmem:[%s7 + $0x260] sm:$0xff]
        %v7923 = vld [vmem:[%s7 + $0x268] sm:$0xff]
        %v7924 = vld [vmem:[%s7 + $0x270] sm:$0xff]
        %v7925 = vld [vmem:[%s7 + $0x278] sm:$0xff]
        %v7926 = vld [vmem:[%s7 + $0x280] sm:$0xff]
        %v7927 = vld [vmem:[%s7 + $0x288] sm:$0xff]
        %v7928 = vld [vmem:[%s7 + $0x290] sm:$0xff]
        %v7929 = vld [vmem:[%s7 + $0x298] sm:$0xff]
        %v7930 = vld [vmem:[%s7 + $0x2a0] sm:$0xff]
        %v7931 = vld [vmem:[%s7 + $0x2a8] sm:$0xff]
        %v7932 = vld [vmem:[%s7 + $0x2b0] sm:$0xff]
        %v7933 = vld [vmem:[%s7 + $0x2b8] sm:$0xff]
        %v7934 = vld [vmem:[%s7 + $0x2c0] sm:$0xff]
        %v7935 = vld [vmem:[%s7 + $0x2c8] sm:$0xff]
        %v7936 = vld [vmem:[%s7 + $0x2d0] sm:$0xff]
        %v7937 = vld [vmem:[%s7 + $0x2d8] sm:$0xff]
        %v7938 = vld [vmem:[%s7 + $0x2e0] sm:$0xff]
        %v7939 = vld [vmem:[%s7 + $0x2e8] sm:$0xff]
        %v7940 = vld [vmem:[%s7 + $0x2f0] sm:$0xff]
        %v7941 = vld [vmem:[%s7 + $0x2f8] sm:$0xff]
        %v7942 = vld [vmem:[%s7 + $0x300] sm:$0xff]
        %v7943 = vld [vmem:[%s7 + $0x308] sm:$0xff]
        %v7944 = vld [vmem:[%s7 + $0x310] sm:$0xff]
        %v7945 = vld [vmem:[%s7 + $0x318] sm:$0xff]
        %v7946 = vld [vmem:[%s7 + $0x320] sm:$0xff]
        %v7947 = vld [vmem:[%s7 + $0x328] sm:$0xff]
        %v7948 = vld [vmem:[%s7 + $0x330] sm:$0xff]
        %v7949 = vld [vmem:[%s7 + $0x338] sm:$0xff]
        %v7950 = vld [vmem:[%s7 + $0x340] sm:$0xff]
        %v7951 = vld [vmem:[%s7 + $0x348] sm:$0xff]
        %v7952 = vld [vmem:[%s7 + $0x350] sm:$0xff]
        %v7953 = vld [vmem:[%s7 + $0x358] sm:$0xff]
        %v7954 = vld [vmem:[%s7 + $0x360] sm:$0xff]
        %v7955 = vld [vmem:[%s7 + $0x368] sm:$0xff]
        %v7956 = vld [vmem:[%s7 + $0x370] sm:$0xff]
        %v7957 = vld [vmem:[%s7 + $0x378] sm:$0xff]
        %v7958 = vld [vmem:[%s7 + $0x380] sm:$0xff]
        %v7959 = vld [vmem:[%s7 + $0x388] sm:$0xff]
        %v7960 = vld [vmem:[%s7 + $0x390] sm:$0xff]
        %v7961 = vld [vmem:[%s7 + $0x398] sm:$0xff]
        %v7962 = vld [vmem:[%s7 + $0x3a0] sm:$0xff]
        %v7963 = vld [vmem:[%s7 + $0x3a8] sm:$0xff]
        %v7964 = vld [vmem:[%s7 + $0x3b0] sm:$0xff]
        %v7965 = vld [vmem:[%s7 + $0x3b8] sm:$0xff]
        %v7966 = vld [vmem:[%s7 + $0x3c0] sm:$0xff]
        %v7967 = vld [vmem:[%s7 + $0x3c8] sm:$0xff]
        %v7968 = vld [vmem:[%s7 + $0x3d0] sm:$0xff]
        %v7969 = vld [vmem:[%s7 + $0x3d8] sm:$0xff]
        %v7970 = vld [vmem:[%s7 + $0x3e0] sm:$0xff]
        %v7971 = vld [vmem:[%s7 + $0x3e8] sm:$0xff]
        %v7972 = vld [vmem:[%s7 + $0x3f0] sm:$0xff]
        %v7973 = vld [vmem:[%s7 + $0x3f8] sm:$0xff]
        %v7974 = vld [vmem:[%s8] sm:$0xf]
        %v7976 = vlaneseq
        %v7977 = vshrl.u32 %v7976, 7
        %v7978 = vsub.s32 0, %v7977
        %v7979 = vrot.slane %v7974, %v7978
        %v7980 = vlaneseq
        %v7981 = vshrl.u32 %v7980, 7
        %v7982 = vsub.s32 1, %v7981
        %v7983 = vrot.slane %v7974, %v7982
        %v7984 = vlaneseq
        %v7985 = vshrl.u32 %v7984, 7
        %v7986 = vsub.s32 2, %v7985
        %v7987 = vrot.slane %v7974, %v7986
        %v7988 = vlaneseq
        %v7989 = vshrl.u32 %v7988, 7
        %v7990 = vsub.s32 3, %v7989
        %v7991 = vrot.slane %v7974, %v7990
        %v8124 = vunpack.c.l.b16 %v7846
        %v8125 = vunpack.c.h.b16 %v7846
        %v8126 = vunpack.c.l.b16 %v7847
        %v8127 = vunpack.c.h.b16 %v7847
        %v8128 = vunpack.c.l.b16 %v7848
        %v8129 = vunpack.c.h.b16 %v7848
        %v8130 = vunpack.c.l.b16 %v7849
        %v8131 = vunpack.c.h.b16 %v7849
        %v8132 = vunpack.c.l.b16 %v7850
        %v8133 = vunpack.c.h.b16 %v7850
        %v8134 = vunpack.c.l.b16 %v7851
        %v8135 = vunpack.c.h.b16 %v7851
        %v8136 = vunpack.c.l.b16 %v7852
        %v8137 = vunpack.c.h.b16 %v7852
        %v8138 = vunpack.c.l.b16 %v7853
        %v8139 = vunpack.c.h.b16 %v7853
        %v8140 = vunpack.c.l.b16 %v7854
        %v8141 = vunpack.c.h.b16 %v7854
        %v8142 = vunpack.c.l.b16 %v7855
        %v8143 = vunpack.c.h.b16 %v7855
        %v8144 = vunpack.c.l.b16 %v7856
        %v8145 = vunpack.c.h.b16 %v7856
        %v8146 = vunpack.c.l.b16 %v7857
        %v8147 = vunpack.c.h.b16 %v7857
        %v8148 = vunpack.c.l.b16 %v7858
        %v8149 = vunpack.c.h.b16 %v7858
        %v8150 = vunpack.c.l.b16 %v7859
        %v8151 = vunpack.c.h.b16 %v7859
        %v8152 = vunpack.c.l.b16 %v7860
        %v8153 = vunpack.c.h.b16 %v7860
        %v8154 = vunpack.c.l.b16 %v7861
        %v8155 = vunpack.c.h.b16 %v7861
        %v8156 = vunpack.c.l.b16 %v7862
        %v8157 = vunpack.c.h.b16 %v7862
        %v8158 = vunpack.c.l.b16 %v7863
        %v8159 = vunpack.c.h.b16 %v7863
        %v8160 = vunpack.c.l.b16 %v7864
        %v8161 = vunpack.c.h.b16 %v7864
        %v8162 = vunpack.c.l.b16 %v7865
        %v8163 = vunpack.c.h.b16 %v7865
        %v8164 = vunpack.c.l.b16 %v7866
        %v8165 = vunpack.c.h.b16 %v7866
        %v8166 = vunpack.c.l.b16 %v7867
        %v8167 = vunpack.c.h.b16 %v7867
        %v8168 = vunpack.c.l.b16 %v7868
        %v8169 = vunpack.c.h.b16 %v7868
        %v8170 = vunpack.c.l.b16 %v7869
        %v8171 = vunpack.c.h.b16 %v7869
        %v8172 = vunpack.c.l.b16 %v7870
        %v8173 = vunpack.c.h.b16 %v7870
        %v8174 = vunpack.c.l.b16 %v7871
        %v8175 = vunpack.c.h.b16 %v7871
        %v8176 = vunpack.c.l.b16 %v7872
        %v8177 = vunpack.c.h.b16 %v7872
        %v8178 = vunpack.c.l.b16 %v7873
        %v8179 = vunpack.c.h.b16 %v7873
        %v8180 = vunpack.c.l.b16 %v7874
        %v8181 = vunpack.c.h.b16 %v7874
        %v8182 = vunpack.c.l.b16 %v7875
        %v8183 = vunpack.c.h.b16 %v7875
        %v8184 = vunpack.c.l.b16 %v7876
        %v8185 = vunpack.c.h.b16 %v7876
        %v8186 = vunpack.c.l.b16 %v7877
        %v8187 = vunpack.c.h.b16 %v7877
        %v8188 = vunpack.c.l.b16 %v7878
        %v8189 = vunpack.c.h.b16 %v7878
        %v8190 = vunpack.c.l.b16 %v7879
        %v8191 = vunpack.c.h.b16 %v7879
        %v8192 = vunpack.c.l.b16 %v7880
        %v8193 = vunpack.c.h.b16 %v7880
        %v8194 = vunpack.c.l.b16 %v7881
        %v8195 = vunpack.c.h.b16 %v7881
        %v8196 = vunpack.c.l.b16 %v7882
        %v8197 = vunpack.c.h.b16 %v7882
        %v8198 = vunpack.c.l.b16 %v7883
        %v8199 = vunpack.c.h.b16 %v7883
        %v8200 = vunpack.c.l.b16 %v7884
        %v8201 = vunpack.c.h.b16 %v7884
        %v8202 = vunpack.c.l.b16 %v7885
        %v8203 = vunpack.c.h.b16 %v7885
        %v8204 = vunpack.c.l.b16 %v7886
        %v8205 = vunpack.c.h.b16 %v7886
        %v8206 = vunpack.c.l.b16 %v7887
        %v8207 = vunpack.c.h.b16 %v7887
        %v8208 = vunpack.c.l.b16 %v7888
        %v8209 = vunpack.c.h.b16 %v7888
        %v8210 = vunpack.c.l.b16 %v7889
        %v8211 = vunpack.c.h.b16 %v7889
        %v8212 = vunpack.c.l.b16 %v7890
        %v8213 = vunpack.c.h.b16 %v7890
        %v8214 = vunpack.c.l.b16 %v7891
        %v8215 = vunpack.c.h.b16 %v7891
        %v8216 = vunpack.c.l.b16 %v7892
        %v8217 = vunpack.c.h.b16 %v7892
        %v8218 = vunpack.c.l.b16 %v7893
        %v8219 = vunpack.c.h.b16 %v7893
        %v8220 = vunpack.c.l.b16 %v7894
        %v8221 = vunpack.c.h.b16 %v7894
        %v8222 = vunpack.c.l.b16 %v7895
        %v8223 = vunpack.c.h.b16 %v7895
        %v8224 = vunpack.c.l.b16 %v7896
        %v8225 = vunpack.c.h.b16 %v7896
        %v8226 = vunpack.c.l.b16 %v7897
        %v8227 = vunpack.c.h.b16 %v7897
        %v8228 = vunpack.c.l.b16 %v7898
        %v8229 = vunpack.c.h.b16 %v7898
        %v8230 = vunpack.c.l.b16 %v7899
        %v8231 = vunpack.c.h.b16 %v7899
        %v8232 = vunpack.c.l.b16 %v7900
        %v8233 = vunpack.c.h.b16 %v7900
        %v8234 = vunpack.c.l.b16 %v7901
        %v8235 = vunpack.c.h.b16 %v7901
        %v8236 = vunpack.c.l.b16 %v7902
        %v8237 = vunpack.c.h.b16 %v7902
        %v8238 = vunpack.c.l.b16 %v7903
        %v8239 = vunpack.c.h.b16 %v7903
        %v8240 = vunpack.c.l.b16 %v7904
        %v8241 = vunpack.c.h.b16 %v7904
        %v8242 = vunpack.c.l.b16 %v7905
        %v8243 = vunpack.c.h.b16 %v7905
        %v8244 = vunpack.c.l.b16 %v7906
        %v8245 = vunpack.c.h.b16 %v7906
        %v8246 = vunpack.c.l.b16 %v7907
        %v8247 = vunpack.c.h.b16 %v7907
        %v8248 = vunpack.c.l.b16 %v7908
        %v8249 = vunpack.c.h.b16 %v7908
        %v8250 = vunpack.c.l.b16 %v7909
        %v8251 = vunpack.c.h.b16 %v7909
        %v8252 = vunpack.c.l.b16 %v7910
        %v8253 = vunpack.c.h.b16 %v7910
        %v8254 = vunpack.c.l.b16 %v7911
        %v8255 = vunpack.c.h.b16 %v7911
        %v8256 = vunpack.c.l.b16 %v7912
        %v8257 = vunpack.c.h.b16 %v7912
        %v8258 = vunpack.c.l.b16 %v7913
        %v8259 = vunpack.c.h.b16 %v7913
        %v8260 = vunpack.c.l.b16 %v7914
        %v8261 = vunpack.c.h.b16 %v7914
        %v8262 = vunpack.c.l.b16 %v7915
        %v8263 = vunpack.c.h.b16 %v7915
        %v8264 = vunpack.c.l.b16 %v7916
        %v8265 = vunpack.c.h.b16 %v7916
        %v8266 = vunpack.c.l.b16 %v7917
        %v8267 = vunpack.c.h.b16 %v7917
        %v8268 = vunpack.c.l.b16 %v7918
        %v8269 = vunpack.c.h.b16 %v7918
        %v8270 = vunpack.c.l.b16 %v7919
        %v8271 = vunpack.c.h.b16 %v7919
        %v8272 = vunpack.c.l.b16 %v7920
        %v8273 = vunpack.c.h.b16 %v7920
        %v8274 = vunpack.c.l.b16 %v7921
        %v8275 = vunpack.c.h.b16 %v7921
        %v8276 = vunpack.c.l.b16 %v7922
        %v8277 = vunpack.c.h.b16 %v7922
        %v8278 = vunpack.c.l.b16 %v7923
        %v8279 = vunpack.c.h.b16 %v7923
        %v8280 = vunpack.c.l.b16 %v7924
        %v8281 = vunpack.c.h.b16 %v7924
        %v8282 = vunpack.c.l.b16 %v7925
        %v8283 = vunpack.c.h.b16 %v7925
        %v8284 = vunpack.c.l.b16 %v7926
        %v8285 = vunpack.c.h.b16 %v7926
        %v8286 = vunpack.c.l.b16 %v7927
        %v8287 = vunpack.c.h.b16 %v7927
        %v8288 = vunpack.c.l.b16 %v7928
        %v8289 = vunpack.c.h.b16 %v7928
        %v8290 = vunpack.c.l.b16 %v7929
        %v8291 = vunpack.c.h.b16 %v7929
        %v8292 = vunpack.c.l.b16 %v7930
        %v8293 = vunpack.c.h.b16 %v7930
        %v8294 = vunpack.c.l.b16 %v7931
        %v8295 = vunpack.c.h.b16 %v7931
        %v8296 = vunpack.c.l.b16 %v7932
        %v8297 = vunpack.c.h.b16 %v7932
        %v8298 = vunpack.c.l.b16 %v7933
        %v8299 = vunpack.c.h.b16 %v7933
        %v8300 = vunpack.c.l.b16 %v7934
        %v8301 = vunpack.c.h.b16 %v7934
        %v8302 = vunpack.c.l.b16 %v7935
        %v8303 = vunpack.c.h.b16 %v7935
        %v8304 = vunpack.c.l.b16 %v7936
        %v8305 = vunpack.c.h.b16 %v7936
        %v8306 = vunpack.c.l.b16 %v7937
        %v8307 = vunpack.c.h.b16 %v7937
        %v8308 = vunpack.c.l.b16 %v7938
        %v8309 = vunpack.c.h.b16 %v7938
        %v8310 = vunpack.c.l.b16 %v7939
        %v8311 = vunpack.c.h.b16 %v7939
        %v8312 = vunpack.c.l.b16 %v7940
        %v8313 = vunpack.c.h.b16 %v7940
        %v8314 = vunpack.c.l.b16 %v7941
        %v8315 = vunpack.c.h.b16 %v7941
        %v8316 = vunpack.c.l.b16 %v7942
        %v8317 = vunpack.c.h.b16 %v7942
        %v8318 = vunpack.c.l.b16 %v7943
        %v8319 = vunpack.c.h.b16 %v7943
        %v8320 = vunpack.c.l.b16 %v7944
        %v8321 = vunpack.c.h.b16 %v7944
        %v8322 = vunpack.c.l.b16 %v7945
        %v8323 = vunpack.c.h.b16 %v7945
        %v8324 = vunpack.c.l.b16 %v7946
        %v8325 = vunpack.c.h.b16 %v7946
        %v8326 = vunpack.c.l.b16 %v7947
        %v8327 = vunpack.c.h.b16 %v7947
        %v8328 = vunpack.c.l.b16 %v7948
        %v8329 = vunpack.c.h.b16 %v7948
        %v8330 = vunpack.c.l.b16 %v7949
        %v8331 = vunpack.c.h.b16 %v7949
        %v8332 = vunpack.c.l.b16 %v7950
        %v8333 = vunpack.c.h.b16 %v7950
        %v8334 = vunpack.c.l.b16 %v7951
        %v8335 = vunpack.c.h.b16 %v7951
        %v8336 = vunpack.c.l.b16 %v7952
        %v8337 = vunpack.c.h.b16 %v7952
        %v8338 = vunpack.c.l.b16 %v7953
        %v8339 = vunpack.c.h.b16 %v7953
        %v8340 = vunpack.c.l.b16 %v7954
        %v8341 = vunpack.c.h.b16 %v7954
        %v8342 = vunpack.c.l.b16 %v7955
        %v8343 = vunpack.c.h.b16 %v7955
        %v8344 = vunpack.c.l.b16 %v7956
        %v8345 = vunpack.c.h.b16 %v7956
        %v8346 = vunpack.c.l.b16 %v7957
        %v8347 = vunpack.c.h.b16 %v7957
        %v8348 = vunpack.c.l.b16 %v7958
        %v8349 = vunpack.c.h.b16 %v7958
        %v8350 = vunpack.c.l.b16 %v7959
        %v8351 = vunpack.c.h.b16 %v7959
        %v8352 = vunpack.c.l.b16 %v7960
        %v8353 = vunpack.c.h.b16 %v7960
        %v8354 = vunpack.c.l.b16 %v7961
        %v8355 = vunpack.c.h.b16 %v7961
        %v8356 = vunpack.c.l.b16 %v7962
        %v8357 = vunpack.c.h.b16 %v7962
        %v8358 = vunpack.c.l.b16 %v7963
        %v8359 = vunpack.c.h.b16 %v7963
        %v8360 = vunpack.c.l.b16 %v7964
        %v8361 = vunpack.c.h.b16 %v7964
        %v8362 = vunpack.c.l.b16 %v7965
        %v8363 = vunpack.c.h.b16 %v7965
        %v8364 = vunpack.c.l.b16 %v7966
        %v8365 = vunpack.c.h.b16 %v7966
        %v8366 = vunpack.c.l.b16 %v7967
        %v8367 = vunpack.c.h.b16 %v7967
        %v8368 = vunpack.c.l.b16 %v7968
        %v8369 = vunpack.c.h.b16 %v7968
        %v8370 = vunpack.c.l.b16 %v7969
        %v8371 = vunpack.c.h.b16 %v7969
        %v8372 = vunpack.c.l.b16 %v7970
        %v8373 = vunpack.c.h.b16 %v7970
        %v8374 = vunpack.c.l.b16 %v7971
        %v8375 = vunpack.c.h.b16 %v7971
        %v8376 = vunpack.c.l.b16 %v7972
        %v8377 = vunpack.c.h.b16 %v7972
        %v8378 = vunpack.c.l.b16 %v7973
        %v8379 = vunpack.c.h.b16 %v7973
        %v8380 = vpack.c.b16 %v8128, %v8124
        %v8381 = vpack.c.b16 %v8129, %v8125
        %v8382 = vpack.c.b16 %v8130, %v8126
        %v8383 = vpack.c.b16 %v8131, %v8127
        %v8384 = vpack.c.b16 %v8136, %v8132
        %v8385 = vpack.c.b16 %v8137, %v8133
        %v8386 = vpack.c.b16 %v8138, %v8134
        %v8387 = vpack.c.b16 %v8139, %v8135
        %v8388 = vpack.c.b16 %v8144, %v8140
        %v8389 = vpack.c.b16 %v8145, %v8141
        %v8390 = vpack.c.b16 %v8146, %v8142
        %v8391 = vpack.c.b16 %v8147, %v8143
        %v8392 = vpack.c.b16 %v8152, %v8148
        %v8393 = vpack.c.b16 %v8153, %v8149
        %v8394 = vpack.c.b16 %v8154, %v8150
        %v8395 = vpack.c.b16 %v8155, %v8151
        %v8396 = vpack.c.b16 %v8160, %v8156
        %v8397 = vpack.c.b16 %v8161, %v8157
        %v8398 = vpack.c.b16 %v8162, %v8158
        %v8399 = vpack.c.b16 %v8163, %v8159
        %v8400 = vpack.c.b16 %v8168, %v8164
        %v8401 = vpack.c.b16 %v8169, %v8165
        %v8402 = vpack.c.b16 %v8170, %v8166
        %v8403 = vpack.c.b16 %v8171, %v8167
        %v8404 = vpack.c.b16 %v8176, %v8172
        %v8405 = vpack.c.b16 %v8177, %v8173
        %v8406 = vpack.c.b16 %v8178, %v8174
        %v8407 = vpack.c.b16 %v8179, %v8175
        %v8408 = vpack.c.b16 %v8184, %v8180
        %v8409 = vpack.c.b16 %v8185, %v8181
        %v8410 = vpack.c.b16 %v8186, %v8182
        %v8411 = vpack.c.b16 %v8187, %v8183
        %v8412 = vpack.c.b16 %v8192, %v8188
        %v8413 = vpack.c.b16 %v8193, %v8189
        %v8414 = vpack.c.b16 %v8194, %v8190
        %v8415 = vpack.c.b16 %v8195, %v8191
        %v8416 = vpack.c.b16 %v8200, %v8196
        %v8417 = vpack.c.b16 %v8201, %v8197
        %v8418 = vpack.c.b16 %v8202, %v8198
        %v8419 = vpack.c.b16 %v8203, %v8199
        %v8420 = vpack.c.b16 %v8208, %v8204
        %v8421 = vpack.c.b16 %v8209, %v8205
        %v8422 = vpack.c.b16 %v8210, %v8206
        %v8423 = vpack.c.b16 %v8211, %v8207
        %v8424 = vpack.c.b16 %v8216, %v8212
        %v8425 = vpack.c.b16 %v8217, %v8213
        %v8426 = vpack.c.b16 %v8218, %v8214
        %v8427 = vpack.c.b16 %v8219, %v8215
        %v8428 = vpack.c.b16 %v8224, %v8220
        %v8429 = vpack.c.b16 %v8225, %v8221
        %v8430 = vpack.c.b16 %v8226, %v8222
        %v8431 = vpack.c.b16 %v8227, %v8223
        %v8432 = vpack.c.b16 %v8232, %v8228
        %v8433 = vpack.c.b16 %v8233, %v8229
        %v8434 = vpack.c.b16 %v8234, %v8230
        %v8435 = vpack.c.b16 %v8235, %v8231
        %v8436 = vpack.c.b16 %v8240, %v8236
        %v8437 = vpack.c.b16 %v8241, %v8237
        %v8438 = vpack.c.b16 %v8242, %v8238
        %v8439 = vpack.c.b16 %v8243, %v8239
        %v8440 = vpack.c.b16 %v8248, %v8244
        %v8441 = vpack.c.b16 %v8249, %v8245
        %v8442 = vpack.c.b16 %v8250, %v8246
        %v8443 = vpack.c.b16 %v8251, %v8247
        %v8444 = vpack.c.b16 %v8256, %v8252
        %v8445 = vpack.c.b16 %v8257, %v8253
        %v8446 = vpack.c.b16 %v8258, %v8254
        %v8447 = vpack.c.b16 %v8259, %v8255
        %v8448 = vpack.c.b16 %v8264, %v8260
        %v8449 = vpack.c.b16 %v8265, %v8261
        %v8450 = vpack.c.b16 %v8266, %v8262
        %v8451 = vpack.c.b16 %v8267, %v8263
        %v8452 = vpack.c.b16 %v8272, %v8268
        %v8453 = vpack.c.b16 %v8273, %v8269
        %v8454 = vpack.c.b16 %v8274, %v8270
        %v8455 = vpack.c.b16 %v8275, %v8271
        %v8456 = vpack.c.b16 %v8280, %v8276
        %v8457 = vpack.c.b16 %v8281, %v8277
        %v8458 = vpack.c.b16 %v8282, %v8278
        %v8459 = vpack.c.b16 %v8283, %v8279
        %v8460 = vpack.c.b16 %v8288, %v8284
        %v8461 = vpack.c.b16 %v8289, %v8285
        %v8462 = vpack.c.b16 %v8290, %v8286
        %v8463 = vpack.c.b16 %v8291, %v8287
        %v8464 = vpack.c.b16 %v8296, %v8292
        %v8465 = vpack.c.b16 %v8297, %v8293
        %v8466 = vpack.c.b16 %v8298, %v8294
        %v8467 = vpack.c.b16 %v8299, %v8295
        %v8468 = vpack.c.b16 %v8304, %v8300
        %v8469 = vpack.c.b16 %v8305, %v8301
        %v8470 = vpack.c.b16 %v8306, %v8302
        %v8471 = vpack.c.b16 %v8307, %v8303
        %v8472 = vpack.c.b16 %v8312, %v8308
        %v8473 = vpack.c.b16 %v8313, %v8309
        %v8474 = vpack.c.b16 %v8314, %v8310
        %v8475 = vpack.c.b16 %v8315, %v8311
        %v8476 = vpack.c.b16 %v8320, %v8316
        %v8477 = vpack.c.b16 %v8321, %v8317
        %v8478 = vpack.c.b16 %v8322, %v8318
        %v8479 = vpack.c.b16 %v8323, %v8319
        %v8480 = vpack.c.b16 %v8328, %v8324
        %v8481 = vpack.c.b16 %v8329, %v8325
        %v8482 = vpack.c.b16 %v8330, %v8326
        %v8483 = vpack.c.b16 %v8331, %v8327
        %v8484 = vpack.c.b16 %v8336, %v8332
        %v8485 = vpack.c.b16 %v8337, %v8333
        %v8486 = vpack.c.b16 %v8338, %v8334
        %v8487 = vpack.c.b16 %v8339, %v8335
        %v8488 = vpack.c.b16 %v8344, %v8340
        %v8489 = vpack.c.b16 %v8345, %v8341
        %v8490 = vpack.c.b16 %v8346, %v8342
        %v8491 = vpack.c.b16 %v8347, %v8343
        %v8492 = vpack.c.b16 %v8352, %v8348
        %v8493 = vpack.c.b16 %v8353, %v8349
        %v8494 = vpack.c.b16 %v8354, %v8350
        %v8495 = vpack.c.b16 %v8355, %v8351
        %v8496 = vpack.c.b16 %v8360, %v8356
        %v8497 = vpack.c.b16 %v8361, %v8357
        %v8498 = vpack.c.b16 %v8362, %v8358
        %v8499 = vpack.c.b16 %v8363, %v8359
        %v8500 = vpack.c.b16 %v8368, %v8364
        %v8501 = vpack.c.b16 %v8369, %v8365
        %v8502 = vpack.c.b16 %v8370, %v8366
        %v8503 = vpack.c.b16 %v8371, %v8367
        %v8504 = vpack.c.b16 %v8376, %v8372
        %v8505 = vpack.c.b16 %v8377, %v8373
        %v8506 = vpack.c.b16 %v8378, %v8374
        %v8507 = vpack.c.b16 %v8379, %v8375
        %8636 = vmatprep.subr.bf16.mxu0 %v8409
        %8637 = vmatpush1.bf16.msra.mxu0 %v8408
        %8638 = vmatprep.subr.bf16.mxu0 %v8405
        %8639 = vmatpush1.bf16.msra.mxu0 %v8404
        %8640 = vmatprep.subr.bf16.mxu0 %v8401
        %8641 = vmatpush1.bf16.msra.mxu0 %v8400
        %8642 = vmatprep.subr.bf16.mxu0 %v8397
        %8643 = vmatpush1.bf16.msra.mxu0 %v8396
        %8644 = vmatprep.subr.bf16.mxu0 %v8393
        %8645 = vmatpush1.bf16.msra.mxu0 %v8392
        %8646 = vmatprep.subr.bf16.mxu0 %v8389
        %8647 = vmatpush1.bf16.msra.mxu0 %v8388
        %8648 = vmatprep.subr.bf16.mxu0 %v8385
        %8649 = vmatpush1.bf16.msra.mxu0 %v8384
        %8650 = vmatprep.subr.bf16.mxu0 %v8381
        %8651 = vmatpush1.bf16.msra.mxu0 %v8380
        %8652 = vmatprep.subr.bf16.mxu0 %v8441
        %8653 = vmatpush2.bf16.msra.mxu0 %v8440
        %8654 = vmatprep.subr.bf16.mxu0 %v8437
        %8655 = vmatpush2.bf16.msra.mxu0 %v8436
        %8656 = vmatprep.subr.bf16.mxu0 %v8433
        %8657 = vmatpush2.bf16.msra.mxu0 %v8432
        %8658 = vmatprep.subr.bf16.mxu0 %v8429
        %8659 = vmatpush2.bf16.msra.mxu0 %v8428
        %8660 = vmatprep.subr.bf16.mxu0 %v8425
        %8661 = vmatpush2.bf16.msra.mxu0 %v8424
        %8662 = vmatprep.subr.bf16.mxu0 %v8421
        %8663 = vmatpush2.bf16.msra.mxu0 %v8420
        %8664 = vmatprep.subr.bf16.mxu0 %v8417
        %8665 = vmatpush2.bf16.msra.mxu0 %v8416
        %8666 = vmatprep.subr.bf16.mxu0 %v8413
        %8667 = vmatpush2.bf16.msra.mxu0 %v8412
        %8668 = vmatprep.mubr.bf16.mxu0 %v7815
        %8669 = vmatmul.mubr.bf16.gmra.mxu0 %v7814
        %v8670 = vpop.f32.mrf.mxu0
        %v8671 = vadd.f32 %v7979, %v8670
        %v8672 = vpop.f32.mrf.mxu0
        %v8673 = vadd.f32 %v7983, %v8672
        %v8674 = vpop.f32.mrf.mxu0
        %v8675 = vadd.f32 %v7979, %v8674
        %v8676 = vpop.f32.mrf.mxu0
        %v8677 = vadd.f32 %v7983, %v8676
        %8678 = vmatprep.mubr.bf16.mxu0 %v7819
        %8679 = vmatmul.mubr.bf16.gmra.mxu0 %v7818
        %v8680 = vpop.f32.mrf.mxu0
        %v8681 = vadd.f32 %v7979, %v8680
        %v8682 = vpop.f32.mrf.mxu0
        %v8683 = vadd.f32 %v7983, %v8682
        %v8684 = vpop.f32.mrf.mxu0
        %v8685 = vadd.f32 %v7979, %v8684
        %v8686 = vpop.f32.mrf.mxu0
        %v8687 = vadd.f32 %v7983, %v8686
        %8688 = vmatprep.mubr.bf16.mxu0 %v7823
        %8689 = vmatmul.mubr.bf16.gmra.mxu0 %v7822
        %v8690 = vpop.f32.mrf.mxu0
        %v8691 = vadd.f32 %v7979, %v8690
        %v8692 = vpop.f32.mrf.mxu0
        %v8693 = vadd.f32 %v7983, %v8692
        %v8694 = vpop.f32.mrf.mxu0
        %v8695 = vadd.f32 %v7979, %v8694
        %v8696 = vpop.f32.mrf.mxu0
        %v8697 = vadd.f32 %v7983, %v8696
        %8698 = vmatprep.mubr.bf16.mxu0 %v7827
        %8699 = vmatmul.mubr.bf16.gmra.mxu0 %v7826
        %v8700 = vpop.f32.mrf.mxu0
        %v8701 = vadd.f32 %v7979, %v8700
        %v8702 = vpop.f32.mrf.mxu0
        %v8703 = vadd.f32 %v7983, %v8702
        %v8704 = vpop.f32.mrf.mxu0
        %v8705 = vadd.f32 %v7979, %v8704
        %v8706 = vpop.f32.mrf.mxu0
        %v8707 = vadd.f32 %v7983, %v8706
        %8708 = vmatprep.mubr.bf16.mxu0 %v7831
        %8709 = vmatmul.mubr.bf16.gmra.mxu0 %v7830
        %v8710 = vpop.f32.mrf.mxu0
        %v8711 = vadd.f32 %v7979, %v8710
        %v8712 = vpop.f32.mrf.mxu0
        %v8713 = vadd.f32 %v7983, %v8712
        %v8714 = vpop.f32.mrf.mxu0
        %v8715 = vadd.f32 %v7979, %v8714
        %v8716 = vpop.f32.mrf.mxu0
        %v8717 = vadd.f32 %v7983, %v8716
        %8718 = vmatprep.mubr.bf16.mxu0 %v7835
        %8719 = vmatmul.mubr.bf16.gmra.mxu0 %v7834
        %v8720 = vpop.f32.mrf.mxu0
        %v8721 = vadd.f32 %v7979, %v8720
        %v8722 = vpop.f32.mrf.mxu0
        %v8723 = vadd.f32 %v7983, %v8722
        %v8724 = vpop.f32.mrf.mxu0
        %v8725 = vadd.f32 %v7979, %v8724
        %v8726 = vpop.f32.mrf.mxu0
        %v8727 = vadd.f32 %v7983, %v8726
        %8728 = vmatprep.mubr.bf16.mxu0 %v7839
        %8729 = vmatmul.mubr.bf16.gmra.mxu0 %v7838
        %v8730 = vpop.f32.mrf.mxu0
        %v8731 = vadd.f32 %v7979, %v8730
        %v8732 = vpop.f32.mrf.mxu0
        %v8733 = vadd.f32 %v7983, %v8732
        %v8734 = vpop.f32.mrf.mxu0
        %v8735 = vadd.f32 %v7979, %v8734
        %v8736 = vpop.f32.mrf.mxu0
        %v8737 = vadd.f32 %v7983, %v8736
        %8738 = vmatprep.mubr.bf16.mxu0 %v7843
        %8739 = vmatmul.mubr.bf16.gmra.mxu0 %v7842
        %v8740 = vpop.f32.mrf.mxu0
        %v8741 = vadd.f32 %v7979, %v8740
        %v8742 = vpop.f32.mrf.mxu0
        %v8743 = vadd.f32 %v7983, %v8742
        %v8744 = vpop.f32.mrf.mxu0
        %v8745 = vadd.f32 %v7979, %v8744
        %v8746 = vpop.f32.mrf.mxu0
        %v8747 = vadd.f32 %v7983, %v8746
        %8748 = vdwg.mxu0
        %8749 = vmatprep.subr.bf16.mxu0 %v8473
        %8750 = vmatpush1.bf16.msra.mxu0 %v8472
        %8751 = vmatprep.subr.bf16.mxu0 %v8469
        %8752 = vmatpush1.bf16.msra.mxu0 %v8468
        %8753 = vmatprep.subr.bf16.mxu0 %v8465
        %8754 = vmatpush1.bf16.msra.mxu0 %v8464
        %8755 = vmatprep.subr.bf16.mxu0 %v8461
        %8756 = vmatpush1.bf16.msra.mxu0 %v8460
        %8757 = vmatprep.subr.bf16.mxu0 %v8457
        %8758 = vmatpush1.bf16.msra.mxu0 %v8456
        %8759 = vmatprep.subr.bf16.mxu0 %v8453
        %8760 = vmatpush1.bf16.msra.mxu0 %v8452
        %8761 = vmatprep.subr.bf16.mxu0 %v8449
        %8762 = vmatpush1.bf16.msra.mxu0 %v8448
        %8763 = vmatprep.subr.bf16.mxu0 %v8445
        %8764 = vmatpush1.bf16.msra.mxu0 %v8444
        %8765 = vmatprep.subr.bf16.mxu0 %v8505
        %8766 = vmatpush2.bf16.msra.mxu0 %v8504
        %8767 = vmatprep.subr.bf16.mxu0 %v8501
        %8768 = vmatpush2.bf16.msra.mxu0 %v8500
        %8769 = vmatprep.subr.bf16.mxu0 %v8497
        %8770 = vmatpush2.bf16.msra.mxu0 %v8496
        %8771 = vmatprep.subr.bf16.mxu0 %v8493
        %8772 = vmatpush2.bf16.msra.mxu0 %v8492
        %8773 = vmatprep.subr.bf16.mxu0 %v8489
        %8774 = vmatpush2.bf16.msra.mxu0 %v8488
        %8775 = vmatprep.subr.bf16.mxu0 %v8485
        %8776 = vmatpush2.bf16.msra.mxu0 %v8484
        %8777 = vmatprep.subr.bf16.mxu0 %v8481
        %8778 = vmatpush2.bf16.msra.mxu0 %v8480
        %8779 = vmatprep.subr.bf16.mxu0 %v8477
        %8780 = vmatpush2.bf16.msra.mxu0 %v8476
        %8781 = vmatprep.mubr.bf16.mxu0 %v7817
        %8782 = vmatmul.mubr.bf16.gmra.mxu0 %v7816
        %v8783 = vpop.f32.mrf.mxu0
        %v8784 = vadd.f32 %v8671, %v8783
        %v8785 = vpop.f32.mrf.mxu0
        %v8786 = vadd.f32 %v8673, %v8785
        %v8787 = vpop.f32.mrf.mxu0
        %v8788 = vadd.f32 %v8675, %v8787
        %v8789 = vpop.f32.mrf.mxu0
        %v8790 = vadd.f32 %v8677, %v8789
        %8791 = vmatprep.mubr.bf16.mxu0 %v7821
        %8792 = vmatmul.mubr.bf16.gmra.mxu0 %v7820
        %v8793 = vpop.f32.mrf.mxu0
        %v8794 = vadd.f32 %v8681, %v8793
        %v8795 = vpop.f32.mrf.mxu0
        %v8796 = vadd.f32 %v8683, %v8795
        %v8797 = vpop.f32.mrf.mxu0
        %v8798 = vadd.f32 %v8685, %v8797
        %v8799 = vpop.f32.mrf.mxu0
        %v8800 = vadd.f32 %v8687, %v8799
        %8801 = vmatprep.mubr.bf16.mxu0 %v7825
        %8802 = vmatmul.mubr.bf16.gmra.mxu0 %v7824
        %v8803 = vpop.f32.mrf.mxu0
        %v8804 = vadd.f32 %v8691, %v8803
        %v8805 = vpop.f32.mrf.mxu0
        %v8806 = vadd.f32 %v8693, %v8805
        %v8807 = vpop.f32.mrf.mxu0
        %v8808 = vadd.f32 %v8695, %v8807
        %v8809 = vpop.f32.mrf.mxu0
        %v8810 = vadd.f32 %v8697, %v8809
        %8811 = vmatprep.mubr.bf16.mxu0 %v7829
        %8812 = vmatmul.mubr.bf16.gmra.mxu0 %v7828
        %v8813 = vpop.f32.mrf.mxu0
        %v8814 = vadd.f32 %v8701, %v8813
        %v8815 = vpop.f32.mrf.mxu0
        %v8816 = vadd.f32 %v8703, %v8815
        %v8817 = vpop.f32.mrf.mxu0
        %v8818 = vadd.f32 %v8705, %v8817
        %v8819 = vpop.f32.mrf.mxu0
        %v8820 = vadd.f32 %v8707, %v8819
        %8821 = vmatprep.mubr.bf16.mxu0 %v7833
        %8822 = vmatmul.mubr.bf16.gmra.mxu0 %v7832
        %v8823 = vpop.f32.mrf.mxu0
        %v8824 = vadd.f32 %v8711, %v8823
        %v8825 = vpop.f32.mrf.mxu0
        %v8826 = vadd.f32 %v8713, %v8825
        %v8827 = vpop.f32.mrf.mxu0
        %v8828 = vadd.f32 %v8715, %v8827
        %v8829 = vpop.f32.mrf.mxu0
        %v8830 = vadd.f32 %v8717, %v8829
        %8831 = vmatprep.mubr.bf16.mxu0 %v7837
        %8832 = vmatmul.mubr.bf16.gmra.mxu0 %v7836
        %v8833 = vpop.f32.mrf.mxu0
        %v8834 = vadd.f32 %v8721, %v8833
        %v8835 = vpop.f32.mrf.mxu0
        %v8836 = vadd.f32 %v8723, %v8835
        %v8837 = vpop.f32.mrf.mxu0
        %v8838 = vadd.f32 %v8725, %v8837
        %v8839 = vpop.f32.mrf.mxu0
        %v8840 = vadd.f32 %v8727, %v8839
        %8841 = vmatprep.mubr.bf16.mxu0 %v7841
        %8842 = vmatmul.mubr.bf16.gmra.mxu0 %v7840
        %v8843 = vpop.f32.mrf.mxu0
        %v8844 = vadd.f32 %v8731, %v8843
        %v8845 = vpop.f32.mrf.mxu0
        %v8846 = vadd.f32 %v8733, %v8845
        %v8847 = vpop.f32.mrf.mxu0
        %v8848 = vadd.f32 %v8735, %v8847
        %v8849 = vpop.f32.mrf.mxu0
        %v8850 = vadd.f32 %v8737, %v8849
        %8851 = vmatprep.mubr.bf16.mxu0 %v7845
        %8852 = vmatmul.mubr.bf16.gmra.mxu0 %v7844
        %v8853 = vpop.f32.mrf.mxu0
        %v8854 = vadd.f32 %v8741, %v8853
        %v8855 = vpop.f32.mrf.mxu0
        %v8856 = vadd.f32 %v8743, %v8855
        %v8857 = vpop.f32.mrf.mxu0
        %v8858 = vadd.f32 %v8745, %v8857
        %v8859 = vpop.f32.mrf.mxu0
        %v8860 = vadd.f32 %v8747, %v8859
        %8861 = vdwg.mxu0
        %8862 = vmatprep.subr.bf16.mxu0 %v8411
        %8863 = vmatpush1.bf16.msra.mxu0 %v8410
        %8864 = vmatprep.subr.bf16.mxu0 %v8407
        %8865 = vmatpush1.bf16.msra.mxu0 %v8406
        %8866 = vmatprep.subr.bf16.mxu0 %v8403
        %8867 = vmatpush1.bf16.msra.mxu0 %v8402
        %8868 = vmatprep.subr.bf16.mxu0 %v8399
        %8869 = vmatpush1.bf16.msra.mxu0 %v8398
        %8870 = vmatprep.subr.bf16.mxu0 %v8395
        %8871 = vmatpush1.bf16.msra.mxu0 %v8394
        %8872 = vmatprep.subr.bf16.mxu0 %v8391
        %8873 = vmatpush1.bf16.msra.mxu0 %v8390
        %8874 = vmatprep.subr.bf16.mxu0 %v8387
        %8875 = vmatpush1.bf16.msra.mxu0 %v8386
        %8876 = vmatprep.subr.bf16.mxu0 %v8383
        %8877 = vmatpush1.bf16.msra.mxu0 %v8382
        %8878 = vmatprep.subr.bf16.mxu0 %v8443
        %8879 = vmatpush2.bf16.msra.mxu0 %v8442
        %8880 = vmatprep.subr.bf16.mxu0 %v8439
        %8881 = vmatpush2.bf16.msra.mxu0 %v8438
        %8882 = vmatprep.subr.bf16.mxu0 %v8435
        %8883 = vmatpush2.bf16.msra.mxu0 %v8434
        %8884 = vmatprep.subr.bf16.mxu0 %v8431
        %8885 = vmatpush2.bf16.msra.mxu0 %v8430
        %8886 = vmatprep.subr.bf16.mxu0 %v8427
        %8887 = vmatpush2.bf16.msra.mxu0 %v8426
        %8888 = vmatprep.subr.bf16.mxu0 %v8423
        %8889 = vmatpush2.bf16.msra.mxu0 %v8422
        %8890 = vmatprep.subr.bf16.mxu0 %v8419
        %8891 = vmatpush2.bf16.msra.mxu0 %v8418
        %8892 = vmatprep.subr.bf16.mxu0 %v8415
        %8893 = vmatpush2.bf16.msra.mxu0 %v8414
        %8894 = vmatprep.mubr.bf16.mxu0 %v7815
        %8895 = vmatmul.mubr.bf16.gmra.mxu0 %v7814
        %v8896 = vpop.f32.mrf.mxu0
        %v8897 = vadd.f32 %v7987, %v8896
        %v8898 = vpop.f32.mrf.mxu0
        %v8899 = vadd.f32 %v7991, %v8898
        %v8900 = vpop.f32.mrf.mxu0
        %v8901 = vadd.f32 %v7987, %v8900
        %v8902 = vpop.f32.mrf.mxu0
        %v8903 = vadd.f32 %v7991, %v8902
        %8904 = vmatprep.mubr.bf16.mxu0 %v7819
        %8905 = vmatmul.mubr.bf16.gmra.mxu0 %v7818
        %v8906 = vpop.f32.mrf.mxu0
        %v8907 = vadd.f32 %v7987, %v8906
        %v8908 = vpop.f32.mrf.mxu0
        %v8909 = vadd.f32 %v7991, %v8908
        %v8910 = vpop.f32.mrf.mxu0
        %v8911 = vadd.f32 %v7987, %v8910
        %v8912 = vpop.f32.mrf.mxu0
        %v8913 = vadd.f32 %v7991, %v8912
        %8914 = vmatprep.mubr.bf16.mxu0 %v7823
        %8915 = vmatmul.mubr.bf16.gmra.mxu0 %v7822
        %v8916 = vpop.f32.mrf.mxu0
        %v8917 = vadd.f32 %v7987, %v8916
        %v8918 = vpop.f32.mrf.mxu0
        %v8919 = vadd.f32 %v7991, %v8918
        %v8920 = vpop.f32.mrf.mxu0
        %v8921 = vadd.f32 %v7987, %v8920
        %v8922 = vpop.f32.mrf.mxu0
        %v8923 = vadd.f32 %v7991, %v8922
        %8924 = vmatprep.mubr.bf16.mxu0 %v7827
        %8925 = vmatmul.mubr.bf16.gmra.mxu0 %v7826
        %v8926 = vpop.f32.mrf.mxu0
        %v8927 = vadd.f32 %v7987, %v8926
        %v8928 = vpop.f32.mrf.mxu0
        %v8929 = vadd.f32 %v7991, %v8928
        %v8930 = vpop.f32.mrf.mxu0
        %v8931 = vadd.f32 %v7987, %v8930
        %v8932 = vpop.f32.mrf.mxu0
        %v8933 = vadd.f32 %v7991, %v8932
        %8934 = vmatprep.mubr.bf16.mxu0 %v7831
        %8935 = vmatmul.mubr.bf16.gmra.mxu0 %v7830
        %v8936 = vpop.f32.mrf.mxu0
        %v8937 = vadd.f32 %v7987, %v8936
        %v8938 = vpop.f32.mrf.mxu0
        %v8939 = vadd.f32 %v7991, %v8938
        %v8940 = vpop.f32.mrf.mxu0
        %v8941 = vadd.f32 %v7987, %v8940
        %v8942 = vpop.f32.mrf.mxu0
        %v8943 = vadd.f32 %v7991, %v8942
        %8944 = vmatprep.mubr.bf16.mxu0 %v7835
        %8945 = vmatmul.mubr.bf16.gmra.mxu0 %v7834
        %v8946 = vpop.f32.mrf.mxu0
        %v8947 = vadd.f32 %v7987, %v8946
        %v8948 = vpop.f32.mrf.mxu0
        %v8949 = vadd.f32 %v7991, %v8948
        %v8950 = vpop.f32.mrf.mxu0
        %v8951 = vadd.f32 %v7987, %v8950
        %v8952 = vpop.f32.mrf.mxu0
        %v8953 = vadd.f32 %v7991, %v8952
        %8954 = vmatprep.mubr.bf16.mxu0 %v7839
        %8955 = vmatmul.mubr.bf16.gmra.mxu0 %v7838
        %v8956 = vpop.f32.mrf.mxu0
        %v8957 = vadd.f32 %v7987, %v8956
        %v8958 = vpop.f32.mrf.mxu0
        %v8959 = vadd.f32 %v7991, %v8958
        %v8960 = vpop.f32.mrf.mxu0
        %v8961 = vadd.f32 %v7987, %v8960
        %v8962 = vpop.f32.mrf.mxu0
        %v8963 = vadd.f32 %v7991, %v8962
        %8964 = vmatprep.mubr.bf16.mxu0 %v7843
        %8965 = vmatmul.mubr.bf16.gmra.mxu0 %v7842
        %v8966 = vpop.f32.mrf.mxu0
        %v8967 = vadd.f32 %v7987, %v8966
        %v8968 = vpop.f32.mrf.mxu0
        %v8969 = vadd.f32 %v7991, %v8968
        %v8970 = vpop.f32.mrf.mxu0
        %v8971 = vadd.f32 %v7987, %v8970
        %v8972 = vpop.f32.mrf.mxu0
        %v8973 = vadd.f32 %v7991, %v8972
        %8974 = vdwg.mxu0
        %8975 = vmatprep.subr.bf16.mxu0 %v8475
        %8976 = vmatpush1.bf16.msra.mxu0 %v8474
        %8977 = vmatprep.subr.bf16.mxu0 %v8471
        %8978 = vmatpush1.bf16.msra.mxu0 %v8470
        %8979 = vmatprep.subr.bf16.mxu0 %v8467
        %8980 = vmatpush1.bf16.msra.mxu0 %v8466
        %8981 = vmatprep.subr.bf16.mxu0 %v8463
        %8982 = vmatpush1.bf16.msra.mxu0 %v8462
        %8983 = vmatprep.subr.bf16.mxu0 %v8459
        %8984 = vmatpush1.bf16.msra.mxu0 %v8458
        %8985 = vmatprep.subr.bf16.mxu0 %v8455
        %8986 = vmatpush1.bf16.msra.mxu0 %v8454
        %8987 = vmatprep.subr.bf16.mxu0 %v8451
        %8988 = vmatpush1.bf16.msra.mxu0 %v8450
        %8989 = vmatprep.subr.bf16.mxu0 %v8447
        %8990 = vmatpush1.bf16.msra.mxu0 %v8446
        %8991 = vmatprep.subr.bf16.mxu0 %v8507
        %8992 = vmatpush2.bf16.msra.mxu0 %v8506
        %8993 = vmatprep.subr.bf16.mxu0 %v8503
        %8994 = vmatpush2.bf16.msra.mxu0 %v8502
        %8995 = vmatprep.subr.bf16.mxu0 %v8499
        %8996 = vmatpush2.bf16.msra.mxu0 %v8498
        %8997 = vmatprep.subr.bf16.mxu0 %v8495
        %8998 = vmatpush2.bf16.msra.mxu0 %v8494
        %8999 = vmatprep.subr.bf16.mxu0 %v8491
        %9000 = vmatpush2.bf16.msra.mxu0 %v8490
        %9001 = vmatprep.subr.bf16.mxu0 %v8487
        %9002 = vmatpush2.bf16.msra.mxu0 %v8486
        %9003 = vmatprep.subr.bf16.mxu0 %v8483
        %9004 = vmatpush2.bf16.msra.mxu0 %v8482
        %9005 = vmatprep.subr.bf16.mxu0 %v8479
        %9006 = vmatpush2.bf16.msra.mxu0 %v8478
        %9007 = vmatprep.mubr.bf16.mxu0 %v7817
        %9008 = vmatmul.mubr.bf16.gmra.mxu0 %v7816
        %v9009 = vpop.f32.mrf.mxu0
        %v9010 = vadd.f32 %v8897, %v9009
        %v9011 = vpop.f32.mrf.mxu0
        %v9012 = vadd.f32 %v8899, %v9011
        %v9013 = vpop.f32.mrf.mxu0
        %v9014 = vadd.f32 %v8901, %v9013
        %v9015 = vpop.f32.mrf.mxu0
        %v9016 = vadd.f32 %v8903, %v9015
        %9017 = vmatprep.mubr.bf16.mxu0 %v7821
        %9018 = vmatmul.mubr.bf16.gmra.mxu0 %v7820
        %v9019 = vpop.f32.mrf.mxu0
        %v9020 = vadd.f32 %v8907, %v9019
        %v9021 = vpop.f32.mrf.mxu0
        %v9022 = vadd.f32 %v8909, %v9021
        %v9023 = vpop.f32.mrf.mxu0
        %v9024 = vadd.f32 %v8911, %v9023
        %v9025 = vpop.f32.mrf.mxu0
        %v9026 = vadd.f32 %v8913, %v9025
        %9027 = vmatprep.mubr.bf16.mxu0 %v7825
        %9028 = vmatmul.mubr.bf16.gmra.mxu0 %v7824
        %v9029 = vpop.f32.mrf.mxu0
        %v9030 = vadd.f32 %v8917, %v9029
        %v9031 = vpop.f32.mrf.mxu0
        %v9032 = vadd.f32 %v8919, %v9031
        %v9033 = vpop.f32.mrf.mxu0
        %v9034 = vadd.f32 %v8921, %v9033
        %v9035 = vpop.f32.mrf.mxu0
        %v9036 = vadd.f32 %v8923, %v9035
        %9037 = vmatprep.mubr.bf16.mxu0 %v7829
        %9038 = vmatmul.mubr.bf16.gmra.mxu0 %v7828
        %v9039 = vpop.f32.mrf.mxu0
        %v9040 = vadd.f32 %v8927, %v9039
        %v9041 = vpop.f32.mrf.mxu0
        %v9042 = vadd.f32 %v8929, %v9041
        %v9043 = vpop.f32.mrf.mxu0
        %v9044 = vadd.f32 %v8931, %v9043
        %v9045 = vpop.f32.mrf.mxu0
        %v9046 = vadd.f32 %v8933, %v9045
        %9047 = vmatprep.mubr.bf16.mxu0 %v7833
        %9048 = vmatmul.mubr.bf16.gmra.mxu0 %v7832
        %v9049 = vpop.f32.mrf.mxu0
        %v9050 = vadd.f32 %v8937, %v9049
        %v9051 = vpop.f32.mrf.mxu0
        %v9052 = vadd.f32 %v8939, %v9051
        %v9053 = vpop.f32.mrf.mxu0
        %v9054 = vadd.f32 %v8941, %v9053
        %v9055 = vpop.f32.mrf.mxu0
        %v9056 = vadd.f32 %v8943, %v9055
        %9057 = vmatprep.mubr.bf16.mxu0 %v7837
        %9058 = vmatmul.mubr.bf16.gmra.mxu0 %v7836
        %v9059 = vpop.f32.mrf.mxu0
        %v9060 = vadd.f32 %v8947, %v9059
        %v9061 = vpop.f32.mrf.mxu0
        %v9062 = vadd.f32 %v8949, %v9061
        %v9063 = vpop.f32.mrf.mxu0
        %v9064 = vadd.f32 %v8951, %v9063
        %v9065 = vpop.f32.mrf.mxu0
        %v9066 = vadd.f32 %v8953, %v9065
        %9067 = vmatprep.mubr.bf16.mxu0 %v7841
        %9068 = vmatmul.mubr.bf16.gmra.mxu0 %v7840
        %v9069 = vpop.f32.mrf.mxu0
        %v9070 = vadd.f32 %v8957, %v9069
        %v9071 = vpop.f32.mrf.mxu0
        %v9072 = vadd.f32 %v8959, %v9071
        %v9073 = vpop.f32.mrf.mxu0
        %v9074 = vadd.f32 %v8961, %v9073
        %v9075 = vpop.f32.mrf.mxu0
        %v9076 = vadd.f32 %v8963, %v9075
        %9077 = vmatprep.mubr.bf16.mxu0 %v7845
        %9078 = vmatmul.mubr.bf16.gmra.mxu0 %v7844
        %v9079 = vpop.f32.mrf.mxu0
        %v9080 = vadd.f32 %v8967, %v9079
        %v9081 = vpop.f32.mrf.mxu0
        %v9082 = vadd.f32 %v8969, %v9081
        %v9083 = vpop.f32.mrf.mxu0
        %v9084 = vadd.f32 %v8971, %v9083
        %v9085 = vpop.f32.mrf.mxu0
        %v9086 = vadd.f32 %v8973, %v9085
        %9087 = vdwg.mxu0
        %9088 = vst [vmem:[%s370] sm:$0xff] %v8784
        %9089 = vst [vmem:[%s370 + $0x8] sm:$0xff] %v8786
        %9090 = vst [vmem:[%s370 + $0x10] sm:$0xff] %v9010
        %9091 = vst [vmem:[%s370 + $0x18] sm:$0xff] %v9012
        %9092 = vst [vmem:[%s370 + $0x20] sm:$0xff] %v8788
        %9093 = vst [vmem:[%s370 + $0x28] sm:$0xff] %v8790
        %9094 = vst [vmem:[%s370 + $0x30] sm:$0xff] %v9014
        %9095 = vst [vmem:[%s370 + $0x38] sm:$0xff] %v9016
        %9096 = vst [vmem:[%s370 + $0x40] sm:$0xff] %v8794
        %9097 = vst [vmem:[%s370 + $0x48] sm:$0xff] %v8796
        %9098 = vst [vmem:[%s370 + $0x50] sm:$0xff] %v9020
        %9099 = vst [vmem:[%s370 + $0x58] sm:$0xff] %v9022
        %9100 = vst [vmem:[%s370 + $0x60] sm:$0xff] %v8798
        %9101 = vst [vmem:[%s370 + $0x68] sm:$0xff] %v8800
        %9102 = vst [vmem:[%s370 + $0x70] sm:$0xff] %v9024
        %9103 = vst [vmem:[%s370 + $0x78] sm:$0xff] %v9026
        %9104 = vst [vmem:[%s370 + $0x80] sm:$0xff] %v8804
        %9105 = vst [vmem:[%s370 + $0x88] sm:$0xff] %v8806
        %9106 = vst [vmem:[%s370 + $0x90] sm:$0xff] %v9030
        %9107 = vst [vmem:[%s370 + $0x98] sm:$0xff] %v9032
        %9108 = vst [vmem:[%s370 + $0xa0] sm:$0xff] %v8808
        %9109 = vst [vmem:[%s370 + $0xa8] sm:$0xff] %v8810
        %9110 = vst [vmem:[%s370 + $0xb0] sm:$0xff] %v9034
        %9111 = vst [vmem:[%s370 + $0xb8] sm:$0xff] %v9036
        %9112 = vst [vmem:[%s370 + $0xc0] sm:$0xff] %v8814
        %9113 = vst [vmem:[%s370 + $0xc8] sm:$0xff] %v8816
        %9114 = vst [vmem:[%s370 + $0xd0] sm:$0xff] %v9040
        %9115 = vst [vmem:[%s370 + $0xd8] sm:$0xff] %v9042
        %9116 = vst [vmem:[%s370 + $0xe0] sm:$0xff] %v8818
        %9117 = vst [vmem:[%s370 + $0xe8] sm:$0xff] %v8820
        %9118 = vst [vmem:[%s370 + $0xf0] sm:$0xff] %v9044
        %9119 = vst [vmem:[%s370 + $0xf8] sm:$0xff] %v9046
        %9120 = vst [vmem:[%s370 + $0x100] sm:$0xff] %v8824
        %9121 = vst [vmem:[%s370 + $0x108] sm:$0xff] %v8826
        %9122 = vst [vmem:[%s370 + $0x110] sm:$0xff] %v9050
        %9123 = vst [vmem:[%s370 + $0x118] sm:$0xff] %v9052
        %9124 = vst [vmem:[%s370 + $0x120] sm:$0xff] %v8828
        %9125 = vst [vmem:[%s370 + $0x128] sm:$0xff] %v8830
        %9126 = vst [vmem:[%s370 + $0x130] sm:$0xff] %v9054
        %9127 = vst [vmem:[%s370 + $0x138] sm:$0xff] %v9056
        %9128 = vst [vmem:[%s370 + $0x140] sm:$0xff] %v8834
        %9129 = vst [vmem:[%s370 + $0x148] sm:$0xff] %v8836
        %9130 = vst [vmem:[%s370 + $0x150] sm:$0xff] %v9060
        %9131 = vst [vmem:[%s370 + $0x158] sm:$0xff] %v9062
        %9132 = vst [vmem:[%s370 + $0x160] sm:$0xff] %v8838
        %9133 = vst [vmem:[%s370 + $0x168] sm:$0xff] %v8840
        %9134 = vst [vmem:[%s370 + $0x170] sm:$0xff] %v9064
        %9135 = vst [vmem:[%s370 + $0x178] sm:$0xff] %v9066
        %9136 = vst [vmem:[%s370 + $0x180] sm:$0xff] %v8844
        %9137 = vst [vmem:[%s370 + $0x188] sm:$0xff] %v8846
        %9138 = vst [vmem:[%s370 + $0x190] sm:$0xff] %v9070
        %9139 = vst [vmem:[%s370 + $0x198] sm:$0xff] %v9072
        %9140 = vst [vmem:[%s370 + $0x1a0] sm:$0xff] %v8848
        %9141 = vst [vmem:[%s370 + $0x1a8] sm:$0xff] %v8850
        %9142 = vst [vmem:[%s370 + $0x1b0] sm:$0xff] %v9074
        %9143 = vst [vmem:[%s370 + $0x1b8] sm:$0xff] %v9076
        %9144 = vst [vmem:[%s370 + $0x1c0] sm:$0xff] %v8854
        %9145 = vst [vmem:[%s370 + $0x1c8] sm:$0xff] %v8856
        %9146 = vst [vmem:[%s370 + $0x1d0] sm:$0xff] %v9080
        %9147 = vst [vmem:[%s370 + $0x1d8] sm:$0xff] %v9082
        %9148 = vst [vmem:[%s370 + $0x1e0] sm:$0xff] %v8858
        %9149 = vst [vmem:[%s370 + $0x1e8] sm:$0xff] %v8860
        %9150 = vst [vmem:[%s370 + $0x1f0] sm:$0xff] %v9084
        %9151 = vst [vmem:[%s370 + $0x1f8] sm:$0xff] %v9086
        %s9152 = sand.u32 %s240, 1
        %s9153 = scalar_lea.sflag [#allocation4], %s9152
        %s9154 = sand.u32 %s240, 1
        %s9155 = smul.addr %s9154, 512
        %s9156 = scalar_lea.vmem [#allocation3], %s9155
        // Predicated region
        $region57: #{self_attention_forward.1} parent=55 // pred_check
          %p9157 = pneg %p250
        $region58: #{self_attention_forward.1} parent=55 // pred_check_branch
          %9159 = sbr.rel (%p9157) target = $region60
        $region59: #{self_attention_forward.1} parent=55 // pred_region
          %s9161 = ssub.s32 8192, 8192
          %9162 = vsyncadd %s9153, %s9161
          %s9163 = smul.addr %s23, 64
          %s9164 = smul.addr %s9163, 128
          %s9165 = scalar_lea.hbm %s9, %s9164
          %s9166 = sshll.u32 %s9156, 4
          %s9167 = int_to_ptr.vmem [resolvable:$true] %s9166
          %9172 = dma.vmem_to_hbm [thread:$0]  %s9167, 8192, %s9165, %s9153, 512, 512, 32
        $region60: #{self_attention_forward.1} parent=55 // pred_fallthru
          _
      $region56: #{self_attention_forward.1} parent=5 // pred_fallthru
        _
      %p9173 = scmp.le.s32.totalorder 2, %s18
      // Predicated region
      $region61: #{self_attention_forward.1} parent=5 // pred_check
        %p9174 = pneg %p9173
      $region62: #{self_attention_forward.1} parent=5 // pred_check_branch
        %9176 = sbr.rel (%p9174) target = $region64
      $region63: #{self_attention_forward.1} parent=5 // pred_region
        %s9177 = ssub.s32 %s18, 2
        // Predicated region
        $region65: #{self_attention_forward.1} parent=63 // pred_check
          %p9178 = pneg %p256
        $region66: #{self_attention_forward.1} parent=63 // pred_check_branch
          %9180 = sbr.rel (%p9178) target = $region68
        $region67: #{self_attention_forward.1} parent=63 // pred_region
          %s9181 = sand.u32 %s241, 1
          %s9182 = scalar_lea.sflag [#allocation4], %s9181
          %s9183 = sand.u32 %s241, 1
          %s9184 = smul.addr %s9183, 512
          %s9185 = scalar_lea.vmem [#allocation3], %s9184
          %9186 = dma.done %s9182, 8192
        $region68: #{self_attention_forward.1} parent=63 // pred_fallthru
          _
      $region64: #{self_attention_forward.1} parent=5 // pred_fallthru
        _
    $region6: #{self_attention_forward.1} parent=1 // loop_footer
      %s22 = sadd.s32 1, %s18
    $region7: #{self_attention_forward.1} parent=1 // loop_footer_branch
      %17 = sbr.rel target = $region3
    $region8: #{self_attention_forward.1} parent=1 // loop_exit
      _
    %9187 = vsyncpa [#allocation4], 1
    %s9188 = scalar_lea.sflag [#allocation4], 1
    %9189 = vsyncpa %s9188, 1

</llo_original>
